<compile_context>
chip_gen: v5e
topology: v5e:2x2
jax: 0.10.0
libtpu: 0.0.40
codegen_flags: <defaults>
</compile_context>

<pallas_src>
import jax
import jax.numpy as jnp
from jax import lax
from jax.experimental import pallas as pl
from jax.experimental.pallas import tpu as pltpu


def decoder_kernel(x_ref, h0_ref, c0_ref,
                   wih0_ref, whh0_ref, b0_ref,
                   wih1_ref, whh1_ref, b1_ref,
                   wt_ref, bt_ref,
                   out_ref, tag_ref, hn_ref, cn_ref,
                   xg_ref):
    # x_ref is time-major (S, BB, IN); out_ref (S, BB, H); tag_ref (S, BB, TP).
    S, BB, IN = x_ref.shape
    H = out_ref.shape[-1]
    TP = tag_ref.shape[-1]
    cdt = wih0_ref.dtype                       # MXU operand dtype (f32 or bf16)

    # Loop-invariant weights / hoisted broadcasts.
    whh0 = whh0_ref[...]                       # (H, 4H)
    wih1 = wih1_ref[...]                       # (H, 4H)
    whh1 = whh1_ref[...]                       # (H, 4H)
    b1b = jnp.broadcast_to(b1_ref[...], (BB, 4 * H))   # hoisted bias broadcast

    # --- Hoisted layer-0 input projection (one big GEMM, off the per-step path)
    x_all = jnp.maximum(x_ref[...], 0.0).astype(cdt)   # F.relu(input)
    xg = (jnp.dot(x_all.reshape(S * BB, IN), wih0_ref[...],
                  preferred_element_type=jnp.float32)
          + b0_ref[...])                                # (S*BB, 4H) f32
    xg_ref[...] = xg.reshape(S, BB, 4 * H)

    # Hoisted gate-lane mask: gate order [i, f, g, o]; tanh only on the g lanes.
    lane = lax.broadcasted_iota(jnp.int32, (BB, 4 * H), 1)
    is_g = (lane >= 2 * H) & (lane < 3 * H)

    def activate(gates):
        # One full-vreg sigmoid + one full-vreg tanh (EUP), merged on the VPU.
        a = jnp.where(is_g, jnp.tanh(gates), jax.nn.sigmoid(gates))
        return a[:, 0:H], a[:, H:2 * H], a[:, 2 * H:3 * H], a[:, 3 * H:4 * H]

    h0_init, h1_init = h0_ref[0], h0_ref[1]
    c0_init, c1_init = c0_ref[0], c0_ref[1]

    # TODO(synk): nn.LSTM inter-layer dropout is train-mode only; eval semantics
    # (no dropout) are modeled here.
    def body(t, carry):
        h0, c0, h1, c1 = carry
        # Layer 0: input pre-gates precomputed; per step only h @ W_hh0.
        g0 = xg_ref[t] + jnp.dot(h0.astype(cdt), whh0,
                                 preferred_element_type=jnp.float32)
        i0, f0, gg0, o0 = activate(g0)
        c0n = f0 * c0 + i0 * gg0
        h0n = o0 * jnp.tanh(c0n)
        # Layer 1: two dots — no per-step lane concat on the serial path.
        g1 = (jnp.dot(h0n.astype(cdt), wih1, preferred_element_type=jnp.float32)
              + jnp.dot(h1.astype(cdt), whh1, preferred_element_type=jnp.float32)
              + b1b)
        i1, f1, gg1, o1 = activate(g1)
        c1n = f1 * c1 + i1 * gg1
        h1n = o1 * jnp.tanh(c1n)
        out_ref[t] = h1n                        # contiguous leading-axis store
        return (h0n, c0n, h1n, c1n)

    # S is small here (S=8): full unroll.  For larger S, switch to unroll=4.
    h0f, c0f, h1f, c1f = lax.fori_loop(
        0, S, body, (h0_init, c0_init, h1_init, c1_init), unroll=True)

    hn_ref[0] = h0f
    hn_ref[1] = h1f
    cn_ref[0] = c0f
    cn_ref[1] = c1f

    # --- Hoisted hidden2tag + LogSoftmax(dim=1) -------------------------------
    # PyTorch dim=1 of the (B, S, T) tensor is the SEQUENCE axis == axis 0 here.
    hs = out_ref[...]                                      # (S, BB, H)
    logits = (jnp.dot(hs.reshape(S * BB, H).astype(cdt), wt_ref[...],
                      preferred_element_type=jnp.float32)
              + bt_ref[...]).reshape(S, BB, TP)
    m = jnp.max(logits, axis=0, keepdims=True)
    lse = jnp.log(jnp.sum(jnp.exp(logits - m), axis=0, keepdims=True)) + m
    tag_ref[...] = logits - lse                            # full-lane stores (TP=128k)


def _pick_block_batch(B):
    """Batch rows per grid step (multiple of the 8-row sublane tile)."""
    # Up to 64 rows per step (feeds more MXU rows, amortizes grid overhead);
    # cap at 64 to avoid vreg pressure with the fully-unrolled recurrence;
    # never pad a small batch far past one sublane tile.
    bb = min(64, 8 * pl.cdiv(B, 8))
    # v7x megacore: when the batch is big enough, keep >= 2 grid blocks so the
    # "parallel" batch axis can shard across the two TensorCores.
    if pl.cdiv(B, bb) < 2 and B > 32:
        bb = 8 * pl.cdiv(pl.cdiv(B, 2), 8)
    return bb


def decoder_forward(x, hidden, params, mxu_dtype=jnp.float32):
    """DecoderRNN forward.  mxu_dtype=jnp.bfloat16 uses bf16 MXU operands
    (v6e/v7x); accumulation and all elementwise math stay f32."""
    h0, c0 = hidden
    B, S, IN = x.shape
    H = h0.shape[-1]
    T = params["wt"].shape[-1]
    TP = 128 * pl.cdiv(T, 128)               # lane-dense tag width

    BB = _pick_block_batch(B)
    nb = pl.cdiv(B, BB)
    B_pad = nb * BB
    pad = B_pad - B

    # Time-major + pad batch to full sublane tiles (padded rows are inert).
    xt = jnp.transpose(x, (1, 0, 2))                       # (S, B, IN)
    if pad:
        xt = jnp.pad(xt, ((0, 0), (0, pad), (0, 0)))
        h0p = jnp.pad(h0, ((0, 0), (0, pad), (0, 0)))
        c0p = jnp.pad(c0, ((0, 0), (0, pad), (0, 0)))
    else:
        h0p, c0p = h0, c0

    wd = mxu_dtype
    wih0 = params["wih0"].astype(wd)
    whh0 = params["whh0"].astype(wd)
    wih1 = params["wih1"].astype(wd)
    whh1 = params["whh1"].astype(wd)
    # Lane-dense hidden2tag: pad output lanes to a multiple of 128.
    wt_p = jnp.pad(params["wt"], ((0, 0), (0, TP - T))).astype(wd)
    bt_p = jnp.pad(params["bt"], ((0, 0), (0, TP - T)))    # bias stays f32

    args = (xt, h0p, c0p, wih0, whh0, params["b0"],
            wih1, whh1, params["b1"], wt_p, bt_p)

    bmap3 = lambda b: (0, b, 0)
    wmap2 = lambda b: (0, 0)
    in_specs = [
        pl.BlockSpec((S, BB, IN), bmap3),        # x (time-major)
        pl.BlockSpec((2, BB, H), bmap3),         # h0
        pl.BlockSpec((2, BB, H), bmap3),         # c0
        pl.BlockSpec((IN, 4 * H), wmap2),        # wih0
        pl.BlockSpec((H, 4 * H), wmap2),         # whh0
        pl.BlockSpec((1, 4 * H), wmap2),         # b0
        pl.BlockSpec((H, 4 * H), wmap2),         # wih1
        pl.BlockSpec((H, 4 * H), wmap2),         # whh1
        pl.BlockSpec((1, 4 * H), wmap2),         # b1
        pl.BlockSpec((H, TP), wmap2),            # hidden2tag weight (lane-padded)
        pl.BlockSpec((1, TP), wmap2),            # hidden2tag bias (lane-padded)
    ]
    out_specs = (
        pl.BlockSpec((S, BB, H), bmap3),         # lstm output (time-major)
        pl.BlockSpec((S, BB, TP), bmap3),        # log-softmax tags (time-major)
        pl.BlockSpec((2, BB, H), bmap3),         # h_n
        pl.BlockSpec((2, BB, H), bmap3),         # c_n
    )
    out_shapes = (
        jax.ShapeDtypeStruct((S, B_pad, H), jnp.float32),
        jax.ShapeDtypeStruct((S, B_pad, TP), jnp.float32),
        jax.ShapeDtypeStruct((2, B_pad, H), jnp.float32),
        jax.ShapeDtypeStruct((2, B_pad, H), jnp.float32),
    )

    out_tm, tag_tm, hn_p, cn_p = pl.pallas_call(
        decoder_kernel,
        out_shape=out_shapes,
        grid=(nb,),
        in_specs=in_specs,
        out_specs=out_specs,
        scratch_shapes=[pltpu.VMEM((S, BB, 4 * H), jnp.float32)],  # precomputed input gates
        compiler_params=pltpu.CompilerParams(
            dimension_semantics=("parallel",)),   # batch blocks are independent
    )(*args)

    # Back to batch-first; drop batch + tag-lane padding (XLA fuses these copies).
    out = jnp.transpose(out_tm, (1, 0, 2))[:B]
    tag = jnp.transpose(tag_tm, (1, 0, 2))[:B, :, :T]
    hn = hn_p[:, :B]
    cn = cn_p[:, :B]
    return out, tag, (hn, cn)


# ----------------------- pure-JAX reference (for checking) -------------------
def decoder_reference(x, hidden, p):
    h0, c0 = hidden
    H = h0.shape[-1]
    x = jnp.maximum(x, 0.0)

    def cell(x_t, h, c, wih, whh, b):
        g = x_t @ wih + h @ whh + b
        i = jax.nn.sigmoid(g[:, 0 * H:1 * H])
        f = jax.nn.sigmoid(g[:, 1 * H:2 * H])
        gg = jnp.tanh(g[:, 2 * H:3 * H])
        o = jax.nn.sigmoid(g[:, 3 * H:4 * H])
        c_new = f * c + i * gg
        return o * jnp.tanh(c_new), c_new

    h0a, c0a = h0[0], c0[0]
    h1a, c1a = h0[1], c0[1]
    outs, logits = [], []
    for t in range(x.shape[1]):
        h0a, c0a = cell(x[:, t, :], h0a, c0a, p["wih0"], p["whh0"], p["b0"])
        h1a, c1a = cell(h0a, h1a, c1a, p["wih1"], p["whh1"], p["b1"])
        outs.append(h1a)
        logits.append(h1a @ p["wt"] + p["bt"])
    out = jnp.stack(outs, axis=1)
    lg = jnp.stack(logits, axis=1)
    tag = lg - jax.scipy.special.logsumexp(lg, axis=1, keepdims=True)
    return out, tag, (jnp.stack([h0a, h1a]), jnp.stack([c0a, c1a]))


if __name__ == "__main__":
    # Use full-precision f32 matmuls on both the kernel and the XLA reference so
    # the f32 comparison is apples-to-apples (precision attr is set at trace time).
    jax.config.update("jax_default_matmul_precision", "highest")

    # Small config: batch=2, seq=8, embedding_dim=16 (LSTM in = 2E = 32),
    # hidden_dim=32, entity_tag_size=7 -> tag_size=8.
    B, S, E, H, T = 2, 8, 16, 32, 8
    IN = 2 * E

    key = jax.random.PRNGKey(0)
    ks = jax.random.split(key, 12)
    k = 1.0 / jnp.sqrt(H)

    def u(kk, shape):
        return jax.random.uniform(kk, shape, jnp.float32, -k, k)

    params = {
        "wih0": u(ks[0], (IN, 4 * H)),
        "whh0": u(ks[1], (H, 4 * H)),
        "b0":   u(ks[2], (1, 4 * H)),   # b_ih + b_hh folded together
        "wih1": u(ks[3], (H, 4 * H)),
        "whh1": u(ks[4], (H, 4 * H)),
        "b1":   u(ks[5], (1, 4 * H)),
        "wt":   u(ks[6], (H, T)),       # hidden2tag
        "bt":   u(ks[7], (1, T)),
    }

    x = jax.random.normal(ks[8], (B, S, IN), jnp.float32)
    h0 = jnp.zeros((2, B, H), jnp.float32)   # initHidden()
    c0 = jnp.zeros((2, B, H), jnp.float32)

    r_out, r_tag, (r_hn, r_cn) = decoder_reference(x, (h0, c0), params)

    # f32 MXU operands: tight check.
    out, tag, (hn, cn) = decoder_forward(x, (h0, c0), params)
    jax.block_until_ready((out, tag, hn, cn))
    assert jnp.allclose(out, r_out, atol=1e-3, rtol=1e-3)
    assert jnp.allclose(tag, r_tag, atol=1e-3, rtol=1e-3)
    assert jnp.allclose(hn, r_hn, atol=1e-3, rtol=1e-3)
    assert jnp.allclose(cn, r_cn, atol=1e-3, rtol=1e-3)

    # bf16 MXU operands (v6e/v7x fast path): loose sanity check (f32 accumulate,
    # elementwise math in f32; only MXU operand rounding differs).
    out_b, tag_b, (hn_b, cn_b) = decoder_forward(
        x, (h0, c0), params, mxu_dtype=jnp.bfloat16)
    jax.block_until_ready((out_b, tag_b, hn_b, cn_b))
    assert jnp.allclose(out_b, r_out, atol=1e-1, rtol=1e-1)
    assert jnp.allclose(tag_b, r_tag, atol=1e-1, rtol=1e-1)
    assert jnp.allclose(hn_b, r_hn, atol=1e-1, rtol=1e-1)
    assert jnp.allclose(cn_b, r_cn, atol=1e-1, rtol=1e-1)

    print("KERNEL_OK")
</pallas_src>

<mosaic_0001>
module attributes {stable_mosaic.version = 11 : i64} {
  func.func @decoder_kernel(%arg0: i32, %arg1: memref<8x8x32xf32, #tpu.memory_space<vmem>>, %arg2: memref<2x8x32xf32, #tpu.memory_space<vmem>>, %arg3: memref<2x8x32xf32, #tpu.memory_space<vmem>>, %arg4: memref<32x128xf32, #tpu.memory_space<vmem>>, %arg5: memref<32x128xf32, #tpu.memory_space<vmem>>, %arg6: memref<1x128xf32, #tpu.memory_space<vmem>>, %arg7: memref<32x128xf32, #tpu.memory_space<vmem>>, %arg8: memref<32x128xf32, #tpu.memory_space<vmem>>, %arg9: memref<1x128xf32, #tpu.memory_space<vmem>>, %arg10: memref<32x128xf32, #tpu.memory_space<vmem>>, %arg11: memref<1x128xf32, #tpu.memory_space<vmem>>, %arg12: memref<8x8x32xf32, #tpu.memory_space<vmem>>, %arg13: memref<8x8x128xf32, #tpu.memory_space<vmem>>, %arg14: memref<2x8x32xf32, #tpu.memory_space<vmem>>, %arg15: memref<2x8x32xf32, #tpu.memory_space<vmem>>, %arg16: memref<8x8x128xf32, #tpu.memory_space<vmem>>) attributes {dimension_semantics = [#tpu.dimension_semantics<parallel>], iteration_bounds = array<i64: 1>, scalar_prefetch = 0 : i64, scratch_operands = 1 : i64, tpu.core_type = #tpu.core_type<tc>, window_params = [{transform_indices = @transform_0, window_bounds = array<i64: 8, 8, 32>}, {transform_indices = @transform_1, window_bounds = array<i64: 2, 8, 32>}, {transform_indices = @transform_2, window_bounds = array<i64: 2, 8, 32>}, {pipeline_mode = #tpu.pipeline_mode<synchronous>, transform_indices = @transform_3, window_bounds = array<i64: 32, 128>}, {pipeline_mode = #tpu.pipeline_mode<synchronous>, transform_indices = @transform_4, window_bounds = array<i64: 32, 128>}, {pipeline_mode = #tpu.pipeline_mode<synchronous>, transform_indices = @transform_5, window_bounds = array<i64: 1, 128>}, {pipeline_mode = #tpu.pipeline_mode<synchronous>, transform_indices = @transform_6, window_bounds = array<i64: 32, 128>}, {pipeline_mode = #tpu.pipeline_mode<synchronous>, transform_indices = @transform_7, window_bounds = array<i64: 32, 128>}, {pipeline_mode = #tpu.pipeline_mode<synchronous>, transform_indices = @transform_8, window_bounds = array<i64: 1, 128>}, {pipeline_mode = #tpu.pipeline_mode<synchronous>, transform_indices = @transform_9, window_bounds = array<i64: 32, 128>}, {pipeline_mode = #tpu.pipeline_mode<synchronous>, transform_indices = @transform_10, window_bounds = array<i64: 1, 128>}, {transform_indices = @transform_11, window_bounds = array<i64: 8, 8, 32>}, {transform_indices = @transform_12, window_bounds = array<i64: 8, 8, 128>}, {transform_indices = @transform_13, window_bounds = array<i64: 2, 8, 32>}, {transform_indices = @transform_14, window_bounds = array<i64: 2, 8, 32>}]} {
    %c0 = arith.constant 0 : index
    %c0_0 = arith.constant 0 : index
    %0 = vector.load %arg5[%c0, %c0_0] : memref<32x128xf32, #tpu.memory_space<vmem>>, vector<32x128xf32>
    %c0_1 = arith.constant 0 : index
    %c0_2 = arith.constant 0 : index
    %1 = vector.load %arg7[%c0_1, %c0_2] : memref<32x128xf32, #tpu.memory_space<vmem>>, vector<32x128xf32>
    %c0_3 = arith.constant 0 : index
    %c0_4 = arith.constant 0 : index
    %2 = vector.load %arg8[%c0_3, %c0_4] : memref<32x128xf32, #tpu.memory_space<vmem>>, vector<32x128xf32>
    %c0_5 = arith.constant 0 : index
    %c0_6 = arith.constant 0 : index
    %3 = vector.load %arg9[%c0_5, %c0_6] : memref<1x128xf32, #tpu.memory_space<vmem>>, vector<1x128xf32>
    %4 = vector.shape_cast %3 : vector<1x128xf32> to vector<1x128xf32>
    %5 = vector.broadcast %4 : vector<1x128xf32> to vector<8x128xf32>
    %c0_7 = arith.constant 0 : index
    %c0_8 = arith.constant 0 : index
    %c0_9 = arith.constant 0 : index
    %6 = vector.load %arg1[%c0_7, %c0_8, %c0_9] : memref<8x8x32xf32, #tpu.memory_space<vmem>>, vector<8x8x32xf32>
    %cst = arith.constant 0.000000e+00 : f32
    %7 = vector.broadcast %cst : f32 to vector<8x8x32xf32>
    %8 = arith.maximumf %6, %7 : vector<8x8x32xf32>
    %9 = vector.shape_cast %8 : vector<8x8x32xf32> to vector<64x32xf32>
    %c0_10 = arith.constant 0 : index
    %c0_11 = arith.constant 0 : index
    %10 = vector.load %arg4[%c0_10, %c0_11] : memref<32x128xf32, #tpu.memory_space<vmem>>, vector<32x128xf32>
    %cst_12 = arith.constant dense<0.000000e+00> : vector<64x128xf32>
    %11 = tpu.matmul %9, %10, %cst_12 {dimension_numbers = #tpu.dot_dimension_numbers<[1], [0], [0], [1], [0, 0, 1, 1], [], []>, precision = #tpu.contract_precision<fp32>} : vector<64x32xf32>, vector<32x128xf32>, vector<64x128xf32> -> vector<64x128xf32>
    %c0_13 = arith.constant 0 : index
    %c0_14 = arith.constant 0 : index
    %12 = vector.load %arg6[%c0_13, %c0_14] : memref<1x128xf32, #tpu.memory_space<vmem>>, vector<1x128xf32>
    %13 = vector.broadcast %12 : vector<1x128xf32> to vector<64x128xf32>
    %14 = arith.addf %11, %13 : vector<64x128xf32>
    %15 = vector.shape_cast %14 : vector<64x128xf32> to vector<8x8x128xf32>
    %c0_15 = arith.constant 0 : index
    %c0_16 = arith.constant 0 : index
    %c0_17 = arith.constant 0 : index
    %16 = vector.load %arg16[%c0_15, %c0_16, %c0_17] : memref<8x8x128xf32, #tpu.memory_space<vmem>>, vector<8x8x128xf32>
    tpu.vector_store %arg16[%c0_15, %c0_16, %c0_17], %15 {strides = array<i32>} : memref<8x8x128xf32, #tpu.memory_space<vmem>>, vector<8x8x128xf32>,
    %17 = tpu.iota {dimensions = array<i32: 1>} : vector<8x128xi32>
    %c64_i32 = arith.constant 64 : i32
    %18 = vector.broadcast %c64_i32 : i32 to vector<8x128xi32>
    %19 = arith.cmpi sge, %17, %18 : vector<8x128xi32>
    %c96_i32 = arith.constant 96 : i32
    %20 = vector.broadcast %c96_i32 : i32 to vector<8x128xi32>
    %21 = arith.cmpi slt, %17, %20 : vector<8x128xi32>
    %22 = arith.andi %19, %21 : vector<8x128xi1>
    %c0_18 = arith.constant 0 : index
    %c0_19 = arith.constant 0 : index
    %c0_20 = arith.constant 0 : index
    %23 = vector.load %arg2[%c0_18, %c0_19, %c0_20] : memref<2x8x32xf32, #tpu.memory_space<vmem>>, vector<1x8x32xf32>
    %24 = vector.shape_cast %23 : vector<1x8x32xf32> to vector<8x32xf32>
    %c1 = arith.constant 1 : index
    %c0_21 = arith.constant 0 : index
    %c0_22 = arith.constant 0 : index
    %25 = vector.load %arg2[%c1, %c0_21, %c0_22] : memref<2x8x32xf32, #tpu.memory_space<vmem>>, vector<1x8x32xf32>
    %26 = vector.shape_cast %25 : vector<1x8x32xf32> to vector<8x32xf32>
    %c0_23 = arith.constant 0 : index
    %c0_24 = arith.constant 0 : index
    %c0_25 = arith.constant 0 : index
    %27 = vector.load %arg3[%c0_23, %c0_24, %c0_25] : memref<2x8x32xf32, #tpu.memory_space<vmem>>, vector<1x8x32xf32>
    %28 = vector.shape_cast %27 : vector<1x8x32xf32> to vector<8x32xf32>
    %c1_26 = arith.constant 1 : index
    %c0_27 = arith.constant 0 : index
    %c0_28 = arith.constant 0 : index
    %29 = vector.load %arg3[%c1_26, %c0_27, %c0_28] : memref<2x8x32xf32, #tpu.memory_space<vmem>>, vector<1x8x32xf32>
    %30 = vector.shape_cast %29 : vector<1x8x32xf32> to vector<8x32xf32>
    %c0_i32 = arith.constant 0 : i32
    %31 = arith.index_cast %c0_i32 : i32 to index
    %c0_29 = arith.constant 0 : index
    %c0_30 = arith.constant 0 : index
    %32 = vector.load %arg16[%31, %c0_29, %c0_30] : memref<8x8x128xf32, #tpu.memory_space<vmem>>, vector<1x8x128xf32>
    %33 = vector.shape_cast %32 : vector<1x8x128xf32> to vector<8x128xf32>
    %cst_31 = arith.constant dense<0.000000e+00> : vector<8x128xf32>
    %34 = tpu.matmul %24, %0, %cst_31 {dimension_numbers = #tpu.dot_dimension_numbers<[1], [0], [0], [1], [0, 0, 1, 1], [], []>, precision = #tpu.contract_precision<fp32>} : vector<8x32xf32>, vector<32x128xf32>, vector<8x128xf32> -> vector<8x128xf32>
    %35 = arith.addf %33, %34 : vector<8x128xf32>
    %36 = math.tanh %35 : vector<8x128xf32>
    %37 = arith.negf %35 : vector<8x128xf32>
    %38 = math.exp %37 : vector<8x128xf32>
    %cst_32 = arith.constant 1.000000e+00 : f32
    %39 = vector.broadcast %cst_32 : f32 to vector<8x128xf32>
    %40 = arith.addf %39, %38 : vector<8x128xf32>
    %41 = arith.divf %39, %40 : vector<8x128xf32>
    %42 = arith.select %22, %36, %41 : vector<8x128xi1>, vector<8x128xf32>
    %43 = vector.extract_strided_slice %42 {offsets = [0, 0], sizes = [8, 32], strides = [1, 1]} : vector<8x128xf32> to vector<8x32xf32>
    %44 = vector.extract_strided_slice %42 {offsets = [0, 32], sizes = [8, 32], strides = [1, 1]} : vector<8x128xf32> to vector<8x32xf32>
    %45 = vector.extract_strided_slice %42 {offsets = [0, 64], sizes = [8, 32], strides = [1, 1]} : vector<8x128xf32> to vector<8x32xf32>
    %46 = vector.extract_strided_slice %42 {offsets = [0, 96], sizes = [8, 32], strides = [1, 1]} : vector<8x128xf32> to vector<8x32xf32>
    %47 = arith.mulf %44, %28 : vector<8x32xf32>
    %48 = arith.mulf %43, %45 : vector<8x32xf32>
    %49 = arith.addf %47, %48 : vector<8x32xf32>
    %50 = math.tanh %49 : vector<8x32xf32>
    %51 = arith.mulf %46, %50 : vector<8x32xf32>
    %cst_33 = arith.constant dense<0.000000e+00> : vector<8x128xf32>
    %52 = tpu.matmul %51, %1, %cst_33 {dimension_numbers = #tpu.dot_dimension_numbers<[1], [0], [0], [1], [0, 0, 1, 1], [], []>, precision = #tpu.contract_precision<fp32>} : vector<8x32xf32>, vector<32x128xf32>, vector<8x128xf32> -> vector<8x128xf32>
    %cst_34 = arith.constant dense<0.000000e+00> : vector<8x128xf32>
    %53 = tpu.matmul %26, %2, %cst_34 {dimension_numbers = #tpu.dot_dimension_numbers<[1], [0], [0], [1], [0, 0, 1, 1], [], []>, precision = #tpu.contract_precision<fp32>} : vector<8x32xf32>, vector<32x128xf32>, vector<8x128xf32> -> vector<8x128xf32>
    %54 = arith.addf %52, %53 : vector<8x128xf32>
    %55 = arith.addf %54, %5 : vector<8x128xf32>
    %56 = math.tanh %55 : vector<8x128xf32>
    %57 = arith.negf %55 : vector<8x128xf32>
    %58 = math.exp %57 : vector<8x128xf32>
    %cst_35 = arith.constant 1.000000e+00 : f32
    %59 = vector.broadcast %cst_35 : f32 to vector<8x128xf32>
    %60 = arith.addf %59, %58 : vector<8x128xf32>
    %61 = arith.divf %59, %60 : vector<8x128xf32>
    %62 = arith.select %22, %56, %61 : vector<8x128xi1>, vector<8x128xf32>
    %63 = vector.extract_strided_slice %62 {offsets = [0, 0], sizes = [8, 32], strides = [1, 1]} : vector<8x128xf32> to vector<8x32xf32>
    %64 = vector.extract_strided_slice %62 {offsets = [0, 32], sizes = [8, 32], strides = [1, 1]} : vector<8x128xf32> to vector<8x32xf32>
    %65 = vector.extract_strided_slice %62 {offsets = [0, 64], sizes = [8, 32], strides = [1, 1]} : vector<8x128xf32> to vector<8x32xf32>
    %66 = vector.extract_strided_slice %62 {offsets = [0, 96], sizes = [8, 32], strides = [1, 1]} : vector<8x128xf32> to vector<8x32xf32>
    %67 = arith.mulf %64, %30 : vector<8x32xf32>
    %68 = arith.mulf %63, %65 : vector<8x32xf32>
    %69 = arith.addf %67, %68 : vector<8x32xf32>
    %70 = math.tanh %69 : vector<8x32xf32>
    %71 = arith.mulf %66, %70 : vector<8x32xf32>
    %72 = arith.index_cast %c0_i32 : i32 to index
    %c0_36 = arith.constant 0 : index
    %c0_37 = arith.constant 0 : index
    %73 = vector.load %arg12[%72, %c0_36, %c0_37] : memref<8x8x32xf32, #tpu.memory_space<vmem>>, vector<1x8x32xf32>
    %74 = vector.shape_cast %73 : vector<1x8x32xf32> to vector<8x32xf32>
    %75 = vector.shape_cast %71 : vector<8x32xf32> to vector<1x8x32xf32>
    tpu.vector_store %arg12[%72, %c0_36, %c0_37], %75 {strides = array<i32>} : memref<8x8x32xf32, #tpu.memory_space<vmem>>, vector<1x8x32xf32>,
    %c1_i32 = arith.constant 1 : i32
    %76 = arith.index_cast %c1_i32 : i32 to index
    %c0_38 = arith.constant 0 : index
    %c0_39 = arith.constant 0 : index
    %77 = vector.load %arg16[%76, %c0_38, %c0_39] : memref<8x8x128xf32, #tpu.memory_space<vmem>>, vector<1x8x128xf32>
    %78 = vector.shape_cast %77 : vector<1x8x128xf32> to vector<8x128xf32>
    %cst_40 = arith.constant dense<0.000000e+00> : vector<8x128xf32>
    %79 = tpu.matmul %51, %0, %cst_40 {dimension_numbers = #tpu.dot_dimension_numbers<[1], [0], [0], [1], [0, 0, 1, 1], [], []>, precision = #tpu.contract_precision<fp32>} : vector<8x32xf32>, vector<32x128xf32>, vector<8x128xf32> -> vector<8x128xf32>
    %80 = arith.addf %78, %79 : vector<8x128xf32>
    %81 = math.tanh %80 : vector<8x128xf32>
    %82 = arith.negf %80 : vector<8x128xf32>
    %83 = math.exp %82 : vector<8x128xf32>
    %cst_41 = arith.constant 1.000000e+00 : f32
    %84 = vector.broadcast %cst_41 : f32 to vector<8x128xf32>
    %85 = arith.addf %84, %83 : vector<8x128xf32>
    %86 = arith.divf %84, %85 : vector<8x128xf32>
    %87 = arith.select %22, %81, %86 : vector<8x128xi1>, vector<8x128xf32>
    %88 = vector.extract_strided_slice %87 {offsets = [0, 0], sizes = [8, 32], strides = [1, 1]} : vector<8x128xf32> to vector<8x32xf32>
    %89 = vector.extract_strided_slice %87 {offsets = [0, 32], sizes = [8, 32], strides = [1, 1]} : vector<8x128xf32> to vector<8x32xf32>
    %90 = vector.extract_strided_slice %87 {offsets = [0, 64], sizes = [8, 32], strides = [1, 1]} : vector<8x128xf32> to vector<8x32xf32>
    %91 = vector.extract_strided_slice %87 {offsets = [0, 96], sizes = [8, 32], strides = [1, 1]} : vector<8x128xf32> to vector<8x32xf32>
    %92 = arith.mulf %89, %49 : vector<8x32xf32>
    %93 = arith.mulf %88, %90 : vector<8x32xf32>
    %94 = arith.addf %92, %93 : vector<8x32xf32>
    %95 = math.tanh %94 : vector<8x32xf32>
    %96 = arith.mulf %91, %95 : vector<8x32xf32>
    %cst_42 = arith.constant dense<0.000000e+00> : vector<8x128xf32>
    %97 = tpu.matmul %96, %1, %cst_42 {dimension_numbers = #tpu.dot_dimension_numbers<[1], [0], [0], [1], [0, 0, 1, 1], [], []>, precision = #tpu.contract_precision<fp32>} : vector<8x32xf32>, vector<32x128xf32>, vector<8x128xf32> -> vector<8x128xf32>
    %cst_43 = arith.constant dense<0.000000e+00> : vector<8x128xf32>
    %98 = tpu.matmul %71, %2, %cst_43 {dimension_numbers = #tpu.dot_dimension_numbers<[1], [0], [0], [1], [0, 0, 1, 1], [], []>, precision = #tpu.contract_precision<fp32>} : vector<8x32xf32>, vector<32x128xf32>, vector<8x128xf32> -> vector<8x128xf32>
    %99 = arith.addf %97, %98 : vector<8x128xf32>
    %100 = arith.addf %99, %5 : vector<8x128xf32>
    %101 = math.tanh %100 : vector<8x128xf32>
    %102 = arith.negf %100 : vector<8x128xf32>
    %103 = math.exp %102 : vector<8x128xf32>
    %cst_44 = arith.constant 1.000000e+00 : f32
    %104 = vector.broadcast %cst_44 : f32 to vector<8x128xf32>
    %105 = arith.addf %104, %103 : vector<8x128xf32>
    %106 = arith.divf %104, %105 : vector<8x128xf32>
    %107 = arith.select %22, %101, %106 : vector<8x128xi1>, vector<8x128xf32>
    %108 = vector.extract_strided_slice %107 {offsets = [0, 0], sizes = [8, 32], strides = [1, 1]} : vector<8x128xf32> to vector<8x32xf32>
    %109 = vector.extract_strided_slice %107 {offsets = [0, 32], sizes = [8, 32], strides = [1, 1]} : vector<8x128xf32> to vector<8x32xf32>
    %110 = vector.extract_strided_slice %107 {offsets = [0, 64], sizes = [8, 32], strides = [1, 1]} : vector<8x128xf32> to vector<8x32xf32>
    %111 = vector.extract_strided_slice %107 {offsets = [0, 96], sizes = [8, 32], strides = [1, 1]} : vector<8x128xf32> to vector<8x32xf32>
    %112 = arith.mulf %109, %69 : vector<8x32xf32>
    %113 = arith.mulf %108, %110 : vector<8x32xf32>
    %114 = arith.addf %112, %113 : vector<8x32xf32>
    %115 = math.tanh %114 : vector<8x32xf32>
    %116 = arith.mulf %111, %115 : vector<8x32xf32>
    %117 = arith.index_cast %c1_i32 : i32 to index
    %c0_45 = arith.constant 0 : index
    %c0_46 = arith.constant 0 : index
    %118 = vector.load %arg12[%117, %c0_45, %c0_46] : memref<8x8x32xf32, #tpu.memory_space<vmem>>, vector<1x8x32xf32>
    %119 = vector.shape_cast %118 : vector<1x8x32xf32> to vector<8x32xf32>
    %120 = vector.shape_cast %116 : vector<8x32xf32> to vector<1x8x32xf32>
    tpu.vector_store %arg12[%117, %c0_45, %c0_46], %120 {strides = array<i32>} : memref<8x8x32xf32, #tpu.memory_space<vmem>>, vector<1x8x32xf32>,
    %c2_i32 = arith.constant 2 : i32
    %121 = arith.index_cast %c2_i32 : i32 to index
    %c0_47 = arith.constant 0 : index
    %c0_48 = arith.constant 0 : index
    %122 = vector.load %arg16[%121, %c0_47, %c0_48] : memref<8x8x128xf32, #tpu.memory_space<vmem>>, vector<1x8x128xf32>
    %123 = vector.shape_cast %122 : vector<1x8x128xf32> to vector<8x128xf32>
    %cst_49 = arith.constant dense<0.000000e+00> : vector<8x128xf32>
    %124 = tpu.matmul %96, %0, %cst_49 {dimension_numbers = #tpu.dot_dimension_numbers<[1], [0], [0], [1], [0, 0, 1, 1], [], []>, precision = #tpu.contract_precision<fp32>} : vector<8x32xf32>, vector<32x128xf32>, vector<8x128xf32> -> vector<8x128xf32>
    %125 = arith.addf %123, %124 : vector<8x128xf32>
    %126 = math.tanh %125 : vector<8x128xf32>
    %127 = arith.negf %125 : vector<8x128xf32>
    %128 = math.exp %127 : vector<8x128xf32>
    %cst_50 = arith.constant 1.000000e+00 : f32
    %129 = vector.broadcast %cst_50 : f32 to vector<8x128xf32>
    %130 = arith.addf %129, %128 : vector<8x128xf32>
    %131 = arith.divf %129, %130 : vector<8x128xf32>
    %132 = arith.select %22, %126, %131 : vector<8x128xi1>, vector<8x128xf32>
    %133 = vector.extract_strided_slice %132 {offsets = [0, 0], sizes = [8, 32], strides = [1, 1]} : vector<8x128xf32> to vector<8x32xf32>
    %134 = vector.extract_strided_slice %132 {offsets = [0, 32], sizes = [8, 32], strides = [1, 1]} : vector<8x128xf32> to vector<8x32xf32>
    %135 = vector.extract_strided_slice %132 {offsets = [0, 64], sizes = [8, 32], strides = [1, 1]} : vector<8x128xf32> to vector<8x32xf32>
    %136 = vector.extract_strided_slice %132 {offsets = [0, 96], sizes = [8, 32], strides = [1, 1]} : vector<8x128xf32> to vector<8x32xf32>
    %137 = arith.mulf %134, %94 : vector<8x32xf32>
    %138 = arith.mulf %133, %135 : vector<8x32xf32>
    %139 = arith.addf %137, %138 : vector<8x32xf32>
    %140 = math.tanh %139 : vector<8x32xf32>
    %141 = arith.mulf %136, %140 : vector<8x32xf32>
    %cst_51 = arith.constant dense<0.000000e+00> : vector<8x128xf32>
    %142 = tpu.matmul %141, %1, %cst_51 {dimension_numbers = #tpu.dot_dimension_numbers<[1], [0], [0], [1], [0, 0, 1, 1], [], []>, precision = #tpu.contract_precision<fp32>} : vector<8x32xf32>, vector<32x128xf32>, vector<8x128xf32> -> vector<8x128xf32>
    %cst_52 = arith.constant dense<0.000000e+00> : vector<8x128xf32>
    %143 = tpu.matmul %116, %2, %cst_52 {dimension_numbers = #tpu.dot_dimension_numbers<[1], [0], [0], [1], [0, 0, 1, 1], [], []>, precision = #tpu.contract_precision<fp32>} : vector<8x32xf32>, vector<32x128xf32>, vector<8x128xf32> -> vector<8x128xf32>
    %144 = arith.addf %142, %143 : vector<8x128xf32>
    %145 = arith.addf %144, %5 : vector<8x128xf32>
    %146 = math.tanh %145 : vector<8x128xf32>
    %147 = arith.negf %145 : vector<8x128xf32>
    %148 = math.exp %147 : vector<8x128xf32>
    %cst_53 = arith.constant 1.000000e+00 : f32
    %149 = vector.broadcast %cst_53 : f32 to vector<8x128xf32>
    %150 = arith.addf %149, %148 : vector<8x128xf32>
    %151 = arith.divf %149, %150 : vector<8x128xf32>
    %152 = arith.select %22, %146, %151 : vector<8x128xi1>, vector<8x128xf32>
    %153 = vector.extract_strided_slice %152 {offsets = [0, 0], sizes = [8, 32], strides = [1, 1]} : vector<8x128xf32> to vector<8x32xf32>
    %154 = vector.extract_strided_slice %152 {offsets = [0, 32], sizes = [8, 32], strides = [1, 1]} : vector<8x128xf32> to vector<8x32xf32>
    %155 = vector.extract_strided_slice %152 {offsets = [0, 64], sizes = [8, 32], strides = [1, 1]} : vector<8x128xf32> to vector<8x32xf32>
    %156 = vector.extract_strided_slice %152 {offsets = [0, 96], sizes = [8, 32], strides = [1, 1]} : vector<8x128xf32> to vector<8x32xf32>
    %157 = arith.mulf %154, %114 : vector<8x32xf32>
    %158 = arith.mulf %153, %155 : vector<8x32xf32>
    %159 = arith.addf %157, %158 : vector<8x32xf32>
    %160 = math.tanh %159 : vector<8x32xf32>
    %161 = arith.mulf %156, %160 : vector<8x32xf32>
    %162 = arith.index_cast %c2_i32 : i32 to index
    %c0_54 = arith.constant 0 : index
    %c0_55 = arith.constant 0 : index
    %163 = vector.load %arg12[%162, %c0_54, %c0_55] : memref<8x8x32xf32, #tpu.memory_space<vmem>>, vector<1x8x32xf32>
    %164 = vector.shape_cast %163 : vector<1x8x32xf32> to vector<8x32xf32>
    %165 = vector.shape_cast %161 : vector<8x32xf32> to vector<1x8x32xf32>
    tpu.vector_store %arg12[%162, %c0_54, %c0_55], %165 {strides = array<i32>} : memref<8x8x32xf32, #tpu.memory_space<vmem>>, vector<1x8x32xf32>,
    %c3_i32 = arith.constant 3 : i32
    %166 = arith.index_cast %c3_i32 : i32 to index
    %c0_56 = arith.constant 0 : index
    %c0_57 = arith.constant 0 : index
    %167 = vector.load %arg16[%166, %c0_56, %c0_57] : memref<8x8x128xf32, #tpu.memory_space<vmem>>, vector<1x8x128xf32>
    %168 = vector.shape_cast %167 : vector<1x8x128xf32> to vector<8x128xf32>
    %cst_58 = arith.constant dense<0.000000e+00> : vector<8x128xf32>
    %169 = tpu.matmul %141, %0, %cst_58 {dimension_numbers = #tpu.dot_dimension_numbers<[1], [0], [0], [1], [0, 0, 1, 1], [], []>, precision = #tpu.contract_precision<fp32>} : vector<8x32xf32>, vector<32x128xf32>, vector<8x128xf32> -> vector<8x128xf32>
    %170 = arith.addf %168, %169 : vector<8x128xf32>
    %171 = math.tanh %170 : vector<8x128xf32>
    %172 = arith.negf %170 : vector<8x128xf32>
    %173 = math.exp %172 : vector<8x128xf32>
    %cst_59 = arith.constant 1.000000e+00 : f32
    %174 = vector.broadcast %cst_59 : f32 to vector<8x128xf32>
    %175 = arith.addf %174, %173 : vector<8x128xf32>
    %176 = arith.divf %174, %175 : vector<8x128xf32>
    %177 = arith.select %22, %171, %176 : vector<8x128xi1>, vector<8x128xf32>
    %178 = vector.extract_strided_slice %177 {offsets = [0, 0], sizes = [8, 32], strides = [1, 1]} : vector<8x128xf32> to vector<8x32xf32>
    %179 = vector.extract_strided_slice %177 {offsets = [0, 32], sizes = [8, 32], strides = [1, 1]} : vector<8x128xf32> to vector<8x32xf32>
    %180 = vector.extract_strided_slice %177 {offsets = [0, 64], sizes = [8, 32], strides = [1, 1]} : vector<8x128xf32> to vector<8x32xf32>
    %181 = vector.extract_strided_slice %177 {offsets = [0, 96], sizes = [8, 32], strides = [1, 1]} : vector<8x128xf32> to vector<8x32xf32>
    %182 = arith.mulf %179, %139 : vector<8x32xf32>
    %183 = arith.mulf %178, %180 : vector<8x32xf32>
    %184 = arith.addf %182, %183 : vector<8x32xf32>
    %185 = math.tanh %184 : vector<8x32xf32>
    %186 = arith.mulf %181, %185 : vector<8x32xf32>
    %cst_60 = arith.constant dense<0.000000e+00> : vector<8x128xf32>
    %187 = tpu.matmul %186, %1, %cst_60 {dimension_numbers = #tpu.dot_dimension_numbers<[1], [0], [0], [1], [0, 0, 1, 1], [], []>, precision = #tpu.contract_precision<fp32>} : vector<8x32xf32>, vector<32x128xf32>, vector<8x128xf32> -> vector<8x128xf32>
    %cst_61 = arith.constant dense<0.000000e+00> : vector<8x128xf32>
    %188 = tpu.matmul %161, %2, %cst_61 {dimension_numbers = #tpu.dot_dimension_numbers<[1], [0], [0], [1], [0, 0, 1, 1], [], []>, precision = #tpu.contract_precision<fp32>} : vector<8x32xf32>, vector<32x128xf32>, vector<8x128xf32> -> vector<8x128xf32>
    %189 = arith.addf %187, %188 : vector<8x128xf32>
    %190 = arith.addf %189, %5 : vector<8x128xf32>
    %191 = math.tanh %190 : vector<8x128xf32>
    %192 = arith.negf %190 : vector<8x128xf32>
    %193 = math.exp %192 : vector<8x128xf32>
    %cst_62 = arith.constant 1.000000e+00 : f32
    %194 = vector.broadcast %cst_62 : f32 to vector<8x128xf32>
    %195 = arith.addf %194, %193 : vector<8x128xf32>
    %196 = arith.divf %194, %195 : vector<8x128xf32>
    %197 = arith.select %22, %191, %196 : vector<8x128xi1>, vector<8x128xf32>
    %198 = vector.extract_strided_slice %197 {offsets = [0, 0], sizes = [8, 32], strides = [1, 1]} : vector<8x128xf32> to vector<8x32xf32>
    %199 = vector.extract_strided_slice %197 {offsets = [0, 32], sizes = [8, 32], strides = [1, 1]} : vector<8x128xf32> to vector<8x32xf32>
    %200 = vector.extract_strided_slice %197 {offsets = [0, 64], sizes = [8, 32], strides = [1, 1]} : vector<8x128xf32> to vector<8x32xf32>
    %201 = vector.extract_strided_slice %197 {offsets = [0, 96], sizes = [8, 32], strides = [1, 1]} : vector<8x128xf32> to vector<8x32xf32>
    %202 = arith.mulf %199, %159 : vector<8x32xf32>
    %203 = arith.mulf %198, %200 : vector<8x32xf32>
    %204 = arith.addf %202, %203 : vector<8x32xf32>
    %205 = math.tanh %204 : vector<8x32xf32>
    %206 = arith.mulf %201, %205 : vector<8x32xf32>
    %207 = arith.index_cast %c3_i32 : i32 to index
    %c0_63 = arith.constant 0 : index
    %c0_64 = arith.constant 0 : index
    %208 = vector.load %arg12[%207, %c0_63, %c0_64] : memref<8x8x32xf32, #tpu.memory_space<vmem>>, vector<1x8x32xf32>
    %209 = vector.shape_cast %208 : vector<1x8x32xf32> to vector<8x32xf32>
    %210 = vector.shape_cast %206 : vector<8x32xf32> to vector<1x8x32xf32>
    tpu.vector_store %arg12[%207, %c0_63, %c0_64], %210 {strides = array<i32>} : memref<8x8x32xf32, #tpu.memory_space<vmem>>, vector<1x8x32xf32>,
    %c4_i32 = arith.constant 4 : i32
    %211 = arith.index_cast %c4_i32 : i32 to index
    %c0_65 = arith.constant 0 : index
    %c0_66 = arith.constant 0 : index
    %212 = vector.load %arg16[%211, %c0_65, %c0_66] : memref<8x8x128xf32, #tpu.memory_space<vmem>>, vector<1x8x128xf32>
    %213 = vector.shape_cast %212 : vector<1x8x128xf32> to vector<8x128xf32>
    %cst_67 = arith.constant dense<0.000000e+00> : vector<8x128xf32>
    %214 = tpu.matmul %186, %0, %cst_67 {dimension_numbers = #tpu.dot_dimension_numbers<[1], [0], [0], [1], [0, 0, 1, 1], [], []>, precision = #tpu.contract_precision<fp32>} : vector<8x32xf32>, vector<32x128xf32>, vector<8x128xf32> -> vector<8x128xf32>
    %215 = arith.addf %213, %214 : vector<8x128xf32>
    %216 = math.tanh %215 : vector<8x128xf32>
    %217 = arith.negf %215 : vector<8x128xf32>
    %218 = math.exp %217 : vector<8x128xf32>
    %cst_68 = arith.constant 1.000000e+00 : f32
    %219 = vector.broadcast %cst_68 : f32 to vector<8x128xf32>
    %220 = arith.addf %219, %218 : vector<8x128xf32>
    %221 = arith.divf %219, %220 : vector<8x128xf32>
    %222 = arith.select %22, %216, %221 : vector<8x128xi1>, vector<8x128xf32>
    %223 = vector.extract_strided_slice %222 {offsets = [0, 0], sizes = [8, 32], strides = [1, 1]} : vector<8x128xf32> to vector<8x32xf32>
    %224 = vector.extract_strided_slice %222 {offsets = [0, 32], sizes = [8, 32], strides = [1, 1]} : vector<8x128xf32> to vector<8x32xf32>
    %225 = vector.extract_strided_slice %222 {offsets = [0, 64], sizes = [8, 32], strides = [1, 1]} : vector<8x128xf32> to vector<8x32xf32>
    %226 = vector.extract_strided_slice %222 {offsets = [0, 96], sizes = [8, 32], strides = [1, 1]} : vector<8x128xf32> to vector<8x32xf32>
    %227 = arith.mulf %224, %184 : vector<8x32xf32>
    %228 = arith.mulf %223, %225 : vector<8x32xf32>
    %229 = arith.addf %227, %228 : vector<8x32xf32>
    %230 = math.tanh %229 : vector<8x32xf32>
    %231 = arith.mulf %226, %230 : vector<8x32xf32>
    %cst_69 = arith.constant dense<0.000000e+00> : vector<8x128xf32>
    %232 = tpu.matmul %231, %1, %cst_69 {dimension_numbers = #tpu.dot_dimension_numbers<[1], [0], [0], [1], [0, 0, 1, 1], [], []>, precision = #tpu.contract_precision<fp32>} : vector<8x32xf32>, vector<32x128xf32>, vector<8x128xf32> -> vector<8x128xf32>
    %cst_70 = arith.constant dense<0.000000e+00> : vector<8x128xf32>
    %233 = tpu.matmul %206, %2, %cst_70 {dimension_numbers = #tpu.dot_dimension_numbers<[1], [0], [0], [1], [0, 0, 1, 1], [], []>, precision = #tpu.contract_precision<fp32>} : vector<8x32xf32>, vector<32x128xf32>, vector<8x128xf32> -> vector<8x128xf32>
    %234 = arith.addf %232, %233 : vector<8x128xf32>
    %235 = arith.addf %234, %5 : vector<8x128xf32>
    %236 = math.tanh %235 : vector<8x128xf32>
    %237 = arith.negf %235 : vector<8x128xf32>
    %238 = math.exp %237 : vector<8x128xf32>
    %cst_71 = arith.constant 1.000000e+00 : f32
    %239 = vector.broadcast %cst_71 : f32 to vector<8x128xf32>
    %240 = arith.addf %239, %238 : vector<8x128xf32>
    %241 = arith.divf %239, %240 : vector<8x128xf32>
    %242 = arith.select %22, %236, %241 : vector<8x128xi1>, vector<8x128xf32>
    %243 = vector.extract_strided_slice %242 {offsets = [0, 0], sizes = [8, 32], strides = [1, 1]} : vector<8x128xf32> to vector<8x32xf32>
    %244 = vector.extract_strided_slice %242 {offsets = [0, 32], sizes = [8, 32], strides = [1, 1]} : vector<8x128xf32> to vector<8x32xf32>
    %245 = vector.extract_strided_slice %242 {offsets = [0, 64], sizes = [8, 32], strides = [1, 1]} : vector<8x128xf32> to vector<8x32xf32>
    %246 = vector.extract_strided_slice %242 {offsets = [0, 96], sizes = [8, 32], strides = [1, 1]} : vector<8x128xf32> to vector<8x32xf32>
    %247 = arith.mulf %244, %204 : vector<8x32xf32>
    %248 = arith.mulf %243, %245 : vector<8x32xf32>
    %249 = arith.addf %247, %248 : vector<8x32xf32>
    %250 = math.tanh %249 : vector<8x32xf32>
    %251 = arith.mulf %246, %250 : vector<8x32xf32>
    %252 = arith.index_cast %c4_i32 : i32 to index
    %c0_72 = arith.constant 0 : index
    %c0_73 = arith.constant 0 : index
    %253 = vector.load %arg12[%252, %c0_72, %c0_73] : memref<8x8x32xf32, #tpu.memory_space<vmem>>, vector<1x8x32xf32>
    %254 = vector.shape_cast %253 : vector<1x8x32xf32> to vector<8x32xf32>
    %255 = vector.shape_cast %251 : vector<8x32xf32> to vector<1x8x32xf32>
    tpu.vector_store %arg12[%252, %c0_72, %c0_73], %255 {strides = array<i32>} : memref<8x8x32xf32, #tpu.memory_space<vmem>>, vector<1x8x32xf32>,
    %c5_i32 = arith.constant 5 : i32
    %256 = arith.index_cast %c5_i32 : i32 to index
    %c0_74 = arith.constant 0 : index
    %c0_75 = arith.constant 0 : index
    %257 = vector.load %arg16[%256, %c0_74, %c0_75] : memref<8x8x128xf32, #tpu.memory_space<vmem>>, vector<1x8x128xf32>
    %258 = vector.shape_cast %257 : vector<1x8x128xf32> to vector<8x128xf32>
    %cst_76 = arith.constant dense<0.000000e+00> : vector<8x128xf32>
    %259 = tpu.matmul %231, %0, %cst_76 {dimension_numbers = #tpu.dot_dimension_numbers<[1], [0], [0], [1], [0, 0, 1, 1], [], []>, precision = #tpu.contract_precision<fp32>} : vector<8x32xf32>, vector<32x128xf32>, vector<8x128xf32> -> vector<8x128xf32>
    %260 = arith.addf %258, %259 : vector<8x128xf32>
    %261 = math.tanh %260 : vector<8x128xf32>
    %262 = arith.negf %260 : vector<8x128xf32>
    %263 = math.exp %262 : vector<8x128xf32>
    %cst_77 = arith.constant 1.000000e+00 : f32
    %264 = vector.broadcast %cst_77 : f32 to vector<8x128xf32>
    %265 = arith.addf %264, %263 : vector<8x128xf32>
    %266 = arith.divf %264, %265 : vector<8x128xf32>
    %267 = arith.select %22, %261, %266 : vector<8x128xi1>, vector<8x128xf32>
    %268 = vector.extract_strided_slice %267 {offsets = [0, 0], sizes = [8, 32], strides = [1, 1]} : vector<8x128xf32> to vector<8x32xf32>
    %269 = vector.extract_strided_slice %267 {offsets = [0, 32], sizes = [8, 32], strides = [1, 1]} : vector<8x128xf32> to vector<8x32xf32>
    %270 = vector.extract_strided_slice %267 {offsets = [0, 64], sizes = [8, 32], strides = [1, 1]} : vector<8x128xf32> to vector<8x32xf32>
    %271 = vector.extract_strided_slice %267 {offsets = [0, 96], sizes = [8, 32], strides = [1, 1]} : vector<8x128xf32> to vector<8x32xf32>
    %272 = arith.mulf %269, %229 : vector<8x32xf32>
    %273 = arith.mulf %268, %270 : vector<8x32xf32>
    %274 = arith.addf %272, %273 : vector<8x32xf32>
    %275 = math.tanh %274 : vector<8x32xf32>
    %276 = arith.mulf %271, %275 : vector<8x32xf32>
    %cst_78 = arith.constant dense<0.000000e+00> : vector<8x128xf32>
    %277 = tpu.matmul %276, %1, %cst_78 {dimension_numbers = #tpu.dot_dimension_numbers<[1], [0], [0], [1], [0, 0, 1, 1], [], []>, precision = #tpu.contract_precision<fp32>} : vector<8x32xf32>, vector<32x128xf32>, vector<8x128xf32> -> vector<8x128xf32>
    %cst_79 = arith.constant dense<0.000000e+00> : vector<8x128xf32>
    %278 = tpu.matmul %251, %2, %cst_79 {dimension_numbers = #tpu.dot_dimension_numbers<[1], [0], [0], [1], [0, 0, 1, 1], [], []>, precision = #tpu.contract_precision<fp32>} : vector<8x32xf32>, vector<32x128xf32>, vector<8x128xf32> -> vector<8x128xf32>
    %279 = arith.addf %277, %278 : vector<8x128xf32>
    %280 = arith.addf %279, %5 : vector<8x128xf32>
    %281 = math.tanh %280 : vector<8x128xf32>
    %282 = arith.negf %280 : vector<8x128xf32>
    %283 = math.exp %282 : vector<8x128xf32>
    %cst_80 = arith.constant 1.000000e+00 : f32
    %284 = vector.broadcast %cst_80 : f32 to vector<8x128xf32>
    %285 = arith.addf %284, %283 : vector<8x128xf32>
    %286 = arith.divf %284, %285 : vector<8x128xf32>
    %287 = arith.select %22, %281, %286 : vector<8x128xi1>, vector<8x128xf32>
    %288 = vector.extract_strided_slice %287 {offsets = [0, 0], sizes = [8, 32], strides = [1, 1]} : vector<8x128xf32> to vector<8x32xf32>
    %289 = vector.extract_strided_slice %287 {offsets = [0, 32], sizes = [8, 32], strides = [1, 1]} : vector<8x128xf32> to vector<8x32xf32>
    %290 = vector.extract_strided_slice %287 {offsets = [0, 64], sizes = [8, 32], strides = [1, 1]} : vector<8x128xf32> to vector<8x32xf32>
    %291 = vector.extract_strided_slice %287 {offsets = [0, 96], sizes = [8, 32], strides = [1, 1]} : vector<8x128xf32> to vector<8x32xf32>
    %292 = arith.mulf %289, %249 : vector<8x32xf32>
    %293 = arith.mulf %288, %290 : vector<8x32xf32>
    %294 = arith.addf %292, %293 : vector<8x32xf32>
    %295 = math.tanh %294 : vector<8x32xf32>
    %296 = arith.mulf %291, %295 : vector<8x32xf32>
    %297 = arith.index_cast %c5_i32 : i32 to index
    %c0_81 = arith.constant 0 : index
    %c0_82 = arith.constant 0 : index
    %298 = vector.load %arg12[%297, %c0_81, %c0_82] : memref<8x8x32xf32, #tpu.memory_space<vmem>>, vector<1x8x32xf32>
    %299 = vector.shape_cast %298 : vector<1x8x32xf32> to vector<8x32xf32>
    %300 = vector.shape_cast %296 : vector<8x32xf32> to vector<1x8x32xf32>
    tpu.vector_store %arg12[%297, %c0_81, %c0_82], %300 {strides = array<i32>} : memref<8x8x32xf32, #tpu.memory_space<vmem>>, vector<1x8x32xf32>,
    %c6_i32 = arith.constant 6 : i32
    %301 = arith.index_cast %c6_i32 : i32 to index
    %c0_83 = arith.constant 0 : index
    %c0_84 = arith.constant 0 : index
    %302 = vector.load %arg16[%301, %c0_83, %c0_84] : memref<8x8x128xf32, #tpu.memory_space<vmem>>, vector<1x8x128xf32>
    %303 = vector.shape_cast %302 : vector<1x8x128xf32> to vector<8x128xf32>
    %cst_85 = arith.constant dense<0.000000e+00> : vector<8x128xf32>
    %304 = tpu.matmul %276, %0, %cst_85 {dimension_numbers = #tpu.dot_dimension_numbers<[1], [0], [0], [1], [0, 0, 1, 1], [], []>, precision = #tpu.contract_precision<fp32>} : vector<8x32xf32>, vector<32x128xf32>, vector<8x128xf32> -> vector<8x128xf32>
    %305 = arith.addf %303, %304 : vector<8x128xf32>
    %306 = math.tanh %305 : vector<8x128xf32>
    %307 = arith.negf %305 : vector<8x128xf32>
    %308 = math.exp %307 : vector<8x128xf32>
    %cst_86 = arith.constant 1.000000e+00 : f32
    %309 = vector.broadcast %cst_86 : f32 to vector<8x128xf32>
    %310 = arith.addf %309, %308 : vector<8x128xf32>
    %311 = arith.divf %309, %310 : vector<8x128xf32>
    %312 = arith.select %22, %306, %311 : vector<8x128xi1>, vector<8x128xf32>
    %313 = vector.extract_strided_slice %312 {offsets = [0, 0], sizes = [8, 32], strides = [1, 1]} : vector<8x128xf32> to vector<8x32xf32>
    %314 = vector.extract_strided_slice %312 {offsets = [0, 32], sizes = [8, 32], strides = [1, 1]} : vector<8x128xf32> to vector<8x32xf32>
    %315 = vector.extract_strided_slice %312 {offsets = [0, 64], sizes = [8, 32], strides = [1, 1]} : vector<8x128xf32> to vector<8x32xf32>
    %316 = vector.extract_strided_slice %312 {offsets = [0, 96], sizes = [8, 32], strides = [1, 1]} : vector<8x128xf32> to vector<8x32xf32>
    %317 = arith.mulf %314, %274 : vector<8x32xf32>
    %318 = arith.mulf %313, %315 : vector<8x32xf32>
    %319 = arith.addf %317, %318 : vector<8x32xf32>
    %320 = math.tanh %319 : vector<8x32xf32>
    %321 = arith.mulf %316, %320 : vector<8x32xf32>
    %cst_87 = arith.constant dense<0.000000e+00> : vector<8x128xf32>
    %322 = tpu.matmul %321, %1, %cst_87 {dimension_numbers = #tpu.dot_dimension_numbers<[1], [0], [0], [1], [0, 0, 1, 1], [], []>, precision = #tpu.contract_precision<fp32>} : vector<8x32xf32>, vector<32x128xf32>, vector<8x128xf32> -> vector<8x128xf32>
    %cst_88 = arith.constant dense<0.000000e+00> : vector<8x128xf32>
    %323 = tpu.matmul %296, %2, %cst_88 {dimension_numbers = #tpu.dot_dimension_numbers<[1], [0], [0], [1], [0, 0, 1, 1], [], []>, precision = #tpu.contract_precision<fp32>} : vector<8x32xf32>, vector<32x128xf32>, vector<8x128xf32> -> vector<8x128xf32>
    %324 = arith.addf %322, %323 : vector<8x128xf32>
    %325 = arith.addf %324, %5 : vector<8x128xf32>
    %326 = math.tanh %325 : vector<8x128xf32>
    %327 = arith.negf %325 : vector<8x128xf32>
    %328 = math.exp %327 : vector<8x128xf32>
    %cst_89 = arith.constant 1.000000e+00 : f32
    %329 = vector.broadcast %cst_89 : f32 to vector<8x128xf32>
    %330 = arith.addf %329, %328 : vector<8x128xf32>
    %331 = arith.divf %329, %330 : vector<8x128xf32>
    %332 = arith.select %22, %326, %331 : vector<8x128xi1>, vector<8x128xf32>
    %333 = vector.extract_strided_slice %332 {offsets = [0, 0], sizes = [8, 32], strides = [1, 1]} : vector<8x128xf32> to vector<8x32xf32>
    %334 = vector.extract_strided_slice %332 {offsets = [0, 32], sizes = [8, 32], strides = [1, 1]} : vector<8x128xf32> to vector<8x32xf32>
    %335 = vector.extract_strided_slice %332 {offsets = [0, 64], sizes = [8, 32], strides = [1, 1]} : vector<8x128xf32> to vector<8x32xf32>
    %336 = vector.extract_strided_slice %332 {offsets = [0, 96], sizes = [8, 32], strides = [1, 1]} : vector<8x128xf32> to vector<8x32xf32>
    %337 = arith.mulf %334, %294 : vector<8x32xf32>
    %338 = arith.mulf %333, %335 : vector<8x32xf32>
    %339 = arith.addf %337, %338 : vector<8x32xf32>
    %340 = math.tanh %339 : vector<8x32xf32>
    %341 = arith.mulf %336, %340 : vector<8x32xf32>
    %342 = arith.index_cast %c6_i32 : i32 to index
    %c0_90 = arith.constant 0 : index
    %c0_91 = arith.constant 0 : index
    %343 = vector.load %arg12[%342, %c0_90, %c0_91] : memref<8x8x32xf32, #tpu.memory_space<vmem>>, vector<1x8x32xf32>
    %344 = vector.shape_cast %343 : vector<1x8x32xf32> to vector<8x32xf32>
    %345 = vector.shape_cast %341 : vector<8x32xf32> to vector<1x8x32xf32>
    tpu.vector_store %arg12[%342, %c0_90, %c0_91], %345 {strides = array<i32>} : memref<8x8x32xf32, #tpu.memory_space<vmem>>, vector<1x8x32xf32>,
    %c7_i32 = arith.constant 7 : i32
    %346 = arith.index_cast %c7_i32 : i32 to index
    %c0_92 = arith.constant 0 : index
    %c0_93 = arith.constant 0 : index
    %347 = vector.load %arg16[%346, %c0_92, %c0_93] : memref<8x8x128xf32, #tpu.memory_space<vmem>>, vector<1x8x128xf32>
    %348 = vector.shape_cast %347 : vector<1x8x128xf32> to vector<8x128xf32>
    %cst_94 = arith.constant dense<0.000000e+00> : vector<8x128xf32>
    %349 = tpu.matmul %321, %0, %cst_94 {dimension_numbers = #tpu.dot_dimension_numbers<[1], [0], [0], [1], [0, 0, 1, 1], [], []>, precision = #tpu.contract_precision<fp32>} : vector<8x32xf32>, vector<32x128xf32>, vector<8x128xf32> -> vector<8x128xf32>
    %350 = arith.addf %348, %349 : vector<8x128xf32>
    %351 = math.tanh %350 : vector<8x128xf32>
    %352 = arith.negf %350 : vector<8x128xf32>
    %353 = math.exp %352 : vector<8x128xf32>
    %cst_95 = arith.constant 1.000000e+00 : f32
    %354 = vector.broadcast %cst_95 : f32 to vector<8x128xf32>
    %355 = arith.addf %354, %353 : vector<8x128xf32>
    %356 = arith.divf %354, %355 : vector<8x128xf32>
    %357 = arith.select %22, %351, %356 : vector<8x128xi1>, vector<8x128xf32>
    %358 = vector.extract_strided_slice %357 {offsets = [0, 0], sizes = [8, 32], strides = [1, 1]} : vector<8x128xf32> to vector<8x32xf32>
    %359 = vector.extract_strided_slice %357 {offsets = [0, 32], sizes = [8, 32], strides = [1, 1]} : vector<8x128xf32> to vector<8x32xf32>
    %360 = vector.extract_strided_slice %357 {offsets = [0, 64], sizes = [8, 32], strides = [1, 1]} : vector<8x128xf32> to vector<8x32xf32>
    %361 = vector.extract_strided_slice %357 {offsets = [0, 96], sizes = [8, 32], strides = [1, 1]} : vector<8x128xf32> to vector<8x32xf32>
    %362 = arith.mulf %359, %319 : vector<8x32xf32>
    %363 = arith.mulf %358, %360 : vector<8x32xf32>
    %364 = arith.addf %362, %363 : vector<8x32xf32>
    %365 = math.tanh %364 : vector<8x32xf32>
    %366 = arith.mulf %361, %365 : vector<8x32xf32>
    %cst_96 = arith.constant dense<0.000000e+00> : vector<8x128xf32>
    %367 = tpu.matmul %366, %1, %cst_96 {dimension_numbers = #tpu.dot_dimension_numbers<[1], [0], [0], [1], [0, 0, 1, 1], [], []>, precision = #tpu.contract_precision<fp32>} : vector<8x32xf32>, vector<32x128xf32>, vector<8x128xf32> -> vector<8x128xf32>
    %cst_97 = arith.constant dense<0.000000e+00> : vector<8x128xf32>
    %368 = tpu.matmul %341, %2, %cst_97 {dimension_numbers = #tpu.dot_dimension_numbers<[1], [0], [0], [1], [0, 0, 1, 1], [], []>, precision = #tpu.contract_precision<fp32>} : vector<8x32xf32>, vector<32x128xf32>, vector<8x128xf32> -> vector<8x128xf32>
    %369 = arith.addf %367, %368 : vector<8x128xf32>
    %370 = arith.addf %369, %5 : vector<8x128xf32>
    %371 = math.tanh %370 : vector<8x128xf32>
    %372 = arith.negf %370 : vector<8x128xf32>
    %373 = math.exp %372 : vector<8x128xf32>
    %cst_98 = arith.constant 1.000000e+00 : f32
    %374 = vector.broadcast %cst_98 : f32 to vector<8x128xf32>
    %375 = arith.addf %374, %373 : vector<8x128xf32>
    %376 = arith.divf %374, %375 : vector<8x128xf32>
    %377 = arith.select %22, %371, %376 : vector<8x128xi1>, vector<8x128xf32>
    %378 = vector.extract_strided_slice %377 {offsets = [0, 0], sizes = [8, 32], strides = [1, 1]} : vector<8x128xf32> to vector<8x32xf32>
    %379 = vector.extract_strided_slice %377 {offsets = [0, 32], sizes = [8, 32], strides = [1, 1]} : vector<8x128xf32> to vector<8x32xf32>
    %380 = vector.extract_strided_slice %377 {offsets = [0, 64], sizes = [8, 32], strides = [1, 1]} : vector<8x128xf32> to vector<8x32xf32>
    %381 = vector.extract_strided_slice %377 {offsets = [0, 96], sizes = [8, 32], strides = [1, 1]} : vector<8x128xf32> to vector<8x32xf32>
    %382 = arith.mulf %379, %339 : vector<8x32xf32>
    %383 = arith.mulf %378, %380 : vector<8x32xf32>
    %384 = arith.addf %382, %383 : vector<8x32xf32>
    %385 = math.tanh %384 : vector<8x32xf32>
    %386 = arith.mulf %381, %385 : vector<8x32xf32>
    %387 = arith.index_cast %c7_i32 : i32 to index
    %c0_99 = arith.constant 0 : index
    %c0_100 = arith.constant 0 : index
    %388 = vector.load %arg12[%387, %c0_99, %c0_100] : memref<8x8x32xf32, #tpu.memory_space<vmem>>, vector<1x8x32xf32>
    %389 = vector.shape_cast %388 : vector<1x8x32xf32> to vector<8x32xf32>
    %390 = vector.shape_cast %386 : vector<8x32xf32> to vector<1x8x32xf32>
    tpu.vector_store %arg12[%387, %c0_99, %c0_100], %390 {strides = array<i32>} : memref<8x8x32xf32, #tpu.memory_space<vmem>>, vector<1x8x32xf32>,
    %c8_i32 = arith.constant 8 : i32
    %c0_101 = arith.constant 0 : index
    %c0_102 = arith.constant 0 : index
    %c0_103 = arith.constant 0 : index
    %391 = vector.load %arg14[%c0_101, %c0_102, %c0_103] : memref<2x8x32xf32, #tpu.memory_space<vmem>>, vector<1x8x32xf32>
    %392 = vector.shape_cast %391 : vector<1x8x32xf32> to vector<8x32xf32>
    %393 = vector.shape_cast %366 : vector<8x32xf32> to vector<1x8x32xf32>
    tpu.vector_store %arg14[%c0_101, %c0_102, %c0_103], %393 {strides = array<i32>} : memref<2x8x32xf32, #tpu.memory_space<vmem>>, vector<1x8x32xf32>,
    %c1_104 = arith.constant 1 : index
    %c0_105 = arith.constant 0 : index
    %c0_106 = arith.constant 0 : index
    %394 = vector.load %arg14[%c1_104, %c0_105, %c0_106] : memref<2x8x32xf32, #tpu.memory_space<vmem>>, vector<1x8x32xf32>
    %395 = vector.shape_cast %394 : vector<1x8x32xf32> to vector<8x32xf32>
    %396 = vector.shape_cast %386 : vector<8x32xf32> to vector<1x8x32xf32>
    tpu.vector_store %arg14[%c1_104, %c0_105, %c0_106], %396 {strides = array<i32>} : memref<2x8x32xf32, #tpu.memory_space<vmem>>, vector<1x8x32xf32>,
    %c0_107 = arith.constant 0 : index
    %c0_108 = arith.constant 0 : index
    %c0_109 = arith.constant 0 : index
    %397 = vector.load %arg15[%c0_107, %c0_108, %c0_109] : memref<2x8x32xf32, #tpu.memory_space<vmem>>, vector<1x8x32xf32>
    %398 = vector.shape_cast %397 : vector<1x8x32xf32> to vector<8x32xf32>
    %399 = vector.shape_cast %364 : vector<8x32xf32> to vector<1x8x32xf32>
    tpu.vector_store %arg15[%c0_107, %c0_108, %c0_109], %399 {strides = array<i32>} : memref<2x8x32xf32, #tpu.memory_space<vmem>>, vector<1x8x32xf32>,
    %c1_110 = arith.constant 1 : index
    %c0_111 = arith.constant 0 : index
    %c0_112 = arith.constant 0 : index
    %400 = vector.load %arg15[%c1_110, %c0_111, %c0_112] : memref<2x8x32xf32, #tpu.memory_space<vmem>>, vector<1x8x32xf32>
    %401 = vector.shape_cast %400 : vector<1x8x32xf32> to vector<8x32xf32>
    %402 = vector.shape_cast %384 : vector<8x32xf32> to vector<1x8x32xf32>
    tpu.vector_store %arg15[%c1_110, %c0_111, %c0_112], %402 {strides = array<i32>} : memref<2x8x32xf32, #tpu.memory_space<vmem>>, vector<1x8x32xf32>,
    %c0_113 = arith.constant 0 : index
    %c0_114 = arith.constant 0 : index
    %c0_115 = arith.constant 0 : index
    %403 = vector.load %arg12[%c0_113, %c0_114, %c0_115] : memref<8x8x32xf32, #tpu.memory_space<vmem>>, vector<8x8x32xf32>
    %404 = vector.shape_cast %403 : vector<8x8x32xf32> to vector<64x32xf32>
    %c0_116 = arith.constant 0 : index
    %c0_117 = arith.constant 0 : index
    %405 = vector.load %arg10[%c0_116, %c0_117] : memref<32x128xf32, #tpu.memory_space<vmem>>, vector<32x128xf32>
    %cst_118 = arith.constant dense<0.000000e+00> : vector<64x128xf32>
    %406 = tpu.matmul %404, %405, %cst_118 {dimension_numbers = #tpu.dot_dimension_numbers<[1], [0], [0], [1], [0, 0, 1, 1], [], []>, precision = #tpu.contract_precision<fp32>} : vector<64x32xf32>, vector<32x128xf32>, vector<64x128xf32> -> vector<64x128xf32>
    %c0_119 = arith.constant 0 : index
    %c0_120 = arith.constant 0 : index
    %407 = vector.load %arg11[%c0_119, %c0_120] : memref<1x128xf32, #tpu.memory_space<vmem>>, vector<1x128xf32>
    %408 = vector.broadcast %407 : vector<1x128xf32> to vector<64x128xf32>
    %409 = arith.addf %406, %408 : vector<64x128xf32>
    %410 = vector.shape_cast %409 : vector<64x128xf32> to vector<8x8x128xf32>
    %cst_121 = arith.constant dense<0xFF800000> : vector<8x128xf32>
    %411 = vector.multi_reduction <maximumf>, %410, %cst_121 [0] : vector<8x8x128xf32> to vector<8x128xf32>
    %412 = vector.shape_cast %411 : vector<8x128xf32> to vector<1x8x128xf32>
    %413 = vector.broadcast %412 : vector<1x8x128xf32> to vector<8x8x128xf32>
    %414 = arith.subf %410, %413 : vector<8x8x128xf32>
    %415 = math.exp %414 : vector<8x8x128xf32>
    %cst_122 = arith.constant dense<0.000000e+00> : vector<8x128xf32>
    %416 = vector.multi_reduction <add>, %415, %cst_122 [0] : vector<8x8x128xf32> to vector<8x128xf32>
    %417 = vector.shape_cast %416 : vector<8x128xf32> to vector<1x8x128xf32>
    %418 = math.log %417 : vector<1x8x128xf32>
    %419 = arith.addf %418, %412 : vector<1x8x128xf32>
    %420 = vector.broadcast %419 : vector<1x8x128xf32> to vector<8x8x128xf32>
    %421 = arith.subf %410, %420 : vector<8x8x128xf32>
    %c0_123 = arith.constant 0 : index
    %c0_124 = arith.constant 0 : index
    %c0_125 = arith.constant 0 : index
    %422 = vector.load %arg13[%c0_123, %c0_124, %c0_125] : memref<8x8x128xf32, #tpu.memory_space<vmem>>, vector<8x8x128xf32>
    tpu.vector_store %arg13[%c0_123, %c0_124, %c0_125], %421 {strides = array<i32>} : memref<8x8x128xf32, #tpu.memory_space<vmem>>, vector<8x8x128xf32>,
    return
  }
  func.func @transform_0(%arg0: i32) -> (i32, i32, i32) {
    %c0_i32 = arith.constant 0 : i32
    %c0_i32_0 = arith.constant 0 : i32
    %c0_i32_1 = arith.constant 0 : i32
    return %c0_i32, %arg0, %c0_i32_0 : i32, i32, i32
  }
  func.func @transform_1(%arg0: i32) -> (i32, i32, i32) {
    %c0_i32 = arith.constant 0 : i32
    %c0_i32_0 = arith.constant 0 : i32
    %c0_i32_1 = arith.constant 0 : i32
    return %c0_i32, %arg0, %c0_i32_0 : i32, i32, i32
  }
  func.func @transform_2(%arg0: i32) -> (i32, i32, i32) {
    %c0_i32 = arith.constant 0 : i32
    %c0_i32_0 = arith.constant 0 : i32
    %c0_i32_1 = arith.constant 0 : i32
    return %c0_i32, %arg0, %c0_i32_0 : i32, i32, i32
  }
  func.func @transform_3(%arg0: i32) -> (i32, i32) {
    %c0_i32 = arith.constant 0 : i32
    %c0_i32_0 = arith.constant 0 : i32
    %c0_i32_1 = arith.constant 0 : i32
    return %c0_i32, %c0_i32_0 : i32, i32
  }
  func.func @transform_4(%arg0: i32) -> (i32, i32) {
    %c0_i32 = arith.constant 0 : i32
    %c0_i32_0 = arith.constant 0 : i32
    %c0_i32_1 = arith.constant 0 : i32
    return %c0_i32, %c0_i32_0 : i32, i32
  }
  func.func @transform_5(%arg0: i32) -> (i32, i32) {
    %c0_i32 = arith.constant 0 : i32
    %c0_i32_0 = arith.constant 0 : i32
    %c0_i32_1 = arith.constant 0 : i32
    return %c0_i32, %c0_i32_0 : i32, i32
  }
  func.func @transform_6(%arg0: i32) -> (i32, i32) {
    %c0_i32 = arith.constant 0 : i32
    %c0_i32_0 = arith.constant 0 : i32
    %c0_i32_1 = arith.constant 0 : i32
    return %c0_i32, %c0_i32_0 : i32, i32
  }
  func.func @transform_7(%arg0: i32) -> (i32, i32) {
    %c0_i32 = arith.constant 0 : i32
    %c0_i32_0 = arith.constant 0 : i32
    %c0_i32_1 = arith.constant 0 : i32
    return %c0_i32, %c0_i32_0 : i32, i32
  }
  func.func @transform_8(%arg0: i32) -> (i32, i32) {
    %c0_i32 = arith.constant 0 : i32
    %c0_i32_0 = arith.constant 0 : i32
    %c0_i32_1 = arith.constant 0 : i32
    return %c0_i32, %c0_i32_0 : i32, i32
  }
  func.func @transform_9(%arg0: i32) -> (i32, i32) {
    %c0_i32 = arith.constant 0 : i32
    %c0_i32_0 = arith.constant 0 : i32
    %c0_i32_1 = arith.constant 0 : i32
    return %c0_i32, %c0_i32_0 : i32, i32
  }
  func.func @transform_10(%arg0: i32) -> (i32, i32) {
    %c0_i32 = arith.constant 0 : i32
    %c0_i32_0 = arith.constant 0 : i32
    %c0_i32_1 = arith.constant 0 : i32
    return %c0_i32, %c0_i32_0 : i32, i32
  }
  func.func @transform_11(%arg0: i32) -> (i32, i32, i32) {
    %c0_i32 = arith.constant 0 : i32
    %c0_i32_0 = arith.constant 0 : i32
    %c0_i32_1 = arith.constant 0 : i32
    return %c0_i32, %arg0, %c0_i32_0 : i32, i32, i32
  }
  func.func @transform_12(%arg0: i32) -> (i32, i32, i32) {
    %c0_i32 = arith.constant 0 : i32
    %c0_i32_0 = arith.constant 0 : i32
    %c0_i32_1 = arith.constant 0 : i32
    return %c0_i32, %arg0, %c0_i32_0 : i32, i32, i32
  }
  func.func @transform_13(%arg0: i32) -> (i32, i32, i32) {
    %c0_i32 = arith.constant 0 : i32
    %c0_i32_0 = arith.constant 0 : i32
    %c0_i32_1 = arith.constant 0 : i32
    return %c0_i32, %arg0, %c0_i32_0 : i32, i32, i32
  }
  func.func @transform_14(%arg0: i32) -> (i32, i32, i32) {
    %c0_i32 = arith.constant 0 : i32
    %c0_i32_0 = arith.constant 0 : i32
    %c0_i32_1 = arith.constant 0 : i32
    return %c0_i32, %arg0, %c0_i32_0 : i32, i32, i32
  }
}

</mosaic_0001>

<llo_original>
// kernel: tpu_custom_call.1
$region0: #{tpu_custom_call.1}
  #allocation0 [shape = 'u32[]', space=smem, size = 0x4, offset = 0x4, fixed_abs, tag = 'smem constant byte address 0x4 - core index']
  #allocation1 [shape = 'u32[72,128]{1,0:T(1,128)}', space=vmem, size = 0x9000, scoped, tag = 'internal scratch']
  #allocation2 [shape = 'f32[8,8,128]{2,1,0:T(8,128)}', space=vmem, size = 0x8000, scoped, tag = 'scratch operand']
  %s0 = inlined_call_operand.hbm [shape: f32[8,8,32], index: 0, kind: input, shape index: {}]
  %s1 = inlined_call_operand.hbm [shape: f32[2,8,32], index: 1, kind: input, shape index: {}]
  %s2 = inlined_call_operand.hbm [shape: f32[2,8,32], index: 2, kind: input, shape index: {}]
  %s3 = inlined_call_operand.hbm [shape: f32[32,128], index: 3, kind: input, shape index: {}]
  %s4 = inlined_call_operand.hbm [shape: f32[32,128], index: 4, kind: input, shape index: {}]
  %s5 = inlined_call_operand.vmem [shape: f32[1,128], index: 5, kind: input, shape index: {}]
  %s6 = inlined_call_operand.hbm [shape: f32[32,128], index: 6, kind: input, shape index: {}]
  %s7 = inlined_call_operand.hbm [shape: f32[32,128], index: 7, kind: input, shape index: {}]
  %s8 = inlined_call_operand.vmem [shape: f32[1,128], index: 8, kind: input, shape index: {}]
  %s9 = inlined_call_operand.hbm [shape: f32[32,128], index: 9, kind: input, shape index: {}]
  %s10 = inlined_call_operand.vmem [shape: f32[1,128], index: 10, kind: input, shape index: {}]
  %s11 = inlined_call_operand.hbm [shape: f32[8,8,32], index: 11, kind: output, shape index: {0}]
  %s12 = inlined_call_operand.hbm [shape: f32[8,8,128], index: 12, kind: output, shape index: {1}]
  %s13 = inlined_call_operand.hbm [shape: f32[2,8,32], index: 13, kind: output, shape index: {2}]
  %s14 = inlined_call_operand.hbm [shape: f32[2,8,32], index: 14, kind: output, shape index: {3}]
  %15 = xla_tuple %s11, %s12, %s13, %s14
  %s16 = sld [smem:[#allocation0]]
  $region110: #{tpu_custom_call.1} parent=0
    _
  %s18 = ssub.s32 1, %s16
  %s19 = scalar_select 0, %s18, %s16
  $region1: #{tpu_custom_call.1} parent=0
    #allocation3 [shape = 'u8[32768]{0}', space=vmem, size = 0x8000, scoped, tag = 'input window, operand 0, single buffered']
    #allocation4 [shape = 's32[1]{0}', space=sflag, size = 0x4, scoped, tag = 'scoped memory for tpu_custom_call.1']
    #allocation5 [shape = 's32[1]{0}', space=sflag, size = 0x4, scoped, tag = 'scoped memory for tpu_custom_call.1']
    #allocation6 [shape = 'u8[8192]{0}', space=vmem, size = 0x2000, scoped, tag = 'input window, operand 1, single buffered']
    #allocation7 [shape = 's32[1]{0}', space=sflag, size = 0x4, scoped, tag = 'scoped memory for tpu_custom_call.1']
    #allocation8 [shape = 'u8[8192]{0}', space=vmem, size = 0x2000, scoped, tag = 'input window, operand 2, single buffered']
    #allocation9 [shape = 'u8[16384]{0}', space=vmem, size = 0x4000, scoped, tag = 'input window, operand 3, single buffered']
    #allocation10 [shape = 's32[1]{0}', space=sflag, size = 0x4, scoped, tag = 'scoped memory for tpu_custom_call.1']
    #allocation11 [shape = 'u8[16384]{0}', space=vmem, size = 0x4000, scoped, tag = 'input window, operand 4, single buffered']
    #allocation12 [shape = 'u8[16384]{0}', space=vmem, size = 0x4000, scoped, tag = 'input window, operand 6, single buffered']
    #allocation13 [shape = 's32[1]{0}', space=sflag, size = 0x4, scoped, tag = 'scoped memory for tpu_custom_call.1']
    #allocation14 [shape = 'u8[16384]{0}', space=vmem, size = 0x4000, scoped, tag = 'input window, operand 7, single buffered']
    #allocation15 [shape = 'u8[16384]{0}', space=vmem, size = 0x4000, scoped, tag = 'input window, operand 9, single buffered']
    #allocation16 [shape = 's32[1]{0}', space=sflag, size = 0x4, scoped, tag = 'scoped memory for tpu_custom_call.1']
    #allocation17 [shape = 'u8[32768]{0}', space=vmem, size = 0x8000, scoped, tag = 'output window, operand 0, single buffered']
    #allocation18 [shape = 'u8[32768]{0}', space=vmem, size = 0x8000, scoped, tag = 'output window, operand 1, single buffered']
    #allocation19 [shape = 's32[1]{0}', space=sflag, size = 0x4, scoped, tag = 'scoped memory for tpu_custom_call.1']
    #allocation20 [shape = 'u8[8192]{0}', space=vmem, size = 0x2000, scoped, tag = 'output window, operand 2, single buffered']
    #allocation21 [shape = 'u8[8192]{0}', space=vmem, size = 0x2000, scoped, tag = 'output window, operand 3, single buffered']
    #allocation22 [shape = 's32[1]{0}', space=sflag, size = 0x4, scoped, tag = 'scoped memory for tpu_custom_call.1']
    %20 = vsyncpa [#allocation4], 0
    %21 = vsyncpa [#allocation7], 0
    %22 = vsyncpa [#allocation10], 0
    %23 = vsyncpa [#allocation13], 0
    %24 = vsyncpa [#allocation16], 0
    %25 = vsyncpa [#allocation5], 0
    %26 = vsyncpa [#allocation19], 0
    %27 = vsyncpa [#allocation22], 0
    // Predicated region
    $region2: #{tpu_custom_call.1} parent=1 // pred_check
      _
    $region3: #{tpu_custom_call.1} parent=1 // pred_check_branch
      %29 = sbr.rel (0) target = $region5
    $region4: #{tpu_custom_call.1} parent=1 // pred_region
      %31 = vsyncadd [#allocation4], 0
      %s32 = sshll.u32 %s0, 4
      %s33 = int_to_ptr.hbm [resolvable:$true] %s32
      %s34 = sshll.u32 [#allocation3], 4
      %s35 = int_to_ptr.vmem [resolvable:$true] %s34
      %40 = dma.hbm_to_vmem [thread:$0]  %s33, 1024, %s35, [#allocation4], 128, 128, 8
    $region5: #{tpu_custom_call.1} parent=1 // pred_fallthru
      _
    // Predicated region
    $region6: #{tpu_custom_call.1} parent=1 // pred_check
      _
    $region7: #{tpu_custom_call.1} parent=1 // pred_check_branch
      %42 = sbr.rel (0) target = $region9
    $region8: #{tpu_custom_call.1} parent=1 // pred_region
      %44 = vsyncadd [#allocation7], 0
      %s45 = sshll.u32 %s1, 4
      %s46 = int_to_ptr.hbm [resolvable:$true] %s45
      %s47 = sshll.u32 [#allocation6], 4
      %s48 = int_to_ptr.vmem [resolvable:$true] %s47
      %53 = dma.hbm_to_vmem [thread:$0]  %s46, 256, %s48, [#allocation7], 128, 128, 8
    $region9: #{tpu_custom_call.1} parent=1 // pred_fallthru
      _
    // Predicated region
    $region10: #{tpu_custom_call.1} parent=1 // pred_check
      _
    $region11: #{tpu_custom_call.1} parent=1 // pred_check_branch
      %55 = sbr.rel (0) target = $region13
    $region12: #{tpu_custom_call.1} parent=1 // pred_region
      %57 = vsyncadd [#allocation7], 0
      %s58 = sshll.u32 %s2, 4
      %s59 = int_to_ptr.hbm [resolvable:$true] %s58
      %s60 = sshll.u32 [#allocation8], 4
      %s61 = int_to_ptr.vmem [resolvable:$true] %s60
      %66 = dma.hbm_to_vmem [thread:$0]  %s59, 256, %s61, [#allocation7], 128, 128, 8
    $region13: #{tpu_custom_call.1} parent=1 // pred_fallthru
      _
    // Predicated region
    $region14: #{tpu_custom_call.1} parent=1 // pred_check
      _
    $region15: #{tpu_custom_call.1} parent=1 // pred_check_branch
      %68 = sbr.rel (0) target = $region17
    $region16: #{tpu_custom_call.1} parent=1 // pred_region
      %70 = vsyncadd [#allocation10], 0
      %s71 = sshll.u32 %s3, 4
      %s72 = int_to_ptr.hbm [resolvable:$true] %s71
      %s73 = sshll.u32 [#allocation9], 4
      %s74 = int_to_ptr.vmem [resolvable:$true] %s73
      %79 = dma.hbm_to_vmem [thread:$0]  %s72, 512, %s74, [#allocation10], 128, 128, 8
    $region17: #{tpu_custom_call.1} parent=1 // pred_fallthru
      _
    // Predicated region
    $region18: #{tpu_custom_call.1} parent=1 // pred_check
      _
    $region19: #{tpu_custom_call.1} parent=1 // pred_check_branch
      %81 = sbr.rel (0) target = $region21
    $region20: #{tpu_custom_call.1} parent=1 // pred_region
      %83 = vsyncadd [#allocation10], 0
      %s84 = sshll.u32 %s4, 4
      %s85 = int_to_ptr.hbm [resolvable:$true] %s84
      %s86 = sshll.u32 [#allocation11], 4
      %s87 = int_to_ptr.vmem [resolvable:$true] %s86
      %92 = dma.hbm_to_vmem [thread:$0]  %s85, 512, %s87, [#allocation10], 128, 128, 8
    $region21: #{tpu_custom_call.1} parent=1 // pred_fallthru
      _
    // Predicated region
    $region22: #{tpu_custom_call.1} parent=1 // pred_check
      _
    $region23: #{tpu_custom_call.1} parent=1 // pred_check_branch
      %94 = sbr.rel (0) target = $region25
    $region24: #{tpu_custom_call.1} parent=1 // pred_region
      _
    $region25: #{tpu_custom_call.1} parent=1 // pred_fallthru
      _
    // Predicated region
    $region26: #{tpu_custom_call.1} parent=1 // pred_check
      _
    $region27: #{tpu_custom_call.1} parent=1 // pred_check_branch
      %96 = sbr.rel (0) target = $region29
    $region28: #{tpu_custom_call.1} parent=1 // pred_region
      %98 = vsyncadd [#allocation13], 0
      %s99 = sshll.u32 %s6, 4
      %s100 = int_to_ptr.hbm [resolvable:$true] %s99
      %s101 = sshll.u32 [#allocation12], 4
      %s102 = int_to_ptr.vmem [resolvable:$true] %s101
      %107 = dma.hbm_to_vmem [thread:$0]  %s100, 512, %s102, [#allocation13], 128, 128, 8
    $region29: #{tpu_custom_call.1} parent=1 // pred_fallthru
      _
    // Predicated region
    $region30: #{tpu_custom_call.1} parent=1 // pred_check
      _
    $region31: #{tpu_custom_call.1} parent=1 // pred_check_branch
      %109 = sbr.rel (0) target = $region33
    $region32: #{tpu_custom_call.1} parent=1 // pred_region
      %111 = vsyncadd [#allocation13], 0
      %s112 = sshll.u32 %s7, 4
      %s113 = int_to_ptr.hbm [resolvable:$true] %s112
      %s114 = sshll.u32 [#allocation14], 4
      %s115 = int_to_ptr.vmem [resolvable:$true] %s114
      %120 = dma.hbm_to_vmem [thread:$0]  %s113, 512, %s115, [#allocation13], 128, 128, 8
    $region33: #{tpu_custom_call.1} parent=1 // pred_fallthru
      _
    // Predicated region
    $region34: #{tpu_custom_call.1} parent=1 // pred_check
      _
    $region35: #{tpu_custom_call.1} parent=1 // pred_check_branch
      %122 = sbr.rel (0) target = $region37
    $region36: #{tpu_custom_call.1} parent=1 // pred_region
      _
    $region37: #{tpu_custom_call.1} parent=1 // pred_fallthru
      _
    // Predicated region
    $region38: #{tpu_custom_call.1} parent=1 // pred_check
      _
    $region39: #{tpu_custom_call.1} parent=1 // pred_check_branch
      %124 = sbr.rel (0) target = $region41
    $region40: #{tpu_custom_call.1} parent=1 // pred_region
      %126 = vsyncadd [#allocation16], 0
      %s127 = sshll.u32 %s9, 4
      %s128 = int_to_ptr.hbm [resolvable:$true] %s127
      %s129 = sshll.u32 [#allocation15], 4
      %s130 = int_to_ptr.vmem [resolvable:$true] %s129
      %135 = dma.hbm_to_vmem [thread:$0]  %s128, 512, %s130, [#allocation16], 128, 128, 8
    $region41: #{tpu_custom_call.1} parent=1 // pred_fallthru
      _
    // Predicated region
    $region42: #{tpu_custom_call.1} parent=1 // pred_check
      _
    $region43: #{tpu_custom_call.1} parent=1 // pred_check_branch
      %137 = sbr.rel (0) target = $region45
    $region44: #{tpu_custom_call.1} parent=1 // pred_region
      _
    $region45: #{tpu_custom_call.1} parent=1 // pred_fallthru
      _
    // Predicated region
    $region46: #{tpu_custom_call.1} parent=1 // pred_check
      _
    $region47: #{tpu_custom_call.1} parent=1 // pred_check_branch
      %139 = sbr.rel (0) target = $region49
    $region48: #{tpu_custom_call.1} parent=1 // pred_region
      %141 = dma.done [#allocation4], 1024
    $region49: #{tpu_custom_call.1} parent=1 // pred_fallthru
      _
    // Predicated region
    $region50: #{tpu_custom_call.1} parent=1 // pred_check
      _
    $region51: #{tpu_custom_call.1} parent=1 // pred_check_branch
      %143 = sbr.rel (0) target = $region53
    $region52: #{tpu_custom_call.1} parent=1 // pred_region
      %145 = dma.done [#allocation7], 256
    $region53: #{tpu_custom_call.1} parent=1 // pred_fallthru
      _
    // Predicated region
    $region54: #{tpu_custom_call.1} parent=1 // pred_check
      _
    $region55: #{tpu_custom_call.1} parent=1 // pred_check_branch
      %147 = sbr.rel (0) target = $region57
    $region56: #{tpu_custom_call.1} parent=1 // pred_region
      %149 = dma.done [#allocation7], 256
    $region57: #{tpu_custom_call.1} parent=1 // pred_fallthru
      _
    // Predicated region
    $region58: #{tpu_custom_call.1} parent=1 // pred_check
      _
    $region59: #{tpu_custom_call.1} parent=1 // pred_check_branch
      %151 = sbr.rel (0) target = $region61
    $region60: #{tpu_custom_call.1} parent=1 // pred_region
      %153 = dma.done [#allocation10], 512
    $region61: #{tpu_custom_call.1} parent=1 // pred_fallthru
      _
    // Predicated region
    $region62: #{tpu_custom_call.1} parent=1 // pred_check
      _
    $region63: #{tpu_custom_call.1} parent=1 // pred_check_branch
      %155 = sbr.rel (0) target = $region65
    $region64: #{tpu_custom_call.1} parent=1 // pred_region
      %157 = dma.done [#allocation10], 512
    $region65: #{tpu_custom_call.1} parent=1 // pred_fallthru
      _
    // Predicated region
    $region66: #{tpu_custom_call.1} parent=1 // pred_check
      _
    $region67: #{tpu_custom_call.1} parent=1 // pred_check_branch
      %159 = sbr.rel (0) target = $region69
    $region68: #{tpu_custom_call.1} parent=1 // pred_region
      %161 = dma.done [#allocation13], 512
    $region69: #{tpu_custom_call.1} parent=1 // pred_fallthru
      _
    // Predicated region
    $region70: #{tpu_custom_call.1} parent=1 // pred_check
      _
    $region71: #{tpu_custom_call.1} parent=1 // pred_check_branch
      %163 = sbr.rel (0) target = $region73
    $region72: #{tpu_custom_call.1} parent=1 // pred_region
      %165 = dma.done [#allocation13], 512
    $region73: #{tpu_custom_call.1} parent=1 // pred_fallthru
      _
    // Predicated region
    $region74: #{tpu_custom_call.1} parent=1 // pred_check
      _
    $region75: #{tpu_custom_call.1} parent=1 // pred_check_branch
      %167 = sbr.rel (0) target = $region77
    $region76: #{tpu_custom_call.1} parent=1 // pred_region
      %169 = dma.done [#allocation16], 512
    $region77: #{tpu_custom_call.1} parent=1 // pred_fallthru
      _
    %v170 = vld [vmem:[#allocation11] sm:$0xff]
    %v171 = vld [vmem:[#allocation11 + $0x8] sm:$0xff]
    %v172 = vld [vmem:[#allocation11 + $0x10] sm:$0xff]
    %v173 = vld [vmem:[#allocation11 + $0x18] sm:$0xff]
    %v174 = vld [vmem:[#allocation12] sm:$0xff]
    %v175 = vld [vmem:[#allocation12 + $0x8] sm:$0xff]
    %v176 = vld [vmem:[#allocation12 + $0x10] sm:$0xff]
    %v177 = vld [vmem:[#allocation12 + $0x18] sm:$0xff]
    %v178 = vld [vmem:[#allocation14] sm:$0xff]
    %v179 = vld [vmem:[#allocation14 + $0x8] sm:$0xff]
    %v180 = vld [vmem:[#allocation14 + $0x10] sm:$0xff]
    %v181 = vld [vmem:[#allocation14 + $0x18] sm:$0xff]
    %v182 = vld [vmem:[%s8] sm:$0x1]
    %v184 = vperm.slane %v182, 0
    %v186 = vld [vmem:[#allocation3] sm:$0xff]
    %v187 = vld [vmem:[#allocation3 + $0x8] sm:$0xff]
    %v188 = vld [vmem:[#allocation3 + $0x10] sm:$0xff]
    %v189 = vld [vmem:[#allocation3 + $0x18] sm:$0xff]
    %v190 = vld [vmem:[#allocation3 + $0x20] sm:$0xff]
    %v191 = vld [vmem:[#allocation3 + $0x28] sm:$0xff]
    %v192 = vld [vmem:[#allocation3 + $0x30] sm:$0xff]
    %v193 = vld [vmem:[#allocation3 + $0x38] sm:$0xff]
    %v194 = vmax.f32 %v186, 0.0
    %v195 = vmax.f32 %v187, 0.0
    %v196 = vmax.f32 %v188, 0.0
    %v197 = vmax.f32 %v189, 0.0
    %v198 = vmax.f32 %v190, 0.0
    %v199 = vmax.f32 %v191, 0.0
    %v200 = vmax.f32 %v192, 0.0
    %v201 = vmax.f32 %v193, 0.0
    %v202 = vld [vmem:[#allocation9] sm:$0xff]
    %v203 = vld [vmem:[#allocation9 + $0x8] sm:$0xff]
    %v204 = vld [vmem:[#allocation9 + $0x10] sm:$0xff]
    %v205 = vld [vmem:[#allocation9 + $0x18] sm:$0xff]
    %v206 = vld [vmem:[%s5] sm:$0x1]
    %v208 = vperm.slane %v206, 0
    %vm210 = vcmask 261120
    %v212 = vsel %vm210, %v194, 0
    %v215 = vsel %vm210, %v195, 0
    %v218 = vsel %vm210, %v196, 0
    %v221 = vsel %vm210, %v197, 0
    %v224 = vsel %vm210, %v198, 0
    %v227 = vsel %vm210, %v199, 0
    %v230 = vsel %vm210, %v200, 0
    %v233 = vsel %vm210, %v201, 0
    %235 = vmatpush.msra.mxu0 0.0
    %236 = vmatpush.msra.mxu0 0.0
    %237 = vmatpush.msra.mxu0 0.0
    %238 = vmatpush.msra.mxu0 0.0
    %239 = vmatpush.msra.mxu0 0.0
    %240 = vmatpush.msra.mxu0 0.0
    %241 = vmatpush.msra.mxu0 0.0
    %242 = vmatpush.msra.mxu0 0.0
    %243 = vmatpush.msra.mxu0 0.0
    %244 = vmatpush.msra.mxu0 0.0
    %245 = vmatpush.msra.mxu0 0.0
    %246 = vmatpush.msra.mxu0 0.0
    %v247 = vand.u32 %v205, 4294901760
    %248 = vmatpush.msra.mxu0 %v247
    %v249 = vand.u32 %v204, 4294901760
    %250 = vmatpush.msra.mxu0 %v249
    %v251 = vand.u32 %v203, 4294901760
    %252 = vmatpush.msra.mxu0 %v251
    %v253 = vand.u32 %v202, 4294901760
    %254 = vmatpush.msra.mxu0 %v253
    %v255 = vand.u32 %v212, 4294901760
    %v256 = vsub.f32 %v212, %v255
    %v257 = vand.u32 %v256, 4294901760
    %v258 = vsub.f32 %v256, %v257
    %v259 = vand.u32 %v258, 4294901760
    %260 = vmatmul.f32.gmra.mxu0 %v259
    %v261 = vpop.f32.mrf.mxu0
    %v262 = vadd.f32 %v208, %v261
    %v263 = vand.u32 %v215, 4294901760
    %v264 = vsub.f32 %v215, %v263
    %v265 = vand.u32 %v264, 4294901760
    %v266 = vsub.f32 %v264, %v265
    %v267 = vand.u32 %v266, 4294901760
    %268 = vmatmul.f32.gmra.mxu0 %v267
    %v269 = vpop.f32.mrf.mxu0
    %v270 = vadd.f32 %v208, %v269
    %v271 = vand.u32 %v218, 4294901760
    %v272 = vsub.f32 %v218, %v271
    %v273 = vand.u32 %v272, 4294901760
    %v274 = vsub.f32 %v272, %v273
    %v275 = vand.u32 %v274, 4294901760
    %276 = vmatmul.f32.gmra.mxu0 %v275
    %v277 = vpop.f32.mrf.mxu0
    %v278 = vadd.f32 %v208, %v277
    %v279 = vand.u32 %v221, 4294901760
    %v280 = vsub.f32 %v221, %v279
    %v281 = vand.u32 %v280, 4294901760
    %v282 = vsub.f32 %v280, %v281
    %v283 = vand.u32 %v282, 4294901760
    %284 = vmatmul.f32.gmra.mxu0 %v283
    %v285 = vpop.f32.mrf.mxu0
    %v286 = vadd.f32 %v208, %v285
    %v287 = vand.u32 %v224, 4294901760
    %v288 = vsub.f32 %v224, %v287
    %v289 = vand.u32 %v288, 4294901760
    %v290 = vsub.f32 %v288, %v289
    %v291 = vand.u32 %v290, 4294901760
    %292 = vmatmul.f32.gmra.mxu0 %v291
    %v293 = vpop.f32.mrf.mxu0
    %v294 = vadd.f32 %v208, %v293
    %v295 = vand.u32 %v227, 4294901760
    %v296 = vsub.f32 %v227, %v295
    %v297 = vand.u32 %v296, 4294901760
    %v298 = vsub.f32 %v296, %v297
    %v299 = vand.u32 %v298, 4294901760
    %300 = vmatmul.f32.gmra.mxu0 %v299
    %v301 = vpop.f32.mrf.mxu0
    %v302 = vadd.f32 %v208, %v301
    %v303 = vand.u32 %v230, 4294901760
    %v304 = vsub.f32 %v230, %v303
    %v305 = vand.u32 %v304, 4294901760
    %v306 = vsub.f32 %v304, %v305
    %v307 = vand.u32 %v306, 4294901760
    %308 = vmatmul.f32.gmra.mxu0 %v307
    %v309 = vpop.f32.mrf.mxu0
    %v310 = vadd.f32 %v208, %v309
    %v311 = vand.u32 %v233, 4294901760
    %v312 = vsub.f32 %v233, %v311
    %v313 = vand.u32 %v312, 4294901760
    %v314 = vsub.f32 %v312, %v313
    %v315 = vand.u32 %v314, 4294901760
    %316 = vmatmul.f32.gmra.mxu0 %v315
    %v317 = vpop.f32.mrf.mxu0
    %v318 = vadd.f32 %v208, %v317
    %319 = vdwg.mxu0
    %320 = vmatpush.msra.mxu0 0.0
    %321 = vmatpush.msra.mxu0 0.0
    %322 = vmatpush.msra.mxu0 0.0
    %323 = vmatpush.msra.mxu0 0.0
    %324 = vmatpush.msra.mxu0 0.0
    %325 = vmatpush.msra.mxu0 0.0
    %326 = vmatpush.msra.mxu0 0.0
    %327 = vmatpush.msra.mxu0 0.0
    %328 = vmatpush.msra.mxu0 0.0
    %329 = vmatpush.msra.mxu0 0.0
    %330 = vmatpush.msra.mxu0 0.0
    %331 = vmatpush.msra.mxu0 0.0
    %v332 = vand.u32 %v205, 4294901760
    %v333 = vsub.f32 %v205, %v332
    %v334 = vand.u32 %v333, 4294901760
    %v335 = vsub.f32 %v333, %v334
    %v336 = vand.u32 %v335, 4294901760
    %337 = vmatpush.msra.mxu0 %v336
    %v338 = vand.u32 %v204, 4294901760
    %v339 = vsub.f32 %v204, %v338
    %v340 = vand.u32 %v339, 4294901760
    %v341 = vsub.f32 %v339, %v340
    %v342 = vand.u32 %v341, 4294901760
    %343 = vmatpush.msra.mxu0 %v342
    %v344 = vand.u32 %v203, 4294901760
    %v345 = vsub.f32 %v203, %v344
    %v346 = vand.u32 %v345, 4294901760
    %v347 = vsub.f32 %v345, %v346
    %v348 = vand.u32 %v347, 4294901760
    %349 = vmatpush.msra.mxu0 %v348
    %v350 = vand.u32 %v202, 4294901760
    %v351 = vsub.f32 %v202, %v350
    %v352 = vand.u32 %v351, 4294901760
    %v353 = vsub.f32 %v351, %v352
    %v354 = vand.u32 %v353, 4294901760
    %355 = vmatpush.msra.mxu0 %v354
    %v356 = vand.u32 %v212, 4294901760
    %357 = vmatmul.f32.gmra.mxu0 %v356
    %v358 = vpop.f32.mrf.mxu0
    %v359 = vadd.f32 %v262, %v358
    %v360 = vand.u32 %v215, 4294901760
    %361 = vmatmul.f32.gmra.mxu0 %v360
    %v362 = vpop.f32.mrf.mxu0
    %v363 = vadd.f32 %v270, %v362
    %v364 = vand.u32 %v218, 4294901760
    %365 = vmatmul.f32.gmra.mxu0 %v364
    %v366 = vpop.f32.mrf.mxu0
    %v367 = vadd.f32 %v278, %v366
    %v368 = vand.u32 %v221, 4294901760
    %369 = vmatmul.f32.gmra.mxu0 %v368
    %v370 = vpop.f32.mrf.mxu0
    %v371 = vadd.f32 %v286, %v370
    %v372 = vand.u32 %v224, 4294901760
    %373 = vmatmul.f32.gmra.mxu0 %v372
    %v374 = vpop.f32.mrf.mxu0
    %v375 = vadd.f32 %v294, %v374
    %v376 = vand.u32 %v227, 4294901760
    %377 = vmatmul.f32.gmra.mxu0 %v376
    %v378 = vpop.f32.mrf.mxu0
    %v379 = vadd.f32 %v302, %v378
    %v380 = vand.u32 %v230, 4294901760
    %381 = vmatmul.f32.gmra.mxu0 %v380
    %v382 = vpop.f32.mrf.mxu0
    %v383 = vadd.f32 %v310, %v382
    %v384 = vand.u32 %v233, 4294901760
    %385 = vmatmul.f32.gmra.mxu0 %v384
    %v386 = vpop.f32.mrf.mxu0
    %v387 = vadd.f32 %v318, %v386
    %388 = vdwg.mxu0
    %389 = vmatpush.msra.mxu0 0.0
    %390 = vmatpush.msra.mxu0 0.0
    %391 = vmatpush.msra.mxu0 0.0
    %392 = vmatpush.msra.mxu0 0.0
    %393 = vmatpush.msra.mxu0 0.0
    %394 = vmatpush.msra.mxu0 0.0
    %395 = vmatpush.msra.mxu0 0.0
    %396 = vmatpush.msra.mxu0 0.0
    %397 = vmatpush.msra.mxu0 0.0
    %398 = vmatpush.msra.mxu0 0.0
    %399 = vmatpush.msra.mxu0 0.0
    %400 = vmatpush.msra.mxu0 0.0
    %v401 = vand.u32 %v205, 4294901760
    %v402 = vsub.f32 %v205, %v401
    %403 = vmatpush.msra.mxu0 %v402
    %v404 = vand.u32 %v204, 4294901760
    %v405 = vsub.f32 %v204, %v404
    %406 = vmatpush.msra.mxu0 %v405
    %v407 = vand.u32 %v203, 4294901760
    %v408 = vsub.f32 %v203, %v407
    %409 = vmatpush.msra.mxu0 %v408
    %v410 = vand.u32 %v202, 4294901760
    %v411 = vsub.f32 %v202, %v410
    %412 = vmatpush.msra.mxu0 %v411
    %v413 = vand.u32 %v212, 4294901760
    %v414 = vsub.f32 %v212, %v413
    %415 = vmatmul.f32.gmra.mxu0 %v414
    %v416 = vpop.f32.mrf.mxu0
    %v417 = vadd.f32 %v359, %v416
    %v418 = vand.u32 %v215, 4294901760
    %v419 = vsub.f32 %v215, %v418
    %420 = vmatmul.f32.gmra.mxu0 %v419
    %v421 = vpop.f32.mrf.mxu0
    %v422 = vadd.f32 %v363, %v421
    %v423 = vand.u32 %v218, 4294901760
    %v424 = vsub.f32 %v218, %v423
    %425 = vmatmul.f32.gmra.mxu0 %v424
    %v426 = vpop.f32.mrf.mxu0
    %v427 = vadd.f32 %v367, %v426
    %v428 = vand.u32 %v221, 4294901760
    %v429 = vsub.f32 %v221, %v428
    %430 = vmatmul.f32.gmra.mxu0 %v429
    %v431 = vpop.f32.mrf.mxu0
    %v432 = vadd.f32 %v371, %v431
    %v433 = vand.u32 %v224, 4294901760
    %v434 = vsub.f32 %v224, %v433
    %435 = vmatmul.f32.gmra.mxu0 %v434
    %v436 = vpop.f32.mrf.mxu0
    %v437 = vadd.f32 %v375, %v436
    %v438 = vand.u32 %v227, 4294901760
    %v439 = vsub.f32 %v227, %v438
    %440 = vmatmul.f32.gmra.mxu0 %v439
    %v441 = vpop.f32.mrf.mxu0
    %v442 = vadd.f32 %v379, %v441
    %v443 = vand.u32 %v230, 4294901760
    %v444 = vsub.f32 %v230, %v443
    %445 = vmatmul.f32.gmra.mxu0 %v444
    %v446 = vpop.f32.mrf.mxu0
    %v447 = vadd.f32 %v383, %v446
    %v448 = vand.u32 %v233, 4294901760
    %v449 = vsub.f32 %v233, %v448
    %450 = vmatmul.f32.gmra.mxu0 %v449
    %v451 = vpop.f32.mrf.mxu0
    %v452 = vadd.f32 %v387, %v451
    %453 = vdwg.mxu0
    %454 = vmatpush.msra.mxu0 0.0
    %455 = vmatpush.msra.mxu0 0.0
    %456 = vmatpush.msra.mxu0 0.0
    %457 = vmatpush.msra.mxu0 0.0
    %458 = vmatpush.msra.mxu0 0.0
    %459 = vmatpush.msra.mxu0 0.0
    %460 = vmatpush.msra.mxu0 0.0
    %461 = vmatpush.msra.mxu0 0.0
    %462 = vmatpush.msra.mxu0 0.0
    %463 = vmatpush.msra.mxu0 0.0
    %464 = vmatpush.msra.mxu0 0.0
    %465 = vmatpush.msra.mxu0 0.0
    %v466 = vand.u32 %v205, 4294901760
    %467 = vmatpush.msra.mxu0 %v466
    %v468 = vand.u32 %v204, 4294901760
    %469 = vmatpush.msra.mxu0 %v468
    %v470 = vand.u32 %v203, 4294901760
    %471 = vmatpush.msra.mxu0 %v470
    %v472 = vand.u32 %v202, 4294901760
    %473 = vmatpush.msra.mxu0 %v472
    %v474 = vand.u32 %v212, 4294901760
    %v475 = vsub.f32 %v212, %v474
    %v476 = vand.u32 %v475, 4294901760
    %477 = vmatmul.f32.gmra.mxu0 %v476
    %v478 = vpop.f32.mrf.mxu0
    %v479 = vadd.f32 %v417, %v478
    %v480 = vand.u32 %v215, 4294901760
    %v481 = vsub.f32 %v215, %v480
    %v482 = vand.u32 %v481, 4294901760
    %483 = vmatmul.f32.gmra.mxu0 %v482
    %v484 = vpop.f32.mrf.mxu0
    %v485 = vadd.f32 %v422, %v484
    %v486 = vand.u32 %v218, 4294901760
    %v487 = vsub.f32 %v218, %v486
    %v488 = vand.u32 %v487, 4294901760
    %489 = vmatmul.f32.gmra.mxu0 %v488
    %v490 = vpop.f32.mrf.mxu0
    %v491 = vadd.f32 %v427, %v490
    %v492 = vand.u32 %v221, 4294901760
    %v493 = vsub.f32 %v221, %v492
    %v494 = vand.u32 %v493, 4294901760
    %495 = vmatmul.f32.gmra.mxu0 %v494
    %v496 = vpop.f32.mrf.mxu0
    %v497 = vadd.f32 %v432, %v496
    %v498 = vand.u32 %v224, 4294901760
    %v499 = vsub.f32 %v224, %v498
    %v500 = vand.u32 %v499, 4294901760
    %501 = vmatmul.f32.gmra.mxu0 %v500
    %v502 = vpop.f32.mrf.mxu0
    %v503 = vadd.f32 %v437, %v502
    %v504 = vand.u32 %v227, 4294901760
    %v505 = vsub.f32 %v227, %v504
    %v506 = vand.u32 %v505, 4294901760
    %507 = vmatmul.f32.gmra.mxu0 %v506
    %v508 = vpop.f32.mrf.mxu0
    %v509 = vadd.f32 %v442, %v508
    %v510 = vand.u32 %v230, 4294901760
    %v511 = vsub.f32 %v230, %v510
    %v512 = vand.u32 %v511, 4294901760
    %513 = vmatmul.f32.gmra.mxu0 %v512
    %v514 = vpop.f32.mrf.mxu0
    %v515 = vadd.f32 %v447, %v514
    %v516 = vand.u32 %v233, 4294901760
    %v517 = vsub.f32 %v233, %v516
    %v518 = vand.u32 %v517, 4294901760
    %519 = vmatmul.f32.gmra.mxu0 %v518
    %v520 = vpop.f32.mrf.mxu0
    %v521 = vadd.f32 %v452, %v520
    %522 = vdwg.mxu0
    %523 = vmatpush.msra.mxu0 0.0
    %524 = vmatpush.msra.mxu0 0.0
    %525 = vmatpush.msra.mxu0 0.0
    %526 = vmatpush.msra.mxu0 0.0
    %527 = vmatpush.msra.mxu0 0.0
    %528 = vmatpush.msra.mxu0 0.0
    %529 = vmatpush.msra.mxu0 0.0
    %530 = vmatpush.msra.mxu0 0.0
    %531 = vmatpush.msra.mxu0 0.0
    %532 = vmatpush.msra.mxu0 0.0
    %533 = vmatpush.msra.mxu0 0.0
    %534 = vmatpush.msra.mxu0 0.0
    %v535 = vand.u32 %v205, 4294901760
    %v536 = vsub.f32 %v205, %v535
    %v537 = vand.u32 %v536, 4294901760
    %538 = vmatpush.msra.mxu0 %v537
    %v539 = vand.u32 %v204, 4294901760
    %v540 = vsub.f32 %v204, %v539
    %v541 = vand.u32 %v540, 4294901760
    %542 = vmatpush.msra.mxu0 %v541
    %v543 = vand.u32 %v203, 4294901760
    %v544 = vsub.f32 %v203, %v543
    %v545 = vand.u32 %v544, 4294901760
    %546 = vmatpush.msra.mxu0 %v545
    %v547 = vand.u32 %v202, 4294901760
    %v548 = vsub.f32 %v202, %v547
    %v549 = vand.u32 %v548, 4294901760
    %550 = vmatpush.msra.mxu0 %v549
    %v551 = vand.u32 %v212, 4294901760
    %552 = vmatmul.f32.gmra.mxu0 %v551
    %v553 = vpop.f32.mrf.mxu0
    %v554 = vadd.f32 %v479, %v553
    %v555 = vand.u32 %v215, 4294901760
    %556 = vmatmul.f32.gmra.mxu0 %v555
    %v557 = vpop.f32.mrf.mxu0
    %v558 = vadd.f32 %v485, %v557
    %v559 = vand.u32 %v218, 4294901760
    %560 = vmatmul.f32.gmra.mxu0 %v559
    %v561 = vpop.f32.mrf.mxu0
    %v562 = vadd.f32 %v491, %v561
    %v563 = vand.u32 %v221, 4294901760
    %564 = vmatmul.f32.gmra.mxu0 %v563
    %v565 = vpop.f32.mrf.mxu0
    %v566 = vadd.f32 %v497, %v565
    %v567 = vand.u32 %v224, 4294901760
    %568 = vmatmul.f32.gmra.mxu0 %v567
    %v569 = vpop.f32.mrf.mxu0
    %v570 = vadd.f32 %v503, %v569
    %v571 = vand.u32 %v227, 4294901760
    %572 = vmatmul.f32.gmra.mxu0 %v571
    %v573 = vpop.f32.mrf.mxu0
    %v574 = vadd.f32 %v509, %v573
    %v575 = vand.u32 %v230, 4294901760
    %576 = vmatmul.f32.gmra.mxu0 %v575
    %v577 = vpop.f32.mrf.mxu0
    %v578 = vadd.f32 %v515, %v577
    %v579 = vand.u32 %v233, 4294901760
    %580 = vmatmul.f32.gmra.mxu0 %v579
    %v581 = vpop.f32.mrf.mxu0
    %v582 = vadd.f32 %v521, %v581
    %583 = vdwg.mxu0
    %584 = vmatpush.msra.mxu0 0.0
    %585 = vmatpush.msra.mxu0 0.0
    %586 = vmatpush.msra.mxu0 0.0
    %587 = vmatpush.msra.mxu0 0.0
    %588 = vmatpush.msra.mxu0 0.0
    %589 = vmatpush.msra.mxu0 0.0
    %590 = vmatpush.msra.mxu0 0.0
    %591 = vmatpush.msra.mxu0 0.0
    %592 = vmatpush.msra.mxu0 0.0
    %593 = vmatpush.msra.mxu0 0.0
    %594 = vmatpush.msra.mxu0 0.0
    %595 = vmatpush.msra.mxu0 0.0
    %v596 = vand.u32 %v205, 4294901760
    %597 = vmatpush.msra.mxu0 %v596
    %v598 = vand.u32 %v204, 4294901760
    %599 = vmatpush.msra.mxu0 %v598
    %v600 = vand.u32 %v203, 4294901760
    %601 = vmatpush.msra.mxu0 %v600
    %v602 = vand.u32 %v202, 4294901760
    %603 = vmatpush.msra.mxu0 %v602
    %v604 = vand.u32 %v212, 4294901760
    %605 = vmatmul.f32.gmra.mxu0 %v604
    %v606 = vpop.f32.mrf.mxu0
    %v607 = vadd.f32 %v554, %v606
    %v608 = vand.u32 %v215, 4294901760
    %609 = vmatmul.f32.gmra.mxu0 %v608
    %v610 = vpop.f32.mrf.mxu0
    %v611 = vadd.f32 %v558, %v610
    %v612 = vand.u32 %v218, 4294901760
    %613 = vmatmul.f32.gmra.mxu0 %v612
    %v614 = vpop.f32.mrf.mxu0
    %v615 = vadd.f32 %v562, %v614
    %v616 = vand.u32 %v221, 4294901760
    %617 = vmatmul.f32.gmra.mxu0 %v616
    %v618 = vpop.f32.mrf.mxu0
    %v619 = vadd.f32 %v566, %v618
    %v620 = vand.u32 %v224, 4294901760
    %621 = vmatmul.f32.gmra.mxu0 %v620
    %v622 = vpop.f32.mrf.mxu0
    %v623 = vadd.f32 %v570, %v622
    %v624 = vand.u32 %v227, 4294901760
    %625 = vmatmul.f32.gmra.mxu0 %v624
    %v626 = vpop.f32.mrf.mxu0
    %v627 = vadd.f32 %v574, %v626
    %v628 = vand.u32 %v230, 4294901760
    %629 = vmatmul.f32.gmra.mxu0 %v628
    %v630 = vpop.f32.mrf.mxu0
    %v631 = vadd.f32 %v578, %v630
    %v632 = vand.u32 %v233, 4294901760
    %633 = vmatmul.f32.gmra.mxu0 %v632
    %v634 = vpop.f32.mrf.mxu0
    %v635 = vadd.f32 %v582, %v634
    %636 = vdwg.mxu0
    %637 = vst [vmem:[#allocation2] sm:$0xff] %v607
    %638 = vst [vmem:[#allocation2 + $0x8] sm:$0xff] %v611
    %639 = vst [vmem:[#allocation2 + $0x10] sm:$0xff] %v615
    %640 = vst [vmem:[#allocation2 + $0x18] sm:$0xff] %v619
    %641 = vst [vmem:[#allocation2 + $0x20] sm:$0xff] %v623
    %642 = vst [vmem:[#allocation2 + $0x28] sm:$0xff] %v627
    %643 = vst [vmem:[#allocation2 + $0x30] sm:$0xff] %v631
    %644 = vst [vmem:[#allocation2 + $0x38] sm:$0xff] %v635
    %v645 = vlaneseq
    %v646 = vand.u32 %v645, 127
    %vm647 = vcmp.ge.s32.totalorder %v646, 64
    %vm648 = vcmp.lt.s32.totalorder %v646, 96
    %vm649 = vmand %vm647, %vm648
    %v650 = vld [vmem:[#allocation6] sm:$0xff]
    %s651 = scalar_lea.vmem [#allocation6], 8
    %v652 = vld [vmem:[%s651] sm:$0xff]
    %v653 = vld [vmem:[#allocation8] sm:$0xff]
    %s654 = scalar_lea.vmem [#allocation8], 8
    %v655 = vld [vmem:[%s654] sm:$0xff]
    %v656 = vld [vmem:[#allocation2] sm:$0xff]
    %v658 = vsel %vm210, %v650, 0
    %660 = vmatpush.msra.mxu0 0.0
    %661 = vmatpush.msra.mxu0 0.0
    %662 = vmatpush.msra.mxu0 0.0
    %663 = vmatpush.msra.mxu0 0.0
    %664 = vmatpush.msra.mxu0 0.0
    %665 = vmatpush.msra.mxu0 0.0
    %666 = vmatpush.msra.mxu0 0.0
    %667 = vmatpush.msra.mxu0 0.0
    %668 = vmatpush.msra.mxu0 0.0
    %669 = vmatpush.msra.mxu0 0.0
    %670 = vmatpush.msra.mxu0 0.0
    %671 = vmatpush.msra.mxu0 0.0
    %v672 = vand.u32 %v173, 4294901760
    %673 = vmatpush.msra.mxu0 %v672
    %v674 = vand.u32 %v172, 4294901760
    %675 = vmatpush.msra.mxu0 %v674
    %v676 = vand.u32 %v171, 4294901760
    %677 = vmatpush.msra.mxu0 %v676
    %v678 = vand.u32 %v170, 4294901760
    %679 = vmatpush.msra.mxu0 %v678
    %v680 = vand.u32 %v658, 4294901760
    %v681 = vsub.f32 %v658, %v680
    %v682 = vand.u32 %v681, 4294901760
    %v683 = vsub.f32 %v681, %v682
    %v684 = vand.u32 %v683, 4294901760
    %685 = vmatmul.f32.gmra.mxu0 %v684
    %v686 = vpop.f32.mrf.mxu0
    %v687 = vadd.f32 0.0, %v686
    %688 = vdwg.mxu0
    %689 = vmatpush.msra.mxu0 0.0
    %690 = vmatpush.msra.mxu0 0.0
    %691 = vmatpush.msra.mxu0 0.0
    %692 = vmatpush.msra.mxu0 0.0
    %693 = vmatpush.msra.mxu0 0.0
    %694 = vmatpush.msra.mxu0 0.0
    %695 = vmatpush.msra.mxu0 0.0
    %696 = vmatpush.msra.mxu0 0.0
    %697 = vmatpush.msra.mxu0 0.0
    %698 = vmatpush.msra.mxu0 0.0
    %699 = vmatpush.msra.mxu0 0.0
    %700 = vmatpush.msra.mxu0 0.0
    %v701 = vand.u32 %v173, 4294901760
    %v702 = vsub.f32 %v173, %v701
    %v703 = vand.u32 %v702, 4294901760
    %v704 = vsub.f32 %v702, %v703
    %v705 = vand.u32 %v704, 4294901760
    %706 = vmatpush.msra.mxu0 %v705
    %v707 = vand.u32 %v172, 4294901760
    %v708 = vsub.f32 %v172, %v707
    %v709 = vand.u32 %v708, 4294901760
    %v710 = vsub.f32 %v708, %v709
    %v711 = vand.u32 %v710, 4294901760
    %712 = vmatpush.msra.mxu0 %v711
    %v713 = vand.u32 %v171, 4294901760
    %v714 = vsub.f32 %v171, %v713
    %v715 = vand.u32 %v714, 4294901760
    %v716 = vsub.f32 %v714, %v715
    %v717 = vand.u32 %v716, 4294901760
    %718 = vmatpush.msra.mxu0 %v717
    %v719 = vand.u32 %v170, 4294901760
    %v720 = vsub.f32 %v170, %v719
    %v721 = vand.u32 %v720, 4294901760
    %v722 = vsub.f32 %v720, %v721
    %v723 = vand.u32 %v722, 4294901760
    %724 = vmatpush.msra.mxu0 %v723
    %v725 = vand.u32 %v658, 4294901760
    %726 = vmatmul.f32.gmra.mxu0 %v725
    %v727 = vpop.f32.mrf.mxu0
    %v728 = vadd.f32 %v687, %v727
    %729 = vdwg.mxu0
    %730 = vmatpush.msra.mxu0 0.0
    %731 = vmatpush.msra.mxu0 0.0
    %732 = vmatpush.msra.mxu0 0.0
    %733 = vmatpush.msra.mxu0 0.0
    %734 = vmatpush.msra.mxu0 0.0
    %735 = vmatpush.msra.mxu0 0.0
    %736 = vmatpush.msra.mxu0 0.0
    %737 = vmatpush.msra.mxu0 0.0
    %738 = vmatpush.msra.mxu0 0.0
    %739 = vmatpush.msra.mxu0 0.0
    %740 = vmatpush.msra.mxu0 0.0
    %741 = vmatpush.msra.mxu0 0.0
    %v742 = vand.u32 %v173, 4294901760
    %v743 = vsub.f32 %v173, %v742
    %744 = vmatpush.msra.mxu0 %v743
    %v745 = vand.u32 %v172, 4294901760
    %v746 = vsub.f32 %v172, %v745
    %747 = vmatpush.msra.mxu0 %v746
    %v748 = vand.u32 %v171, 4294901760
    %v749 = vsub.f32 %v171, %v748
    %750 = vmatpush.msra.mxu0 %v749
    %v751 = vand.u32 %v170, 4294901760
    %v752 = vsub.f32 %v170, %v751
    %753 = vmatpush.msra.mxu0 %v752
    %v754 = vand.u32 %v658, 4294901760
    %v755 = vsub.f32 %v658, %v754
    %756 = vmatmul.f32.gmra.mxu0 %v755
    %v757 = vpop.f32.mrf.mxu0
    %v758 = vadd.f32 %v728, %v757
    %759 = vdwg.mxu0
    %760 = vmatpush.msra.mxu0 0.0
    %761 = vmatpush.msra.mxu0 0.0
    %762 = vmatpush.msra.mxu0 0.0
    %763 = vmatpush.msra.mxu0 0.0
    %764 = vmatpush.msra.mxu0 0.0
    %765 = vmatpush.msra.mxu0 0.0
    %766 = vmatpush.msra.mxu0 0.0
    %767 = vmatpush.msra.mxu0 0.0
    %768 = vmatpush.msra.mxu0 0.0
    %769 = vmatpush.msra.mxu0 0.0
    %770 = vmatpush.msra.mxu0 0.0
    %771 = vmatpush.msra.mxu0 0.0
    %v772 = vand.u32 %v173, 4294901760
    %773 = vmatpush.msra.mxu0 %v772
    %v774 = vand.u32 %v172, 4294901760
    %775 = vmatpush.msra.mxu0 %v774
    %v776 = vand.u32 %v171, 4294901760
    %777 = vmatpush.msra.mxu0 %v776
    %v778 = vand.u32 %v170, 4294901760
    %779 = vmatpush.msra.mxu0 %v778
    %v780 = vand.u32 %v658, 4294901760
    %v781 = vsub.f32 %v658, %v780
    %v782 = vand.u32 %v781, 4294901760
    %783 = vmatmul.f32.gmra.mxu0 %v782
    %v784 = vpop.f32.mrf.mxu0
    %v785 = vadd.f32 %v758, %v784
    %786 = vdwg.mxu0
    %787 = vmatpush.msra.mxu0 0.0
    %788 = vmatpush.msra.mxu0 0.0
    %789 = vmatpush.msra.mxu0 0.0
    %790 = vmatpush.msra.mxu0 0.0
    %791 = vmatpush.msra.mxu0 0.0
    %792 = vmatpush.msra.mxu0 0.0
    %793 = vmatpush.msra.mxu0 0.0
    %794 = vmatpush.msra.mxu0 0.0
    %795 = vmatpush.msra.mxu0 0.0
    %796 = vmatpush.msra.mxu0 0.0
    %797 = vmatpush.msra.mxu0 0.0
    %798 = vmatpush.msra.mxu0 0.0
    %v799 = vand.u32 %v173, 4294901760
    %v800 = vsub.f32 %v173, %v799
    %v801 = vand.u32 %v800, 4294901760
    %802 = vmatpush.msra.mxu0 %v801
    %v803 = vand.u32 %v172, 4294901760
    %v804 = vsub.f32 %v172, %v803
    %v805 = vand.u32 %v804, 4294901760
    %806 = vmatpush.msra.mxu0 %v805
    %v807 = vand.u32 %v171, 4294901760
    %v808 = vsub.f32 %v171, %v807
    %v809 = vand.u32 %v808, 4294901760
    %810 = vmatpush.msra.mxu0 %v809
    %v811 = vand.u32 %v170, 4294901760
    %v812 = vsub.f32 %v170, %v811
    %v813 = vand.u32 %v812, 4294901760
    %814 = vmatpush.msra.mxu0 %v813
    %v815 = vand.u32 %v658, 4294901760
    %816 = vmatmul.f32.gmra.mxu0 %v815
    %v817 = vpop.f32.mrf.mxu0
    %v818 = vadd.f32 %v785, %v817
    %819 = vdwg.mxu0
    %820 = vmatpush.msra.mxu0 0.0
    %821 = vmatpush.msra.mxu0 0.0
    %822 = vmatpush.msra.mxu0 0.0
    %823 = vmatpush.msra.mxu0 0.0
    %824 = vmatpush.msra.mxu0 0.0
    %825 = vmatpush.msra.mxu0 0.0
    %826 = vmatpush.msra.mxu0 0.0
    %827 = vmatpush.msra.mxu0 0.0
    %828 = vmatpush.msra.mxu0 0.0
    %829 = vmatpush.msra.mxu0 0.0
    %830 = vmatpush.msra.mxu0 0.0
    %831 = vmatpush.msra.mxu0 0.0
    %v832 = vand.u32 %v173, 4294901760
    %833 = vmatpush.msra.mxu0 %v832
    %v834 = vand.u32 %v172, 4294901760
    %835 = vmatpush.msra.mxu0 %v834
    %v836 = vand.u32 %v171, 4294901760
    %837 = vmatpush.msra.mxu0 %v836
    %v838 = vand.u32 %v170, 4294901760
    %839 = vmatpush.msra.mxu0 %v838
    %v840 = vand.u32 %v658, 4294901760
    %841 = vmatmul.f32.gmra.mxu0 %v840
    %v842 = vpop.f32.mrf.mxu0
    %v843 = vadd.f32 %v818, %v842
    %844 = vdwg.mxu0
    %v845 = vadd.f32 %v656, %v843
    %v846 = vtanh.pop %v845
    %v847 = vxor.u32 %v845, 2147483648
    %v848 = vmul.f32 %v847, 1.442695
    %v849 = vpow.pop %v848
    %v850 = vadd.f32 %v849, 1.0
    %v851 = vrcp.pop %v850
    %v852 = vmul.f32 %v850, %v851
    %v853 = vsub.f32 1.0, %v852
    %v854 = vmul.f32 %v851, %v853
    %v855 = vadd.f32 %v851, %v854
    %vm856 = vweird.f32 %v850
    %vm857 = vweird.f32 %v851
    %vm858 = vmor %vm856, %vm857
    %v859 = vsel %vm858, %v851, %v855
    %v860 = vand.u32 2147483647, %v850
    %vm861 = vcmp.eq.f32.partialorder %v860, 8.507059e+37
    %v862 = vand.u32 %v850, 2147483648
    %v863 = vor.u32 1.1754944e-38, %v862
    %v864 = vsel %vm861, %v863, %v859
    %v865 = vmul.f32 1.0, %v864
    %v866 = vsel %vm649, %v846, %v865
    %868 = vrot.lane.b32.xlu0 %v653, 32
    %v869 = vpop.permute.xlu0 %868
    %v871 = vmul.f32 %v866, %v869
    %873 = vrot.lane.b32.xlu0 %v866, 64
    %v874 = vpop.permute.xlu0 %873
    %v876 = vmul.f32 %v866, %v874
    %878 = vrot.lane.b32.xlu0 %v876, 32
    %v879 = vpop.permute.xlu0 %878
    %v881 = vadd.f32 %v871, %v879
    %v882 = vtanh.pop %v881
    %884 = vrot.lane.b32.xlu0 %v882, 64
    %v885 = vpop.permute.xlu0 %884
    %v887 = vmul.f32 %v866, %v885
    %v889 = vsel %vm210, %v652, 0
    %891 = vmatpush.msra.mxu0 0.0
    %892 = vmatpush.msra.mxu0 0.0
    %893 = vmatpush.msra.mxu0 0.0
    %894 = vmatpush.msra.mxu0 0.0
    %895 = vmatpush.msra.mxu0 0.0
    %896 = vmatpush.msra.mxu0 0.0
    %897 = vmatpush.msra.mxu0 0.0
    %898 = vmatpush.msra.mxu0 0.0
    %899 = vmatpush.msra.mxu0 0.0
    %900 = vmatpush.msra.mxu0 0.0
    %901 = vmatpush.msra.mxu0 0.0
    %902 = vmatpush.msra.mxu0 0.0
    %v903 = vand.u32 %v181, 4294901760
    %904 = vmatpush.msra.mxu0 %v903
    %v905 = vand.u32 %v180, 4294901760
    %906 = vmatpush.msra.mxu0 %v905
    %v907 = vand.u32 %v179, 4294901760
    %908 = vmatpush.msra.mxu0 %v907
    %v909 = vand.u32 %v178, 4294901760
    %910 = vmatpush.msra.mxu0 %v909
    %v911 = vand.u32 %v889, 4294901760
    %v912 = vsub.f32 %v889, %v911
    %v913 = vand.u32 %v912, 4294901760
    %v914 = vsub.f32 %v912, %v913
    %v915 = vand.u32 %v914, 4294901760
    %916 = vmatmul.f32.gmra.mxu0 %v915
    %v917 = vpop.f32.mrf.mxu0
    %v918 = vadd.f32 0.0, %v917
    %919 = vdwg.mxu0
    %920 = vmatpush.msra.mxu0 0.0
    %921 = vmatpush.msra.mxu0 0.0
    %922 = vmatpush.msra.mxu0 0.0
    %923 = vmatpush.msra.mxu0 0.0
    %924 = vmatpush.msra.mxu0 0.0
    %925 = vmatpush.msra.mxu0 0.0
    %926 = vmatpush.msra.mxu0 0.0
    %927 = vmatpush.msra.mxu0 0.0
    %928 = vmatpush.msra.mxu0 0.0
    %929 = vmatpush.msra.mxu0 0.0
    %930 = vmatpush.msra.mxu0 0.0
    %931 = vmatpush.msra.mxu0 0.0
    %v932 = vand.u32 %v181, 4294901760
    %v933 = vsub.f32 %v181, %v932
    %v934 = vand.u32 %v933, 4294901760
    %v935 = vsub.f32 %v933, %v934
    %v936 = vand.u32 %v935, 4294901760
    %937 = vmatpush.msra.mxu0 %v936
    %v938 = vand.u32 %v180, 4294901760
    %v939 = vsub.f32 %v180, %v938
    %v940 = vand.u32 %v939, 4294901760
    %v941 = vsub.f32 %v939, %v940
    %v942 = vand.u32 %v941, 4294901760
    %943 = vmatpush.msra.mxu0 %v942
    %v944 = vand.u32 %v179, 4294901760
    %v945 = vsub.f32 %v179, %v944
    %v946 = vand.u32 %v945, 4294901760
    %v947 = vsub.f32 %v945, %v946
    %v948 = vand.u32 %v947, 4294901760
    %949 = vmatpush.msra.mxu0 %v948
    %v950 = vand.u32 %v178, 4294901760
    %v951 = vsub.f32 %v178, %v950
    %v952 = vand.u32 %v951, 4294901760
    %v953 = vsub.f32 %v951, %v952
    %v954 = vand.u32 %v953, 4294901760
    %955 = vmatpush.msra.mxu0 %v954
    %v956 = vand.u32 %v889, 4294901760
    %957 = vmatmul.f32.gmra.mxu0 %v956
    %v958 = vpop.f32.mrf.mxu0
    %v959 = vadd.f32 %v918, %v958
    %960 = vdwg.mxu0
    %961 = vmatpush.msra.mxu0 0.0
    %962 = vmatpush.msra.mxu0 0.0
    %963 = vmatpush.msra.mxu0 0.0
    %964 = vmatpush.msra.mxu0 0.0
    %965 = vmatpush.msra.mxu0 0.0
    %966 = vmatpush.msra.mxu0 0.0
    %967 = vmatpush.msra.mxu0 0.0
    %968 = vmatpush.msra.mxu0 0.0
    %969 = vmatpush.msra.mxu0 0.0
    %970 = vmatpush.msra.mxu0 0.0
    %971 = vmatpush.msra.mxu0 0.0
    %972 = vmatpush.msra.mxu0 0.0
    %v973 = vand.u32 %v181, 4294901760
    %v974 = vsub.f32 %v181, %v973
    %975 = vmatpush.msra.mxu0 %v974
    %v976 = vand.u32 %v180, 4294901760
    %v977 = vsub.f32 %v180, %v976
    %978 = vmatpush.msra.mxu0 %v977
    %v979 = vand.u32 %v179, 4294901760
    %v980 = vsub.f32 %v179, %v979
    %981 = vmatpush.msra.mxu0 %v980
    %v982 = vand.u32 %v178, 4294901760
    %v983 = vsub.f32 %v178, %v982
    %984 = vmatpush.msra.mxu0 %v983
    %v985 = vand.u32 %v889, 4294901760
    %v986 = vsub.f32 %v889, %v985
    %987 = vmatmul.f32.gmra.mxu0 %v986
    %v988 = vpop.f32.mrf.mxu0
    %v989 = vadd.f32 %v959, %v988
    %990 = vdwg.mxu0
    %991 = vmatpush.msra.mxu0 0.0
    %992 = vmatpush.msra.mxu0 0.0
    %993 = vmatpush.msra.mxu0 0.0
    %994 = vmatpush.msra.mxu0 0.0
    %995 = vmatpush.msra.mxu0 0.0
    %996 = vmatpush.msra.mxu0 0.0
    %997 = vmatpush.msra.mxu0 0.0
    %998 = vmatpush.msra.mxu0 0.0
    %999 = vmatpush.msra.mxu0 0.0
    %1000 = vmatpush.msra.mxu0 0.0
    %1001 = vmatpush.msra.mxu0 0.0
    %1002 = vmatpush.msra.mxu0 0.0
    %v1003 = vand.u32 %v181, 4294901760
    %1004 = vmatpush.msra.mxu0 %v1003
    %v1005 = vand.u32 %v180, 4294901760
    %1006 = vmatpush.msra.mxu0 %v1005
    %v1007 = vand.u32 %v179, 4294901760
    %1008 = vmatpush.msra.mxu0 %v1007
    %v1009 = vand.u32 %v178, 4294901760
    %1010 = vmatpush.msra.mxu0 %v1009
    %v1011 = vand.u32 %v889, 4294901760
    %v1012 = vsub.f32 %v889, %v1011
    %v1013 = vand.u32 %v1012, 4294901760
    %1014 = vmatmul.f32.gmra.mxu0 %v1013
    %v1015 = vpop.f32.mrf.mxu0
    %v1016 = vadd.f32 %v989, %v1015
    %1017 = vdwg.mxu0
    %1018 = vmatpush.msra.mxu0 0.0
    %1019 = vmatpush.msra.mxu0 0.0
    %1020 = vmatpush.msra.mxu0 0.0
    %1021 = vmatpush.msra.mxu0 0.0
    %1022 = vmatpush.msra.mxu0 0.0
    %1023 = vmatpush.msra.mxu0 0.0
    %1024 = vmatpush.msra.mxu0 0.0
    %1025 = vmatpush.msra.mxu0 0.0
    %1026 = vmatpush.msra.mxu0 0.0
    %1027 = vmatpush.msra.mxu0 0.0
    %1028 = vmatpush.msra.mxu0 0.0
    %1029 = vmatpush.msra.mxu0 0.0
    %v1030 = vand.u32 %v181, 4294901760
    %v1031 = vsub.f32 %v181, %v1030
    %v1032 = vand.u32 %v1031, 4294901760
    %1033 = vmatpush.msra.mxu0 %v1032
    %v1034 = vand.u32 %v180, 4294901760
    %v1035 = vsub.f32 %v180, %v1034
    %v1036 = vand.u32 %v1035, 4294901760
    %1037 = vmatpush.msra.mxu0 %v1036
    %v1038 = vand.u32 %v179, 4294901760
    %v1039 = vsub.f32 %v179, %v1038
    %v1040 = vand.u32 %v1039, 4294901760
    %1041 = vmatpush.msra.mxu0 %v1040
    %v1042 = vand.u32 %v178, 4294901760
    %v1043 = vsub.f32 %v178, %v1042
    %v1044 = vand.u32 %v1043, 4294901760
    %1045 = vmatpush.msra.mxu0 %v1044
    %v1046 = vand.u32 %v889, 4294901760
    %1047 = vmatmul.f32.gmra.mxu0 %v1046
    %v1048 = vpop.f32.mrf.mxu0
    %v1049 = vadd.f32 %v1016, %v1048
    %1050 = vdwg.mxu0
    %1051 = vmatpush.msra.mxu0 0.0
    %1052 = vmatpush.msra.mxu0 0.0
    %1053 = vmatpush.msra.mxu0 0.0
    %1054 = vmatpush.msra.mxu0 0.0
    %1055 = vmatpush.msra.mxu0 0.0
    %1056 = vmatpush.msra.mxu0 0.0
    %1057 = vmatpush.msra.mxu0 0.0
    %1058 = vmatpush.msra.mxu0 0.0
    %1059 = vmatpush.msra.mxu0 0.0
    %1060 = vmatpush.msra.mxu0 0.0
    %1061 = vmatpush.msra.mxu0 0.0
    %1062 = vmatpush.msra.mxu0 0.0
    %v1063 = vand.u32 %v181, 4294901760
    %1064 = vmatpush.msra.mxu0 %v1063
    %v1065 = vand.u32 %v180, 4294901760
    %1066 = vmatpush.msra.mxu0 %v1065
    %v1067 = vand.u32 %v179, 4294901760
    %1068 = vmatpush.msra.mxu0 %v1067
    %v1069 = vand.u32 %v178, 4294901760
    %1070 = vmatpush.msra.mxu0 %v1069
    %v1071 = vand.u32 %v889, 4294901760
    %1072 = vmatmul.f32.gmra.mxu0 %v1071
    %v1073 = vpop.f32.mrf.mxu0
    %v1074 = vadd.f32 %v1049, %v1073
    %1075 = vdwg.mxu0
    %1077 = vrot.lane.b32.xlu0 %v887, 32
    %v1078 = vpop.permute.xlu0 %1077
    %v1079 = vsel %vm210, %v1078, 0
    %1081 = vmatpush.msra.mxu0 0.0
    %1082 = vmatpush.msra.mxu0 0.0
    %1083 = vmatpush.msra.mxu0 0.0
    %1084 = vmatpush.msra.mxu0 0.0
    %1085 = vmatpush.msra.mxu0 0.0
    %1086 = vmatpush.msra.mxu0 0.0
    %1087 = vmatpush.msra.mxu0 0.0
    %1088 = vmatpush.msra.mxu0 0.0
    %1089 = vmatpush.msra.mxu0 0.0
    %1090 = vmatpush.msra.mxu0 0.0
    %1091 = vmatpush.msra.mxu0 0.0
    %1092 = vmatpush.msra.mxu0 0.0
    %v1093 = vand.u32 %v177, 4294901760
    %1094 = vmatpush.msra.mxu0 %v1093
    %v1095 = vand.u32 %v176, 4294901760
    %1096 = vmatpush.msra.mxu0 %v1095
    %v1097 = vand.u32 %v175, 4294901760
    %1098 = vmatpush.msra.mxu0 %v1097
    %v1099 = vand.u32 %v174, 4294901760
    %1100 = vmatpush.msra.mxu0 %v1099
    %v1101 = vand.u32 %v1079, 4294901760
    %v1102 = vsub.f32 %v1079, %v1101
    %v1103 = vand.u32 %v1102, 4294901760
    %v1104 = vsub.f32 %v1102, %v1103
    %v1105 = vand.u32 %v1104, 4294901760
    %1106 = vmatmul.f32.gmra.mxu0 %v1105
    %v1107 = vpop.f32.mrf.mxu0
    %v1108 = vadd.f32 %v1074, %v1107
    %1109 = vdwg.mxu0
    %1110 = vmatpush.msra.mxu0 0.0
    %1111 = vmatpush.msra.mxu0 0.0
    %1112 = vmatpush.msra.mxu0 0.0
    %1113 = vmatpush.msra.mxu0 0.0
    %1114 = vmatpush.msra.mxu0 0.0
    %1115 = vmatpush.msra.mxu0 0.0
    %1116 = vmatpush.msra.mxu0 0.0
    %1117 = vmatpush.msra.mxu0 0.0
    %1118 = vmatpush.msra.mxu0 0.0
    %1119 = vmatpush.msra.mxu0 0.0
    %1120 = vmatpush.msra.mxu0 0.0
    %1121 = vmatpush.msra.mxu0 0.0
    %v1122 = vand.u32 %v177, 4294901760
    %v1123 = vsub.f32 %v177, %v1122
    %v1124 = vand.u32 %v1123, 4294901760
    %v1125 = vsub.f32 %v1123, %v1124
    %v1126 = vand.u32 %v1125, 4294901760
    %1127 = vmatpush.msra.mxu0 %v1126
    %v1128 = vand.u32 %v176, 4294901760
    %v1129 = vsub.f32 %v176, %v1128
    %v1130 = vand.u32 %v1129, 4294901760
    %v1131 = vsub.f32 %v1129, %v1130
    %v1132 = vand.u32 %v1131, 4294901760
    %1133 = vmatpush.msra.mxu0 %v1132
    %v1134 = vand.u32 %v175, 4294901760
    %v1135 = vsub.f32 %v175, %v1134
    %v1136 = vand.u32 %v1135, 4294901760
    %v1137 = vsub.f32 %v1135, %v1136
    %v1138 = vand.u32 %v1137, 4294901760
    %1139 = vmatpush.msra.mxu0 %v1138
    %v1140 = vand.u32 %v174, 4294901760
    %v1141 = vsub.f32 %v174, %v1140
    %v1142 = vand.u32 %v1141, 4294901760
    %v1143 = vsub.f32 %v1141, %v1142
    %v1144 = vand.u32 %v1143, 4294901760
    %1145 = vmatpush.msra.mxu0 %v1144
    %v1146 = vand.u32 %v1079, 4294901760
    %1147 = vmatmul.f32.gmra.mxu0 %v1146
    %v1148 = vpop.f32.mrf.mxu0
    %v1149 = vadd.f32 %v1108, %v1148
    %1150 = vdwg.mxu0
    %1151 = vmatpush.msra.mxu0 0.0
    %1152 = vmatpush.msra.mxu0 0.0
    %1153 = vmatpush.msra.mxu0 0.0
    %1154 = vmatpush.msra.mxu0 0.0
    %1155 = vmatpush.msra.mxu0 0.0
    %1156 = vmatpush.msra.mxu0 0.0
    %1157 = vmatpush.msra.mxu0 0.0
    %1158 = vmatpush.msra.mxu0 0.0
    %1159 = vmatpush.msra.mxu0 0.0
    %1160 = vmatpush.msra.mxu0 0.0
    %1161 = vmatpush.msra.mxu0 0.0
    %1162 = vmatpush.msra.mxu0 0.0
    %v1163 = vand.u32 %v177, 4294901760
    %v1164 = vsub.f32 %v177, %v1163
    %1165 = vmatpush.msra.mxu0 %v1164
    %v1166 = vand.u32 %v176, 4294901760
    %v1167 = vsub.f32 %v176, %v1166
    %1168 = vmatpush.msra.mxu0 %v1167
    %v1169 = vand.u32 %v175, 4294901760
    %v1170 = vsub.f32 %v175, %v1169
    %1171 = vmatpush.msra.mxu0 %v1170
    %v1172 = vand.u32 %v174, 4294901760
    %v1173 = vsub.f32 %v174, %v1172
    %1174 = vmatpush.msra.mxu0 %v1173
    %v1175 = vand.u32 %v1079, 4294901760
    %v1176 = vsub.f32 %v1079, %v1175
    %1177 = vmatmul.f32.gmra.mxu0 %v1176
    %v1178 = vpop.f32.mrf.mxu0
    %v1179 = vadd.f32 %v1149, %v1178
    %1180 = vdwg.mxu0
    %1181 = vmatpush.msra.mxu0 0.0
    %1182 = vmatpush.msra.mxu0 0.0
    %1183 = vmatpush.msra.mxu0 0.0
    %1184 = vmatpush.msra.mxu0 0.0
    %1185 = vmatpush.msra.mxu0 0.0
    %1186 = vmatpush.msra.mxu0 0.0
    %1187 = vmatpush.msra.mxu0 0.0
    %1188 = vmatpush.msra.mxu0 0.0
    %1189 = vmatpush.msra.mxu0 0.0
    %1190 = vmatpush.msra.mxu0 0.0
    %1191 = vmatpush.msra.mxu0 0.0
    %1192 = vmatpush.msra.mxu0 0.0
    %v1193 = vand.u32 %v177, 4294901760
    %1194 = vmatpush.msra.mxu0 %v1193
    %v1195 = vand.u32 %v176, 4294901760
    %1196 = vmatpush.msra.mxu0 %v1195
    %v1197 = vand.u32 %v175, 4294901760
    %1198 = vmatpush.msra.mxu0 %v1197
    %v1199 = vand.u32 %v174, 4294901760
    %1200 = vmatpush.msra.mxu0 %v1199
    %v1201 = vand.u32 %v1079, 4294901760
    %v1202 = vsub.f32 %v1079, %v1201
    %v1203 = vand.u32 %v1202, 4294901760
    %1204 = vmatmul.f32.gmra.mxu0 %v1203
    %v1205 = vpop.f32.mrf.mxu0
    %v1206 = vadd.f32 %v1179, %v1205
    %1207 = vdwg.mxu0
    %1208 = vmatpush.msra.mxu0 0.0
    %1209 = vmatpush.msra.mxu0 0.0
    %1210 = vmatpush.msra.mxu0 0.0
    %1211 = vmatpush.msra.mxu0 0.0
    %1212 = vmatpush.msra.mxu0 0.0
    %1213 = vmatpush.msra.mxu0 0.0
    %1214 = vmatpush.msra.mxu0 0.0
    %1215 = vmatpush.msra.mxu0 0.0
    %1216 = vmatpush.msra.mxu0 0.0
    %1217 = vmatpush.msra.mxu0 0.0
    %1218 = vmatpush.msra.mxu0 0.0
    %1219 = vmatpush.msra.mxu0 0.0
    %v1220 = vand.u32 %v177, 4294901760
    %v1221 = vsub.f32 %v177, %v1220
    %v1222 = vand.u32 %v1221, 4294901760
    %1223 = vmatpush.msra.mxu0 %v1222
    %v1224 = vand.u32 %v176, 4294901760
    %v1225 = vsub.f32 %v176, %v1224
    %v1226 = vand.u32 %v1225, 4294901760
    %1227 = vmatpush.msra.mxu0 %v1226
    %v1228 = vand.u32 %v175, 4294901760
    %v1229 = vsub.f32 %v175, %v1228
    %v1230 = vand.u32 %v1229, 4294901760
    %1231 = vmatpush.msra.mxu0 %v1230
    %v1232 = vand.u32 %v174, 4294901760
    %v1233 = vsub.f32 %v174, %v1232
    %v1234 = vand.u32 %v1233, 4294901760
    %1235 = vmatpush.msra.mxu0 %v1234
    %v1236 = vand.u32 %v1079, 4294901760
    %1237 = vmatmul.f32.gmra.mxu0 %v1236
    %v1238 = vpop.f32.mrf.mxu0
    %v1239 = vadd.f32 %v1206, %v1238
    %1240 = vdwg.mxu0
    %1241 = vmatpush.msra.mxu0 0.0
    %1242 = vmatpush.msra.mxu0 0.0
    %1243 = vmatpush.msra.mxu0 0.0
    %1244 = vmatpush.msra.mxu0 0.0
    %1245 = vmatpush.msra.mxu0 0.0
    %1246 = vmatpush.msra.mxu0 0.0
    %1247 = vmatpush.msra.mxu0 0.0
    %1248 = vmatpush.msra.mxu0 0.0
    %1249 = vmatpush.msra.mxu0 0.0
    %1250 = vmatpush.msra.mxu0 0.0
    %1251 = vmatpush.msra.mxu0 0.0
    %1252 = vmatpush.msra.mxu0 0.0
    %v1253 = vand.u32 %v177, 4294901760
    %1254 = vmatpush.msra.mxu0 %v1253
    %v1255 = vand.u32 %v176, 4294901760
    %1256 = vmatpush.msra.mxu0 %v1255
    %v1257 = vand.u32 %v175, 4294901760
    %1258 = vmatpush.msra.mxu0 %v1257
    %v1259 = vand.u32 %v174, 4294901760
    %1260 = vmatpush.msra.mxu0 %v1259
    %v1261 = vand.u32 %v1079, 4294901760
    %1262 = vmatmul.f32.gmra.mxu0 %v1261
    %v1263 = vpop.f32.mrf.mxu0
    %v1264 = vadd.f32 %v1239, %v1263
    %1265 = vdwg.mxu0
    %v1266 = vadd.f32 %v1264, %v184
    %v1267 = vtanh.pop %v1266
    %v1268 = vxor.u32 %v1266, 2147483648
    %v1269 = vmul.f32 %v1268, 1.442695
    %v1270 = vpow.pop %v1269
    %v1271 = vadd.f32 %v1270, 1.0
    %v1272 = vrcp.pop %v1271
    %v1273 = vmul.f32 %v1271, %v1272
    %v1274 = vsub.f32 1.0, %v1273
    %v1275 = vmul.f32 %v1272, %v1274
    %v1276 = vadd.f32 %v1272, %v1275
    %vm1277 = vweird.f32 %v1271
    %vm1278 = vweird.f32 %v1272
    %vm1279 = vmor %vm1277, %vm1278
    %v1280 = vsel %vm1279, %v1272, %v1276
    %v1281 = vand.u32 2147483647, %v1271
    %vm1282 = vcmp.eq.f32.partialorder %v1281, 8.507059e+37
    %v1283 = vand.u32 %v1271, 2147483648
    %v1284 = vor.u32 1.1754944e-38, %v1283
    %v1285 = vsel %vm1282, %v1284, %v1280
    %v1286 = vmul.f32 1.0, %v1285
    %v1287 = vsel %vm649, %v1267, %v1286
    %1289 = vrot.lane.b32.xlu0 %v655, 32
    %v1290 = vpop.permute.xlu0 %1289
    %v1292 = vmul.f32 %v1287, %v1290
    %1294 = vrot.lane.b32.xlu0 %v1287, 64
    %v1295 = vpop.permute.xlu0 %1294
    %v1297 = vmul.f32 %v1287, %v1295
    %1299 = vrot.lane.b32.xlu0 %v1297, 32
    %v1300 = vpop.permute.xlu0 %1299
    %v1302 = vadd.f32 %v1292, %v1300
    %v1303 = vtanh.pop %v1302
    %1305 = vrot.lane.b32.xlu0 %v1303, 64
    %v1306 = vpop.permute.xlu0 %1305
    %v1308 = vmul.f32 %v1287, %v1306
    %1310 = vrot.lane.b32.xlu0 %v1308, 32
    %v1311 = vpop.permute.xlu0 %1310
    %1313 = vst.msk [vmem:[#allocation17] sm:$0xff] %vm210, %v1311
    %s1314 = scalar_lea.vmem [#allocation2], 8
    %v1315 = vld [vmem:[%s1314] sm:$0xff]
    %1316 = vmatpush.msra.mxu0 0.0
    %1317 = vmatpush.msra.mxu0 0.0
    %1318 = vmatpush.msra.mxu0 0.0
    %1319 = vmatpush.msra.mxu0 0.0
    %1320 = vmatpush.msra.mxu0 0.0
    %1321 = vmatpush.msra.mxu0 0.0
    %1322 = vmatpush.msra.mxu0 0.0
    %1323 = vmatpush.msra.mxu0 0.0
    %1324 = vmatpush.msra.mxu0 0.0
    %1325 = vmatpush.msra.mxu0 0.0
    %1326 = vmatpush.msra.mxu0 0.0
    %1327 = vmatpush.msra.mxu0 0.0
    %v1328 = vand.u32 %v173, 4294901760
    %1329 = vmatpush.msra.mxu0 %v1328
    %v1330 = vand.u32 %v172, 4294901760
    %1331 = vmatpush.msra.mxu0 %v1330
    %v1332 = vand.u32 %v171, 4294901760
    %1333 = vmatpush.msra.mxu0 %v1332
    %v1334 = vand.u32 %v170, 4294901760
    %1335 = vmatpush.msra.mxu0 %v1334
    %v1336 = vand.u32 %v1079, 4294901760
    %v1337 = vsub.f32 %v1079, %v1336
    %v1338 = vand.u32 %v1337, 4294901760
    %v1339 = vsub.f32 %v1337, %v1338
    %v1340 = vand.u32 %v1339, 4294901760
    %1341 = vmatmul.f32.gmra.mxu0 %v1340
    %v1342 = vpop.f32.mrf.mxu0
    %v1343 = vadd.f32 0.0, %v1342
    %1344 = vdwg.mxu0
    %1345 = vmatpush.msra.mxu0 0.0
    %1346 = vmatpush.msra.mxu0 0.0
    %1347 = vmatpush.msra.mxu0 0.0
    %1348 = vmatpush.msra.mxu0 0.0
    %1349 = vmatpush.msra.mxu0 0.0
    %1350 = vmatpush.msra.mxu0 0.0
    %1351 = vmatpush.msra.mxu0 0.0
    %1352 = vmatpush.msra.mxu0 0.0
    %1353 = vmatpush.msra.mxu0 0.0
    %1354 = vmatpush.msra.mxu0 0.0
    %1355 = vmatpush.msra.mxu0 0.0
    %1356 = vmatpush.msra.mxu0 0.0
    %v1357 = vand.u32 %v173, 4294901760
    %v1358 = vsub.f32 %v173, %v1357
    %v1359 = vand.u32 %v1358, 4294901760
    %v1360 = vsub.f32 %v1358, %v1359
    %v1361 = vand.u32 %v1360, 4294901760
    %1362 = vmatpush.msra.mxu0 %v1361
    %v1363 = vand.u32 %v172, 4294901760
    %v1364 = vsub.f32 %v172, %v1363
    %v1365 = vand.u32 %v1364, 4294901760
    %v1366 = vsub.f32 %v1364, %v1365
    %v1367 = vand.u32 %v1366, 4294901760
    %1368 = vmatpush.msra.mxu0 %v1367
    %v1369 = vand.u32 %v171, 4294901760
    %v1370 = vsub.f32 %v171, %v1369
    %v1371 = vand.u32 %v1370, 4294901760
    %v1372 = vsub.f32 %v1370, %v1371
    %v1373 = vand.u32 %v1372, 4294901760
    %1374 = vmatpush.msra.mxu0 %v1373
    %v1375 = vand.u32 %v170, 4294901760
    %v1376 = vsub.f32 %v170, %v1375
    %v1377 = vand.u32 %v1376, 4294901760
    %v1378 = vsub.f32 %v1376, %v1377
    %v1379 = vand.u32 %v1378, 4294901760
    %1380 = vmatpush.msra.mxu0 %v1379
    %v1381 = vand.u32 %v1079, 4294901760
    %1382 = vmatmul.f32.gmra.mxu0 %v1381
    %v1383 = vpop.f32.mrf.mxu0
    %v1384 = vadd.f32 %v1343, %v1383
    %1385 = vdwg.mxu0
    %1386 = vmatpush.msra.mxu0 0.0
    %1387 = vmatpush.msra.mxu0 0.0
    %1388 = vmatpush.msra.mxu0 0.0
    %1389 = vmatpush.msra.mxu0 0.0
    %1390 = vmatpush.msra.mxu0 0.0
    %1391 = vmatpush.msra.mxu0 0.0
    %1392 = vmatpush.msra.mxu0 0.0
    %1393 = vmatpush.msra.mxu0 0.0
    %1394 = vmatpush.msra.mxu0 0.0
    %1395 = vmatpush.msra.mxu0 0.0
    %1396 = vmatpush.msra.mxu0 0.0
    %1397 = vmatpush.msra.mxu0 0.0
    %v1398 = vand.u32 %v173, 4294901760
    %v1399 = vsub.f32 %v173, %v1398
    %1400 = vmatpush.msra.mxu0 %v1399
    %v1401 = vand.u32 %v172, 4294901760
    %v1402 = vsub.f32 %v172, %v1401
    %1403 = vmatpush.msra.mxu0 %v1402
    %v1404 = vand.u32 %v171, 4294901760
    %v1405 = vsub.f32 %v171, %v1404
    %1406 = vmatpush.msra.mxu0 %v1405
    %v1407 = vand.u32 %v170, 4294901760
    %v1408 = vsub.f32 %v170, %v1407
    %1409 = vmatpush.msra.mxu0 %v1408
    %v1410 = vand.u32 %v1079, 4294901760
    %v1411 = vsub.f32 %v1079, %v1410
    %1412 = vmatmul.f32.gmra.mxu0 %v1411
    %v1413 = vpop.f32.mrf.mxu0
    %v1414 = vadd.f32 %v1384, %v1413
    %1415 = vdwg.mxu0
    %1416 = vmatpush.msra.mxu0 0.0
    %1417 = vmatpush.msra.mxu0 0.0
    %1418 = vmatpush.msra.mxu0 0.0
    %1419 = vmatpush.msra.mxu0 0.0
    %1420 = vmatpush.msra.mxu0 0.0
    %1421 = vmatpush.msra.mxu0 0.0
    %1422 = vmatpush.msra.mxu0 0.0
    %1423 = vmatpush.msra.mxu0 0.0
    %1424 = vmatpush.msra.mxu0 0.0
    %1425 = vmatpush.msra.mxu0 0.0
    %1426 = vmatpush.msra.mxu0 0.0
    %1427 = vmatpush.msra.mxu0 0.0
    %v1428 = vand.u32 %v173, 4294901760
    %1429 = vmatpush.msra.mxu0 %v1428
    %v1430 = vand.u32 %v172, 4294901760
    %1431 = vmatpush.msra.mxu0 %v1430
    %v1432 = vand.u32 %v171, 4294901760
    %1433 = vmatpush.msra.mxu0 %v1432
    %v1434 = vand.u32 %v170, 4294901760
    %1435 = vmatpush.msra.mxu0 %v1434
    %v1436 = vand.u32 %v1079, 4294901760
    %v1437 = vsub.f32 %v1079, %v1436
    %v1438 = vand.u32 %v1437, 4294901760
    %1439 = vmatmul.f32.gmra.mxu0 %v1438
    %v1440 = vpop.f32.mrf.mxu0
    %v1441 = vadd.f32 %v1414, %v1440
    %1442 = vdwg.mxu0
    %1443 = vmatpush.msra.mxu0 0.0
    %1444 = vmatpush.msra.mxu0 0.0
    %1445 = vmatpush.msra.mxu0 0.0
    %1446 = vmatpush.msra.mxu0 0.0
    %1447 = vmatpush.msra.mxu0 0.0
    %1448 = vmatpush.msra.mxu0 0.0
    %1449 = vmatpush.msra.mxu0 0.0
    %1450 = vmatpush.msra.mxu0 0.0
    %1451 = vmatpush.msra.mxu0 0.0
    %1452 = vmatpush.msra.mxu0 0.0
    %1453 = vmatpush.msra.mxu0 0.0
    %1454 = vmatpush.msra.mxu0 0.0
    %v1455 = vand.u32 %v173, 4294901760
    %v1456 = vsub.f32 %v173, %v1455
    %v1457 = vand.u32 %v1456, 4294901760
    %1458 = vmatpush.msra.mxu0 %v1457
    %v1459 = vand.u32 %v172, 4294901760
    %v1460 = vsub.f32 %v172, %v1459
    %v1461 = vand.u32 %v1460, 4294901760
    %1462 = vmatpush.msra.mxu0 %v1461
    %v1463 = vand.u32 %v171, 4294901760
    %v1464 = vsub.f32 %v171, %v1463
    %v1465 = vand.u32 %v1464, 4294901760
    %1466 = vmatpush.msra.mxu0 %v1465
    %v1467 = vand.u32 %v170, 4294901760
    %v1468 = vsub.f32 %v170, %v1467
    %v1469 = vand.u32 %v1468, 4294901760
    %1470 = vmatpush.msra.mxu0 %v1469
    %v1471 = vand.u32 %v1079, 4294901760
    %1472 = vmatmul.f32.gmra.mxu0 %v1471
    %v1473 = vpop.f32.mrf.mxu0
    %v1474 = vadd.f32 %v1441, %v1473
    %1475 = vdwg.mxu0
    %1476 = vmatpush.msra.mxu0 0.0
    %1477 = vmatpush.msra.mxu0 0.0
    %1478 = vmatpush.msra.mxu0 0.0
    %1479 = vmatpush.msra.mxu0 0.0
    %1480 = vmatpush.msra.mxu0 0.0
    %1481 = vmatpush.msra.mxu0 0.0
    %1482 = vmatpush.msra.mxu0 0.0
    %1483 = vmatpush.msra.mxu0 0.0
    %1484 = vmatpush.msra.mxu0 0.0
    %1485 = vmatpush.msra.mxu0 0.0
    %1486 = vmatpush.msra.mxu0 0.0
    %1487 = vmatpush.msra.mxu0 0.0
    %v1488 = vand.u32 %v173, 4294901760
    %1489 = vmatpush.msra.mxu0 %v1488
    %v1490 = vand.u32 %v172, 4294901760
    %1491 = vmatpush.msra.mxu0 %v1490
    %v1492 = vand.u32 %v171, 4294901760
    %1493 = vmatpush.msra.mxu0 %v1492
    %v1494 = vand.u32 %v170, 4294901760
    %1495 = vmatpush.msra.mxu0 %v1494
    %v1496 = vand.u32 %v1079, 4294901760
    %1497 = vmatmul.f32.gmra.mxu0 %v1496
    %v1498 = vpop.f32.mrf.mxu0
    %v1499 = vadd.f32 %v1474, %v1498
    %1500 = vdwg.mxu0
    %v1501 = vadd.f32 %v1315, %v1499
    %v1502 = vtanh.pop %v1501
    %v1503 = vxor.u32 %v1501, 2147483648
    %v1504 = vmul.f32 %v1503, 1.442695
    %v1505 = vpow.pop %v1504
    %v1506 = vadd.f32 %v1505, 1.0
    %v1507 = vrcp.pop %v1506
    %v1508 = vmul.f32 %v1506, %v1507
    %v1509 = vsub.f32 1.0, %v1508
    %v1510 = vmul.f32 %v1507, %v1509
    %v1511 = vadd.f32 %v1507, %v1510
    %vm1512 = vweird.f32 %v1506
    %vm1513 = vweird.f32 %v1507
    %vm1514 = vmor %vm1512, %vm1513
    %v1515 = vsel %vm1514, %v1507, %v1511
    %v1516 = vand.u32 2147483647, %v1506
    %vm1517 = vcmp.eq.f32.partialorder %v1516, 8.507059e+37
    %v1518 = vand.u32 %v1506, 2147483648
    %v1519 = vor.u32 1.1754944e-38, %v1518
    %v1520 = vsel %vm1517, %v1519, %v1515
    %v1521 = vmul.f32 1.0, %v1520
    %v1522 = vsel %vm649, %v1502, %v1521
    %v1523 = vmul.f32 %v1522, %v881
    %1525 = vrot.lane.b32.xlu0 %v1522, 64
    %v1526 = vpop.permute.xlu0 %1525
    %v1528 = vmul.f32 %v1522, %v1526
    %1530 = vrot.lane.b32.xlu0 %v1528, 32
    %v1531 = vpop.permute.xlu0 %1530
    %v1533 = vadd.f32 %v1523, %v1531
    %v1534 = vtanh.pop %v1533
    %1536 = vrot.lane.b32.xlu0 %v1534, 64
    %v1537 = vpop.permute.xlu0 %1536
    %v1539 = vmul.f32 %v1522, %v1537
    %v1540 = vsel %vm210, %v1311, 0
    %1542 = vmatpush.msra.mxu0 0.0
    %1543 = vmatpush.msra.mxu0 0.0
    %1544 = vmatpush.msra.mxu0 0.0
    %1545 = vmatpush.msra.mxu0 0.0
    %1546 = vmatpush.msra.mxu0 0.0
    %1547 = vmatpush.msra.mxu0 0.0
    %1548 = vmatpush.msra.mxu0 0.0
    %1549 = vmatpush.msra.mxu0 0.0
    %1550 = vmatpush.msra.mxu0 0.0
    %1551 = vmatpush.msra.mxu0 0.0
    %1552 = vmatpush.msra.mxu0 0.0
    %1553 = vmatpush.msra.mxu0 0.0
    %v1554 = vand.u32 %v181, 4294901760
    %1555 = vmatpush.msra.mxu0 %v1554
    %v1556 = vand.u32 %v180, 4294901760
    %1557 = vmatpush.msra.mxu0 %v1556
    %v1558 = vand.u32 %v179, 4294901760
    %1559 = vmatpush.msra.mxu0 %v1558
    %v1560 = vand.u32 %v178, 4294901760
    %1561 = vmatpush.msra.mxu0 %v1560
    %v1562 = vand.u32 %v1540, 4294901760
    %v1563 = vsub.f32 %v1540, %v1562
    %v1564 = vand.u32 %v1563, 4294901760
    %v1565 = vsub.f32 %v1563, %v1564
    %v1566 = vand.u32 %v1565, 4294901760
    %1567 = vmatmul.f32.gmra.mxu0 %v1566
    %v1568 = vpop.f32.mrf.mxu0
    %v1569 = vadd.f32 0.0, %v1568
    %1570 = vdwg.mxu0
    %1571 = vmatpush.msra.mxu0 0.0
    %1572 = vmatpush.msra.mxu0 0.0
    %1573 = vmatpush.msra.mxu0 0.0
    %1574 = vmatpush.msra.mxu0 0.0
    %1575 = vmatpush.msra.mxu0 0.0
    %1576 = vmatpush.msra.mxu0 0.0
    %1577 = vmatpush.msra.mxu0 0.0
    %1578 = vmatpush.msra.mxu0 0.0
    %1579 = vmatpush.msra.mxu0 0.0
    %1580 = vmatpush.msra.mxu0 0.0
    %1581 = vmatpush.msra.mxu0 0.0
    %1582 = vmatpush.msra.mxu0 0.0
    %v1583 = vand.u32 %v181, 4294901760
    %v1584 = vsub.f32 %v181, %v1583
    %v1585 = vand.u32 %v1584, 4294901760
    %v1586 = vsub.f32 %v1584, %v1585
    %v1587 = vand.u32 %v1586, 4294901760
    %1588 = vmatpush.msra.mxu0 %v1587
    %v1589 = vand.u32 %v180, 4294901760
    %v1590 = vsub.f32 %v180, %v1589
    %v1591 = vand.u32 %v1590, 4294901760
    %v1592 = vsub.f32 %v1590, %v1591
    %v1593 = vand.u32 %v1592, 4294901760
    %1594 = vmatpush.msra.mxu0 %v1593
    %v1595 = vand.u32 %v179, 4294901760
    %v1596 = vsub.f32 %v179, %v1595
    %v1597 = vand.u32 %v1596, 4294901760
    %v1598 = vsub.f32 %v1596, %v1597
    %v1599 = vand.u32 %v1598, 4294901760
    %1600 = vmatpush.msra.mxu0 %v1599
    %v1601 = vand.u32 %v178, 4294901760
    %v1602 = vsub.f32 %v178, %v1601
    %v1603 = vand.u32 %v1602, 4294901760
    %v1604 = vsub.f32 %v1602, %v1603
    %v1605 = vand.u32 %v1604, 4294901760
    %1606 = vmatpush.msra.mxu0 %v1605
    %v1607 = vand.u32 %v1540, 4294901760
    %1608 = vmatmul.f32.gmra.mxu0 %v1607
    %v1609 = vpop.f32.mrf.mxu0
    %v1610 = vadd.f32 %v1569, %v1609
    %1611 = vdwg.mxu0
    %1612 = vmatpush.msra.mxu0 0.0
    %1613 = vmatpush.msra.mxu0 0.0
    %1614 = vmatpush.msra.mxu0 0.0
    %1615 = vmatpush.msra.mxu0 0.0
    %1616 = vmatpush.msra.mxu0 0.0
    %1617 = vmatpush.msra.mxu0 0.0
    %1618 = vmatpush.msra.mxu0 0.0
    %1619 = vmatpush.msra.mxu0 0.0
    %1620 = vmatpush.msra.mxu0 0.0
    %1621 = vmatpush.msra.mxu0 0.0
    %1622 = vmatpush.msra.mxu0 0.0
    %1623 = vmatpush.msra.mxu0 0.0
    %v1624 = vand.u32 %v181, 4294901760
    %v1625 = vsub.f32 %v181, %v1624
    %1626 = vmatpush.msra.mxu0 %v1625
    %v1627 = vand.u32 %v180, 4294901760
    %v1628 = vsub.f32 %v180, %v1627
    %1629 = vmatpush.msra.mxu0 %v1628
    %v1630 = vand.u32 %v179, 4294901760
    %v1631 = vsub.f32 %v179, %v1630
    %1632 = vmatpush.msra.mxu0 %v1631
    %v1633 = vand.u32 %v178, 4294901760
    %v1634 = vsub.f32 %v178, %v1633
    %1635 = vmatpush.msra.mxu0 %v1634
    %v1636 = vand.u32 %v1540, 4294901760
    %v1637 = vsub.f32 %v1540, %v1636
    %1638 = vmatmul.f32.gmra.mxu0 %v1637
    %v1639 = vpop.f32.mrf.mxu0
    %v1640 = vadd.f32 %v1610, %v1639
    %1641 = vdwg.mxu0
    %1642 = vmatpush.msra.mxu0 0.0
    %1643 = vmatpush.msra.mxu0 0.0
    %1644 = vmatpush.msra.mxu0 0.0
    %1645 = vmatpush.msra.mxu0 0.0
    %1646 = vmatpush.msra.mxu0 0.0
    %1647 = vmatpush.msra.mxu0 0.0
    %1648 = vmatpush.msra.mxu0 0.0
    %1649 = vmatpush.msra.mxu0 0.0
    %1650 = vmatpush.msra.mxu0 0.0
    %1651 = vmatpush.msra.mxu0 0.0
    %1652 = vmatpush.msra.mxu0 0.0
    %1653 = vmatpush.msra.mxu0 0.0
    %v1654 = vand.u32 %v181, 4294901760
    %1655 = vmatpush.msra.mxu0 %v1654
    %v1656 = vand.u32 %v180, 4294901760
    %1657 = vmatpush.msra.mxu0 %v1656
    %v1658 = vand.u32 %v179, 4294901760
    %1659 = vmatpush.msra.mxu0 %v1658
    %v1660 = vand.u32 %v178, 4294901760
    %1661 = vmatpush.msra.mxu0 %v1660
    %v1662 = vand.u32 %v1540, 4294901760
    %v1663 = vsub.f32 %v1540, %v1662
    %v1664 = vand.u32 %v1663, 4294901760
    %1665 = vmatmul.f32.gmra.mxu0 %v1664
    %v1666 = vpop.f32.mrf.mxu0
    %v1667 = vadd.f32 %v1640, %v1666
    %1668 = vdwg.mxu0
    %1669 = vmatpush.msra.mxu0 0.0
    %1670 = vmatpush.msra.mxu0 0.0
    %1671 = vmatpush.msra.mxu0 0.0
    %1672 = vmatpush.msra.mxu0 0.0
    %1673 = vmatpush.msra.mxu0 0.0
    %1674 = vmatpush.msra.mxu0 0.0
    %1675 = vmatpush.msra.mxu0 0.0
    %1676 = vmatpush.msra.mxu0 0.0
    %1677 = vmatpush.msra.mxu0 0.0
    %1678 = vmatpush.msra.mxu0 0.0
    %1679 = vmatpush.msra.mxu0 0.0
    %1680 = vmatpush.msra.mxu0 0.0
    %v1681 = vand.u32 %v181, 4294901760
    %v1682 = vsub.f32 %v181, %v1681
    %v1683 = vand.u32 %v1682, 4294901760
    %1684 = vmatpush.msra.mxu0 %v1683
    %v1685 = vand.u32 %v180, 4294901760
    %v1686 = vsub.f32 %v180, %v1685
    %v1687 = vand.u32 %v1686, 4294901760
    %1688 = vmatpush.msra.mxu0 %v1687
    %v1689 = vand.u32 %v179, 4294901760
    %v1690 = vsub.f32 %v179, %v1689
    %v1691 = vand.u32 %v1690, 4294901760
    %1692 = vmatpush.msra.mxu0 %v1691
    %v1693 = vand.u32 %v178, 4294901760
    %v1694 = vsub.f32 %v178, %v1693
    %v1695 = vand.u32 %v1694, 4294901760
    %1696 = vmatpush.msra.mxu0 %v1695
    %v1697 = vand.u32 %v1540, 4294901760
    %1698 = vmatmul.f32.gmra.mxu0 %v1697
    %v1699 = vpop.f32.mrf.mxu0
    %v1700 = vadd.f32 %v1667, %v1699
    %1701 = vdwg.mxu0
    %1702 = vmatpush.msra.mxu0 0.0
    %1703 = vmatpush.msra.mxu0 0.0
    %1704 = vmatpush.msra.mxu0 0.0
    %1705 = vmatpush.msra.mxu0 0.0
    %1706 = vmatpush.msra.mxu0 0.0
    %1707 = vmatpush.msra.mxu0 0.0
    %1708 = vmatpush.msra.mxu0 0.0
    %1709 = vmatpush.msra.mxu0 0.0
    %1710 = vmatpush.msra.mxu0 0.0
    %1711 = vmatpush.msra.mxu0 0.0
    %1712 = vmatpush.msra.mxu0 0.0
    %1713 = vmatpush.msra.mxu0 0.0
    %v1714 = vand.u32 %v181, 4294901760
    %1715 = vmatpush.msra.mxu0 %v1714
    %v1716 = vand.u32 %v180, 4294901760
    %1717 = vmatpush.msra.mxu0 %v1716
    %v1718 = vand.u32 %v179, 4294901760
    %1719 = vmatpush.msra.mxu0 %v1718
    %v1720 = vand.u32 %v178, 4294901760
    %1721 = vmatpush.msra.mxu0 %v1720
    %v1722 = vand.u32 %v1540, 4294901760
    %1723 = vmatmul.f32.gmra.mxu0 %v1722
    %v1724 = vpop.f32.mrf.mxu0
    %v1725 = vadd.f32 %v1700, %v1724
    %1726 = vdwg.mxu0
    %1728 = vrot.lane.b32.xlu0 %v1539, 32
    %v1729 = vpop.permute.xlu0 %1728
    %v1730 = vsel %vm210, %v1729, 0
    %1732 = vmatpush.msra.mxu0 0.0
    %1733 = vmatpush.msra.mxu0 0.0
    %1734 = vmatpush.msra.mxu0 0.0
    %1735 = vmatpush.msra.mxu0 0.0
    %1736 = vmatpush.msra.mxu0 0.0
    %1737 = vmatpush.msra.mxu0 0.0
    %1738 = vmatpush.msra.mxu0 0.0
    %1739 = vmatpush.msra.mxu0 0.0
    %1740 = vmatpush.msra.mxu0 0.0
    %1741 = vmatpush.msra.mxu0 0.0
    %1742 = vmatpush.msra.mxu0 0.0
    %1743 = vmatpush.msra.mxu0 0.0
    %v1744 = vand.u32 %v177, 4294901760
    %1745 = vmatpush.msra.mxu0 %v1744
    %v1746 = vand.u32 %v176, 4294901760
    %1747 = vmatpush.msra.mxu0 %v1746
    %v1748 = vand.u32 %v175, 4294901760
    %1749 = vmatpush.msra.mxu0 %v1748
    %v1750 = vand.u32 %v174, 4294901760
    %1751 = vmatpush.msra.mxu0 %v1750
    %v1752 = vand.u32 %v1730, 4294901760
    %v1753 = vsub.f32 %v1730, %v1752
    %v1754 = vand.u32 %v1753, 4294901760
    %v1755 = vsub.f32 %v1753, %v1754
    %v1756 = vand.u32 %v1755, 4294901760
    %1757 = vmatmul.f32.gmra.mxu0 %v1756
    %v1758 = vpop.f32.mrf.mxu0
    %v1759 = vadd.f32 %v1725, %v1758
    %1760 = vdwg.mxu0
    %1761 = vmatpush.msra.mxu0 0.0
    %1762 = vmatpush.msra.mxu0 0.0
    %1763 = vmatpush.msra.mxu0 0.0
    %1764 = vmatpush.msra.mxu0 0.0
    %1765 = vmatpush.msra.mxu0 0.0
    %1766 = vmatpush.msra.mxu0 0.0
    %1767 = vmatpush.msra.mxu0 0.0
    %1768 = vmatpush.msra.mxu0 0.0
    %1769 = vmatpush.msra.mxu0 0.0
    %1770 = vmatpush.msra.mxu0 0.0
    %1771 = vmatpush.msra.mxu0 0.0
    %1772 = vmatpush.msra.mxu0 0.0
    %v1773 = vand.u32 %v177, 4294901760
    %v1774 = vsub.f32 %v177, %v1773
    %v1775 = vand.u32 %v1774, 4294901760
    %v1776 = vsub.f32 %v1774, %v1775
    %v1777 = vand.u32 %v1776, 4294901760
    %1778 = vmatpush.msra.mxu0 %v1777
    %v1779 = vand.u32 %v176, 4294901760
    %v1780 = vsub.f32 %v176, %v1779
    %v1781 = vand.u32 %v1780, 4294901760
    %v1782 = vsub.f32 %v1780, %v1781
    %v1783 = vand.u32 %v1782, 4294901760
    %1784 = vmatpush.msra.mxu0 %v1783
    %v1785 = vand.u32 %v175, 4294901760
    %v1786 = vsub.f32 %v175, %v1785
    %v1787 = vand.u32 %v1786, 4294901760
    %v1788 = vsub.f32 %v1786, %v1787
    %v1789 = vand.u32 %v1788, 4294901760
    %1790 = vmatpush.msra.mxu0 %v1789
    %v1791 = vand.u32 %v174, 4294901760
    %v1792 = vsub.f32 %v174, %v1791
    %v1793 = vand.u32 %v1792, 4294901760
    %v1794 = vsub.f32 %v1792, %v1793
    %v1795 = vand.u32 %v1794, 4294901760
    %1796 = vmatpush.msra.mxu0 %v1795
    %v1797 = vand.u32 %v1730, 4294901760
    %1798 = vmatmul.f32.gmra.mxu0 %v1797
    %v1799 = vpop.f32.mrf.mxu0
    %v1800 = vadd.f32 %v1759, %v1799
    %1801 = vdwg.mxu0
    %1802 = vmatpush.msra.mxu0 0.0
    %1803 = vmatpush.msra.mxu0 0.0
    %1804 = vmatpush.msra.mxu0 0.0
    %1805 = vmatpush.msra.mxu0 0.0
    %1806 = vmatpush.msra.mxu0 0.0
    %1807 = vmatpush.msra.mxu0 0.0
    %1808 = vmatpush.msra.mxu0 0.0
    %1809 = vmatpush.msra.mxu0 0.0
    %1810 = vmatpush.msra.mxu0 0.0
    %1811 = vmatpush.msra.mxu0 0.0
    %1812 = vmatpush.msra.mxu0 0.0
    %1813 = vmatpush.msra.mxu0 0.0
    %v1814 = vand.u32 %v177, 4294901760
    %v1815 = vsub.f32 %v177, %v1814
    %1816 = vmatpush.msra.mxu0 %v1815
    %v1817 = vand.u32 %v176, 4294901760
    %v1818 = vsub.f32 %v176, %v1817
    %1819 = vmatpush.msra.mxu0 %v1818
    %v1820 = vand.u32 %v175, 4294901760
    %v1821 = vsub.f32 %v175, %v1820
    %1822 = vmatpush.msra.mxu0 %v1821
    %v1823 = vand.u32 %v174, 4294901760
    %v1824 = vsub.f32 %v174, %v1823
    %1825 = vmatpush.msra.mxu0 %v1824
    %v1826 = vand.u32 %v1730, 4294901760
    %v1827 = vsub.f32 %v1730, %v1826
    %1828 = vmatmul.f32.gmra.mxu0 %v1827
    %v1829 = vpop.f32.mrf.mxu0
    %v1830 = vadd.f32 %v1800, %v1829
    %1831 = vdwg.mxu0
    %1832 = vmatpush.msra.mxu0 0.0
    %1833 = vmatpush.msra.mxu0 0.0
    %1834 = vmatpush.msra.mxu0 0.0
    %1835 = vmatpush.msra.mxu0 0.0
    %1836 = vmatpush.msra.mxu0 0.0
    %1837 = vmatpush.msra.mxu0 0.0
    %1838 = vmatpush.msra.mxu0 0.0
    %1839 = vmatpush.msra.mxu0 0.0
    %1840 = vmatpush.msra.mxu0 0.0
    %1841 = vmatpush.msra.mxu0 0.0
    %1842 = vmatpush.msra.mxu0 0.0
    %1843 = vmatpush.msra.mxu0 0.0
    %v1844 = vand.u32 %v177, 4294901760
    %1845 = vmatpush.msra.mxu0 %v1844
    %v1846 = vand.u32 %v176, 4294901760
    %1847 = vmatpush.msra.mxu0 %v1846
    %v1848 = vand.u32 %v175, 4294901760
    %1849 = vmatpush.msra.mxu0 %v1848
    %v1850 = vand.u32 %v174, 4294901760
    %1851 = vmatpush.msra.mxu0 %v1850
    %v1852 = vand.u32 %v1730, 4294901760
    %v1853 = vsub.f32 %v1730, %v1852
    %v1854 = vand.u32 %v1853, 4294901760
    %1855 = vmatmul.f32.gmra.mxu0 %v1854
    %v1856 = vpop.f32.mrf.mxu0
    %v1857 = vadd.f32 %v1830, %v1856
    %1858 = vdwg.mxu0
    %1859 = vmatpush.msra.mxu0 0.0
    %1860 = vmatpush.msra.mxu0 0.0
    %1861 = vmatpush.msra.mxu0 0.0
    %1862 = vmatpush.msra.mxu0 0.0
    %1863 = vmatpush.msra.mxu0 0.0
    %1864 = vmatpush.msra.mxu0 0.0
    %1865 = vmatpush.msra.mxu0 0.0
    %1866 = vmatpush.msra.mxu0 0.0
    %1867 = vmatpush.msra.mxu0 0.0
    %1868 = vmatpush.msra.mxu0 0.0
    %1869 = vmatpush.msra.mxu0 0.0
    %1870 = vmatpush.msra.mxu0 0.0
    %v1871 = vand.u32 %v177, 4294901760
    %v1872 = vsub.f32 %v177, %v1871
    %v1873 = vand.u32 %v1872, 4294901760
    %1874 = vmatpush.msra.mxu0 %v1873
    %v1875 = vand.u32 %v176, 4294901760
    %v1876 = vsub.f32 %v176, %v1875
    %v1877 = vand.u32 %v1876, 4294901760
    %1878 = vmatpush.msra.mxu0 %v1877
    %v1879 = vand.u32 %v175, 4294901760
    %v1880 = vsub.f32 %v175, %v1879
    %v1881 = vand.u32 %v1880, 4294901760
    %1882 = vmatpush.msra.mxu0 %v1881
    %v1883 = vand.u32 %v174, 4294901760
    %v1884 = vsub.f32 %v174, %v1883
    %v1885 = vand.u32 %v1884, 4294901760
    %1886 = vmatpush.msra.mxu0 %v1885
    %v1887 = vand.u32 %v1730, 4294901760
    %1888 = vmatmul.f32.gmra.mxu0 %v1887
    %v1889 = vpop.f32.mrf.mxu0
    %v1890 = vadd.f32 %v1857, %v1889
    %1891 = vdwg.mxu0
    %1892 = vmatpush.msra.mxu0 0.0
    %1893 = vmatpush.msra.mxu0 0.0
    %1894 = vmatpush.msra.mxu0 0.0
    %1895 = vmatpush.msra.mxu0 0.0
    %1896 = vmatpush.msra.mxu0 0.0
    %1897 = vmatpush.msra.mxu0 0.0
    %1898 = vmatpush.msra.mxu0 0.0
    %1899 = vmatpush.msra.mxu0 0.0
    %1900 = vmatpush.msra.mxu0 0.0
    %1901 = vmatpush.msra.mxu0 0.0
    %1902 = vmatpush.msra.mxu0 0.0
    %1903 = vmatpush.msra.mxu0 0.0
    %v1904 = vand.u32 %v177, 4294901760
    %1905 = vmatpush.msra.mxu0 %v1904
    %v1906 = vand.u32 %v176, 4294901760
    %1907 = vmatpush.msra.mxu0 %v1906
    %v1908 = vand.u32 %v175, 4294901760
    %1909 = vmatpush.msra.mxu0 %v1908
    %v1910 = vand.u32 %v174, 4294901760
    %1911 = vmatpush.msra.mxu0 %v1910
    %v1912 = vand.u32 %v1730, 4294901760
    %1913 = vmatmul.f32.gmra.mxu0 %v1912
    %v1914 = vpop.f32.mrf.mxu0
    %v1915 = vadd.f32 %v1890, %v1914
    %1916 = vdwg.mxu0
    %v1917 = vadd.f32 %v1915, %v184
    %v1918 = vtanh.pop %v1917
    %v1919 = vxor.u32 %v1917, 2147483648
    %v1920 = vmul.f32 %v1919, 1.442695
    %v1921 = vpow.pop %v1920
    %v1922 = vadd.f32 %v1921, 1.0
    %v1923 = vrcp.pop %v1922
    %v1924 = vmul.f32 %v1922, %v1923
    %v1925 = vsub.f32 1.0, %v1924
    %v1926 = vmul.f32 %v1923, %v1925
    %v1927 = vadd.f32 %v1923, %v1926
    %vm1928 = vweird.f32 %v1922
    %vm1929 = vweird.f32 %v1923
    %vm1930 = vmor %vm1928, %vm1929
    %v1931 = vsel %vm1930, %v1923, %v1927
    %v1932 = vand.u32 2147483647, %v1922
    %vm1933 = vcmp.eq.f32.partialorder %v1932, 8.507059e+37
    %v1934 = vand.u32 %v1922, 2147483648
    %v1935 = vor.u32 1.1754944e-38, %v1934
    %v1936 = vsel %vm1933, %v1935, %v1931
    %v1937 = vmul.f32 1.0, %v1936
    %v1938 = vsel %vm649, %v1918, %v1937
    %v1939 = vmul.f32 %v1938, %v1302
    %1941 = vrot.lane.b32.xlu0 %v1938, 64
    %v1942 = vpop.permute.xlu0 %1941
    %v1944 = vmul.f32 %v1938, %v1942
    %1946 = vrot.lane.b32.xlu0 %v1944, 32
    %v1947 = vpop.permute.xlu0 %1946
    %v1949 = vadd.f32 %v1939, %v1947
    %v1950 = vtanh.pop %v1949
    %1952 = vrot.lane.b32.xlu0 %v1950, 64
    %v1953 = vpop.permute.xlu0 %1952
    %v1955 = vmul.f32 %v1938, %v1953
    %1957 = vrot.lane.b32.xlu0 %v1955, 32
    %v1958 = vpop.permute.xlu0 %1957
    %s1960 = scalar_lea.vmem [#allocation17], 8
    %1961 = vst.msk [vmem:[%s1960] sm:$0xff] %vm210, %v1958
    %s1962 = scalar_lea.vmem [#allocation2], 16
    %v1963 = vld [vmem:[%s1962] sm:$0xff]
    %1964 = vmatpush.msra.mxu0 0.0
    %1965 = vmatpush.msra.mxu0 0.0
    %1966 = vmatpush.msra.mxu0 0.0
    %1967 = vmatpush.msra.mxu0 0.0
    %1968 = vmatpush.msra.mxu0 0.0
    %1969 = vmatpush.msra.mxu0 0.0
    %1970 = vmatpush.msra.mxu0 0.0
    %1971 = vmatpush.msra.mxu0 0.0
    %1972 = vmatpush.msra.mxu0 0.0
    %1973 = vmatpush.msra.mxu0 0.0
    %1974 = vmatpush.msra.mxu0 0.0
    %1975 = vmatpush.msra.mxu0 0.0
    %v1976 = vand.u32 %v173, 4294901760
    %1977 = vmatpush.msra.mxu0 %v1976
    %v1978 = vand.u32 %v172, 4294901760
    %1979 = vmatpush.msra.mxu0 %v1978
    %v1980 = vand.u32 %v171, 4294901760
    %1981 = vmatpush.msra.mxu0 %v1980
    %v1982 = vand.u32 %v170, 4294901760
    %1983 = vmatpush.msra.mxu0 %v1982
    %v1984 = vand.u32 %v1730, 4294901760
    %v1985 = vsub.f32 %v1730, %v1984
    %v1986 = vand.u32 %v1985, 4294901760
    %v1987 = vsub.f32 %v1985, %v1986
    %v1988 = vand.u32 %v1987, 4294901760
    %1989 = vmatmul.f32.gmra.mxu0 %v1988
    %v1990 = vpop.f32.mrf.mxu0
    %v1991 = vadd.f32 0.0, %v1990
    %1992 = vdwg.mxu0
    %1993 = vmatpush.msra.mxu0 0.0
    %1994 = vmatpush.msra.mxu0 0.0
    %1995 = vmatpush.msra.mxu0 0.0
    %1996 = vmatpush.msra.mxu0 0.0
    %1997 = vmatpush.msra.mxu0 0.0
    %1998 = vmatpush.msra.mxu0 0.0
    %1999 = vmatpush.msra.mxu0 0.0
    %2000 = vmatpush.msra.mxu0 0.0
    %2001 = vmatpush.msra.mxu0 0.0
    %2002 = vmatpush.msra.mxu0 0.0
    %2003 = vmatpush.msra.mxu0 0.0
    %2004 = vmatpush.msra.mxu0 0.0
    %v2005 = vand.u32 %v173, 4294901760
    %v2006 = vsub.f32 %v173, %v2005
    %v2007 = vand.u32 %v2006, 4294901760
    %v2008 = vsub.f32 %v2006, %v2007
    %v2009 = vand.u32 %v2008, 4294901760
    %2010 = vmatpush.msra.mxu0 %v2009
    %v2011 = vand.u32 %v172, 4294901760
    %v2012 = vsub.f32 %v172, %v2011
    %v2013 = vand.u32 %v2012, 4294901760
    %v2014 = vsub.f32 %v2012, %v2013
    %v2015 = vand.u32 %v2014, 4294901760
    %2016 = vmatpush.msra.mxu0 %v2015
    %v2017 = vand.u32 %v171, 4294901760
    %v2018 = vsub.f32 %v171, %v2017
    %v2019 = vand.u32 %v2018, 4294901760
    %v2020 = vsub.f32 %v2018, %v2019
    %v2021 = vand.u32 %v2020, 4294901760
    %2022 = vmatpush.msra.mxu0 %v2021
    %v2023 = vand.u32 %v170, 4294901760
    %v2024 = vsub.f32 %v170, %v2023
    %v2025 = vand.u32 %v2024, 4294901760
    %v2026 = vsub.f32 %v2024, %v2025
    %v2027 = vand.u32 %v2026, 4294901760
    %2028 = vmatpush.msra.mxu0 %v2027
    %v2029 = vand.u32 %v1730, 4294901760
    %2030 = vmatmul.f32.gmra.mxu0 %v2029
    %v2031 = vpop.f32.mrf.mxu0
    %v2032 = vadd.f32 %v1991, %v2031
    %2033 = vdwg.mxu0
    %2034 = vmatpush.msra.mxu0 0.0
    %2035 = vmatpush.msra.mxu0 0.0
    %2036 = vmatpush.msra.mxu0 0.0
    %2037 = vmatpush.msra.mxu0 0.0
    %2038 = vmatpush.msra.mxu0 0.0
    %2039 = vmatpush.msra.mxu0 0.0
    %2040 = vmatpush.msra.mxu0 0.0
    %2041 = vmatpush.msra.mxu0 0.0
    %2042 = vmatpush.msra.mxu0 0.0
    %2043 = vmatpush.msra.mxu0 0.0
    %2044 = vmatpush.msra.mxu0 0.0
    %2045 = vmatpush.msra.mxu0 0.0
    %v2046 = vand.u32 %v173, 4294901760
    %v2047 = vsub.f32 %v173, %v2046
    %2048 = vmatpush.msra.mxu0 %v2047
    %v2049 = vand.u32 %v172, 4294901760
    %v2050 = vsub.f32 %v172, %v2049
    %2051 = vmatpush.msra.mxu0 %v2050
    %v2052 = vand.u32 %v171, 4294901760
    %v2053 = vsub.f32 %v171, %v2052
    %2054 = vmatpush.msra.mxu0 %v2053
    %v2055 = vand.u32 %v170, 4294901760
    %v2056 = vsub.f32 %v170, %v2055
    %2057 = vmatpush.msra.mxu0 %v2056
    %v2058 = vand.u32 %v1730, 4294901760
    %v2059 = vsub.f32 %v1730, %v2058
    %2060 = vmatmul.f32.gmra.mxu0 %v2059
    %v2061 = vpop.f32.mrf.mxu0
    %v2062 = vadd.f32 %v2032, %v2061
    %2063 = vdwg.mxu0
    %2064 = vmatpush.msra.mxu0 0.0
    %2065 = vmatpush.msra.mxu0 0.0
    %2066 = vmatpush.msra.mxu0 0.0
    %2067 = vmatpush.msra.mxu0 0.0
    %2068 = vmatpush.msra.mxu0 0.0
    %2069 = vmatpush.msra.mxu0 0.0
    %2070 = vmatpush.msra.mxu0 0.0
    %2071 = vmatpush.msra.mxu0 0.0
    %2072 = vmatpush.msra.mxu0 0.0
    %2073 = vmatpush.msra.mxu0 0.0
    %2074 = vmatpush.msra.mxu0 0.0
    %2075 = vmatpush.msra.mxu0 0.0
    %v2076 = vand.u32 %v173, 4294901760
    %2077 = vmatpush.msra.mxu0 %v2076
    %v2078 = vand.u32 %v172, 4294901760
    %2079 = vmatpush.msra.mxu0 %v2078
    %v2080 = vand.u32 %v171, 4294901760
    %2081 = vmatpush.msra.mxu0 %v2080
    %v2082 = vand.u32 %v170, 4294901760
    %2083 = vmatpush.msra.mxu0 %v2082
    %v2084 = vand.u32 %v1730, 4294901760
    %v2085 = vsub.f32 %v1730, %v2084
    %v2086 = vand.u32 %v2085, 4294901760
    %2087 = vmatmul.f32.gmra.mxu0 %v2086
    %v2088 = vpop.f32.mrf.mxu0
    %v2089 = vadd.f32 %v2062, %v2088
    %2090 = vdwg.mxu0
    %2091 = vmatpush.msra.mxu0 0.0
    %2092 = vmatpush.msra.mxu0 0.0
    %2093 = vmatpush.msra.mxu0 0.0
    %2094 = vmatpush.msra.mxu0 0.0
    %2095 = vmatpush.msra.mxu0 0.0
    %2096 = vmatpush.msra.mxu0 0.0
    %2097 = vmatpush.msra.mxu0 0.0
    %2098 = vmatpush.msra.mxu0 0.0
    %2099 = vmatpush.msra.mxu0 0.0
    %2100 = vmatpush.msra.mxu0 0.0
    %2101 = vmatpush.msra.mxu0 0.0
    %2102 = vmatpush.msra.mxu0 0.0
    %v2103 = vand.u32 %v173, 4294901760
    %v2104 = vsub.f32 %v173, %v2103
    %v2105 = vand.u32 %v2104, 4294901760
    %2106 = vmatpush.msra.mxu0 %v2105
    %v2107 = vand.u32 %v172, 4294901760
    %v2108 = vsub.f32 %v172, %v2107
    %v2109 = vand.u32 %v2108, 4294901760
    %2110 = vmatpush.msra.mxu0 %v2109
    %v2111 = vand.u32 %v171, 4294901760
    %v2112 = vsub.f32 %v171, %v2111
    %v2113 = vand.u32 %v2112, 4294901760
    %2114 = vmatpush.msra.mxu0 %v2113
    %v2115 = vand.u32 %v170, 4294901760
    %v2116 = vsub.f32 %v170, %v2115
    %v2117 = vand.u32 %v2116, 4294901760
    %2118 = vmatpush.msra.mxu0 %v2117
    %v2119 = vand.u32 %v1730, 4294901760
    %2120 = vmatmul.f32.gmra.mxu0 %v2119
    %v2121 = vpop.f32.mrf.mxu0
    %v2122 = vadd.f32 %v2089, %v2121
    %2123 = vdwg.mxu0
    %2124 = vmatpush.msra.mxu0 0.0
    %2125 = vmatpush.msra.mxu0 0.0
    %2126 = vmatpush.msra.mxu0 0.0
    %2127 = vmatpush.msra.mxu0 0.0
    %2128 = vmatpush.msra.mxu0 0.0
    %2129 = vmatpush.msra.mxu0 0.0
    %2130 = vmatpush.msra.mxu0 0.0
    %2131 = vmatpush.msra.mxu0 0.0
    %2132 = vmatpush.msra.mxu0 0.0
    %2133 = vmatpush.msra.mxu0 0.0
    %2134 = vmatpush.msra.mxu0 0.0
    %2135 = vmatpush.msra.mxu0 0.0
    %v2136 = vand.u32 %v173, 4294901760
    %2137 = vmatpush.msra.mxu0 %v2136
    %v2138 = vand.u32 %v172, 4294901760
    %2139 = vmatpush.msra.mxu0 %v2138
    %v2140 = vand.u32 %v171, 4294901760
    %2141 = vmatpush.msra.mxu0 %v2140
    %v2142 = vand.u32 %v170, 4294901760
    %2143 = vmatpush.msra.mxu0 %v2142
    %v2144 = vand.u32 %v1730, 4294901760
    %2145 = vmatmul.f32.gmra.mxu0 %v2144
    %v2146 = vpop.f32.mrf.mxu0
    %v2147 = vadd.f32 %v2122, %v2146
    %2148 = vdwg.mxu0
    %v2149 = vadd.f32 %v1963, %v2147
    %v2150 = vtanh.pop %v2149
    %v2151 = vxor.u32 %v2149, 2147483648
    %v2152 = vmul.f32 %v2151, 1.442695
    %v2153 = vpow.pop %v2152
    %v2154 = vadd.f32 %v2153, 1.0
    %v2155 = vrcp.pop %v2154
    %v2156 = vmul.f32 %v2154, %v2155
    %v2157 = vsub.f32 1.0, %v2156
    %v2158 = vmul.f32 %v2155, %v2157
    %v2159 = vadd.f32 %v2155, %v2158
    %vm2160 = vweird.f32 %v2154
    %vm2161 = vweird.f32 %v2155
    %vm2162 = vmor %vm2160, %vm2161
    %v2163 = vsel %vm2162, %v2155, %v2159
    %v2164 = vand.u32 2147483647, %v2154
    %vm2165 = vcmp.eq.f32.partialorder %v2164, 8.507059e+37
    %v2166 = vand.u32 %v2154, 2147483648
    %v2167 = vor.u32 1.1754944e-38, %v2166
    %v2168 = vsel %vm2165, %v2167, %v2163
    %v2169 = vmul.f32 1.0, %v2168
    %v2170 = vsel %vm649, %v2150, %v2169
    %v2171 = vmul.f32 %v2170, %v1533
    %2173 = vrot.lane.b32.xlu0 %v2170, 64
    %v2174 = vpop.permute.xlu0 %2173
    %v2176 = vmul.f32 %v2170, %v2174
    %2178 = vrot.lane.b32.xlu0 %v2176, 32
    %v2179 = vpop.permute.xlu0 %2178
    %v2181 = vadd.f32 %v2171, %v2179
    %v2182 = vtanh.pop %v2181
    %2184 = vrot.lane.b32.xlu0 %v2182, 64
    %v2185 = vpop.permute.xlu0 %2184
    %v2187 = vmul.f32 %v2170, %v2185
    %v2188 = vsel %vm210, %v1958, 0
    %2190 = vmatpush.msra.mxu0 0.0
    %2191 = vmatpush.msra.mxu0 0.0
    %2192 = vmatpush.msra.mxu0 0.0
    %2193 = vmatpush.msra.mxu0 0.0
    %2194 = vmatpush.msra.mxu0 0.0
    %2195 = vmatpush.msra.mxu0 0.0
    %2196 = vmatpush.msra.mxu0 0.0
    %2197 = vmatpush.msra.mxu0 0.0
    %2198 = vmatpush.msra.mxu0 0.0
    %2199 = vmatpush.msra.mxu0 0.0
    %2200 = vmatpush.msra.mxu0 0.0
    %2201 = vmatpush.msra.mxu0 0.0
    %v2202 = vand.u32 %v181, 4294901760
    %2203 = vmatpush.msra.mxu0 %v2202
    %v2204 = vand.u32 %v180, 4294901760
    %2205 = vmatpush.msra.mxu0 %v2204
    %v2206 = vand.u32 %v179, 4294901760
    %2207 = vmatpush.msra.mxu0 %v2206
    %v2208 = vand.u32 %v178, 4294901760
    %2209 = vmatpush.msra.mxu0 %v2208
    %v2210 = vand.u32 %v2188, 4294901760
    %v2211 = vsub.f32 %v2188, %v2210
    %v2212 = vand.u32 %v2211, 4294901760
    %v2213 = vsub.f32 %v2211, %v2212
    %v2214 = vand.u32 %v2213, 4294901760
    %2215 = vmatmul.f32.gmra.mxu0 %v2214
    %v2216 = vpop.f32.mrf.mxu0
    %v2217 = vadd.f32 0.0, %v2216
    %2218 = vdwg.mxu0
    %2219 = vmatpush.msra.mxu0 0.0
    %2220 = vmatpush.msra.mxu0 0.0
    %2221 = vmatpush.msra.mxu0 0.0
    %2222 = vmatpush.msra.mxu0 0.0
    %2223 = vmatpush.msra.mxu0 0.0
    %2224 = vmatpush.msra.mxu0 0.0
    %2225 = vmatpush.msra.mxu0 0.0
    %2226 = vmatpush.msra.mxu0 0.0
    %2227 = vmatpush.msra.mxu0 0.0
    %2228 = vmatpush.msra.mxu0 0.0
    %2229 = vmatpush.msra.mxu0 0.0
    %2230 = vmatpush.msra.mxu0 0.0
    %v2231 = vand.u32 %v181, 4294901760
    %v2232 = vsub.f32 %v181, %v2231
    %v2233 = vand.u32 %v2232, 4294901760
    %v2234 = vsub.f32 %v2232, %v2233
    %v2235 = vand.u32 %v2234, 4294901760
    %2236 = vmatpush.msra.mxu0 %v2235
    %v2237 = vand.u32 %v180, 4294901760
    %v2238 = vsub.f32 %v180, %v2237
    %v2239 = vand.u32 %v2238, 4294901760
    %v2240 = vsub.f32 %v2238, %v2239
    %v2241 = vand.u32 %v2240, 4294901760
    %2242 = vmatpush.msra.mxu0 %v2241
    %v2243 = vand.u32 %v179, 4294901760
    %v2244 = vsub.f32 %v179, %v2243
    %v2245 = vand.u32 %v2244, 4294901760
    %v2246 = vsub.f32 %v2244, %v2245
    %v2247 = vand.u32 %v2246, 4294901760
    %2248 = vmatpush.msra.mxu0 %v2247
    %v2249 = vand.u32 %v178, 4294901760
    %v2250 = vsub.f32 %v178, %v2249
    %v2251 = vand.u32 %v2250, 4294901760
    %v2252 = vsub.f32 %v2250, %v2251
    %v2253 = vand.u32 %v2252, 4294901760
    %2254 = vmatpush.msra.mxu0 %v2253
    %v2255 = vand.u32 %v2188, 4294901760
    %2256 = vmatmul.f32.gmra.mxu0 %v2255
    %v2257 = vpop.f32.mrf.mxu0
    %v2258 = vadd.f32 %v2217, %v2257
    %2259 = vdwg.mxu0
    %2260 = vmatpush.msra.mxu0 0.0
    %2261 = vmatpush.msra.mxu0 0.0
    %2262 = vmatpush.msra.mxu0 0.0
    %2263 = vmatpush.msra.mxu0 0.0
    %2264 = vmatpush.msra.mxu0 0.0
    %2265 = vmatpush.msra.mxu0 0.0
    %2266 = vmatpush.msra.mxu0 0.0
    %2267 = vmatpush.msra.mxu0 0.0
    %2268 = vmatpush.msra.mxu0 0.0
    %2269 = vmatpush.msra.mxu0 0.0
    %2270 = vmatpush.msra.mxu0 0.0
    %2271 = vmatpush.msra.mxu0 0.0
    %v2272 = vand.u32 %v181, 4294901760
    %v2273 = vsub.f32 %v181, %v2272
    %2274 = vmatpush.msra.mxu0 %v2273
    %v2275 = vand.u32 %v180, 4294901760
    %v2276 = vsub.f32 %v180, %v2275
    %2277 = vmatpush.msra.mxu0 %v2276
    %v2278 = vand.u32 %v179, 4294901760
    %v2279 = vsub.f32 %v179, %v2278
    %2280 = vmatpush.msra.mxu0 %v2279
    %v2281 = vand.u32 %v178, 4294901760
    %v2282 = vsub.f32 %v178, %v2281
    %2283 = vmatpush.msra.mxu0 %v2282
    %v2284 = vand.u32 %v2188, 4294901760
    %v2285 = vsub.f32 %v2188, %v2284
    %2286 = vmatmul.f32.gmra.mxu0 %v2285
    %v2287 = vpop.f32.mrf.mxu0
    %v2288 = vadd.f32 %v2258, %v2287
    %2289 = vdwg.mxu0
    %2290 = vmatpush.msra.mxu0 0.0
    %2291 = vmatpush.msra.mxu0 0.0
    %2292 = vmatpush.msra.mxu0 0.0
    %2293 = vmatpush.msra.mxu0 0.0
    %2294 = vmatpush.msra.mxu0 0.0
    %2295 = vmatpush.msra.mxu0 0.0
    %2296 = vmatpush.msra.mxu0 0.0
    %2297 = vmatpush.msra.mxu0 0.0
    %2298 = vmatpush.msra.mxu0 0.0
    %2299 = vmatpush.msra.mxu0 0.0
    %2300 = vmatpush.msra.mxu0 0.0
    %2301 = vmatpush.msra.mxu0 0.0
    %v2302 = vand.u32 %v181, 4294901760
    %2303 = vmatpush.msra.mxu0 %v2302
    %v2304 = vand.u32 %v180, 4294901760
    %2305 = vmatpush.msra.mxu0 %v2304
    %v2306 = vand.u32 %v179, 4294901760
    %2307 = vmatpush.msra.mxu0 %v2306
    %v2308 = vand.u32 %v178, 4294901760
    %2309 = vmatpush.msra.mxu0 %v2308
    %v2310 = vand.u32 %v2188, 4294901760
    %v2311 = vsub.f32 %v2188, %v2310
    %v2312 = vand.u32 %v2311, 4294901760
    %2313 = vmatmul.f32.gmra.mxu0 %v2312
    %v2314 = vpop.f32.mrf.mxu0
    %v2315 = vadd.f32 %v2288, %v2314
    %2316 = vdwg.mxu0
    %2317 = vmatpush.msra.mxu0 0.0
    %2318 = vmatpush.msra.mxu0 0.0
    %2319 = vmatpush.msra.mxu0 0.0
    %2320 = vmatpush.msra.mxu0 0.0
    %2321 = vmatpush.msra.mxu0 0.0
    %2322 = vmatpush.msra.mxu0 0.0
    %2323 = vmatpush.msra.mxu0 0.0
    %2324 = vmatpush.msra.mxu0 0.0
    %2325 = vmatpush.msra.mxu0 0.0
    %2326 = vmatpush.msra.mxu0 0.0
    %2327 = vmatpush.msra.mxu0 0.0
    %2328 = vmatpush.msra.mxu0 0.0
    %v2329 = vand.u32 %v181, 4294901760
    %v2330 = vsub.f32 %v181, %v2329
    %v2331 = vand.u32 %v2330, 4294901760
    %2332 = vmatpush.msra.mxu0 %v2331
    %v2333 = vand.u32 %v180, 4294901760
    %v2334 = vsub.f32 %v180, %v2333
    %v2335 = vand.u32 %v2334, 4294901760
    %2336 = vmatpush.msra.mxu0 %v2335
    %v2337 = vand.u32 %v179, 4294901760
    %v2338 = vsub.f32 %v179, %v2337
    %v2339 = vand.u32 %v2338, 4294901760
    %2340 = vmatpush.msra.mxu0 %v2339
    %v2341 = vand.u32 %v178, 4294901760
    %v2342 = vsub.f32 %v178, %v2341
    %v2343 = vand.u32 %v2342, 4294901760
    %2344 = vmatpush.msra.mxu0 %v2343
    %v2345 = vand.u32 %v2188, 4294901760
    %2346 = vmatmul.f32.gmra.mxu0 %v2345
    %v2347 = vpop.f32.mrf.mxu0
    %v2348 = vadd.f32 %v2315, %v2347
    %2349 = vdwg.mxu0
    %2350 = vmatpush.msra.mxu0 0.0
    %2351 = vmatpush.msra.mxu0 0.0
    %2352 = vmatpush.msra.mxu0 0.0
    %2353 = vmatpush.msra.mxu0 0.0
    %2354 = vmatpush.msra.mxu0 0.0
    %2355 = vmatpush.msra.mxu0 0.0
    %2356 = vmatpush.msra.mxu0 0.0
    %2357 = vmatpush.msra.mxu0 0.0
    %2358 = vmatpush.msra.mxu0 0.0
    %2359 = vmatpush.msra.mxu0 0.0
    %2360 = vmatpush.msra.mxu0 0.0
    %2361 = vmatpush.msra.mxu0 0.0
    %v2362 = vand.u32 %v181, 4294901760
    %2363 = vmatpush.msra.mxu0 %v2362
    %v2364 = vand.u32 %v180, 4294901760
    %2365 = vmatpush.msra.mxu0 %v2364
    %v2366 = vand.u32 %v179, 4294901760
    %2367 = vmatpush.msra.mxu0 %v2366
    %v2368 = vand.u32 %v178, 4294901760
    %2369 = vmatpush.msra.mxu0 %v2368
    %v2370 = vand.u32 %v2188, 4294901760
    %2371 = vmatmul.f32.gmra.mxu0 %v2370
    %v2372 = vpop.f32.mrf.mxu0
    %v2373 = vadd.f32 %v2348, %v2372
    %2374 = vdwg.mxu0
    %2376 = vrot.lane.b32.xlu0 %v2187, 32
    %v2377 = vpop.permute.xlu0 %2376
    %v2378 = vsel %vm210, %v2377, 0
    %2380 = vmatpush.msra.mxu0 0.0
    %2381 = vmatpush.msra.mxu0 0.0
    %2382 = vmatpush.msra.mxu0 0.0
    %2383 = vmatpush.msra.mxu0 0.0
    %2384 = vmatpush.msra.mxu0 0.0
    %2385 = vmatpush.msra.mxu0 0.0
    %2386 = vmatpush.msra.mxu0 0.0
    %2387 = vmatpush.msra.mxu0 0.0
    %2388 = vmatpush.msra.mxu0 0.0
    %2389 = vmatpush.msra.mxu0 0.0
    %2390 = vmatpush.msra.mxu0 0.0
    %2391 = vmatpush.msra.mxu0 0.0
    %v2392 = vand.u32 %v177, 4294901760
    %2393 = vmatpush.msra.mxu0 %v2392
    %v2394 = vand.u32 %v176, 4294901760
    %2395 = vmatpush.msra.mxu0 %v2394
    %v2396 = vand.u32 %v175, 4294901760
    %2397 = vmatpush.msra.mxu0 %v2396
    %v2398 = vand.u32 %v174, 4294901760
    %2399 = vmatpush.msra.mxu0 %v2398
    %v2400 = vand.u32 %v2378, 4294901760
    %v2401 = vsub.f32 %v2378, %v2400
    %v2402 = vand.u32 %v2401, 4294901760
    %v2403 = vsub.f32 %v2401, %v2402
    %v2404 = vand.u32 %v2403, 4294901760
    %2405 = vmatmul.f32.gmra.mxu0 %v2404
    %v2406 = vpop.f32.mrf.mxu0
    %v2407 = vadd.f32 %v2373, %v2406
    %2408 = vdwg.mxu0
    %2409 = vmatpush.msra.mxu0 0.0
    %2410 = vmatpush.msra.mxu0 0.0
    %2411 = vmatpush.msra.mxu0 0.0
    %2412 = vmatpush.msra.mxu0 0.0
    %2413 = vmatpush.msra.mxu0 0.0
    %2414 = vmatpush.msra.mxu0 0.0
    %2415 = vmatpush.msra.mxu0 0.0
    %2416 = vmatpush.msra.mxu0 0.0
    %2417 = vmatpush.msra.mxu0 0.0
    %2418 = vmatpush.msra.mxu0 0.0
    %2419 = vmatpush.msra.mxu0 0.0
    %2420 = vmatpush.msra.mxu0 0.0
    %v2421 = vand.u32 %v177, 4294901760
    %v2422 = vsub.f32 %v177, %v2421
    %v2423 = vand.u32 %v2422, 4294901760
    %v2424 = vsub.f32 %v2422, %v2423
    %v2425 = vand.u32 %v2424, 4294901760
    %2426 = vmatpush.msra.mxu0 %v2425
    %v2427 = vand.u32 %v176, 4294901760
    %v2428 = vsub.f32 %v176, %v2427
    %v2429 = vand.u32 %v2428, 4294901760
    %v2430 = vsub.f32 %v2428, %v2429
    %v2431 = vand.u32 %v2430, 4294901760
    %2432 = vmatpush.msra.mxu0 %v2431
    %v2433 = vand.u32 %v175, 4294901760
    %v2434 = vsub.f32 %v175, %v2433
    %v2435 = vand.u32 %v2434, 4294901760
    %v2436 = vsub.f32 %v2434, %v2435
    %v2437 = vand.u32 %v2436, 4294901760
    %2438 = vmatpush.msra.mxu0 %v2437
    %v2439 = vand.u32 %v174, 4294901760
    %v2440 = vsub.f32 %v174, %v2439
    %v2441 = vand.u32 %v2440, 4294901760
    %v2442 = vsub.f32 %v2440, %v2441
    %v2443 = vand.u32 %v2442, 4294901760
    %2444 = vmatpush.msra.mxu0 %v2443
    %v2445 = vand.u32 %v2378, 4294901760
    %2446 = vmatmul.f32.gmra.mxu0 %v2445
    %v2447 = vpop.f32.mrf.mxu0
    %v2448 = vadd.f32 %v2407, %v2447
    %2449 = vdwg.mxu0
    %2450 = vmatpush.msra.mxu0 0.0
    %2451 = vmatpush.msra.mxu0 0.0
    %2452 = vmatpush.msra.mxu0 0.0
    %2453 = vmatpush.msra.mxu0 0.0
    %2454 = vmatpush.msra.mxu0 0.0
    %2455 = vmatpush.msra.mxu0 0.0
    %2456 = vmatpush.msra.mxu0 0.0
    %2457 = vmatpush.msra.mxu0 0.0
    %2458 = vmatpush.msra.mxu0 0.0
    %2459 = vmatpush.msra.mxu0 0.0
    %2460 = vmatpush.msra.mxu0 0.0
    %2461 = vmatpush.msra.mxu0 0.0
    %v2462 = vand.u32 %v177, 4294901760
    %v2463 = vsub.f32 %v177, %v2462
    %2464 = vmatpush.msra.mxu0 %v2463
    %v2465 = vand.u32 %v176, 4294901760
    %v2466 = vsub.f32 %v176, %v2465
    %2467 = vmatpush.msra.mxu0 %v2466
    %v2468 = vand.u32 %v175, 4294901760
    %v2469 = vsub.f32 %v175, %v2468
    %2470 = vmatpush.msra.mxu0 %v2469
    %v2471 = vand.u32 %v174, 4294901760
    %v2472 = vsub.f32 %v174, %v2471
    %2473 = vmatpush.msra.mxu0 %v2472
    %v2474 = vand.u32 %v2378, 4294901760
    %v2475 = vsub.f32 %v2378, %v2474
    %2476 = vmatmul.f32.gmra.mxu0 %v2475
    %v2477 = vpop.f32.mrf.mxu0
    %v2478 = vadd.f32 %v2448, %v2477
    %2479 = vdwg.mxu0
    %2480 = vmatpush.msra.mxu0 0.0
    %2481 = vmatpush.msra.mxu0 0.0
    %2482 = vmatpush.msra.mxu0 0.0
    %2483 = vmatpush.msra.mxu0 0.0
    %2484 = vmatpush.msra.mxu0 0.0
    %2485 = vmatpush.msra.mxu0 0.0
    %2486 = vmatpush.msra.mxu0 0.0
    %2487 = vmatpush.msra.mxu0 0.0
    %2488 = vmatpush.msra.mxu0 0.0
    %2489 = vmatpush.msra.mxu0 0.0
    %2490 = vmatpush.msra.mxu0 0.0
    %2491 = vmatpush.msra.mxu0 0.0
    %v2492 = vand.u32 %v177, 4294901760
    %2493 = vmatpush.msra.mxu0 %v2492
    %v2494 = vand.u32 %v176, 4294901760
    %2495 = vmatpush.msra.mxu0 %v2494
    %v2496 = vand.u32 %v175, 4294901760
    %2497 = vmatpush.msra.mxu0 %v2496
    %v2498 = vand.u32 %v174, 4294901760
    %2499 = vmatpush.msra.mxu0 %v2498
    %v2500 = vand.u32 %v2378, 4294901760
    %v2501 = vsub.f32 %v2378, %v2500
    %v2502 = vand.u32 %v2501, 4294901760
    %2503 = vmatmul.f32.gmra.mxu0 %v2502
    %v2504 = vpop.f32.mrf.mxu0
    %v2505 = vadd.f32 %v2478, %v2504
    %2506 = vdwg.mxu0
    %2507 = vmatpush.msra.mxu0 0.0
    %2508 = vmatpush.msra.mxu0 0.0
    %2509 = vmatpush.msra.mxu0 0.0
    %2510 = vmatpush.msra.mxu0 0.0
    %2511 = vmatpush.msra.mxu0 0.0
    %2512 = vmatpush.msra.mxu0 0.0
    %2513 = vmatpush.msra.mxu0 0.0
    %2514 = vmatpush.msra.mxu0 0.0
    %2515 = vmatpush.msra.mxu0 0.0
    %2516 = vmatpush.msra.mxu0 0.0
    %2517 = vmatpush.msra.mxu0 0.0
    %2518 = vmatpush.msra.mxu0 0.0
    %v2519 = vand.u32 %v177, 4294901760
    %v2520 = vsub.f32 %v177, %v2519
    %v2521 = vand.u32 %v2520, 4294901760
    %2522 = vmatpush.msra.mxu0 %v2521
    %v2523 = vand.u32 %v176, 4294901760
    %v2524 = vsub.f32 %v176, %v2523
    %v2525 = vand.u32 %v2524, 4294901760
    %2526 = vmatpush.msra.mxu0 %v2525
    %v2527 = vand.u32 %v175, 4294901760
    %v2528 = vsub.f32 %v175, %v2527
    %v2529 = vand.u32 %v2528, 4294901760
    %2530 = vmatpush.msra.mxu0 %v2529
    %v2531 = vand.u32 %v174, 4294901760
    %v2532 = vsub.f32 %v174, %v2531
    %v2533 = vand.u32 %v2532, 4294901760
    %2534 = vmatpush.msra.mxu0 %v2533
    %v2535 = vand.u32 %v2378, 4294901760
    %2536 = vmatmul.f32.gmra.mxu0 %v2535
    %v2537 = vpop.f32.mrf.mxu0
    %v2538 = vadd.f32 %v2505, %v2537
    %2539 = vdwg.mxu0
    %2540 = vmatpush.msra.mxu0 0.0
    %2541 = vmatpush.msra.mxu0 0.0
    %2542 = vmatpush.msra.mxu0 0.0
    %2543 = vmatpush.msra.mxu0 0.0
    %2544 = vmatpush.msra.mxu0 0.0
    %2545 = vmatpush.msra.mxu0 0.0
    %2546 = vmatpush.msra.mxu0 0.0
    %2547 = vmatpush.msra.mxu0 0.0
    %2548 = vmatpush.msra.mxu0 0.0
    %2549 = vmatpush.msra.mxu0 0.0
    %2550 = vmatpush.msra.mxu0 0.0
    %2551 = vmatpush.msra.mxu0 0.0
    %v2552 = vand.u32 %v177, 4294901760
    %2553 = vmatpush.msra.mxu0 %v2552
    %v2554 = vand.u32 %v176, 4294901760
    %2555 = vmatpush.msra.mxu0 %v2554
    %v2556 = vand.u32 %v175, 4294901760
    %2557 = vmatpush.msra.mxu0 %v2556
    %v2558 = vand.u32 %v174, 4294901760
    %2559 = vmatpush.msra.mxu0 %v2558
    %v2560 = vand.u32 %v2378, 4294901760
    %2561 = vmatmul.f32.gmra.mxu0 %v2560
    %v2562 = vpop.f32.mrf.mxu0
    %v2563 = vadd.f32 %v2538, %v2562
    %2564 = vdwg.mxu0
    %v2565 = vadd.f32 %v2563, %v184
    %v2566 = vtanh.pop %v2565
    %v2567 = vxor.u32 %v2565, 2147483648
    %v2568 = vmul.f32 %v2567, 1.442695
    %v2569 = vpow.pop %v2568
    %v2570 = vadd.f32 %v2569, 1.0
    %v2571 = vrcp.pop %v2570
    %v2572 = vmul.f32 %v2570, %v2571
    %v2573 = vsub.f32 1.0, %v2572
    %v2574 = vmul.f32 %v2571, %v2573
    %v2575 = vadd.f32 %v2571, %v2574
    %vm2576 = vweird.f32 %v2570
    %vm2577 = vweird.f32 %v2571
    %vm2578 = vmor %vm2576, %vm2577
    %v2579 = vsel %vm2578, %v2571, %v2575
    %v2580 = vand.u32 2147483647, %v2570
    %vm2581 = vcmp.eq.f32.partialorder %v2580, 8.507059e+37
    %v2582 = vand.u32 %v2570, 2147483648
    %v2583 = vor.u32 1.1754944e-38, %v2582
    %v2584 = vsel %vm2581, %v2583, %v2579
    %v2585 = vmul.f32 1.0, %v2584
    %v2586 = vsel %vm649, %v2566, %v2585
    %v2587 = vmul.f32 %v2586, %v1949
    %2589 = vrot.lane.b32.xlu0 %v2586, 64
    %v2590 = vpop.permute.xlu0 %2589
    %v2592 = vmul.f32 %v2586, %v2590
    %2594 = vrot.lane.b32.xlu0 %v2592, 32
    %v2595 = vpop.permute.xlu0 %2594
    %v2597 = vadd.f32 %v2587, %v2595
    %v2598 = vtanh.pop %v2597
    %2600 = vrot.lane.b32.xlu0 %v2598, 64
    %v2601 = vpop.permute.xlu0 %2600
    %v2603 = vmul.f32 %v2586, %v2601
    %2605 = vrot.lane.b32.xlu0 %v2603, 32
    %v2606 = vpop.permute.xlu0 %2605
    %s2608 = scalar_lea.vmem [#allocation17], 16
    %2609 = vst.msk [vmem:[%s2608] sm:$0xff] %vm210, %v2606
    %s2610 = scalar_lea.vmem [#allocation2], 24
    %v2611 = vld [vmem:[%s2610] sm:$0xff]
    %2612 = vmatpush.msra.mxu0 0.0
    %2613 = vmatpush.msra.mxu0 0.0
    %2614 = vmatpush.msra.mxu0 0.0
    %2615 = vmatpush.msra.mxu0 0.0
    %2616 = vmatpush.msra.mxu0 0.0
    %2617 = vmatpush.msra.mxu0 0.0
    %2618 = vmatpush.msra.mxu0 0.0
    %2619 = vmatpush.msra.mxu0 0.0
    %2620 = vmatpush.msra.mxu0 0.0
    %2621 = vmatpush.msra.mxu0 0.0
    %2622 = vmatpush.msra.mxu0 0.0
    %2623 = vmatpush.msra.mxu0 0.0
    %v2624 = vand.u32 %v173, 4294901760
    %2625 = vmatpush.msra.mxu0 %v2624
    %v2626 = vand.u32 %v172, 4294901760
    %2627 = vmatpush.msra.mxu0 %v2626
    %v2628 = vand.u32 %v171, 4294901760
    %2629 = vmatpush.msra.mxu0 %v2628
    %v2630 = vand.u32 %v170, 4294901760
    %2631 = vmatpush.msra.mxu0 %v2630
    %v2632 = vand.u32 %v2378, 4294901760
    %v2633 = vsub.f32 %v2378, %v2632
    %v2634 = vand.u32 %v2633, 4294901760
    %v2635 = vsub.f32 %v2633, %v2634
    %v2636 = vand.u32 %v2635, 4294901760
    %2637 = vmatmul.f32.gmra.mxu0 %v2636
    %v2638 = vpop.f32.mrf.mxu0
    %v2639 = vadd.f32 0.0, %v2638
    %2640 = vdwg.mxu0
    %2641 = vmatpush.msra.mxu0 0.0
    %2642 = vmatpush.msra.mxu0 0.0
    %2643 = vmatpush.msra.mxu0 0.0
    %2644 = vmatpush.msra.mxu0 0.0
    %2645 = vmatpush.msra.mxu0 0.0
    %2646 = vmatpush.msra.mxu0 0.0
    %2647 = vmatpush.msra.mxu0 0.0
    %2648 = vmatpush.msra.mxu0 0.0
    %2649 = vmatpush.msra.mxu0 0.0
    %2650 = vmatpush.msra.mxu0 0.0
    %2651 = vmatpush.msra.mxu0 0.0
    %2652 = vmatpush.msra.mxu0 0.0
    %v2653 = vand.u32 %v173, 4294901760
    %v2654 = vsub.f32 %v173, %v2653
    %v2655 = vand.u32 %v2654, 4294901760
    %v2656 = vsub.f32 %v2654, %v2655
    %v2657 = vand.u32 %v2656, 4294901760
    %2658 = vmatpush.msra.mxu0 %v2657
    %v2659 = vand.u32 %v172, 4294901760
    %v2660 = vsub.f32 %v172, %v2659
    %v2661 = vand.u32 %v2660, 4294901760
    %v2662 = vsub.f32 %v2660, %v2661
    %v2663 = vand.u32 %v2662, 4294901760
    %2664 = vmatpush.msra.mxu0 %v2663
    %v2665 = vand.u32 %v171, 4294901760
    %v2666 = vsub.f32 %v171, %v2665
    %v2667 = vand.u32 %v2666, 4294901760
    %v2668 = vsub.f32 %v2666, %v2667
    %v2669 = vand.u32 %v2668, 4294901760
    %2670 = vmatpush.msra.mxu0 %v2669
    %v2671 = vand.u32 %v170, 4294901760
    %v2672 = vsub.f32 %v170, %v2671
    %v2673 = vand.u32 %v2672, 4294901760
    %v2674 = vsub.f32 %v2672, %v2673
    %v2675 = vand.u32 %v2674, 4294901760
    %2676 = vmatpush.msra.mxu0 %v2675
    %v2677 = vand.u32 %v2378, 4294901760
    %2678 = vmatmul.f32.gmra.mxu0 %v2677
    %v2679 = vpop.f32.mrf.mxu0
    %v2680 = vadd.f32 %v2639, %v2679
    %2681 = vdwg.mxu0
    %2682 = vmatpush.msra.mxu0 0.0
    %2683 = vmatpush.msra.mxu0 0.0
    %2684 = vmatpush.msra.mxu0 0.0
    %2685 = vmatpush.msra.mxu0 0.0
    %2686 = vmatpush.msra.mxu0 0.0
    %2687 = vmatpush.msra.mxu0 0.0
    %2688 = vmatpush.msra.mxu0 0.0
    %2689 = vmatpush.msra.mxu0 0.0
    %2690 = vmatpush.msra.mxu0 0.0
    %2691 = vmatpush.msra.mxu0 0.0
    %2692 = vmatpush.msra.mxu0 0.0
    %2693 = vmatpush.msra.mxu0 0.0
    %v2694 = vand.u32 %v173, 4294901760
    %v2695 = vsub.f32 %v173, %v2694
    %2696 = vmatpush.msra.mxu0 %v2695
    %v2697 = vand.u32 %v172, 4294901760
    %v2698 = vsub.f32 %v172, %v2697
    %2699 = vmatpush.msra.mxu0 %v2698
    %v2700 = vand.u32 %v171, 4294901760
    %v2701 = vsub.f32 %v171, %v2700
    %2702 = vmatpush.msra.mxu0 %v2701
    %v2703 = vand.u32 %v170, 4294901760
    %v2704 = vsub.f32 %v170, %v2703
    %2705 = vmatpush.msra.mxu0 %v2704
    %v2706 = vand.u32 %v2378, 4294901760
    %v2707 = vsub.f32 %v2378, %v2706
    %2708 = vmatmul.f32.gmra.mxu0 %v2707
    %v2709 = vpop.f32.mrf.mxu0
    %v2710 = vadd.f32 %v2680, %v2709
    %2711 = vdwg.mxu0
    %2712 = vmatpush.msra.mxu0 0.0
    %2713 = vmatpush.msra.mxu0 0.0
    %2714 = vmatpush.msra.mxu0 0.0
    %2715 = vmatpush.msra.mxu0 0.0
    %2716 = vmatpush.msra.mxu0 0.0
    %2717 = vmatpush.msra.mxu0 0.0
    %2718 = vmatpush.msra.mxu0 0.0
    %2719 = vmatpush.msra.mxu0 0.0
    %2720 = vmatpush.msra.mxu0 0.0
    %2721 = vmatpush.msra.mxu0 0.0
    %2722 = vmatpush.msra.mxu0 0.0
    %2723 = vmatpush.msra.mxu0 0.0
    %v2724 = vand.u32 %v173, 4294901760
    %2725 = vmatpush.msra.mxu0 %v2724
    %v2726 = vand.u32 %v172, 4294901760
    %2727 = vmatpush.msra.mxu0 %v2726
    %v2728 = vand.u32 %v171, 4294901760
    %2729 = vmatpush.msra.mxu0 %v2728
    %v2730 = vand.u32 %v170, 4294901760
    %2731 = vmatpush.msra.mxu0 %v2730
    %v2732 = vand.u32 %v2378, 4294901760
    %v2733 = vsub.f32 %v2378, %v2732
    %v2734 = vand.u32 %v2733, 4294901760
    %2735 = vmatmul.f32.gmra.mxu0 %v2734
    %v2736 = vpop.f32.mrf.mxu0
    %v2737 = vadd.f32 %v2710, %v2736
    %2738 = vdwg.mxu0
    %2739 = vmatpush.msra.mxu0 0.0
    %2740 = vmatpush.msra.mxu0 0.0
    %2741 = vmatpush.msra.mxu0 0.0
    %2742 = vmatpush.msra.mxu0 0.0
    %2743 = vmatpush.msra.mxu0 0.0
    %2744 = vmatpush.msra.mxu0 0.0
    %2745 = vmatpush.msra.mxu0 0.0
    %2746 = vmatpush.msra.mxu0 0.0
    %2747 = vmatpush.msra.mxu0 0.0
    %2748 = vmatpush.msra.mxu0 0.0
    %2749 = vmatpush.msra.mxu0 0.0
    %2750 = vmatpush.msra.mxu0 0.0
    %v2751 = vand.u32 %v173, 4294901760
    %v2752 = vsub.f32 %v173, %v2751
    %v2753 = vand.u32 %v2752, 4294901760
    %2754 = vmatpush.msra.mxu0 %v2753
    %v2755 = vand.u32 %v172, 4294901760
    %v2756 = vsub.f32 %v172, %v2755
    %v2757 = vand.u32 %v2756, 4294901760
    %2758 = vmatpush.msra.mxu0 %v2757
    %v2759 = vand.u32 %v171, 4294901760
    %v2760 = vsub.f32 %v171, %v2759
    %v2761 = vand.u32 %v2760, 4294901760
    %2762 = vmatpush.msra.mxu0 %v2761
    %v2763 = vand.u32 %v170, 4294901760
    %v2764 = vsub.f32 %v170, %v2763
    %v2765 = vand.u32 %v2764, 4294901760
    %2766 = vmatpush.msra.mxu0 %v2765
    %v2767 = vand.u32 %v2378, 4294901760
    %2768 = vmatmul.f32.gmra.mxu0 %v2767
    %v2769 = vpop.f32.mrf.mxu0
    %v2770 = vadd.f32 %v2737, %v2769
    %2771 = vdwg.mxu0
    %2772 = vmatpush.msra.mxu0 0.0
    %2773 = vmatpush.msra.mxu0 0.0
    %2774 = vmatpush.msra.mxu0 0.0
    %2775 = vmatpush.msra.mxu0 0.0
    %2776 = vmatpush.msra.mxu0 0.0
    %2777 = vmatpush.msra.mxu0 0.0
    %2778 = vmatpush.msra.mxu0 0.0
    %2779 = vmatpush.msra.mxu0 0.0
    %2780 = vmatpush.msra.mxu0 0.0
    %2781 = vmatpush.msra.mxu0 0.0
    %2782 = vmatpush.msra.mxu0 0.0
    %2783 = vmatpush.msra.mxu0 0.0
    %v2784 = vand.u32 %v173, 4294901760
    %2785 = vmatpush.msra.mxu0 %v2784
    %v2786 = vand.u32 %v172, 4294901760
    %2787 = vmatpush.msra.mxu0 %v2786
    %v2788 = vand.u32 %v171, 4294901760
    %2789 = vmatpush.msra.mxu0 %v2788
    %v2790 = vand.u32 %v170, 4294901760
    %2791 = vmatpush.msra.mxu0 %v2790
    %v2792 = vand.u32 %v2378, 4294901760
    %2793 = vmatmul.f32.gmra.mxu0 %v2792
    %v2794 = vpop.f32.mrf.mxu0
    %v2795 = vadd.f32 %v2770, %v2794
    %2796 = vdwg.mxu0
    %v2797 = vadd.f32 %v2611, %v2795
    %v2798 = vtanh.pop %v2797
    %v2799 = vxor.u32 %v2797, 2147483648
    %v2800 = vmul.f32 %v2799, 1.442695
    %v2801 = vpow.pop %v2800
    %v2802 = vadd.f32 %v2801, 1.0
    %v2803 = vrcp.pop %v2802
    %v2804 = vmul.f32 %v2802, %v2803
    %v2805 = vsub.f32 1.0, %v2804
    %v2806 = vmul.f32 %v2803, %v2805
    %v2807 = vadd.f32 %v2803, %v2806
    %vm2808 = vweird.f32 %v2802
    %vm2809 = vweird.f32 %v2803
    %vm2810 = vmor %vm2808, %vm2809
    %v2811 = vsel %vm2810, %v2803, %v2807
    %v2812 = vand.u32 2147483647, %v2802
    %vm2813 = vcmp.eq.f32.partialorder %v2812, 8.507059e+37
    %v2814 = vand.u32 %v2802, 2147483648
    %v2815 = vor.u32 1.1754944e-38, %v2814
    %v2816 = vsel %vm2813, %v2815, %v2811
    %v2817 = vmul.f32 1.0, %v2816
    %v2818 = vsel %vm649, %v2798, %v2817
    %v2819 = vmul.f32 %v2818, %v2181
    %2821 = vrot.lane.b32.xlu0 %v2818, 64
    %v2822 = vpop.permute.xlu0 %2821
    %v2824 = vmul.f32 %v2818, %v2822
    %2826 = vrot.lane.b32.xlu0 %v2824, 32
    %v2827 = vpop.permute.xlu0 %2826
    %v2829 = vadd.f32 %v2819, %v2827
    %v2830 = vtanh.pop %v2829
    %2832 = vrot.lane.b32.xlu0 %v2830, 64
    %v2833 = vpop.permute.xlu0 %2832
    %v2835 = vmul.f32 %v2818, %v2833
    %v2836 = vsel %vm210, %v2606, 0
    %2838 = vmatpush.msra.mxu0 0.0
    %2839 = vmatpush.msra.mxu0 0.0
    %2840 = vmatpush.msra.mxu0 0.0
    %2841 = vmatpush.msra.mxu0 0.0
    %2842 = vmatpush.msra.mxu0 0.0
    %2843 = vmatpush.msra.mxu0 0.0
    %2844 = vmatpush.msra.mxu0 0.0
    %2845 = vmatpush.msra.mxu0 0.0
    %2846 = vmatpush.msra.mxu0 0.0
    %2847 = vmatpush.msra.mxu0 0.0
    %2848 = vmatpush.msra.mxu0 0.0
    %2849 = vmatpush.msra.mxu0 0.0
    %v2850 = vand.u32 %v181, 4294901760
    %2851 = vmatpush.msra.mxu0 %v2850
    %v2852 = vand.u32 %v180, 4294901760
    %2853 = vmatpush.msra.mxu0 %v2852
    %v2854 = vand.u32 %v179, 4294901760
    %2855 = vmatpush.msra.mxu0 %v2854
    %v2856 = vand.u32 %v178, 4294901760
    %2857 = vmatpush.msra.mxu0 %v2856
    %v2858 = vand.u32 %v2836, 4294901760
    %v2859 = vsub.f32 %v2836, %v2858
    %v2860 = vand.u32 %v2859, 4294901760
    %v2861 = vsub.f32 %v2859, %v2860
    %v2862 = vand.u32 %v2861, 4294901760
    %2863 = vmatmul.f32.gmra.mxu0 %v2862
    %v2864 = vpop.f32.mrf.mxu0
    %v2865 = vadd.f32 0.0, %v2864
    %2866 = vdwg.mxu0
    %2867 = vmatpush.msra.mxu0 0.0
    %2868 = vmatpush.msra.mxu0 0.0
    %2869 = vmatpush.msra.mxu0 0.0
    %2870 = vmatpush.msra.mxu0 0.0
    %2871 = vmatpush.msra.mxu0 0.0
    %2872 = vmatpush.msra.mxu0 0.0
    %2873 = vmatpush.msra.mxu0 0.0
    %2874 = vmatpush.msra.mxu0 0.0
    %2875 = vmatpush.msra.mxu0 0.0
    %2876 = vmatpush.msra.mxu0 0.0
    %2877 = vmatpush.msra.mxu0 0.0
    %2878 = vmatpush.msra.mxu0 0.0
    %v2879 = vand.u32 %v181, 4294901760
    %v2880 = vsub.f32 %v181, %v2879
    %v2881 = vand.u32 %v2880, 4294901760
    %v2882 = vsub.f32 %v2880, %v2881
    %v2883 = vand.u32 %v2882, 4294901760
    %2884 = vmatpush.msra.mxu0 %v2883
    %v2885 = vand.u32 %v180, 4294901760
    %v2886 = vsub.f32 %v180, %v2885
    %v2887 = vand.u32 %v2886, 4294901760
    %v2888 = vsub.f32 %v2886, %v2887
    %v2889 = vand.u32 %v2888, 4294901760
    %2890 = vmatpush.msra.mxu0 %v2889
    %v2891 = vand.u32 %v179, 4294901760
    %v2892 = vsub.f32 %v179, %v2891
    %v2893 = vand.u32 %v2892, 4294901760
    %v2894 = vsub.f32 %v2892, %v2893
    %v2895 = vand.u32 %v2894, 4294901760
    %2896 = vmatpush.msra.mxu0 %v2895
    %v2897 = vand.u32 %v178, 4294901760
    %v2898 = vsub.f32 %v178, %v2897
    %v2899 = vand.u32 %v2898, 4294901760
    %v2900 = vsub.f32 %v2898, %v2899
    %v2901 = vand.u32 %v2900, 4294901760
    %2902 = vmatpush.msra.mxu0 %v2901
    %v2903 = vand.u32 %v2836, 4294901760
    %2904 = vmatmul.f32.gmra.mxu0 %v2903
    %v2905 = vpop.f32.mrf.mxu0
    %v2906 = vadd.f32 %v2865, %v2905
    %2907 = vdwg.mxu0
    %2908 = vmatpush.msra.mxu0 0.0
    %2909 = vmatpush.msra.mxu0 0.0
    %2910 = vmatpush.msra.mxu0 0.0
    %2911 = vmatpush.msra.mxu0 0.0
    %2912 = vmatpush.msra.mxu0 0.0
    %2913 = vmatpush.msra.mxu0 0.0
    %2914 = vmatpush.msra.mxu0 0.0
    %2915 = vmatpush.msra.mxu0 0.0
    %2916 = vmatpush.msra.mxu0 0.0
    %2917 = vmatpush.msra.mxu0 0.0
    %2918 = vmatpush.msra.mxu0 0.0
    %2919 = vmatpush.msra.mxu0 0.0
    %v2920 = vand.u32 %v181, 4294901760
    %v2921 = vsub.f32 %v181, %v2920
    %2922 = vmatpush.msra.mxu0 %v2921
    %v2923 = vand.u32 %v180, 4294901760
    %v2924 = vsub.f32 %v180, %v2923
    %2925 = vmatpush.msra.mxu0 %v2924
    %v2926 = vand.u32 %v179, 4294901760
    %v2927 = vsub.f32 %v179, %v2926
    %2928 = vmatpush.msra.mxu0 %v2927
    %v2929 = vand.u32 %v178, 4294901760
    %v2930 = vsub.f32 %v178, %v2929
    %2931 = vmatpush.msra.mxu0 %v2930
    %v2932 = vand.u32 %v2836, 4294901760
    %v2933 = vsub.f32 %v2836, %v2932
    %2934 = vmatmul.f32.gmra.mxu0 %v2933
    %v2935 = vpop.f32.mrf.mxu0
    %v2936 = vadd.f32 %v2906, %v2935
    %2937 = vdwg.mxu0
    %2938 = vmatpush.msra.mxu0 0.0
    %2939 = vmatpush.msra.mxu0 0.0
    %2940 = vmatpush.msra.mxu0 0.0
    %2941 = vmatpush.msra.mxu0 0.0
    %2942 = vmatpush.msra.mxu0 0.0
    %2943 = vmatpush.msra.mxu0 0.0
    %2944 = vmatpush.msra.mxu0 0.0
    %2945 = vmatpush.msra.mxu0 0.0
    %2946 = vmatpush.msra.mxu0 0.0
    %2947 = vmatpush.msra.mxu0 0.0
    %2948 = vmatpush.msra.mxu0 0.0
    %2949 = vmatpush.msra.mxu0 0.0
    %v2950 = vand.u32 %v181, 4294901760
    %2951 = vmatpush.msra.mxu0 %v2950
    %v2952 = vand.u32 %v180, 4294901760
    %2953 = vmatpush.msra.mxu0 %v2952
    %v2954 = vand.u32 %v179, 4294901760
    %2955 = vmatpush.msra.mxu0 %v2954
    %v2956 = vand.u32 %v178, 4294901760
    %2957 = vmatpush.msra.mxu0 %v2956
    %v2958 = vand.u32 %v2836, 4294901760
    %v2959 = vsub.f32 %v2836, %v2958
    %v2960 = vand.u32 %v2959, 4294901760
    %2961 = vmatmul.f32.gmra.mxu0 %v2960
    %v2962 = vpop.f32.mrf.mxu0
    %v2963 = vadd.f32 %v2936, %v2962
    %2964 = vdwg.mxu0
    %2965 = vmatpush.msra.mxu0 0.0
    %2966 = vmatpush.msra.mxu0 0.0
    %2967 = vmatpush.msra.mxu0 0.0
    %2968 = vmatpush.msra.mxu0 0.0
    %2969 = vmatpush.msra.mxu0 0.0
    %2970 = vmatpush.msra.mxu0 0.0
    %2971 = vmatpush.msra.mxu0 0.0
    %2972 = vmatpush.msra.mxu0 0.0
    %2973 = vmatpush.msra.mxu0 0.0
    %2974 = vmatpush.msra.mxu0 0.0
    %2975 = vmatpush.msra.mxu0 0.0
    %2976 = vmatpush.msra.mxu0 0.0
    %v2977 = vand.u32 %v181, 4294901760
    %v2978 = vsub.f32 %v181, %v2977
    %v2979 = vand.u32 %v2978, 4294901760
    %2980 = vmatpush.msra.mxu0 %v2979
    %v2981 = vand.u32 %v180, 4294901760
    %v2982 = vsub.f32 %v180, %v2981
    %v2983 = vand.u32 %v2982, 4294901760
    %2984 = vmatpush.msra.mxu0 %v2983
    %v2985 = vand.u32 %v179, 4294901760
    %v2986 = vsub.f32 %v179, %v2985
    %v2987 = vand.u32 %v2986, 4294901760
    %2988 = vmatpush.msra.mxu0 %v2987
    %v2989 = vand.u32 %v178, 4294901760
    %v2990 = vsub.f32 %v178, %v2989
    %v2991 = vand.u32 %v2990, 4294901760
    %2992 = vmatpush.msra.mxu0 %v2991
    %v2993 = vand.u32 %v2836, 4294901760
    %2994 = vmatmul.f32.gmra.mxu0 %v2993
    %v2995 = vpop.f32.mrf.mxu0
    %v2996 = vadd.f32 %v2963, %v2995
    %2997 = vdwg.mxu0
    %2998 = vmatpush.msra.mxu0 0.0
    %2999 = vmatpush.msra.mxu0 0.0
    %3000 = vmatpush.msra.mxu0 0.0
    %3001 = vmatpush.msra.mxu0 0.0
    %3002 = vmatpush.msra.mxu0 0.0
    %3003 = vmatpush.msra.mxu0 0.0
    %3004 = vmatpush.msra.mxu0 0.0
    %3005 = vmatpush.msra.mxu0 0.0
    %3006 = vmatpush.msra.mxu0 0.0
    %3007 = vmatpush.msra.mxu0 0.0
    %3008 = vmatpush.msra.mxu0 0.0
    %3009 = vmatpush.msra.mxu0 0.0
    %v3010 = vand.u32 %v181, 4294901760
    %3011 = vmatpush.msra.mxu0 %v3010
    %v3012 = vand.u32 %v180, 4294901760
    %3013 = vmatpush.msra.mxu0 %v3012
    %v3014 = vand.u32 %v179, 4294901760
    %3015 = vmatpush.msra.mxu0 %v3014
    %v3016 = vand.u32 %v178, 4294901760
    %3017 = vmatpush.msra.mxu0 %v3016
    %v3018 = vand.u32 %v2836, 4294901760
    %3019 = vmatmul.f32.gmra.mxu0 %v3018
    %v3020 = vpop.f32.mrf.mxu0
    %v3021 = vadd.f32 %v2996, %v3020
    %3022 = vdwg.mxu0
    %3024 = vrot.lane.b32.xlu0 %v2835, 32
    %v3025 = vpop.permute.xlu0 %3024
    %v3026 = vsel %vm210, %v3025, 0
    %3028 = vmatpush.msra.mxu0 0.0
    %3029 = vmatpush.msra.mxu0 0.0
    %3030 = vmatpush.msra.mxu0 0.0
    %3031 = vmatpush.msra.mxu0 0.0
    %3032 = vmatpush.msra.mxu0 0.0
    %3033 = vmatpush.msra.mxu0 0.0
    %3034 = vmatpush.msra.mxu0 0.0
    %3035 = vmatpush.msra.mxu0 0.0
    %3036 = vmatpush.msra.mxu0 0.0
    %3037 = vmatpush.msra.mxu0 0.0
    %3038 = vmatpush.msra.mxu0 0.0
    %3039 = vmatpush.msra.mxu0 0.0
    %v3040 = vand.u32 %v177, 4294901760
    %3041 = vmatpush.msra.mxu0 %v3040
    %v3042 = vand.u32 %v176, 4294901760
    %3043 = vmatpush.msra.mxu0 %v3042
    %v3044 = vand.u32 %v175, 4294901760
    %3045 = vmatpush.msra.mxu0 %v3044
    %v3046 = vand.u32 %v174, 4294901760
    %3047 = vmatpush.msra.mxu0 %v3046
    %v3048 = vand.u32 %v3026, 4294901760
    %v3049 = vsub.f32 %v3026, %v3048
    %v3050 = vand.u32 %v3049, 4294901760
    %v3051 = vsub.f32 %v3049, %v3050
    %v3052 = vand.u32 %v3051, 4294901760
    %3053 = vmatmul.f32.gmra.mxu0 %v3052
    %v3054 = vpop.f32.mrf.mxu0
    %v3055 = vadd.f32 %v3021, %v3054
    %3056 = vdwg.mxu0
    %3057 = vmatpush.msra.mxu0 0.0
    %3058 = vmatpush.msra.mxu0 0.0
    %3059 = vmatpush.msra.mxu0 0.0
    %3060 = vmatpush.msra.mxu0 0.0
    %3061 = vmatpush.msra.mxu0 0.0
    %3062 = vmatpush.msra.mxu0 0.0
    %3063 = vmatpush.msra.mxu0 0.0
    %3064 = vmatpush.msra.mxu0 0.0
    %3065 = vmatpush.msra.mxu0 0.0
    %3066 = vmatpush.msra.mxu0 0.0
    %3067 = vmatpush.msra.mxu0 0.0
    %3068 = vmatpush.msra.mxu0 0.0
    %v3069 = vand.u32 %v177, 4294901760
    %v3070 = vsub.f32 %v177, %v3069
    %v3071 = vand.u32 %v3070, 4294901760
    %v3072 = vsub.f32 %v3070, %v3071
    %v3073 = vand.u32 %v3072, 4294901760
    %3074 = vmatpush.msra.mxu0 %v3073
    %v3075 = vand.u32 %v176, 4294901760
    %v3076 = vsub.f32 %v176, %v3075
    %v3077 = vand.u32 %v3076, 4294901760
    %v3078 = vsub.f32 %v3076, %v3077
    %v3079 = vand.u32 %v3078, 4294901760
    %3080 = vmatpush.msra.mxu0 %v3079
    %v3081 = vand.u32 %v175, 4294901760
    %v3082 = vsub.f32 %v175, %v3081
    %v3083 = vand.u32 %v3082, 4294901760
    %v3084 = vsub.f32 %v3082, %v3083
    %v3085 = vand.u32 %v3084, 4294901760
    %3086 = vmatpush.msra.mxu0 %v3085
    %v3087 = vand.u32 %v174, 4294901760
    %v3088 = vsub.f32 %v174, %v3087
    %v3089 = vand.u32 %v3088, 4294901760
    %v3090 = vsub.f32 %v3088, %v3089
    %v3091 = vand.u32 %v3090, 4294901760
    %3092 = vmatpush.msra.mxu0 %v3091
    %v3093 = vand.u32 %v3026, 4294901760
    %3094 = vmatmul.f32.gmra.mxu0 %v3093
    %v3095 = vpop.f32.mrf.mxu0
    %v3096 = vadd.f32 %v3055, %v3095
    %3097 = vdwg.mxu0
    %3098 = vmatpush.msra.mxu0 0.0
    %3099 = vmatpush.msra.mxu0 0.0
    %3100 = vmatpush.msra.mxu0 0.0
    %3101 = vmatpush.msra.mxu0 0.0
    %3102 = vmatpush.msra.mxu0 0.0
    %3103 = vmatpush.msra.mxu0 0.0
    %3104 = vmatpush.msra.mxu0 0.0
    %3105 = vmatpush.msra.mxu0 0.0
    %3106 = vmatpush.msra.mxu0 0.0
    %3107 = vmatpush.msra.mxu0 0.0
    %3108 = vmatpush.msra.mxu0 0.0
    %3109 = vmatpush.msra.mxu0 0.0
    %v3110 = vand.u32 %v177, 4294901760
    %v3111 = vsub.f32 %v177, %v3110
    %3112 = vmatpush.msra.mxu0 %v3111
    %v3113 = vand.u32 %v176, 4294901760
    %v3114 = vsub.f32 %v176, %v3113
    %3115 = vmatpush.msra.mxu0 %v3114
    %v3116 = vand.u32 %v175, 4294901760
    %v3117 = vsub.f32 %v175, %v3116
    %3118 = vmatpush.msra.mxu0 %v3117
    %v3119 = vand.u32 %v174, 4294901760
    %v3120 = vsub.f32 %v174, %v3119
    %3121 = vmatpush.msra.mxu0 %v3120
    %v3122 = vand.u32 %v3026, 4294901760
    %v3123 = vsub.f32 %v3026, %v3122
    %3124 = vmatmul.f32.gmra.mxu0 %v3123
    %v3125 = vpop.f32.mrf.mxu0
    %v3126 = vadd.f32 %v3096, %v3125
    %3127 = vdwg.mxu0
    %3128 = vmatpush.msra.mxu0 0.0
    %3129 = vmatpush.msra.mxu0 0.0
    %3130 = vmatpush.msra.mxu0 0.0
    %3131 = vmatpush.msra.mxu0 0.0
    %3132 = vmatpush.msra.mxu0 0.0
    %3133 = vmatpush.msra.mxu0 0.0
    %3134 = vmatpush.msra.mxu0 0.0
    %3135 = vmatpush.msra.mxu0 0.0
    %3136 = vmatpush.msra.mxu0 0.0
    %3137 = vmatpush.msra.mxu0 0.0
    %3138 = vmatpush.msra.mxu0 0.0
    %3139 = vmatpush.msra.mxu0 0.0
    %v3140 = vand.u32 %v177, 4294901760
    %3141 = vmatpush.msra.mxu0 %v3140
    %v3142 = vand.u32 %v176, 4294901760
    %3143 = vmatpush.msra.mxu0 %v3142
    %v3144 = vand.u32 %v175, 4294901760
    %3145 = vmatpush.msra.mxu0 %v3144
    %v3146 = vand.u32 %v174, 4294901760
    %3147 = vmatpush.msra.mxu0 %v3146
    %v3148 = vand.u32 %v3026, 4294901760
    %v3149 = vsub.f32 %v3026, %v3148
    %v3150 = vand.u32 %v3149, 4294901760
    %3151 = vmatmul.f32.gmra.mxu0 %v3150
    %v3152 = vpop.f32.mrf.mxu0
    %v3153 = vadd.f32 %v3126, %v3152
    %3154 = vdwg.mxu0
    %3155 = vmatpush.msra.mxu0 0.0
    %3156 = vmatpush.msra.mxu0 0.0
    %3157 = vmatpush.msra.mxu0 0.0
    %3158 = vmatpush.msra.mxu0 0.0
    %3159 = vmatpush.msra.mxu0 0.0
    %3160 = vmatpush.msra.mxu0 0.0
    %3161 = vmatpush.msra.mxu0 0.0
    %3162 = vmatpush.msra.mxu0 0.0
    %3163 = vmatpush.msra.mxu0 0.0
    %3164 = vmatpush.msra.mxu0 0.0
    %3165 = vmatpush.msra.mxu0 0.0
    %3166 = vmatpush.msra.mxu0 0.0
    %v3167 = vand.u32 %v177, 4294901760
    %v3168 = vsub.f32 %v177, %v3167
    %v3169 = vand.u32 %v3168, 4294901760
    %3170 = vmatpush.msra.mxu0 %v3169
    %v3171 = vand.u32 %v176, 4294901760
    %v3172 = vsub.f32 %v176, %v3171
    %v3173 = vand.u32 %v3172, 4294901760
    %3174 = vmatpush.msra.mxu0 %v3173
    %v3175 = vand.u32 %v175, 4294901760
    %v3176 = vsub.f32 %v175, %v3175
    %v3177 = vand.u32 %v3176, 4294901760
    %3178 = vmatpush.msra.mxu0 %v3177
    %v3179 = vand.u32 %v174, 4294901760
    %v3180 = vsub.f32 %v174, %v3179
    %v3181 = vand.u32 %v3180, 4294901760
    %3182 = vmatpush.msra.mxu0 %v3181
    %v3183 = vand.u32 %v3026, 4294901760
    %3184 = vmatmul.f32.gmra.mxu0 %v3183
    %v3185 = vpop.f32.mrf.mxu0
    %v3186 = vadd.f32 %v3153, %v3185
    %3187 = vdwg.mxu0
    %3188 = vmatpush.msra.mxu0 0.0
    %3189 = vmatpush.msra.mxu0 0.0
    %3190 = vmatpush.msra.mxu0 0.0
    %3191 = vmatpush.msra.mxu0 0.0
    %3192 = vmatpush.msra.mxu0 0.0
    %3193 = vmatpush.msra.mxu0 0.0
    %3194 = vmatpush.msra.mxu0 0.0
    %3195 = vmatpush.msra.mxu0 0.0
    %3196 = vmatpush.msra.mxu0 0.0
    %3197 = vmatpush.msra.mxu0 0.0
    %3198 = vmatpush.msra.mxu0 0.0
    %3199 = vmatpush.msra.mxu0 0.0
    %v3200 = vand.u32 %v177, 4294901760
    %3201 = vmatpush.msra.mxu0 %v3200
    %v3202 = vand.u32 %v176, 4294901760
    %3203 = vmatpush.msra.mxu0 %v3202
    %v3204 = vand.u32 %v175, 4294901760
    %3205 = vmatpush.msra.mxu0 %v3204
    %v3206 = vand.u32 %v174, 4294901760
    %3207 = vmatpush.msra.mxu0 %v3206
    %v3208 = vand.u32 %v3026, 4294901760
    %3209 = vmatmul.f32.gmra.mxu0 %v3208
    %v3210 = vpop.f32.mrf.mxu0
    %v3211 = vadd.f32 %v3186, %v3210
    %3212 = vdwg.mxu0
    %v3213 = vadd.f32 %v3211, %v184
    %v3214 = vtanh.pop %v3213
    %v3215 = vxor.u32 %v3213, 2147483648
    %v3216 = vmul.f32 %v3215, 1.442695
    %v3217 = vpow.pop %v3216
    %v3218 = vadd.f32 %v3217, 1.0
    %v3219 = vrcp.pop %v3218
    %v3220 = vmul.f32 %v3218, %v3219
    %v3221 = vsub.f32 1.0, %v3220
    %v3222 = vmul.f32 %v3219, %v3221
    %v3223 = vadd.f32 %v3219, %v3222
    %vm3224 = vweird.f32 %v3218
    %vm3225 = vweird.f32 %v3219
    %vm3226 = vmor %vm3224, %vm3225
    %v3227 = vsel %vm3226, %v3219, %v3223
    %v3228 = vand.u32 2147483647, %v3218
    %vm3229 = vcmp.eq.f32.partialorder %v3228, 8.507059e+37
    %v3230 = vand.u32 %v3218, 2147483648
    %v3231 = vor.u32 1.1754944e-38, %v3230
    %v3232 = vsel %vm3229, %v3231, %v3227
    %v3233 = vmul.f32 1.0, %v3232
    %v3234 = vsel %vm649, %v3214, %v3233
    %v3235 = vmul.f32 %v3234, %v2597
    %3237 = vrot.lane.b32.xlu0 %v3234, 64
    %v3238 = vpop.permute.xlu0 %3237
    %v3240 = vmul.f32 %v3234, %v3238
    %3242 = vrot.lane.b32.xlu0 %v3240, 32
    %v3243 = vpop.permute.xlu0 %3242
    %v3245 = vadd.f32 %v3235, %v3243
    %v3246 = vtanh.pop %v3245
    %3248 = vrot.lane.b32.xlu0 %v3246, 64
    %v3249 = vpop.permute.xlu0 %3248
    %v3251 = vmul.f32 %v3234, %v3249
    %3253 = vrot.lane.b32.xlu0 %v3251, 32
    %v3254 = vpop.permute.xlu0 %3253
    %s3256 = scalar_lea.vmem [#allocation17], 24
    %3257 = vst.msk [vmem:[%s3256] sm:$0xff] %vm210, %v3254
    %s3258 = scalar_lea.vmem [#allocation2], 32
    %v3259 = vld [vmem:[%s3258] sm:$0xff]
    %3260 = vmatpush.msra.mxu0 0.0
    %3261 = vmatpush.msra.mxu0 0.0
    %3262 = vmatpush.msra.mxu0 0.0
    %3263 = vmatpush.msra.mxu0 0.0
    %3264 = vmatpush.msra.mxu0 0.0
    %3265 = vmatpush.msra.mxu0 0.0
    %3266 = vmatpush.msra.mxu0 0.0
    %3267 = vmatpush.msra.mxu0 0.0
    %3268 = vmatpush.msra.mxu0 0.0
    %3269 = vmatpush.msra.mxu0 0.0
    %3270 = vmatpush.msra.mxu0 0.0
    %3271 = vmatpush.msra.mxu0 0.0
    %v3272 = vand.u32 %v173, 4294901760
    %3273 = vmatpush.msra.mxu0 %v3272
    %v3274 = vand.u32 %v172, 4294901760
    %3275 = vmatpush.msra.mxu0 %v3274
    %v3276 = vand.u32 %v171, 4294901760
    %3277 = vmatpush.msra.mxu0 %v3276
    %v3278 = vand.u32 %v170, 4294901760
    %3279 = vmatpush.msra.mxu0 %v3278
    %v3280 = vand.u32 %v3026, 4294901760
    %v3281 = vsub.f32 %v3026, %v3280
    %v3282 = vand.u32 %v3281, 4294901760
    %v3283 = vsub.f32 %v3281, %v3282
    %v3284 = vand.u32 %v3283, 4294901760
    %3285 = vmatmul.f32.gmra.mxu0 %v3284
    %v3286 = vpop.f32.mrf.mxu0
    %v3287 = vadd.f32 0.0, %v3286
    %3288 = vdwg.mxu0
    %3289 = vmatpush.msra.mxu0 0.0
    %3290 = vmatpush.msra.mxu0 0.0
    %3291 = vmatpush.msra.mxu0 0.0
    %3292 = vmatpush.msra.mxu0 0.0
    %3293 = vmatpush.msra.mxu0 0.0
    %3294 = vmatpush.msra.mxu0 0.0
    %3295 = vmatpush.msra.mxu0 0.0
    %3296 = vmatpush.msra.mxu0 0.0
    %3297 = vmatpush.msra.mxu0 0.0
    %3298 = vmatpush.msra.mxu0 0.0
    %3299 = vmatpush.msra.mxu0 0.0
    %3300 = vmatpush.msra.mxu0 0.0
    %v3301 = vand.u32 %v173, 4294901760
    %v3302 = vsub.f32 %v173, %v3301
    %v3303 = vand.u32 %v3302, 4294901760
    %v3304 = vsub.f32 %v3302, %v3303
    %v3305 = vand.u32 %v3304, 4294901760
    %3306 = vmatpush.msra.mxu0 %v3305
    %v3307 = vand.u32 %v172, 4294901760
    %v3308 = vsub.f32 %v172, %v3307
    %v3309 = vand.u32 %v3308, 4294901760
    %v3310 = vsub.f32 %v3308, %v3309
    %v3311 = vand.u32 %v3310, 4294901760
    %3312 = vmatpush.msra.mxu0 %v3311
    %v3313 = vand.u32 %v171, 4294901760
    %v3314 = vsub.f32 %v171, %v3313
    %v3315 = vand.u32 %v3314, 4294901760
    %v3316 = vsub.f32 %v3314, %v3315
    %v3317 = vand.u32 %v3316, 4294901760
    %3318 = vmatpush.msra.mxu0 %v3317
    %v3319 = vand.u32 %v170, 4294901760
    %v3320 = vsub.f32 %v170, %v3319
    %v3321 = vand.u32 %v3320, 4294901760
    %v3322 = vsub.f32 %v3320, %v3321
    %v3323 = vand.u32 %v3322, 4294901760
    %3324 = vmatpush.msra.mxu0 %v3323
    %v3325 = vand.u32 %v3026, 4294901760
    %3326 = vmatmul.f32.gmra.mxu0 %v3325
    %v3327 = vpop.f32.mrf.mxu0
    %v3328 = vadd.f32 %v3287, %v3327
    %3329 = vdwg.mxu0
    %3330 = vmatpush.msra.mxu0 0.0
    %3331 = vmatpush.msra.mxu0 0.0
    %3332 = vmatpush.msra.mxu0 0.0
    %3333 = vmatpush.msra.mxu0 0.0
    %3334 = vmatpush.msra.mxu0 0.0
    %3335 = vmatpush.msra.mxu0 0.0
    %3336 = vmatpush.msra.mxu0 0.0
    %3337 = vmatpush.msra.mxu0 0.0
    %3338 = vmatpush.msra.mxu0 0.0
    %3339 = vmatpush.msra.mxu0 0.0
    %3340 = vmatpush.msra.mxu0 0.0
    %3341 = vmatpush.msra.mxu0 0.0
    %v3342 = vand.u32 %v173, 4294901760
    %v3343 = vsub.f32 %v173, %v3342
    %3344 = vmatpush.msra.mxu0 %v3343
    %v3345 = vand.u32 %v172, 4294901760
    %v3346 = vsub.f32 %v172, %v3345
    %3347 = vmatpush.msra.mxu0 %v3346
    %v3348 = vand.u32 %v171, 4294901760
    %v3349 = vsub.f32 %v171, %v3348
    %3350 = vmatpush.msra.mxu0 %v3349
    %v3351 = vand.u32 %v170, 4294901760
    %v3352 = vsub.f32 %v170, %v3351
    %3353 = vmatpush.msra.mxu0 %v3352
    %v3354 = vand.u32 %v3026, 4294901760
    %v3355 = vsub.f32 %v3026, %v3354
    %3356 = vmatmul.f32.gmra.mxu0 %v3355
    %v3357 = vpop.f32.mrf.mxu0
    %v3358 = vadd.f32 %v3328, %v3357
    %3359 = vdwg.mxu0
    %3360 = vmatpush.msra.mxu0 0.0
    %3361 = vmatpush.msra.mxu0 0.0
    %3362 = vmatpush.msra.mxu0 0.0
    %3363 = vmatpush.msra.mxu0 0.0
    %3364 = vmatpush.msra.mxu0 0.0
    %3365 = vmatpush.msra.mxu0 0.0
    %3366 = vmatpush.msra.mxu0 0.0
    %3367 = vmatpush.msra.mxu0 0.0
    %3368 = vmatpush.msra.mxu0 0.0
    %3369 = vmatpush.msra.mxu0 0.0
    %3370 = vmatpush.msra.mxu0 0.0
    %3371 = vmatpush.msra.mxu0 0.0
    %v3372 = vand.u32 %v173, 4294901760
    %3373 = vmatpush.msra.mxu0 %v3372
    %v3374 = vand.u32 %v172, 4294901760
    %3375 = vmatpush.msra.mxu0 %v3374
    %v3376 = vand.u32 %v171, 4294901760
    %3377 = vmatpush.msra.mxu0 %v3376
    %v3378 = vand.u32 %v170, 4294901760
    %3379 = vmatpush.msra.mxu0 %v3378
    %v3380 = vand.u32 %v3026, 4294901760
    %v3381 = vsub.f32 %v3026, %v3380
    %v3382 = vand.u32 %v3381, 4294901760
    %3383 = vmatmul.f32.gmra.mxu0 %v3382
    %v3384 = vpop.f32.mrf.mxu0
    %v3385 = vadd.f32 %v3358, %v3384
    %3386 = vdwg.mxu0
    %3387 = vmatpush.msra.mxu0 0.0
    %3388 = vmatpush.msra.mxu0 0.0
    %3389 = vmatpush.msra.mxu0 0.0
    %3390 = vmatpush.msra.mxu0 0.0
    %3391 = vmatpush.msra.mxu0 0.0
    %3392 = vmatpush.msra.mxu0 0.0
    %3393 = vmatpush.msra.mxu0 0.0
    %3394 = vmatpush.msra.mxu0 0.0
    %3395 = vmatpush.msra.mxu0 0.0
    %3396 = vmatpush.msra.mxu0 0.0
    %3397 = vmatpush.msra.mxu0 0.0
    %3398 = vmatpush.msra.mxu0 0.0
    %v3399 = vand.u32 %v173, 4294901760
    %v3400 = vsub.f32 %v173, %v3399
    %v3401 = vand.u32 %v3400, 4294901760
    %3402 = vmatpush.msra.mxu0 %v3401
    %v3403 = vand.u32 %v172, 4294901760
    %v3404 = vsub.f32 %v172, %v3403
    %v3405 = vand.u32 %v3404, 4294901760
    %3406 = vmatpush.msra.mxu0 %v3405
    %v3407 = vand.u32 %v171, 4294901760
    %v3408 = vsub.f32 %v171, %v3407
    %v3409 = vand.u32 %v3408, 4294901760
    %3410 = vmatpush.msra.mxu0 %v3409
    %v3411 = vand.u32 %v170, 4294901760
    %v3412 = vsub.f32 %v170, %v3411
    %v3413 = vand.u32 %v3412, 4294901760
    %3414 = vmatpush.msra.mxu0 %v3413
    %v3415 = vand.u32 %v3026, 4294901760
    %3416 = vmatmul.f32.gmra.mxu0 %v3415
    %v3417 = vpop.f32.mrf.mxu0
    %v3418 = vadd.f32 %v3385, %v3417
    %3419 = vdwg.mxu0
    %3420 = vmatpush.msra.mxu0 0.0
    %3421 = vmatpush.msra.mxu0 0.0
    %3422 = vmatpush.msra.mxu0 0.0
    %3423 = vmatpush.msra.mxu0 0.0
    %3424 = vmatpush.msra.mxu0 0.0
    %3425 = vmatpush.msra.mxu0 0.0
    %3426 = vmatpush.msra.mxu0 0.0
    %3427 = vmatpush.msra.mxu0 0.0
    %3428 = vmatpush.msra.mxu0 0.0
    %3429 = vmatpush.msra.mxu0 0.0
    %3430 = vmatpush.msra.mxu0 0.0
    %3431 = vmatpush.msra.mxu0 0.0
    %v3432 = vand.u32 %v173, 4294901760
    %3433 = vmatpush.msra.mxu0 %v3432
    %v3434 = vand.u32 %v172, 4294901760
    %3435 = vmatpush.msra.mxu0 %v3434
    %v3436 = vand.u32 %v171, 4294901760
    %3437 = vmatpush.msra.mxu0 %v3436
    %v3438 = vand.u32 %v170, 4294901760
    %3439 = vmatpush.msra.mxu0 %v3438
    %v3440 = vand.u32 %v3026, 4294901760
    %3441 = vmatmul.f32.gmra.mxu0 %v3440
    %v3442 = vpop.f32.mrf.mxu0
    %v3443 = vadd.f32 %v3418, %v3442
    %3444 = vdwg.mxu0
    %v3445 = vadd.f32 %v3259, %v3443
    %v3446 = vtanh.pop %v3445
    %v3447 = vxor.u32 %v3445, 2147483648
    %v3448 = vmul.f32 %v3447, 1.442695
    %v3449 = vpow.pop %v3448
    %v3450 = vadd.f32 %v3449, 1.0
    %v3451 = vrcp.pop %v3450
    %v3452 = vmul.f32 %v3450, %v3451
    %v3453 = vsub.f32 1.0, %v3452
    %v3454 = vmul.f32 %v3451, %v3453
    %v3455 = vadd.f32 %v3451, %v3454
    %vm3456 = vweird.f32 %v3450
    %vm3457 = vweird.f32 %v3451
    %vm3458 = vmor %vm3456, %vm3457
    %v3459 = vsel %vm3458, %v3451, %v3455
    %v3460 = vand.u32 2147483647, %v3450
    %vm3461 = vcmp.eq.f32.partialorder %v3460, 8.507059e+37
    %v3462 = vand.u32 %v3450, 2147483648
    %v3463 = vor.u32 1.1754944e-38, %v3462
    %v3464 = vsel %vm3461, %v3463, %v3459
    %v3465 = vmul.f32 1.0, %v3464
    %v3466 = vsel %vm649, %v3446, %v3465
    %v3467 = vmul.f32 %v3466, %v2829
    %3469 = vrot.lane.b32.xlu0 %v3466, 64
    %v3470 = vpop.permute.xlu0 %3469
    %v3472 = vmul.f32 %v3466, %v3470
    %3474 = vrot.lane.b32.xlu0 %v3472, 32
    %v3475 = vpop.permute.xlu0 %3474
    %v3477 = vadd.f32 %v3467, %v3475
    %v3478 = vtanh.pop %v3477
    %3480 = vrot.lane.b32.xlu0 %v3478, 64
    %v3481 = vpop.permute.xlu0 %3480
    %v3483 = vmul.f32 %v3466, %v3481
    %v3484 = vsel %vm210, %v3254, 0
    %3486 = vmatpush.msra.mxu0 0.0
    %3487 = vmatpush.msra.mxu0 0.0
    %3488 = vmatpush.msra.mxu0 0.0
    %3489 = vmatpush.msra.mxu0 0.0
    %3490 = vmatpush.msra.mxu0 0.0
    %3491 = vmatpush.msra.mxu0 0.0
    %3492 = vmatpush.msra.mxu0 0.0
    %3493 = vmatpush.msra.mxu0 0.0
    %3494 = vmatpush.msra.mxu0 0.0
    %3495 = vmatpush.msra.mxu0 0.0
    %3496 = vmatpush.msra.mxu0 0.0
    %3497 = vmatpush.msra.mxu0 0.0
    %v3498 = vand.u32 %v181, 4294901760
    %3499 = vmatpush.msra.mxu0 %v3498
    %v3500 = vand.u32 %v180, 4294901760
    %3501 = vmatpush.msra.mxu0 %v3500
    %v3502 = vand.u32 %v179, 4294901760
    %3503 = vmatpush.msra.mxu0 %v3502
    %v3504 = vand.u32 %v178, 4294901760
    %3505 = vmatpush.msra.mxu0 %v3504
    %v3506 = vand.u32 %v3484, 4294901760
    %v3507 = vsub.f32 %v3484, %v3506
    %v3508 = vand.u32 %v3507, 4294901760
    %v3509 = vsub.f32 %v3507, %v3508
    %v3510 = vand.u32 %v3509, 4294901760
    %3511 = vmatmul.f32.gmra.mxu0 %v3510
    %v3512 = vpop.f32.mrf.mxu0
    %v3513 = vadd.f32 0.0, %v3512
    %3514 = vdwg.mxu0
    %3515 = vmatpush.msra.mxu0 0.0
    %3516 = vmatpush.msra.mxu0 0.0
    %3517 = vmatpush.msra.mxu0 0.0
    %3518 = vmatpush.msra.mxu0 0.0
    %3519 = vmatpush.msra.mxu0 0.0
    %3520 = vmatpush.msra.mxu0 0.0
    %3521 = vmatpush.msra.mxu0 0.0
    %3522 = vmatpush.msra.mxu0 0.0
    %3523 = vmatpush.msra.mxu0 0.0
    %3524 = vmatpush.msra.mxu0 0.0
    %3525 = vmatpush.msra.mxu0 0.0
    %3526 = vmatpush.msra.mxu0 0.0
    %v3527 = vand.u32 %v181, 4294901760
    %v3528 = vsub.f32 %v181, %v3527
    %v3529 = vand.u32 %v3528, 4294901760
    %v3530 = vsub.f32 %v3528, %v3529
    %v3531 = vand.u32 %v3530, 4294901760
    %3532 = vmatpush.msra.mxu0 %v3531
    %v3533 = vand.u32 %v180, 4294901760
    %v3534 = vsub.f32 %v180, %v3533
    %v3535 = vand.u32 %v3534, 4294901760
    %v3536 = vsub.f32 %v3534, %v3535
    %v3537 = vand.u32 %v3536, 4294901760
    %3538 = vmatpush.msra.mxu0 %v3537
    %v3539 = vand.u32 %v179, 4294901760
    %v3540 = vsub.f32 %v179, %v3539
    %v3541 = vand.u32 %v3540, 4294901760
    %v3542 = vsub.f32 %v3540, %v3541
    %v3543 = vand.u32 %v3542, 4294901760
    %3544 = vmatpush.msra.mxu0 %v3543
    %v3545 = vand.u32 %v178, 4294901760
    %v3546 = vsub.f32 %v178, %v3545
    %v3547 = vand.u32 %v3546, 4294901760
    %v3548 = vsub.f32 %v3546, %v3547
    %v3549 = vand.u32 %v3548, 4294901760
    %3550 = vmatpush.msra.mxu0 %v3549
    %v3551 = vand.u32 %v3484, 4294901760
    %3552 = vmatmul.f32.gmra.mxu0 %v3551
    %v3553 = vpop.f32.mrf.mxu0
    %v3554 = vadd.f32 %v3513, %v3553
    %3555 = vdwg.mxu0
    %3556 = vmatpush.msra.mxu0 0.0
    %3557 = vmatpush.msra.mxu0 0.0
    %3558 = vmatpush.msra.mxu0 0.0
    %3559 = vmatpush.msra.mxu0 0.0
    %3560 = vmatpush.msra.mxu0 0.0
    %3561 = vmatpush.msra.mxu0 0.0
    %3562 = vmatpush.msra.mxu0 0.0
    %3563 = vmatpush.msra.mxu0 0.0
    %3564 = vmatpush.msra.mxu0 0.0
    %3565 = vmatpush.msra.mxu0 0.0
    %3566 = vmatpush.msra.mxu0 0.0
    %3567 = vmatpush.msra.mxu0 0.0
    %v3568 = vand.u32 %v181, 4294901760
    %v3569 = vsub.f32 %v181, %v3568
    %3570 = vmatpush.msra.mxu0 %v3569
    %v3571 = vand.u32 %v180, 4294901760
    %v3572 = vsub.f32 %v180, %v3571
    %3573 = vmatpush.msra.mxu0 %v3572
    %v3574 = vand.u32 %v179, 4294901760
    %v3575 = vsub.f32 %v179, %v3574
    %3576 = vmatpush.msra.mxu0 %v3575
    %v3577 = vand.u32 %v178, 4294901760
    %v3578 = vsub.f32 %v178, %v3577
    %3579 = vmatpush.msra.mxu0 %v3578
    %v3580 = vand.u32 %v3484, 4294901760
    %v3581 = vsub.f32 %v3484, %v3580
    %3582 = vmatmul.f32.gmra.mxu0 %v3581
    %v3583 = vpop.f32.mrf.mxu0
    %v3584 = vadd.f32 %v3554, %v3583
    %3585 = vdwg.mxu0
    %3586 = vmatpush.msra.mxu0 0.0
    %3587 = vmatpush.msra.mxu0 0.0
    %3588 = vmatpush.msra.mxu0 0.0
    %3589 = vmatpush.msra.mxu0 0.0
    %3590 = vmatpush.msra.mxu0 0.0
    %3591 = vmatpush.msra.mxu0 0.0
    %3592 = vmatpush.msra.mxu0 0.0
    %3593 = vmatpush.msra.mxu0 0.0
    %3594 = vmatpush.msra.mxu0 0.0
    %3595 = vmatpush.msra.mxu0 0.0
    %3596 = vmatpush.msra.mxu0 0.0
    %3597 = vmatpush.msra.mxu0 0.0
    %v3598 = vand.u32 %v181, 4294901760
    %3599 = vmatpush.msra.mxu0 %v3598
    %v3600 = vand.u32 %v180, 4294901760
    %3601 = vmatpush.msra.mxu0 %v3600
    %v3602 = vand.u32 %v179, 4294901760
    %3603 = vmatpush.msra.mxu0 %v3602
    %v3604 = vand.u32 %v178, 4294901760
    %3605 = vmatpush.msra.mxu0 %v3604
    %v3606 = vand.u32 %v3484, 4294901760
    %v3607 = vsub.f32 %v3484, %v3606
    %v3608 = vand.u32 %v3607, 4294901760
    %3609 = vmatmul.f32.gmra.mxu0 %v3608
    %v3610 = vpop.f32.mrf.mxu0
    %v3611 = vadd.f32 %v3584, %v3610
    %3612 = vdwg.mxu0
    %3613 = vmatpush.msra.mxu0 0.0
    %3614 = vmatpush.msra.mxu0 0.0
    %3615 = vmatpush.msra.mxu0 0.0
    %3616 = vmatpush.msra.mxu0 0.0
    %3617 = vmatpush.msra.mxu0 0.0
    %3618 = vmatpush.msra.mxu0 0.0
    %3619 = vmatpush.msra.mxu0 0.0
    %3620 = vmatpush.msra.mxu0 0.0
    %3621 = vmatpush.msra.mxu0 0.0
    %3622 = vmatpush.msra.mxu0 0.0
    %3623 = vmatpush.msra.mxu0 0.0
    %3624 = vmatpush.msra.mxu0 0.0
    %v3625 = vand.u32 %v181, 4294901760
    %v3626 = vsub.f32 %v181, %v3625
    %v3627 = vand.u32 %v3626, 4294901760
    %3628 = vmatpush.msra.mxu0 %v3627
    %v3629 = vand.u32 %v180, 4294901760
    %v3630 = vsub.f32 %v180, %v3629
    %v3631 = vand.u32 %v3630, 4294901760
    %3632 = vmatpush.msra.mxu0 %v3631
    %v3633 = vand.u32 %v179, 4294901760
    %v3634 = vsub.f32 %v179, %v3633
    %v3635 = vand.u32 %v3634, 4294901760
    %3636 = vmatpush.msra.mxu0 %v3635
    %v3637 = vand.u32 %v178, 4294901760
    %v3638 = vsub.f32 %v178, %v3637
    %v3639 = vand.u32 %v3638, 4294901760
    %3640 = vmatpush.msra.mxu0 %v3639
    %v3641 = vand.u32 %v3484, 4294901760
    %3642 = vmatmul.f32.gmra.mxu0 %v3641
    %v3643 = vpop.f32.mrf.mxu0
    %v3644 = vadd.f32 %v3611, %v3643
    %3645 = vdwg.mxu0
    %3646 = vmatpush.msra.mxu0 0.0
    %3647 = vmatpush.msra.mxu0 0.0
    %3648 = vmatpush.msra.mxu0 0.0
    %3649 = vmatpush.msra.mxu0 0.0
    %3650 = vmatpush.msra.mxu0 0.0
    %3651 = vmatpush.msra.mxu0 0.0
    %3652 = vmatpush.msra.mxu0 0.0
    %3653 = vmatpush.msra.mxu0 0.0
    %3654 = vmatpush.msra.mxu0 0.0
    %3655 = vmatpush.msra.mxu0 0.0
    %3656 = vmatpush.msra.mxu0 0.0
    %3657 = vmatpush.msra.mxu0 0.0
    %v3658 = vand.u32 %v181, 4294901760
    %3659 = vmatpush.msra.mxu0 %v3658
    %v3660 = vand.u32 %v180, 4294901760
    %3661 = vmatpush.msra.mxu0 %v3660
    %v3662 = vand.u32 %v179, 4294901760
    %3663 = vmatpush.msra.mxu0 %v3662
    %v3664 = vand.u32 %v178, 4294901760
    %3665 = vmatpush.msra.mxu0 %v3664
    %v3666 = vand.u32 %v3484, 4294901760
    %3667 = vmatmul.f32.gmra.mxu0 %v3666
    %v3668 = vpop.f32.mrf.mxu0
    %v3669 = vadd.f32 %v3644, %v3668
    %3670 = vdwg.mxu0
    %3672 = vrot.lane.b32.xlu0 %v3483, 32
    %v3673 = vpop.permute.xlu0 %3672
    %v3674 = vsel %vm210, %v3673, 0
    %3676 = vmatpush.msra.mxu0 0.0
    %3677 = vmatpush.msra.mxu0 0.0
    %3678 = vmatpush.msra.mxu0 0.0
    %3679 = vmatpush.msra.mxu0 0.0
    %3680 = vmatpush.msra.mxu0 0.0
    %3681 = vmatpush.msra.mxu0 0.0
    %3682 = vmatpush.msra.mxu0 0.0
    %3683 = vmatpush.msra.mxu0 0.0
    %3684 = vmatpush.msra.mxu0 0.0
    %3685 = vmatpush.msra.mxu0 0.0
    %3686 = vmatpush.msra.mxu0 0.0
    %3687 = vmatpush.msra.mxu0 0.0
    %v3688 = vand.u32 %v177, 4294901760
    %3689 = vmatpush.msra.mxu0 %v3688
    %v3690 = vand.u32 %v176, 4294901760
    %3691 = vmatpush.msra.mxu0 %v3690
    %v3692 = vand.u32 %v175, 4294901760
    %3693 = vmatpush.msra.mxu0 %v3692
    %v3694 = vand.u32 %v174, 4294901760
    %3695 = vmatpush.msra.mxu0 %v3694
    %v3696 = vand.u32 %v3674, 4294901760
    %v3697 = vsub.f32 %v3674, %v3696
    %v3698 = vand.u32 %v3697, 4294901760
    %v3699 = vsub.f32 %v3697, %v3698
    %v3700 = vand.u32 %v3699, 4294901760
    %3701 = vmatmul.f32.gmra.mxu0 %v3700
    %v3702 = vpop.f32.mrf.mxu0
    %v3703 = vadd.f32 %v3669, %v3702
    %3704 = vdwg.mxu0
    %3705 = vmatpush.msra.mxu0 0.0
    %3706 = vmatpush.msra.mxu0 0.0
    %3707 = vmatpush.msra.mxu0 0.0
    %3708 = vmatpush.msra.mxu0 0.0
    %3709 = vmatpush.msra.mxu0 0.0
    %3710 = vmatpush.msra.mxu0 0.0
    %3711 = vmatpush.msra.mxu0 0.0
    %3712 = vmatpush.msra.mxu0 0.0
    %3713 = vmatpush.msra.mxu0 0.0
    %3714 = vmatpush.msra.mxu0 0.0
    %3715 = vmatpush.msra.mxu0 0.0
    %3716 = vmatpush.msra.mxu0 0.0
    %v3717 = vand.u32 %v177, 4294901760
    %v3718 = vsub.f32 %v177, %v3717
    %v3719 = vand.u32 %v3718, 4294901760
    %v3720 = vsub.f32 %v3718, %v3719
    %v3721 = vand.u32 %v3720, 4294901760
    %3722 = vmatpush.msra.mxu0 %v3721
    %v3723 = vand.u32 %v176, 4294901760
    %v3724 = vsub.f32 %v176, %v3723
    %v3725 = vand.u32 %v3724, 4294901760
    %v3726 = vsub.f32 %v3724, %v3725
    %v3727 = vand.u32 %v3726, 4294901760
    %3728 = vmatpush.msra.mxu0 %v3727
    %v3729 = vand.u32 %v175, 4294901760
    %v3730 = vsub.f32 %v175, %v3729
    %v3731 = vand.u32 %v3730, 4294901760
    %v3732 = vsub.f32 %v3730, %v3731
    %v3733 = vand.u32 %v3732, 4294901760
    %3734 = vmatpush.msra.mxu0 %v3733
    %v3735 = vand.u32 %v174, 4294901760
    %v3736 = vsub.f32 %v174, %v3735
    %v3737 = vand.u32 %v3736, 4294901760
    %v3738 = vsub.f32 %v3736, %v3737
    %v3739 = vand.u32 %v3738, 4294901760
    %3740 = vmatpush.msra.mxu0 %v3739
    %v3741 = vand.u32 %v3674, 4294901760
    %3742 = vmatmul.f32.gmra.mxu0 %v3741
    %v3743 = vpop.f32.mrf.mxu0
    %v3744 = vadd.f32 %v3703, %v3743
    %3745 = vdwg.mxu0
    %3746 = vmatpush.msra.mxu0 0.0
    %3747 = vmatpush.msra.mxu0 0.0
    %3748 = vmatpush.msra.mxu0 0.0
    %3749 = vmatpush.msra.mxu0 0.0
    %3750 = vmatpush.msra.mxu0 0.0
    %3751 = vmatpush.msra.mxu0 0.0
    %3752 = vmatpush.msra.mxu0 0.0
    %3753 = vmatpush.msra.mxu0 0.0
    %3754 = vmatpush.msra.mxu0 0.0
    %3755 = vmatpush.msra.mxu0 0.0
    %3756 = vmatpush.msra.mxu0 0.0
    %3757 = vmatpush.msra.mxu0 0.0
    %v3758 = vand.u32 %v177, 4294901760
    %v3759 = vsub.f32 %v177, %v3758
    %3760 = vmatpush.msra.mxu0 %v3759
    %v3761 = vand.u32 %v176, 4294901760
    %v3762 = vsub.f32 %v176, %v3761
    %3763 = vmatpush.msra.mxu0 %v3762
    %v3764 = vand.u32 %v175, 4294901760
    %v3765 = vsub.f32 %v175, %v3764
    %3766 = vmatpush.msra.mxu0 %v3765
    %v3767 = vand.u32 %v174, 4294901760
    %v3768 = vsub.f32 %v174, %v3767
    %3769 = vmatpush.msra.mxu0 %v3768
    %v3770 = vand.u32 %v3674, 4294901760
    %v3771 = vsub.f32 %v3674, %v3770
    %3772 = vmatmul.f32.gmra.mxu0 %v3771
    %v3773 = vpop.f32.mrf.mxu0
    %v3774 = vadd.f32 %v3744, %v3773
    %3775 = vdwg.mxu0
    %3776 = vmatpush.msra.mxu0 0.0
    %3777 = vmatpush.msra.mxu0 0.0
    %3778 = vmatpush.msra.mxu0 0.0
    %3779 = vmatpush.msra.mxu0 0.0
    %3780 = vmatpush.msra.mxu0 0.0
    %3781 = vmatpush.msra.mxu0 0.0
    %3782 = vmatpush.msra.mxu0 0.0
    %3783 = vmatpush.msra.mxu0 0.0
    %3784 = vmatpush.msra.mxu0 0.0
    %3785 = vmatpush.msra.mxu0 0.0
    %3786 = vmatpush.msra.mxu0 0.0
    %3787 = vmatpush.msra.mxu0 0.0
    %v3788 = vand.u32 %v177, 4294901760
    %3789 = vmatpush.msra.mxu0 %v3788
    %v3790 = vand.u32 %v176, 4294901760
    %3791 = vmatpush.msra.mxu0 %v3790
    %v3792 = vand.u32 %v175, 4294901760
    %3793 = vmatpush.msra.mxu0 %v3792
    %v3794 = vand.u32 %v174, 4294901760
    %3795 = vmatpush.msra.mxu0 %v3794
    %v3796 = vand.u32 %v3674, 4294901760
    %v3797 = vsub.f32 %v3674, %v3796
    %v3798 = vand.u32 %v3797, 4294901760
    %3799 = vmatmul.f32.gmra.mxu0 %v3798
    %v3800 = vpop.f32.mrf.mxu0
    %v3801 = vadd.f32 %v3774, %v3800
    %3802 = vdwg.mxu0
    %3803 = vmatpush.msra.mxu0 0.0
    %3804 = vmatpush.msra.mxu0 0.0
    %3805 = vmatpush.msra.mxu0 0.0
    %3806 = vmatpush.msra.mxu0 0.0
    %3807 = vmatpush.msra.mxu0 0.0
    %3808 = vmatpush.msra.mxu0 0.0
    %3809 = vmatpush.msra.mxu0 0.0
    %3810 = vmatpush.msra.mxu0 0.0
    %3811 = vmatpush.msra.mxu0 0.0
    %3812 = vmatpush.msra.mxu0 0.0
    %3813 = vmatpush.msra.mxu0 0.0
    %3814 = vmatpush.msra.mxu0 0.0
    %v3815 = vand.u32 %v177, 4294901760
    %v3816 = vsub.f32 %v177, %v3815
    %v3817 = vand.u32 %v3816, 4294901760
    %3818 = vmatpush.msra.mxu0 %v3817
    %v3819 = vand.u32 %v176, 4294901760
    %v3820 = vsub.f32 %v176, %v3819
    %v3821 = vand.u32 %v3820, 4294901760
    %3822 = vmatpush.msra.mxu0 %v3821
    %v3823 = vand.u32 %v175, 4294901760
    %v3824 = vsub.f32 %v175, %v3823
    %v3825 = vand.u32 %v3824, 4294901760
    %3826 = vmatpush.msra.mxu0 %v3825
    %v3827 = vand.u32 %v174, 4294901760
    %v3828 = vsub.f32 %v174, %v3827
    %v3829 = vand.u32 %v3828, 4294901760
    %3830 = vmatpush.msra.mxu0 %v3829
    %v3831 = vand.u32 %v3674, 4294901760
    %3832 = vmatmul.f32.gmra.mxu0 %v3831
    %v3833 = vpop.f32.mrf.mxu0
    %v3834 = vadd.f32 %v3801, %v3833
    %3835 = vdwg.mxu0
    %3836 = vmatpush.msra.mxu0 0.0
    %3837 = vmatpush.msra.mxu0 0.0
    %3838 = vmatpush.msra.mxu0 0.0
    %3839 = vmatpush.msra.mxu0 0.0
    %3840 = vmatpush.msra.mxu0 0.0
    %3841 = vmatpush.msra.mxu0 0.0
    %3842 = vmatpush.msra.mxu0 0.0
    %3843 = vmatpush.msra.mxu0 0.0
    %3844 = vmatpush.msra.mxu0 0.0
    %3845 = vmatpush.msra.mxu0 0.0
    %3846 = vmatpush.msra.mxu0 0.0
    %3847 = vmatpush.msra.mxu0 0.0
    %v3848 = vand.u32 %v177, 4294901760
    %3849 = vmatpush.msra.mxu0 %v3848
    %v3850 = vand.u32 %v176, 4294901760
    %3851 = vmatpush.msra.mxu0 %v3850
    %v3852 = vand.u32 %v175, 4294901760
    %3853 = vmatpush.msra.mxu0 %v3852
    %v3854 = vand.u32 %v174, 4294901760
    %3855 = vmatpush.msra.mxu0 %v3854
    %v3856 = vand.u32 %v3674, 4294901760
    %3857 = vmatmul.f32.gmra.mxu0 %v3856
    %v3858 = vpop.f32.mrf.mxu0
    %v3859 = vadd.f32 %v3834, %v3858
    %3860 = vdwg.mxu0
    %v3861 = vadd.f32 %v3859, %v184
    %v3862 = vtanh.pop %v3861
    %v3863 = vxor.u32 %v3861, 2147483648
    %v3864 = vmul.f32 %v3863, 1.442695
    %v3865 = vpow.pop %v3864
    %v3866 = vadd.f32 %v3865, 1.0
    %v3867 = vrcp.pop %v3866
    %v3868 = vmul.f32 %v3866, %v3867
    %v3869 = vsub.f32 1.0, %v3868
    %v3870 = vmul.f32 %v3867, %v3869
    %v3871 = vadd.f32 %v3867, %v3870
    %vm3872 = vweird.f32 %v3866
    %vm3873 = vweird.f32 %v3867
    %vm3874 = vmor %vm3872, %vm3873
    %v3875 = vsel %vm3874, %v3867, %v3871
    %v3876 = vand.u32 2147483647, %v3866
    %vm3877 = vcmp.eq.f32.partialorder %v3876, 8.507059e+37
    %v3878 = vand.u32 %v3866, 2147483648
    %v3879 = vor.u32 1.1754944e-38, %v3878
    %v3880 = vsel %vm3877, %v3879, %v3875
    %v3881 = vmul.f32 1.0, %v3880
    %v3882 = vsel %vm649, %v3862, %v3881
    %v3883 = vmul.f32 %v3882, %v3245
    %3885 = vrot.lane.b32.xlu0 %v3882, 64
    %v3886 = vpop.permute.xlu0 %3885
    %v3888 = vmul.f32 %v3882, %v3886
    %3890 = vrot.lane.b32.xlu0 %v3888, 32
    %v3891 = vpop.permute.xlu0 %3890
    %v3893 = vadd.f32 %v3883, %v3891
    %v3894 = vtanh.pop %v3893
    %3896 = vrot.lane.b32.xlu0 %v3894, 64
    %v3897 = vpop.permute.xlu0 %3896
    %v3899 = vmul.f32 %v3882, %v3897
    %3901 = vrot.lane.b32.xlu0 %v3899, 32
    %v3902 = vpop.permute.xlu0 %3901
    %s3904 = scalar_lea.vmem [#allocation17], 32
    %3905 = vst.msk [vmem:[%s3904] sm:$0xff] %vm210, %v3902
    %s3906 = scalar_lea.vmem [#allocation2], 40
    %v3907 = vld [vmem:[%s3906] sm:$0xff]
    %3908 = vmatpush.msra.mxu0 0.0
    %3909 = vmatpush.msra.mxu0 0.0
    %3910 = vmatpush.msra.mxu0 0.0
    %3911 = vmatpush.msra.mxu0 0.0
    %3912 = vmatpush.msra.mxu0 0.0
    %3913 = vmatpush.msra.mxu0 0.0
    %3914 = vmatpush.msra.mxu0 0.0
    %3915 = vmatpush.msra.mxu0 0.0
    %3916 = vmatpush.msra.mxu0 0.0
    %3917 = vmatpush.msra.mxu0 0.0
    %3918 = vmatpush.msra.mxu0 0.0
    %3919 = vmatpush.msra.mxu0 0.0
    %v3920 = vand.u32 %v173, 4294901760
    %3921 = vmatpush.msra.mxu0 %v3920
    %v3922 = vand.u32 %v172, 4294901760
    %3923 = vmatpush.msra.mxu0 %v3922
    %v3924 = vand.u32 %v171, 4294901760
    %3925 = vmatpush.msra.mxu0 %v3924
    %v3926 = vand.u32 %v170, 4294901760
    %3927 = vmatpush.msra.mxu0 %v3926
    %v3928 = vand.u32 %v3674, 4294901760
    %v3929 = vsub.f32 %v3674, %v3928
    %v3930 = vand.u32 %v3929, 4294901760
    %v3931 = vsub.f32 %v3929, %v3930
    %v3932 = vand.u32 %v3931, 4294901760
    %3933 = vmatmul.f32.gmra.mxu0 %v3932
    %v3934 = vpop.f32.mrf.mxu0
    %v3935 = vadd.f32 0.0, %v3934
    %3936 = vdwg.mxu0
    %3937 = vmatpush.msra.mxu0 0.0
    %3938 = vmatpush.msra.mxu0 0.0
    %3939 = vmatpush.msra.mxu0 0.0
    %3940 = vmatpush.msra.mxu0 0.0
    %3941 = vmatpush.msra.mxu0 0.0
    %3942 = vmatpush.msra.mxu0 0.0
    %3943 = vmatpush.msra.mxu0 0.0
    %3944 = vmatpush.msra.mxu0 0.0
    %3945 = vmatpush.msra.mxu0 0.0
    %3946 = vmatpush.msra.mxu0 0.0
    %3947 = vmatpush.msra.mxu0 0.0
    %3948 = vmatpush.msra.mxu0 0.0
    %v3949 = vand.u32 %v173, 4294901760
    %v3950 = vsub.f32 %v173, %v3949
    %v3951 = vand.u32 %v3950, 4294901760
    %v3952 = vsub.f32 %v3950, %v3951
    %v3953 = vand.u32 %v3952, 4294901760
    %3954 = vmatpush.msra.mxu0 %v3953
    %v3955 = vand.u32 %v172, 4294901760
    %v3956 = vsub.f32 %v172, %v3955
    %v3957 = vand.u32 %v3956, 4294901760
    %v3958 = vsub.f32 %v3956, %v3957
    %v3959 = vand.u32 %v3958, 4294901760
    %3960 = vmatpush.msra.mxu0 %v3959
    %v3961 = vand.u32 %v171, 4294901760
    %v3962 = vsub.f32 %v171, %v3961
    %v3963 = vand.u32 %v3962, 4294901760
    %v3964 = vsub.f32 %v3962, %v3963
    %v3965 = vand.u32 %v3964, 4294901760
    %3966 = vmatpush.msra.mxu0 %v3965
    %v3967 = vand.u32 %v170, 4294901760
    %v3968 = vsub.f32 %v170, %v3967
    %v3969 = vand.u32 %v3968, 4294901760
    %v3970 = vsub.f32 %v3968, %v3969
    %v3971 = vand.u32 %v3970, 4294901760
    %3972 = vmatpush.msra.mxu0 %v3971
    %v3973 = vand.u32 %v3674, 4294901760
    %3974 = vmatmul.f32.gmra.mxu0 %v3973
    %v3975 = vpop.f32.mrf.mxu0
    %v3976 = vadd.f32 %v3935, %v3975
    %3977 = vdwg.mxu0
    %3978 = vmatpush.msra.mxu0 0.0
    %3979 = vmatpush.msra.mxu0 0.0
    %3980 = vmatpush.msra.mxu0 0.0
    %3981 = vmatpush.msra.mxu0 0.0
    %3982 = vmatpush.msra.mxu0 0.0
    %3983 = vmatpush.msra.mxu0 0.0
    %3984 = vmatpush.msra.mxu0 0.0
    %3985 = vmatpush.msra.mxu0 0.0
    %3986 = vmatpush.msra.mxu0 0.0
    %3987 = vmatpush.msra.mxu0 0.0
    %3988 = vmatpush.msra.mxu0 0.0
    %3989 = vmatpush.msra.mxu0 0.0
    %v3990 = vand.u32 %v173, 4294901760
    %v3991 = vsub.f32 %v173, %v3990
    %3992 = vmatpush.msra.mxu0 %v3991
    %v3993 = vand.u32 %v172, 4294901760
    %v3994 = vsub.f32 %v172, %v3993
    %3995 = vmatpush.msra.mxu0 %v3994
    %v3996 = vand.u32 %v171, 4294901760
    %v3997 = vsub.f32 %v171, %v3996
    %3998 = vmatpush.msra.mxu0 %v3997
    %v3999 = vand.u32 %v170, 4294901760
    %v4000 = vsub.f32 %v170, %v3999
    %4001 = vmatpush.msra.mxu0 %v4000
    %v4002 = vand.u32 %v3674, 4294901760
    %v4003 = vsub.f32 %v3674, %v4002
    %4004 = vmatmul.f32.gmra.mxu0 %v4003
    %v4005 = vpop.f32.mrf.mxu0
    %v4006 = vadd.f32 %v3976, %v4005
    %4007 = vdwg.mxu0
    %4008 = vmatpush.msra.mxu0 0.0
    %4009 = vmatpush.msra.mxu0 0.0
    %4010 = vmatpush.msra.mxu0 0.0
    %4011 = vmatpush.msra.mxu0 0.0
    %4012 = vmatpush.msra.mxu0 0.0
    %4013 = vmatpush.msra.mxu0 0.0
    %4014 = vmatpush.msra.mxu0 0.0
    %4015 = vmatpush.msra.mxu0 0.0
    %4016 = vmatpush.msra.mxu0 0.0
    %4017 = vmatpush.msra.mxu0 0.0
    %4018 = vmatpush.msra.mxu0 0.0
    %4019 = vmatpush.msra.mxu0 0.0
    %v4020 = vand.u32 %v173, 4294901760
    %4021 = vmatpush.msra.mxu0 %v4020
    %v4022 = vand.u32 %v172, 4294901760
    %4023 = vmatpush.msra.mxu0 %v4022
    %v4024 = vand.u32 %v171, 4294901760
    %4025 = vmatpush.msra.mxu0 %v4024
    %v4026 = vand.u32 %v170, 4294901760
    %4027 = vmatpush.msra.mxu0 %v4026
    %v4028 = vand.u32 %v3674, 4294901760
    %v4029 = vsub.f32 %v3674, %v4028
    %v4030 = vand.u32 %v4029, 4294901760
    %4031 = vmatmul.f32.gmra.mxu0 %v4030
    %v4032 = vpop.f32.mrf.mxu0
    %v4033 = vadd.f32 %v4006, %v4032
    %4034 = vdwg.mxu0
    %4035 = vmatpush.msra.mxu0 0.0
    %4036 = vmatpush.msra.mxu0 0.0
    %4037 = vmatpush.msra.mxu0 0.0
    %4038 = vmatpush.msra.mxu0 0.0
    %4039 = vmatpush.msra.mxu0 0.0
    %4040 = vmatpush.msra.mxu0 0.0
    %4041 = vmatpush.msra.mxu0 0.0
    %4042 = vmatpush.msra.mxu0 0.0
    %4043 = vmatpush.msra.mxu0 0.0
    %4044 = vmatpush.msra.mxu0 0.0
    %4045 = vmatpush.msra.mxu0 0.0
    %4046 = vmatpush.msra.mxu0 0.0
    %v4047 = vand.u32 %v173, 4294901760
    %v4048 = vsub.f32 %v173, %v4047
    %v4049 = vand.u32 %v4048, 4294901760
    %4050 = vmatpush.msra.mxu0 %v4049
    %v4051 = vand.u32 %v172, 4294901760
    %v4052 = vsub.f32 %v172, %v4051
    %v4053 = vand.u32 %v4052, 4294901760
    %4054 = vmatpush.msra.mxu0 %v4053
    %v4055 = vand.u32 %v171, 4294901760
    %v4056 = vsub.f32 %v171, %v4055
    %v4057 = vand.u32 %v4056, 4294901760
    %4058 = vmatpush.msra.mxu0 %v4057
    %v4059 = vand.u32 %v170, 4294901760
    %v4060 = vsub.f32 %v170, %v4059
    %v4061 = vand.u32 %v4060, 4294901760
    %4062 = vmatpush.msra.mxu0 %v4061
    %v4063 = vand.u32 %v3674, 4294901760
    %4064 = vmatmul.f32.gmra.mxu0 %v4063
    %v4065 = vpop.f32.mrf.mxu0
    %v4066 = vadd.f32 %v4033, %v4065
    %4067 = vdwg.mxu0
    %4068 = vmatpush.msra.mxu0 0.0
    %4069 = vmatpush.msra.mxu0 0.0
    %4070 = vmatpush.msra.mxu0 0.0
    %4071 = vmatpush.msra.mxu0 0.0
    %4072 = vmatpush.msra.mxu0 0.0
    %4073 = vmatpush.msra.mxu0 0.0
    %4074 = vmatpush.msra.mxu0 0.0
    %4075 = vmatpush.msra.mxu0 0.0
    %4076 = vmatpush.msra.mxu0 0.0
    %4077 = vmatpush.msra.mxu0 0.0
    %4078 = vmatpush.msra.mxu0 0.0
    %4079 = vmatpush.msra.mxu0 0.0
    %v4080 = vand.u32 %v173, 4294901760
    %4081 = vmatpush.msra.mxu0 %v4080
    %v4082 = vand.u32 %v172, 4294901760
    %4083 = vmatpush.msra.mxu0 %v4082
    %v4084 = vand.u32 %v171, 4294901760
    %4085 = vmatpush.msra.mxu0 %v4084
    %v4086 = vand.u32 %v170, 4294901760
    %4087 = vmatpush.msra.mxu0 %v4086
    %v4088 = vand.u32 %v3674, 4294901760
    %4089 = vmatmul.f32.gmra.mxu0 %v4088
    %v4090 = vpop.f32.mrf.mxu0
    %v4091 = vadd.f32 %v4066, %v4090
    %4092 = vdwg.mxu0
    %v4093 = vadd.f32 %v3907, %v4091
    %v4094 = vtanh.pop %v4093
    %v4095 = vxor.u32 %v4093, 2147483648
    %v4096 = vmul.f32 %v4095, 1.442695
    %v4097 = vpow.pop %v4096
    %v4098 = vadd.f32 %v4097, 1.0
    %v4099 = vrcp.pop %v4098
    %v4100 = vmul.f32 %v4098, %v4099
    %v4101 = vsub.f32 1.0, %v4100
    %v4102 = vmul.f32 %v4099, %v4101
    %v4103 = vadd.f32 %v4099, %v4102
    %vm4104 = vweird.f32 %v4098
    %vm4105 = vweird.f32 %v4099
    %vm4106 = vmor %vm4104, %vm4105
    %v4107 = vsel %vm4106, %v4099, %v4103
    %v4108 = vand.u32 2147483647, %v4098
    %vm4109 = vcmp.eq.f32.partialorder %v4108, 8.507059e+37
    %v4110 = vand.u32 %v4098, 2147483648
    %v4111 = vor.u32 1.1754944e-38, %v4110
    %v4112 = vsel %vm4109, %v4111, %v4107
    %v4113 = vmul.f32 1.0, %v4112
    %v4114 = vsel %vm649, %v4094, %v4113
    %v4115 = vmul.f32 %v4114, %v3477
    %4117 = vrot.lane.b32.xlu0 %v4114, 64
    %v4118 = vpop.permute.xlu0 %4117
    %v4120 = vmul.f32 %v4114, %v4118
    %4122 = vrot.lane.b32.xlu0 %v4120, 32
    %v4123 = vpop.permute.xlu0 %4122
    %v4125 = vadd.f32 %v4115, %v4123
    %v4126 = vtanh.pop %v4125
    %4128 = vrot.lane.b32.xlu0 %v4126, 64
    %v4129 = vpop.permute.xlu0 %4128
    %v4131 = vmul.f32 %v4114, %v4129
    %v4132 = vsel %vm210, %v3902, 0
    %4134 = vmatpush.msra.mxu0 0.0
    %4135 = vmatpush.msra.mxu0 0.0
    %4136 = vmatpush.msra.mxu0 0.0
    %4137 = vmatpush.msra.mxu0 0.0
    %4138 = vmatpush.msra.mxu0 0.0
    %4139 = vmatpush.msra.mxu0 0.0
    %4140 = vmatpush.msra.mxu0 0.0
    %4141 = vmatpush.msra.mxu0 0.0
    %4142 = vmatpush.msra.mxu0 0.0
    %4143 = vmatpush.msra.mxu0 0.0
    %4144 = vmatpush.msra.mxu0 0.0
    %4145 = vmatpush.msra.mxu0 0.0
    %v4146 = vand.u32 %v181, 4294901760
    %4147 = vmatpush.msra.mxu0 %v4146
    %v4148 = vand.u32 %v180, 4294901760
    %4149 = vmatpush.msra.mxu0 %v4148
    %v4150 = vand.u32 %v179, 4294901760
    %4151 = vmatpush.msra.mxu0 %v4150
    %v4152 = vand.u32 %v178, 4294901760
    %4153 = vmatpush.msra.mxu0 %v4152
    %v4154 = vand.u32 %v4132, 4294901760
    %v4155 = vsub.f32 %v4132, %v4154
    %v4156 = vand.u32 %v4155, 4294901760
    %v4157 = vsub.f32 %v4155, %v4156
    %v4158 = vand.u32 %v4157, 4294901760
    %4159 = vmatmul.f32.gmra.mxu0 %v4158
    %v4160 = vpop.f32.mrf.mxu0
    %v4161 = vadd.f32 0.0, %v4160
    %4162 = vdwg.mxu0
    %4163 = vmatpush.msra.mxu0 0.0
    %4164 = vmatpush.msra.mxu0 0.0
    %4165 = vmatpush.msra.mxu0 0.0
    %4166 = vmatpush.msra.mxu0 0.0
    %4167 = vmatpush.msra.mxu0 0.0
    %4168 = vmatpush.msra.mxu0 0.0
    %4169 = vmatpush.msra.mxu0 0.0
    %4170 = vmatpush.msra.mxu0 0.0
    %4171 = vmatpush.msra.mxu0 0.0
    %4172 = vmatpush.msra.mxu0 0.0
    %4173 = vmatpush.msra.mxu0 0.0
    %4174 = vmatpush.msra.mxu0 0.0
    %v4175 = vand.u32 %v181, 4294901760
    %v4176 = vsub.f32 %v181, %v4175
    %v4177 = vand.u32 %v4176, 4294901760
    %v4178 = vsub.f32 %v4176, %v4177
    %v4179 = vand.u32 %v4178, 4294901760
    %4180 = vmatpush.msra.mxu0 %v4179
    %v4181 = vand.u32 %v180, 4294901760
    %v4182 = vsub.f32 %v180, %v4181
    %v4183 = vand.u32 %v4182, 4294901760
    %v4184 = vsub.f32 %v4182, %v4183
    %v4185 = vand.u32 %v4184, 4294901760
    %4186 = vmatpush.msra.mxu0 %v4185
    %v4187 = vand.u32 %v179, 4294901760
    %v4188 = vsub.f32 %v179, %v4187
    %v4189 = vand.u32 %v4188, 4294901760
    %v4190 = vsub.f32 %v4188, %v4189
    %v4191 = vand.u32 %v4190, 4294901760
    %4192 = vmatpush.msra.mxu0 %v4191
    %v4193 = vand.u32 %v178, 4294901760
    %v4194 = vsub.f32 %v178, %v4193
    %v4195 = vand.u32 %v4194, 4294901760
    %v4196 = vsub.f32 %v4194, %v4195
    %v4197 = vand.u32 %v4196, 4294901760
    %4198 = vmatpush.msra.mxu0 %v4197
    %v4199 = vand.u32 %v4132, 4294901760
    %4200 = vmatmul.f32.gmra.mxu0 %v4199
    %v4201 = vpop.f32.mrf.mxu0
    %v4202 = vadd.f32 %v4161, %v4201
    %4203 = vdwg.mxu0
    %4204 = vmatpush.msra.mxu0 0.0
    %4205 = vmatpush.msra.mxu0 0.0
    %4206 = vmatpush.msra.mxu0 0.0
    %4207 = vmatpush.msra.mxu0 0.0
    %4208 = vmatpush.msra.mxu0 0.0
    %4209 = vmatpush.msra.mxu0 0.0
    %4210 = vmatpush.msra.mxu0 0.0
    %4211 = vmatpush.msra.mxu0 0.0
    %4212 = vmatpush.msra.mxu0 0.0
    %4213 = vmatpush.msra.mxu0 0.0
    %4214 = vmatpush.msra.mxu0 0.0
    %4215 = vmatpush.msra.mxu0 0.0
    %v4216 = vand.u32 %v181, 4294901760
    %v4217 = vsub.f32 %v181, %v4216
    %4218 = vmatpush.msra.mxu0 %v4217
    %v4219 = vand.u32 %v180, 4294901760
    %v4220 = vsub.f32 %v180, %v4219
    %4221 = vmatpush.msra.mxu0 %v4220
    %v4222 = vand.u32 %v179, 4294901760
    %v4223 = vsub.f32 %v179, %v4222
    %4224 = vmatpush.msra.mxu0 %v4223
    %v4225 = vand.u32 %v178, 4294901760
    %v4226 = vsub.f32 %v178, %v4225
    %4227 = vmatpush.msra.mxu0 %v4226
    %v4228 = vand.u32 %v4132, 4294901760
    %v4229 = vsub.f32 %v4132, %v4228
    %4230 = vmatmul.f32.gmra.mxu0 %v4229
    %v4231 = vpop.f32.mrf.mxu0
    %v4232 = vadd.f32 %v4202, %v4231
    %4233 = vdwg.mxu0
    %4234 = vmatpush.msra.mxu0 0.0
    %4235 = vmatpush.msra.mxu0 0.0
    %4236 = vmatpush.msra.mxu0 0.0
    %4237 = vmatpush.msra.mxu0 0.0
    %4238 = vmatpush.msra.mxu0 0.0
    %4239 = vmatpush.msra.mxu0 0.0
    %4240 = vmatpush.msra.mxu0 0.0
    %4241 = vmatpush.msra.mxu0 0.0
    %4242 = vmatpush.msra.mxu0 0.0
    %4243 = vmatpush.msra.mxu0 0.0
    %4244 = vmatpush.msra.mxu0 0.0
    %4245 = vmatpush.msra.mxu0 0.0
    %v4246 = vand.u32 %v181, 4294901760
    %4247 = vmatpush.msra.mxu0 %v4246
    %v4248 = vand.u32 %v180, 4294901760
    %4249 = vmatpush.msra.mxu0 %v4248
    %v4250 = vand.u32 %v179, 4294901760
    %4251 = vmatpush.msra.mxu0 %v4250
    %v4252 = vand.u32 %v178, 4294901760
    %4253 = vmatpush.msra.mxu0 %v4252
    %v4254 = vand.u32 %v4132, 4294901760
    %v4255 = vsub.f32 %v4132, %v4254
    %v4256 = vand.u32 %v4255, 4294901760
    %4257 = vmatmul.f32.gmra.mxu0 %v4256
    %v4258 = vpop.f32.mrf.mxu0
    %v4259 = vadd.f32 %v4232, %v4258
    %4260 = vdwg.mxu0
    %4261 = vmatpush.msra.mxu0 0.0
    %4262 = vmatpush.msra.mxu0 0.0
    %4263 = vmatpush.msra.mxu0 0.0
    %4264 = vmatpush.msra.mxu0 0.0
    %4265 = vmatpush.msra.mxu0 0.0
    %4266 = vmatpush.msra.mxu0 0.0
    %4267 = vmatpush.msra.mxu0 0.0
    %4268 = vmatpush.msra.mxu0 0.0
    %4269 = vmatpush.msra.mxu0 0.0
    %4270 = vmatpush.msra.mxu0 0.0
    %4271 = vmatpush.msra.mxu0 0.0
    %4272 = vmatpush.msra.mxu0 0.0
    %v4273 = vand.u32 %v181, 4294901760
    %v4274 = vsub.f32 %v181, %v4273
    %v4275 = vand.u32 %v4274, 4294901760
    %4276 = vmatpush.msra.mxu0 %v4275
    %v4277 = vand.u32 %v180, 4294901760
    %v4278 = vsub.f32 %v180, %v4277
    %v4279 = vand.u32 %v4278, 4294901760
    %4280 = vmatpush.msra.mxu0 %v4279
    %v4281 = vand.u32 %v179, 4294901760
    %v4282 = vsub.f32 %v179, %v4281
    %v4283 = vand.u32 %v4282, 4294901760
    %4284 = vmatpush.msra.mxu0 %v4283
    %v4285 = vand.u32 %v178, 4294901760
    %v4286 = vsub.f32 %v178, %v4285
    %v4287 = vand.u32 %v4286, 4294901760
    %4288 = vmatpush.msra.mxu0 %v4287
    %v4289 = vand.u32 %v4132, 4294901760
    %4290 = vmatmul.f32.gmra.mxu0 %v4289
    %v4291 = vpop.f32.mrf.mxu0
    %v4292 = vadd.f32 %v4259, %v4291
    %4293 = vdwg.mxu0
    %4294 = vmatpush.msra.mxu0 0.0
    %4295 = vmatpush.msra.mxu0 0.0
    %4296 = vmatpush.msra.mxu0 0.0
    %4297 = vmatpush.msra.mxu0 0.0
    %4298 = vmatpush.msra.mxu0 0.0
    %4299 = vmatpush.msra.mxu0 0.0
    %4300 = vmatpush.msra.mxu0 0.0
    %4301 = vmatpush.msra.mxu0 0.0
    %4302 = vmatpush.msra.mxu0 0.0
    %4303 = vmatpush.msra.mxu0 0.0
    %4304 = vmatpush.msra.mxu0 0.0
    %4305 = vmatpush.msra.mxu0 0.0
    %v4306 = vand.u32 %v181, 4294901760
    %4307 = vmatpush.msra.mxu0 %v4306
    %v4308 = vand.u32 %v180, 4294901760
    %4309 = vmatpush.msra.mxu0 %v4308
    %v4310 = vand.u32 %v179, 4294901760
    %4311 = vmatpush.msra.mxu0 %v4310
    %v4312 = vand.u32 %v178, 4294901760
    %4313 = vmatpush.msra.mxu0 %v4312
    %v4314 = vand.u32 %v4132, 4294901760
    %4315 = vmatmul.f32.gmra.mxu0 %v4314
    %v4316 = vpop.f32.mrf.mxu0
    %v4317 = vadd.f32 %v4292, %v4316
    %4318 = vdwg.mxu0
    %4320 = vrot.lane.b32.xlu0 %v4131, 32
    %v4321 = vpop.permute.xlu0 %4320
    %v4322 = vsel %vm210, %v4321, 0
    %4324 = vmatpush.msra.mxu0 0.0
    %4325 = vmatpush.msra.mxu0 0.0
    %4326 = vmatpush.msra.mxu0 0.0
    %4327 = vmatpush.msra.mxu0 0.0
    %4328 = vmatpush.msra.mxu0 0.0
    %4329 = vmatpush.msra.mxu0 0.0
    %4330 = vmatpush.msra.mxu0 0.0
    %4331 = vmatpush.msra.mxu0 0.0
    %4332 = vmatpush.msra.mxu0 0.0
    %4333 = vmatpush.msra.mxu0 0.0
    %4334 = vmatpush.msra.mxu0 0.0
    %4335 = vmatpush.msra.mxu0 0.0
    %v4336 = vand.u32 %v177, 4294901760
    %4337 = vmatpush.msra.mxu0 %v4336
    %v4338 = vand.u32 %v176, 4294901760
    %4339 = vmatpush.msra.mxu0 %v4338
    %v4340 = vand.u32 %v175, 4294901760
    %4341 = vmatpush.msra.mxu0 %v4340
    %v4342 = vand.u32 %v174, 4294901760
    %4343 = vmatpush.msra.mxu0 %v4342
    %v4344 = vand.u32 %v4322, 4294901760
    %v4345 = vsub.f32 %v4322, %v4344
    %v4346 = vand.u32 %v4345, 4294901760
    %v4347 = vsub.f32 %v4345, %v4346
    %v4348 = vand.u32 %v4347, 4294901760
    %4349 = vmatmul.f32.gmra.mxu0 %v4348
    %v4350 = vpop.f32.mrf.mxu0
    %v4351 = vadd.f32 %v4317, %v4350
    %4352 = vdwg.mxu0
    %4353 = vmatpush.msra.mxu0 0.0
    %4354 = vmatpush.msra.mxu0 0.0
    %4355 = vmatpush.msra.mxu0 0.0
    %4356 = vmatpush.msra.mxu0 0.0
    %4357 = vmatpush.msra.mxu0 0.0
    %4358 = vmatpush.msra.mxu0 0.0
    %4359 = vmatpush.msra.mxu0 0.0
    %4360 = vmatpush.msra.mxu0 0.0
    %4361 = vmatpush.msra.mxu0 0.0
    %4362 = vmatpush.msra.mxu0 0.0
    %4363 = vmatpush.msra.mxu0 0.0
    %4364 = vmatpush.msra.mxu0 0.0
    %v4365 = vand.u32 %v177, 4294901760
    %v4366 = vsub.f32 %v177, %v4365
    %v4367 = vand.u32 %v4366, 4294901760
    %v4368 = vsub.f32 %v4366, %v4367
    %v4369 = vand.u32 %v4368, 4294901760
    %4370 = vmatpush.msra.mxu0 %v4369
    %v4371 = vand.u32 %v176, 4294901760
    %v4372 = vsub.f32 %v176, %v4371
    %v4373 = vand.u32 %v4372, 4294901760
    %v4374 = vsub.f32 %v4372, %v4373
    %v4375 = vand.u32 %v4374, 4294901760
    %4376 = vmatpush.msra.mxu0 %v4375
    %v4377 = vand.u32 %v175, 4294901760
    %v4378 = vsub.f32 %v175, %v4377
    %v4379 = vand.u32 %v4378, 4294901760
    %v4380 = vsub.f32 %v4378, %v4379
    %v4381 = vand.u32 %v4380, 4294901760
    %4382 = vmatpush.msra.mxu0 %v4381
    %v4383 = vand.u32 %v174, 4294901760
    %v4384 = vsub.f32 %v174, %v4383
    %v4385 = vand.u32 %v4384, 4294901760
    %v4386 = vsub.f32 %v4384, %v4385
    %v4387 = vand.u32 %v4386, 4294901760
    %4388 = vmatpush.msra.mxu0 %v4387
    %v4389 = vand.u32 %v4322, 4294901760
    %4390 = vmatmul.f32.gmra.mxu0 %v4389
    %v4391 = vpop.f32.mrf.mxu0
    %v4392 = vadd.f32 %v4351, %v4391
    %4393 = vdwg.mxu0
    %4394 = vmatpush.msra.mxu0 0.0
    %4395 = vmatpush.msra.mxu0 0.0
    %4396 = vmatpush.msra.mxu0 0.0
    %4397 = vmatpush.msra.mxu0 0.0
    %4398 = vmatpush.msra.mxu0 0.0
    %4399 = vmatpush.msra.mxu0 0.0
    %4400 = vmatpush.msra.mxu0 0.0
    %4401 = vmatpush.msra.mxu0 0.0
    %4402 = vmatpush.msra.mxu0 0.0
    %4403 = vmatpush.msra.mxu0 0.0
    %4404 = vmatpush.msra.mxu0 0.0
    %4405 = vmatpush.msra.mxu0 0.0
    %v4406 = vand.u32 %v177, 4294901760
    %v4407 = vsub.f32 %v177, %v4406
    %4408 = vmatpush.msra.mxu0 %v4407
    %v4409 = vand.u32 %v176, 4294901760
    %v4410 = vsub.f32 %v176, %v4409
    %4411 = vmatpush.msra.mxu0 %v4410
    %v4412 = vand.u32 %v175, 4294901760
    %v4413 = vsub.f32 %v175, %v4412
    %4414 = vmatpush.msra.mxu0 %v4413
    %v4415 = vand.u32 %v174, 4294901760
    %v4416 = vsub.f32 %v174, %v4415
    %4417 = vmatpush.msra.mxu0 %v4416
    %v4418 = vand.u32 %v4322, 4294901760
    %v4419 = vsub.f32 %v4322, %v4418
    %4420 = vmatmul.f32.gmra.mxu0 %v4419
    %v4421 = vpop.f32.mrf.mxu0
    %v4422 = vadd.f32 %v4392, %v4421
    %4423 = vdwg.mxu0
    %4424 = vmatpush.msra.mxu0 0.0
    %4425 = vmatpush.msra.mxu0 0.0
    %4426 = vmatpush.msra.mxu0 0.0
    %4427 = vmatpush.msra.mxu0 0.0
    %4428 = vmatpush.msra.mxu0 0.0
    %4429 = vmatpush.msra.mxu0 0.0
    %4430 = vmatpush.msra.mxu0 0.0
    %4431 = vmatpush.msra.mxu0 0.0
    %4432 = vmatpush.msra.mxu0 0.0
    %4433 = vmatpush.msra.mxu0 0.0
    %4434 = vmatpush.msra.mxu0 0.0
    %4435 = vmatpush.msra.mxu0 0.0
    %v4436 = vand.u32 %v177, 4294901760
    %4437 = vmatpush.msra.mxu0 %v4436
    %v4438 = vand.u32 %v176, 4294901760
    %4439 = vmatpush.msra.mxu0 %v4438
    %v4440 = vand.u32 %v175, 4294901760
    %4441 = vmatpush.msra.mxu0 %v4440
    %v4442 = vand.u32 %v174, 4294901760
    %4443 = vmatpush.msra.mxu0 %v4442
    %v4444 = vand.u32 %v4322, 4294901760
    %v4445 = vsub.f32 %v4322, %v4444
    %v4446 = vand.u32 %v4445, 4294901760
    %4447 = vmatmul.f32.gmra.mxu0 %v4446
    %v4448 = vpop.f32.mrf.mxu0
    %v4449 = vadd.f32 %v4422, %v4448
    %4450 = vdwg.mxu0
    %4451 = vmatpush.msra.mxu0 0.0
    %4452 = vmatpush.msra.mxu0 0.0
    %4453 = vmatpush.msra.mxu0 0.0
    %4454 = vmatpush.msra.mxu0 0.0
    %4455 = vmatpush.msra.mxu0 0.0
    %4456 = vmatpush.msra.mxu0 0.0
    %4457 = vmatpush.msra.mxu0 0.0
    %4458 = vmatpush.msra.mxu0 0.0
    %4459 = vmatpush.msra.mxu0 0.0
    %4460 = vmatpush.msra.mxu0 0.0
    %4461 = vmatpush.msra.mxu0 0.0
    %4462 = vmatpush.msra.mxu0 0.0
    %v4463 = vand.u32 %v177, 4294901760
    %v4464 = vsub.f32 %v177, %v4463
    %v4465 = vand.u32 %v4464, 4294901760
    %4466 = vmatpush.msra.mxu0 %v4465
    %v4467 = vand.u32 %v176, 4294901760
    %v4468 = vsub.f32 %v176, %v4467
    %v4469 = vand.u32 %v4468, 4294901760
    %4470 = vmatpush.msra.mxu0 %v4469
    %v4471 = vand.u32 %v175, 4294901760
    %v4472 = vsub.f32 %v175, %v4471
    %v4473 = vand.u32 %v4472, 4294901760
    %4474 = vmatpush.msra.mxu0 %v4473
    %v4475 = vand.u32 %v174, 4294901760
    %v4476 = vsub.f32 %v174, %v4475
    %v4477 = vand.u32 %v4476, 4294901760
    %4478 = vmatpush.msra.mxu0 %v4477
    %v4479 = vand.u32 %v4322, 4294901760
    %4480 = vmatmul.f32.gmra.mxu0 %v4479
    %v4481 = vpop.f32.mrf.mxu0
    %v4482 = vadd.f32 %v4449, %v4481
    %4483 = vdwg.mxu0
    %4484 = vmatpush.msra.mxu0 0.0
    %4485 = vmatpush.msra.mxu0 0.0
    %4486 = vmatpush.msra.mxu0 0.0
    %4487 = vmatpush.msra.mxu0 0.0
    %4488 = vmatpush.msra.mxu0 0.0
    %4489 = vmatpush.msra.mxu0 0.0
    %4490 = vmatpush.msra.mxu0 0.0
    %4491 = vmatpush.msra.mxu0 0.0
    %4492 = vmatpush.msra.mxu0 0.0
    %4493 = vmatpush.msra.mxu0 0.0
    %4494 = vmatpush.msra.mxu0 0.0
    %4495 = vmatpush.msra.mxu0 0.0
    %v4496 = vand.u32 %v177, 4294901760
    %4497 = vmatpush.msra.mxu0 %v4496
    %v4498 = vand.u32 %v176, 4294901760
    %4499 = vmatpush.msra.mxu0 %v4498
    %v4500 = vand.u32 %v175, 4294901760
    %4501 = vmatpush.msra.mxu0 %v4500
    %v4502 = vand.u32 %v174, 4294901760
    %4503 = vmatpush.msra.mxu0 %v4502
    %v4504 = vand.u32 %v4322, 4294901760
    %4505 = vmatmul.f32.gmra.mxu0 %v4504
    %v4506 = vpop.f32.mrf.mxu0
    %v4507 = vadd.f32 %v4482, %v4506
    %4508 = vdwg.mxu0
    %v4509 = vadd.f32 %v4507, %v184
    %v4510 = vtanh.pop %v4509
    %v4511 = vxor.u32 %v4509, 2147483648
    %v4512 = vmul.f32 %v4511, 1.442695
    %v4513 = vpow.pop %v4512
    %v4514 = vadd.f32 %v4513, 1.0
    %v4515 = vrcp.pop %v4514
    %v4516 = vmul.f32 %v4514, %v4515
    %v4517 = vsub.f32 1.0, %v4516
    %v4518 = vmul.f32 %v4515, %v4517
    %v4519 = vadd.f32 %v4515, %v4518
    %vm4520 = vweird.f32 %v4514
    %vm4521 = vweird.f32 %v4515
    %vm4522 = vmor %vm4520, %vm4521
    %v4523 = vsel %vm4522, %v4515, %v4519
    %v4524 = vand.u32 2147483647, %v4514
    %vm4525 = vcmp.eq.f32.partialorder %v4524, 8.507059e+37
    %v4526 = vand.u32 %v4514, 2147483648
    %v4527 = vor.u32 1.1754944e-38, %v4526
    %v4528 = vsel %vm4525, %v4527, %v4523
    %v4529 = vmul.f32 1.0, %v4528
    %v4530 = vsel %vm649, %v4510, %v4529
    %v4531 = vmul.f32 %v4530, %v3893
    %4533 = vrot.lane.b32.xlu0 %v4530, 64
    %v4534 = vpop.permute.xlu0 %4533
    %v4536 = vmul.f32 %v4530, %v4534
    %4538 = vrot.lane.b32.xlu0 %v4536, 32
    %v4539 = vpop.permute.xlu0 %4538
    %v4541 = vadd.f32 %v4531, %v4539
    %v4542 = vtanh.pop %v4541
    %4544 = vrot.lane.b32.xlu0 %v4542, 64
    %v4545 = vpop.permute.xlu0 %4544
    %v4547 = vmul.f32 %v4530, %v4545
    %4549 = vrot.lane.b32.xlu0 %v4547, 32
    %v4550 = vpop.permute.xlu0 %4549
    %s4552 = scalar_lea.vmem [#allocation17], 40
    %4553 = vst.msk [vmem:[%s4552] sm:$0xff] %vm210, %v4550
    %s4554 = scalar_lea.vmem [#allocation2], 48
    %v4555 = vld [vmem:[%s4554] sm:$0xff]
    %4556 = vmatpush.msra.mxu0 0.0
    %4557 = vmatpush.msra.mxu0 0.0
    %4558 = vmatpush.msra.mxu0 0.0
    %4559 = vmatpush.msra.mxu0 0.0
    %4560 = vmatpush.msra.mxu0 0.0
    %4561 = vmatpush.msra.mxu0 0.0
    %4562 = vmatpush.msra.mxu0 0.0
    %4563 = vmatpush.msra.mxu0 0.0
    %4564 = vmatpush.msra.mxu0 0.0
    %4565 = vmatpush.msra.mxu0 0.0
    %4566 = vmatpush.msra.mxu0 0.0
    %4567 = vmatpush.msra.mxu0 0.0
    %v4568 = vand.u32 %v173, 4294901760
    %4569 = vmatpush.msra.mxu0 %v4568
    %v4570 = vand.u32 %v172, 4294901760
    %4571 = vmatpush.msra.mxu0 %v4570
    %v4572 = vand.u32 %v171, 4294901760
    %4573 = vmatpush.msra.mxu0 %v4572
    %v4574 = vand.u32 %v170, 4294901760
    %4575 = vmatpush.msra.mxu0 %v4574
    %v4576 = vand.u32 %v4322, 4294901760
    %v4577 = vsub.f32 %v4322, %v4576
    %v4578 = vand.u32 %v4577, 4294901760
    %v4579 = vsub.f32 %v4577, %v4578
    %v4580 = vand.u32 %v4579, 4294901760
    %4581 = vmatmul.f32.gmra.mxu0 %v4580
    %v4582 = vpop.f32.mrf.mxu0
    %v4583 = vadd.f32 0.0, %v4582
    %4584 = vdwg.mxu0
    %4585 = vmatpush.msra.mxu0 0.0
    %4586 = vmatpush.msra.mxu0 0.0
    %4587 = vmatpush.msra.mxu0 0.0
    %4588 = vmatpush.msra.mxu0 0.0
    %4589 = vmatpush.msra.mxu0 0.0
    %4590 = vmatpush.msra.mxu0 0.0
    %4591 = vmatpush.msra.mxu0 0.0
    %4592 = vmatpush.msra.mxu0 0.0
    %4593 = vmatpush.msra.mxu0 0.0
    %4594 = vmatpush.msra.mxu0 0.0
    %4595 = vmatpush.msra.mxu0 0.0
    %4596 = vmatpush.msra.mxu0 0.0
    %v4597 = vand.u32 %v173, 4294901760
    %v4598 = vsub.f32 %v173, %v4597
    %v4599 = vand.u32 %v4598, 4294901760
    %v4600 = vsub.f32 %v4598, %v4599
    %v4601 = vand.u32 %v4600, 4294901760
    %4602 = vmatpush.msra.mxu0 %v4601
    %v4603 = vand.u32 %v172, 4294901760
    %v4604 = vsub.f32 %v172, %v4603
    %v4605 = vand.u32 %v4604, 4294901760
    %v4606 = vsub.f32 %v4604, %v4605
    %v4607 = vand.u32 %v4606, 4294901760
    %4608 = vmatpush.msra.mxu0 %v4607
    %v4609 = vand.u32 %v171, 4294901760
    %v4610 = vsub.f32 %v171, %v4609
    %v4611 = vand.u32 %v4610, 4294901760
    %v4612 = vsub.f32 %v4610, %v4611
    %v4613 = vand.u32 %v4612, 4294901760
    %4614 = vmatpush.msra.mxu0 %v4613
    %v4615 = vand.u32 %v170, 4294901760
    %v4616 = vsub.f32 %v170, %v4615
    %v4617 = vand.u32 %v4616, 4294901760
    %v4618 = vsub.f32 %v4616, %v4617
    %v4619 = vand.u32 %v4618, 4294901760
    %4620 = vmatpush.msra.mxu0 %v4619
    %v4621 = vand.u32 %v4322, 4294901760
    %4622 = vmatmul.f32.gmra.mxu0 %v4621
    %v4623 = vpop.f32.mrf.mxu0
    %v4624 = vadd.f32 %v4583, %v4623
    %4625 = vdwg.mxu0
    %4626 = vmatpush.msra.mxu0 0.0
    %4627 = vmatpush.msra.mxu0 0.0
    %4628 = vmatpush.msra.mxu0 0.0
    %4629 = vmatpush.msra.mxu0 0.0
    %4630 = vmatpush.msra.mxu0 0.0
    %4631 = vmatpush.msra.mxu0 0.0
    %4632 = vmatpush.msra.mxu0 0.0
    %4633 = vmatpush.msra.mxu0 0.0
    %4634 = vmatpush.msra.mxu0 0.0
    %4635 = vmatpush.msra.mxu0 0.0
    %4636 = vmatpush.msra.mxu0 0.0
    %4637 = vmatpush.msra.mxu0 0.0
    %v4638 = vand.u32 %v173, 4294901760
    %v4639 = vsub.f32 %v173, %v4638
    %4640 = vmatpush.msra.mxu0 %v4639
    %v4641 = vand.u32 %v172, 4294901760
    %v4642 = vsub.f32 %v172, %v4641
    %4643 = vmatpush.msra.mxu0 %v4642
    %v4644 = vand.u32 %v171, 4294901760
    %v4645 = vsub.f32 %v171, %v4644
    %4646 = vmatpush.msra.mxu0 %v4645
    %v4647 = vand.u32 %v170, 4294901760
    %v4648 = vsub.f32 %v170, %v4647
    %4649 = vmatpush.msra.mxu0 %v4648
    %v4650 = vand.u32 %v4322, 4294901760
    %v4651 = vsub.f32 %v4322, %v4650
    %4652 = vmatmul.f32.gmra.mxu0 %v4651
    %v4653 = vpop.f32.mrf.mxu0
    %v4654 = vadd.f32 %v4624, %v4653
    %4655 = vdwg.mxu0
    %4656 = vmatpush.msra.mxu0 0.0
    %4657 = vmatpush.msra.mxu0 0.0
    %4658 = vmatpush.msra.mxu0 0.0
    %4659 = vmatpush.msra.mxu0 0.0
    %4660 = vmatpush.msra.mxu0 0.0
    %4661 = vmatpush.msra.mxu0 0.0
    %4662 = vmatpush.msra.mxu0 0.0
    %4663 = vmatpush.msra.mxu0 0.0
    %4664 = vmatpush.msra.mxu0 0.0
    %4665 = vmatpush.msra.mxu0 0.0
    %4666 = vmatpush.msra.mxu0 0.0
    %4667 = vmatpush.msra.mxu0 0.0
    %v4668 = vand.u32 %v173, 4294901760
    %4669 = vmatpush.msra.mxu0 %v4668
    %v4670 = vand.u32 %v172, 4294901760
    %4671 = vmatpush.msra.mxu0 %v4670
    %v4672 = vand.u32 %v171, 4294901760
    %4673 = vmatpush.msra.mxu0 %v4672
    %v4674 = vand.u32 %v170, 4294901760
    %4675 = vmatpush.msra.mxu0 %v4674
    %v4676 = vand.u32 %v4322, 4294901760
    %v4677 = vsub.f32 %v4322, %v4676
    %v4678 = vand.u32 %v4677, 4294901760
    %4679 = vmatmul.f32.gmra.mxu0 %v4678
    %v4680 = vpop.f32.mrf.mxu0
    %v4681 = vadd.f32 %v4654, %v4680
    %4682 = vdwg.mxu0
    %4683 = vmatpush.msra.mxu0 0.0
    %4684 = vmatpush.msra.mxu0 0.0
    %4685 = vmatpush.msra.mxu0 0.0
    %4686 = vmatpush.msra.mxu0 0.0
    %4687 = vmatpush.msra.mxu0 0.0
    %4688 = vmatpush.msra.mxu0 0.0
    %4689 = vmatpush.msra.mxu0 0.0
    %4690 = vmatpush.msra.mxu0 0.0
    %4691 = vmatpush.msra.mxu0 0.0
    %4692 = vmatpush.msra.mxu0 0.0
    %4693 = vmatpush.msra.mxu0 0.0
    %4694 = vmatpush.msra.mxu0 0.0
    %v4695 = vand.u32 %v173, 4294901760
    %v4696 = vsub.f32 %v173, %v4695
    %v4697 = vand.u32 %v4696, 4294901760
    %4698 = vmatpush.msra.mxu0 %v4697
    %v4699 = vand.u32 %v172, 4294901760
    %v4700 = vsub.f32 %v172, %v4699
    %v4701 = vand.u32 %v4700, 4294901760
    %4702 = vmatpush.msra.mxu0 %v4701
    %v4703 = vand.u32 %v171, 4294901760
    %v4704 = vsub.f32 %v171, %v4703
    %v4705 = vand.u32 %v4704, 4294901760
    %4706 = vmatpush.msra.mxu0 %v4705
    %v4707 = vand.u32 %v170, 4294901760
    %v4708 = vsub.f32 %v170, %v4707
    %v4709 = vand.u32 %v4708, 4294901760
    %4710 = vmatpush.msra.mxu0 %v4709
    %v4711 = vand.u32 %v4322, 4294901760
    %4712 = vmatmul.f32.gmra.mxu0 %v4711
    %v4713 = vpop.f32.mrf.mxu0
    %v4714 = vadd.f32 %v4681, %v4713
    %4715 = vdwg.mxu0
    %4716 = vmatpush.msra.mxu0 0.0
    %4717 = vmatpush.msra.mxu0 0.0
    %4718 = vmatpush.msra.mxu0 0.0
    %4719 = vmatpush.msra.mxu0 0.0
    %4720 = vmatpush.msra.mxu0 0.0
    %4721 = vmatpush.msra.mxu0 0.0
    %4722 = vmatpush.msra.mxu0 0.0
    %4723 = vmatpush.msra.mxu0 0.0
    %4724 = vmatpush.msra.mxu0 0.0
    %4725 = vmatpush.msra.mxu0 0.0
    %4726 = vmatpush.msra.mxu0 0.0
    %4727 = vmatpush.msra.mxu0 0.0
    %v4728 = vand.u32 %v173, 4294901760
    %4729 = vmatpush.msra.mxu0 %v4728
    %v4730 = vand.u32 %v172, 4294901760
    %4731 = vmatpush.msra.mxu0 %v4730
    %v4732 = vand.u32 %v171, 4294901760
    %4733 = vmatpush.msra.mxu0 %v4732
    %v4734 = vand.u32 %v170, 4294901760
    %4735 = vmatpush.msra.mxu0 %v4734
    %v4736 = vand.u32 %v4322, 4294901760
    %4737 = vmatmul.f32.gmra.mxu0 %v4736
    %v4738 = vpop.f32.mrf.mxu0
    %v4739 = vadd.f32 %v4714, %v4738
    %4740 = vdwg.mxu0
    %v4741 = vadd.f32 %v4555, %v4739
    %v4742 = vtanh.pop %v4741
    %v4743 = vxor.u32 %v4741, 2147483648
    %v4744 = vmul.f32 %v4743, 1.442695
    %v4745 = vpow.pop %v4744
    %v4746 = vadd.f32 %v4745, 1.0
    %v4747 = vrcp.pop %v4746
    %v4748 = vmul.f32 %v4746, %v4747
    %v4749 = vsub.f32 1.0, %v4748
    %v4750 = vmul.f32 %v4747, %v4749
    %v4751 = vadd.f32 %v4747, %v4750
    %vm4752 = vweird.f32 %v4746
    %vm4753 = vweird.f32 %v4747
    %vm4754 = vmor %vm4752, %vm4753
    %v4755 = vsel %vm4754, %v4747, %v4751
    %v4756 = vand.u32 2147483647, %v4746
    %vm4757 = vcmp.eq.f32.partialorder %v4756, 8.507059e+37
    %v4758 = vand.u32 %v4746, 2147483648
    %v4759 = vor.u32 1.1754944e-38, %v4758
    %v4760 = vsel %vm4757, %v4759, %v4755
    %v4761 = vmul.f32 1.0, %v4760
    %v4762 = vsel %vm649, %v4742, %v4761
    %v4763 = vmul.f32 %v4762, %v4125
    %4765 = vrot.lane.b32.xlu0 %v4762, 64
    %v4766 = vpop.permute.xlu0 %4765
    %v4768 = vmul.f32 %v4762, %v4766
    %4770 = vrot.lane.b32.xlu0 %v4768, 32
    %v4771 = vpop.permute.xlu0 %4770
    %v4773 = vadd.f32 %v4763, %v4771
    %v4774 = vtanh.pop %v4773
    %4776 = vrot.lane.b32.xlu0 %v4774, 64
    %v4777 = vpop.permute.xlu0 %4776
    %v4779 = vmul.f32 %v4762, %v4777
    %v4780 = vsel %vm210, %v4550, 0
    %4782 = vmatpush.msra.mxu0 0.0
    %4783 = vmatpush.msra.mxu0 0.0
    %4784 = vmatpush.msra.mxu0 0.0
    %4785 = vmatpush.msra.mxu0 0.0
    %4786 = vmatpush.msra.mxu0 0.0
    %4787 = vmatpush.msra.mxu0 0.0
    %4788 = vmatpush.msra.mxu0 0.0
    %4789 = vmatpush.msra.mxu0 0.0
    %4790 = vmatpush.msra.mxu0 0.0
    %4791 = vmatpush.msra.mxu0 0.0
    %4792 = vmatpush.msra.mxu0 0.0
    %4793 = vmatpush.msra.mxu0 0.0
    %v4794 = vand.u32 %v181, 4294901760
    %4795 = vmatpush.msra.mxu0 %v4794
    %v4796 = vand.u32 %v180, 4294901760
    %4797 = vmatpush.msra.mxu0 %v4796
    %v4798 = vand.u32 %v179, 4294901760
    %4799 = vmatpush.msra.mxu0 %v4798
    %v4800 = vand.u32 %v178, 4294901760
    %4801 = vmatpush.msra.mxu0 %v4800
    %v4802 = vand.u32 %v4780, 4294901760
    %v4803 = vsub.f32 %v4780, %v4802
    %v4804 = vand.u32 %v4803, 4294901760
    %v4805 = vsub.f32 %v4803, %v4804
    %v4806 = vand.u32 %v4805, 4294901760
    %4807 = vmatmul.f32.gmra.mxu0 %v4806
    %v4808 = vpop.f32.mrf.mxu0
    %v4809 = vadd.f32 0.0, %v4808
    %4810 = vdwg.mxu0
    %4811 = vmatpush.msra.mxu0 0.0
    %4812 = vmatpush.msra.mxu0 0.0
    %4813 = vmatpush.msra.mxu0 0.0
    %4814 = vmatpush.msra.mxu0 0.0
    %4815 = vmatpush.msra.mxu0 0.0
    %4816 = vmatpush.msra.mxu0 0.0
    %4817 = vmatpush.msra.mxu0 0.0
    %4818 = vmatpush.msra.mxu0 0.0
    %4819 = vmatpush.msra.mxu0 0.0
    %4820 = vmatpush.msra.mxu0 0.0
    %4821 = vmatpush.msra.mxu0 0.0
    %4822 = vmatpush.msra.mxu0 0.0
    %v4823 = vand.u32 %v181, 4294901760
    %v4824 = vsub.f32 %v181, %v4823
    %v4825 = vand.u32 %v4824, 4294901760
    %v4826 = vsub.f32 %v4824, %v4825
    %v4827 = vand.u32 %v4826, 4294901760
    %4828 = vmatpush.msra.mxu0 %v4827
    %v4829 = vand.u32 %v180, 4294901760
    %v4830 = vsub.f32 %v180, %v4829
    %v4831 = vand.u32 %v4830, 4294901760
    %v4832 = vsub.f32 %v4830, %v4831
    %v4833 = vand.u32 %v4832, 4294901760
    %4834 = vmatpush.msra.mxu0 %v4833
    %v4835 = vand.u32 %v179, 4294901760
    %v4836 = vsub.f32 %v179, %v4835
    %v4837 = vand.u32 %v4836, 4294901760
    %v4838 = vsub.f32 %v4836, %v4837
    %v4839 = vand.u32 %v4838, 4294901760
    %4840 = vmatpush.msra.mxu0 %v4839
    %v4841 = vand.u32 %v178, 4294901760
    %v4842 = vsub.f32 %v178, %v4841
    %v4843 = vand.u32 %v4842, 4294901760
    %v4844 = vsub.f32 %v4842, %v4843
    %v4845 = vand.u32 %v4844, 4294901760
    %4846 = vmatpush.msra.mxu0 %v4845
    %v4847 = vand.u32 %v4780, 4294901760
    %4848 = vmatmul.f32.gmra.mxu0 %v4847
    %v4849 = vpop.f32.mrf.mxu0
    %v4850 = vadd.f32 %v4809, %v4849
    %4851 = vdwg.mxu0
    %4852 = vmatpush.msra.mxu0 0.0
    %4853 = vmatpush.msra.mxu0 0.0
    %4854 = vmatpush.msra.mxu0 0.0
    %4855 = vmatpush.msra.mxu0 0.0
    %4856 = vmatpush.msra.mxu0 0.0
    %4857 = vmatpush.msra.mxu0 0.0
    %4858 = vmatpush.msra.mxu0 0.0
    %4859 = vmatpush.msra.mxu0 0.0
    %4860 = vmatpush.msra.mxu0 0.0
    %4861 = vmatpush.msra.mxu0 0.0
    %4862 = vmatpush.msra.mxu0 0.0
    %4863 = vmatpush.msra.mxu0 0.0
    %v4864 = vand.u32 %v181, 4294901760
    %v4865 = vsub.f32 %v181, %v4864
    %4866 = vmatpush.msra.mxu0 %v4865
    %v4867 = vand.u32 %v180, 4294901760
    %v4868 = vsub.f32 %v180, %v4867
    %4869 = vmatpush.msra.mxu0 %v4868
    %v4870 = vand.u32 %v179, 4294901760
    %v4871 = vsub.f32 %v179, %v4870
    %4872 = vmatpush.msra.mxu0 %v4871
    %v4873 = vand.u32 %v178, 4294901760
    %v4874 = vsub.f32 %v178, %v4873
    %4875 = vmatpush.msra.mxu0 %v4874
    %v4876 = vand.u32 %v4780, 4294901760
    %v4877 = vsub.f32 %v4780, %v4876
    %4878 = vmatmul.f32.gmra.mxu0 %v4877
    %v4879 = vpop.f32.mrf.mxu0
    %v4880 = vadd.f32 %v4850, %v4879
    %4881 = vdwg.mxu0
    %4882 = vmatpush.msra.mxu0 0.0
    %4883 = vmatpush.msra.mxu0 0.0
    %4884 = vmatpush.msra.mxu0 0.0
    %4885 = vmatpush.msra.mxu0 0.0
    %4886 = vmatpush.msra.mxu0 0.0
    %4887 = vmatpush.msra.mxu0 0.0
    %4888 = vmatpush.msra.mxu0 0.0
    %4889 = vmatpush.msra.mxu0 0.0
    %4890 = vmatpush.msra.mxu0 0.0
    %4891 = vmatpush.msra.mxu0 0.0
    %4892 = vmatpush.msra.mxu0 0.0
    %4893 = vmatpush.msra.mxu0 0.0
    %v4894 = vand.u32 %v181, 4294901760
    %4895 = vmatpush.msra.mxu0 %v4894
    %v4896 = vand.u32 %v180, 4294901760
    %4897 = vmatpush.msra.mxu0 %v4896
    %v4898 = vand.u32 %v179, 4294901760
    %4899 = vmatpush.msra.mxu0 %v4898
    %v4900 = vand.u32 %v178, 4294901760
    %4901 = vmatpush.msra.mxu0 %v4900
    %v4902 = vand.u32 %v4780, 4294901760
    %v4903 = vsub.f32 %v4780, %v4902
    %v4904 = vand.u32 %v4903, 4294901760
    %4905 = vmatmul.f32.gmra.mxu0 %v4904
    %v4906 = vpop.f32.mrf.mxu0
    %v4907 = vadd.f32 %v4880, %v4906
    %4908 = vdwg.mxu0
    %4909 = vmatpush.msra.mxu0 0.0
    %4910 = vmatpush.msra.mxu0 0.0
    %4911 = vmatpush.msra.mxu0 0.0
    %4912 = vmatpush.msra.mxu0 0.0
    %4913 = vmatpush.msra.mxu0 0.0
    %4914 = vmatpush.msra.mxu0 0.0
    %4915 = vmatpush.msra.mxu0 0.0
    %4916 = vmatpush.msra.mxu0 0.0
    %4917 = vmatpush.msra.mxu0 0.0
    %4918 = vmatpush.msra.mxu0 0.0
    %4919 = vmatpush.msra.mxu0 0.0
    %4920 = vmatpush.msra.mxu0 0.0
    %v4921 = vand.u32 %v181, 4294901760
    %v4922 = vsub.f32 %v181, %v4921
    %v4923 = vand.u32 %v4922, 4294901760
    %4924 = vmatpush.msra.mxu0 %v4923
    %v4925 = vand.u32 %v180, 4294901760
    %v4926 = vsub.f32 %v180, %v4925
    %v4927 = vand.u32 %v4926, 4294901760
    %4928 = vmatpush.msra.mxu0 %v4927
    %v4929 = vand.u32 %v179, 4294901760
    %v4930 = vsub.f32 %v179, %v4929
    %v4931 = vand.u32 %v4930, 4294901760
    %4932 = vmatpush.msra.mxu0 %v4931
    %v4933 = vand.u32 %v178, 4294901760
    %v4934 = vsub.f32 %v178, %v4933
    %v4935 = vand.u32 %v4934, 4294901760
    %4936 = vmatpush.msra.mxu0 %v4935
    %v4937 = vand.u32 %v4780, 4294901760
    %4938 = vmatmul.f32.gmra.mxu0 %v4937
    %v4939 = vpop.f32.mrf.mxu0
    %v4940 = vadd.f32 %v4907, %v4939
    %4941 = vdwg.mxu0
    %4942 = vmatpush.msra.mxu0 0.0
    %4943 = vmatpush.msra.mxu0 0.0
    %4944 = vmatpush.msra.mxu0 0.0
    %4945 = vmatpush.msra.mxu0 0.0
    %4946 = vmatpush.msra.mxu0 0.0
    %4947 = vmatpush.msra.mxu0 0.0
    %4948 = vmatpush.msra.mxu0 0.0
    %4949 = vmatpush.msra.mxu0 0.0
    %4950 = vmatpush.msra.mxu0 0.0
    %4951 = vmatpush.msra.mxu0 0.0
    %4952 = vmatpush.msra.mxu0 0.0
    %4953 = vmatpush.msra.mxu0 0.0
    %v4954 = vand.u32 %v181, 4294901760
    %4955 = vmatpush.msra.mxu0 %v4954
    %v4956 = vand.u32 %v180, 4294901760
    %4957 = vmatpush.msra.mxu0 %v4956
    %v4958 = vand.u32 %v179, 4294901760
    %4959 = vmatpush.msra.mxu0 %v4958
    %v4960 = vand.u32 %v178, 4294901760
    %4961 = vmatpush.msra.mxu0 %v4960
    %v4962 = vand.u32 %v4780, 4294901760
    %4963 = vmatmul.f32.gmra.mxu0 %v4962
    %v4964 = vpop.f32.mrf.mxu0
    %v4965 = vadd.f32 %v4940, %v4964
    %4966 = vdwg.mxu0
    %4968 = vrot.lane.b32.xlu0 %v4779, 32
    %v4969 = vpop.permute.xlu0 %4968
    %v4970 = vsel %vm210, %v4969, 0
    %4972 = vmatpush.msra.mxu0 0.0
    %4973 = vmatpush.msra.mxu0 0.0
    %4974 = vmatpush.msra.mxu0 0.0
    %4975 = vmatpush.msra.mxu0 0.0
    %4976 = vmatpush.msra.mxu0 0.0
    %4977 = vmatpush.msra.mxu0 0.0
    %4978 = vmatpush.msra.mxu0 0.0
    %4979 = vmatpush.msra.mxu0 0.0
    %4980 = vmatpush.msra.mxu0 0.0
    %4981 = vmatpush.msra.mxu0 0.0
    %4982 = vmatpush.msra.mxu0 0.0
    %4983 = vmatpush.msra.mxu0 0.0
    %v4984 = vand.u32 %v177, 4294901760
    %4985 = vmatpush.msra.mxu0 %v4984
    %v4986 = vand.u32 %v176, 4294901760
    %4987 = vmatpush.msra.mxu0 %v4986
    %v4988 = vand.u32 %v175, 4294901760
    %4989 = vmatpush.msra.mxu0 %v4988
    %v4990 = vand.u32 %v174, 4294901760
    %4991 = vmatpush.msra.mxu0 %v4990
    %v4992 = vand.u32 %v4970, 4294901760
    %v4993 = vsub.f32 %v4970, %v4992
    %v4994 = vand.u32 %v4993, 4294901760
    %v4995 = vsub.f32 %v4993, %v4994
    %v4996 = vand.u32 %v4995, 4294901760
    %4997 = vmatmul.f32.gmra.mxu0 %v4996
    %v4998 = vpop.f32.mrf.mxu0
    %v4999 = vadd.f32 %v4965, %v4998
    %5000 = vdwg.mxu0
    %5001 = vmatpush.msra.mxu0 0.0
    %5002 = vmatpush.msra.mxu0 0.0
    %5003 = vmatpush.msra.mxu0 0.0
    %5004 = vmatpush.msra.mxu0 0.0
    %5005 = vmatpush.msra.mxu0 0.0
    %5006 = vmatpush.msra.mxu0 0.0
    %5007 = vmatpush.msra.mxu0 0.0
    %5008 = vmatpush.msra.mxu0 0.0
    %5009 = vmatpush.msra.mxu0 0.0
    %5010 = vmatpush.msra.mxu0 0.0
    %5011 = vmatpush.msra.mxu0 0.0
    %5012 = vmatpush.msra.mxu0 0.0
    %v5013 = vand.u32 %v177, 4294901760
    %v5014 = vsub.f32 %v177, %v5013
    %v5015 = vand.u32 %v5014, 4294901760
    %v5016 = vsub.f32 %v5014, %v5015
    %v5017 = vand.u32 %v5016, 4294901760
    %5018 = vmatpush.msra.mxu0 %v5017
    %v5019 = vand.u32 %v176, 4294901760
    %v5020 = vsub.f32 %v176, %v5019
    %v5021 = vand.u32 %v5020, 4294901760
    %v5022 = vsub.f32 %v5020, %v5021
    %v5023 = vand.u32 %v5022, 4294901760
    %5024 = vmatpush.msra.mxu0 %v5023
    %v5025 = vand.u32 %v175, 4294901760
    %v5026 = vsub.f32 %v175, %v5025
    %v5027 = vand.u32 %v5026, 4294901760
    %v5028 = vsub.f32 %v5026, %v5027
    %v5029 = vand.u32 %v5028, 4294901760
    %5030 = vmatpush.msra.mxu0 %v5029
    %v5031 = vand.u32 %v174, 4294901760
    %v5032 = vsub.f32 %v174, %v5031
    %v5033 = vand.u32 %v5032, 4294901760
    %v5034 = vsub.f32 %v5032, %v5033
    %v5035 = vand.u32 %v5034, 4294901760
    %5036 = vmatpush.msra.mxu0 %v5035
    %v5037 = vand.u32 %v4970, 4294901760
    %5038 = vmatmul.f32.gmra.mxu0 %v5037
    %v5039 = vpop.f32.mrf.mxu0
    %v5040 = vadd.f32 %v4999, %v5039
    %5041 = vdwg.mxu0
    %5042 = vmatpush.msra.mxu0 0.0
    %5043 = vmatpush.msra.mxu0 0.0
    %5044 = vmatpush.msra.mxu0 0.0
    %5045 = vmatpush.msra.mxu0 0.0
    %5046 = vmatpush.msra.mxu0 0.0
    %5047 = vmatpush.msra.mxu0 0.0
    %5048 = vmatpush.msra.mxu0 0.0
    %5049 = vmatpush.msra.mxu0 0.0
    %5050 = vmatpush.msra.mxu0 0.0
    %5051 = vmatpush.msra.mxu0 0.0
    %5052 = vmatpush.msra.mxu0 0.0
    %5053 = vmatpush.msra.mxu0 0.0
    %v5054 = vand.u32 %v177, 4294901760
    %v5055 = vsub.f32 %v177, %v5054
    %5056 = vmatpush.msra.mxu0 %v5055
    %v5057 = vand.u32 %v176, 4294901760
    %v5058 = vsub.f32 %v176, %v5057
    %5059 = vmatpush.msra.mxu0 %v5058
    %v5060 = vand.u32 %v175, 4294901760
    %v5061 = vsub.f32 %v175, %v5060
    %5062 = vmatpush.msra.mxu0 %v5061
    %v5063 = vand.u32 %v174, 4294901760
    %v5064 = vsub.f32 %v174, %v5063
    %5065 = vmatpush.msra.mxu0 %v5064
    %v5066 = vand.u32 %v4970, 4294901760
    %v5067 = vsub.f32 %v4970, %v5066
    %5068 = vmatmul.f32.gmra.mxu0 %v5067
    %v5069 = vpop.f32.mrf.mxu0
    %v5070 = vadd.f32 %v5040, %v5069
    %5071 = vdwg.mxu0
    %5072 = vmatpush.msra.mxu0 0.0
    %5073 = vmatpush.msra.mxu0 0.0
    %5074 = vmatpush.msra.mxu0 0.0
    %5075 = vmatpush.msra.mxu0 0.0
    %5076 = vmatpush.msra.mxu0 0.0
    %5077 = vmatpush.msra.mxu0 0.0
    %5078 = vmatpush.msra.mxu0 0.0
    %5079 = vmatpush.msra.mxu0 0.0
    %5080 = vmatpush.msra.mxu0 0.0
    %5081 = vmatpush.msra.mxu0 0.0
    %5082 = vmatpush.msra.mxu0 0.0
    %5083 = vmatpush.msra.mxu0 0.0
    %v5084 = vand.u32 %v177, 4294901760
    %5085 = vmatpush.msra.mxu0 %v5084
    %v5086 = vand.u32 %v176, 4294901760
    %5087 = vmatpush.msra.mxu0 %v5086
    %v5088 = vand.u32 %v175, 4294901760
    %5089 = vmatpush.msra.mxu0 %v5088
    %v5090 = vand.u32 %v174, 4294901760
    %5091 = vmatpush.msra.mxu0 %v5090
    %v5092 = vand.u32 %v4970, 4294901760
    %v5093 = vsub.f32 %v4970, %v5092
    %v5094 = vand.u32 %v5093, 4294901760
    %5095 = vmatmul.f32.gmra.mxu0 %v5094
    %v5096 = vpop.f32.mrf.mxu0
    %v5097 = vadd.f32 %v5070, %v5096
    %5098 = vdwg.mxu0
    %5099 = vmatpush.msra.mxu0 0.0
    %5100 = vmatpush.msra.mxu0 0.0
    %5101 = vmatpush.msra.mxu0 0.0
    %5102 = vmatpush.msra.mxu0 0.0
    %5103 = vmatpush.msra.mxu0 0.0
    %5104 = vmatpush.msra.mxu0 0.0
    %5105 = vmatpush.msra.mxu0 0.0
    %5106 = vmatpush.msra.mxu0 0.0
    %5107 = vmatpush.msra.mxu0 0.0
    %5108 = vmatpush.msra.mxu0 0.0
    %5109 = vmatpush.msra.mxu0 0.0
    %5110 = vmatpush.msra.mxu0 0.0
    %v5111 = vand.u32 %v177, 4294901760
    %v5112 = vsub.f32 %v177, %v5111
    %v5113 = vand.u32 %v5112, 4294901760
    %5114 = vmatpush.msra.mxu0 %v5113
    %v5115 = vand.u32 %v176, 4294901760
    %v5116 = vsub.f32 %v176, %v5115
    %v5117 = vand.u32 %v5116, 4294901760
    %5118 = vmatpush.msra.mxu0 %v5117
    %v5119 = vand.u32 %v175, 4294901760
    %v5120 = vsub.f32 %v175, %v5119
    %v5121 = vand.u32 %v5120, 4294901760
    %5122 = vmatpush.msra.mxu0 %v5121
    %v5123 = vand.u32 %v174, 4294901760
    %v5124 = vsub.f32 %v174, %v5123
    %v5125 = vand.u32 %v5124, 4294901760
    %5126 = vmatpush.msra.mxu0 %v5125
    %v5127 = vand.u32 %v4970, 4294901760
    %5128 = vmatmul.f32.gmra.mxu0 %v5127
    %v5129 = vpop.f32.mrf.mxu0
    %v5130 = vadd.f32 %v5097, %v5129
    %5131 = vdwg.mxu0
    %5132 = vmatpush.msra.mxu0 0.0
    %5133 = vmatpush.msra.mxu0 0.0
    %5134 = vmatpush.msra.mxu0 0.0
    %5135 = vmatpush.msra.mxu0 0.0
    %5136 = vmatpush.msra.mxu0 0.0
    %5137 = vmatpush.msra.mxu0 0.0
    %5138 = vmatpush.msra.mxu0 0.0
    %5139 = vmatpush.msra.mxu0 0.0
    %5140 = vmatpush.msra.mxu0 0.0
    %5141 = vmatpush.msra.mxu0 0.0
    %5142 = vmatpush.msra.mxu0 0.0
    %5143 = vmatpush.msra.mxu0 0.0
    %v5144 = vand.u32 %v177, 4294901760
    %5145 = vmatpush.msra.mxu0 %v5144
    %v5146 = vand.u32 %v176, 4294901760
    %5147 = vmatpush.msra.mxu0 %v5146
    %v5148 = vand.u32 %v175, 4294901760
    %5149 = vmatpush.msra.mxu0 %v5148
    %v5150 = vand.u32 %v174, 4294901760
    %5151 = vmatpush.msra.mxu0 %v5150
    %v5152 = vand.u32 %v4970, 4294901760
    %5153 = vmatmul.f32.gmra.mxu0 %v5152
    %v5154 = vpop.f32.mrf.mxu0
    %v5155 = vadd.f32 %v5130, %v5154
    %5156 = vdwg.mxu0
    %v5157 = vadd.f32 %v5155, %v184
    %v5158 = vtanh.pop %v5157
    %v5159 = vxor.u32 %v5157, 2147483648
    %v5160 = vmul.f32 %v5159, 1.442695
    %v5161 = vpow.pop %v5160
    %v5162 = vadd.f32 %v5161, 1.0
    %v5163 = vrcp.pop %v5162
    %v5164 = vmul.f32 %v5162, %v5163
    %v5165 = vsub.f32 1.0, %v5164
    %v5166 = vmul.f32 %v5163, %v5165
    %v5167 = vadd.f32 %v5163, %v5166
    %vm5168 = vweird.f32 %v5162
    %vm5169 = vweird.f32 %v5163
    %vm5170 = vmor %vm5168, %vm5169
    %v5171 = vsel %vm5170, %v5163, %v5167
    %v5172 = vand.u32 2147483647, %v5162
    %vm5173 = vcmp.eq.f32.partialorder %v5172, 8.507059e+37
    %v5174 = vand.u32 %v5162, 2147483648
    %v5175 = vor.u32 1.1754944e-38, %v5174
    %v5176 = vsel %vm5173, %v5175, %v5171
    %v5177 = vmul.f32 1.0, %v5176
    %v5178 = vsel %vm649, %v5158, %v5177
    %v5179 = vmul.f32 %v5178, %v4541
    %5181 = vrot.lane.b32.xlu0 %v5178, 64
    %v5182 = vpop.permute.xlu0 %5181
    %v5184 = vmul.f32 %v5178, %v5182
    %5186 = vrot.lane.b32.xlu0 %v5184, 32
    %v5187 = vpop.permute.xlu0 %5186
    %v5189 = vadd.f32 %v5179, %v5187
    %v5190 = vtanh.pop %v5189
    %5192 = vrot.lane.b32.xlu0 %v5190, 64
    %v5193 = vpop.permute.xlu0 %5192
    %v5195 = vmul.f32 %v5178, %v5193
    %5197 = vrot.lane.b32.xlu0 %v5195, 32
    %v5198 = vpop.permute.xlu0 %5197
    %s5200 = scalar_lea.vmem [#allocation17], 48
    %5201 = vst.msk [vmem:[%s5200] sm:$0xff] %vm210, %v5198
    %s5202 = scalar_lea.vmem [#allocation2], 56
    %v5203 = vld [vmem:[%s5202] sm:$0xff]
    %5204 = vmatpush.msra.mxu0 0.0
    %5205 = vmatpush.msra.mxu0 0.0
    %5206 = vmatpush.msra.mxu0 0.0
    %5207 = vmatpush.msra.mxu0 0.0
    %5208 = vmatpush.msra.mxu0 0.0
    %5209 = vmatpush.msra.mxu0 0.0
    %5210 = vmatpush.msra.mxu0 0.0
    %5211 = vmatpush.msra.mxu0 0.0
    %5212 = vmatpush.msra.mxu0 0.0
    %5213 = vmatpush.msra.mxu0 0.0
    %5214 = vmatpush.msra.mxu0 0.0
    %5215 = vmatpush.msra.mxu0 0.0
    %v5216 = vand.u32 %v173, 4294901760
    %5217 = vmatpush.msra.mxu0 %v5216
    %v5218 = vand.u32 %v172, 4294901760
    %5219 = vmatpush.msra.mxu0 %v5218
    %v5220 = vand.u32 %v171, 4294901760
    %5221 = vmatpush.msra.mxu0 %v5220
    %v5222 = vand.u32 %v170, 4294901760
    %5223 = vmatpush.msra.mxu0 %v5222
    %v5224 = vand.u32 %v4970, 4294901760
    %v5225 = vsub.f32 %v4970, %v5224
    %v5226 = vand.u32 %v5225, 4294901760
    %v5227 = vsub.f32 %v5225, %v5226
    %v5228 = vand.u32 %v5227, 4294901760
    %5229 = vmatmul.f32.gmra.mxu0 %v5228
    %v5230 = vpop.f32.mrf.mxu0
    %v5231 = vadd.f32 0.0, %v5230
    %5232 = vdwg.mxu0
    %5233 = vmatpush.msra.mxu0 0.0
    %5234 = vmatpush.msra.mxu0 0.0
    %5235 = vmatpush.msra.mxu0 0.0
    %5236 = vmatpush.msra.mxu0 0.0
    %5237 = vmatpush.msra.mxu0 0.0
    %5238 = vmatpush.msra.mxu0 0.0
    %5239 = vmatpush.msra.mxu0 0.0
    %5240 = vmatpush.msra.mxu0 0.0
    %5241 = vmatpush.msra.mxu0 0.0
    %5242 = vmatpush.msra.mxu0 0.0
    %5243 = vmatpush.msra.mxu0 0.0
    %5244 = vmatpush.msra.mxu0 0.0
    %v5245 = vand.u32 %v173, 4294901760
    %v5246 = vsub.f32 %v173, %v5245
    %v5247 = vand.u32 %v5246, 4294901760
    %v5248 = vsub.f32 %v5246, %v5247
    %v5249 = vand.u32 %v5248, 4294901760
    %5250 = vmatpush.msra.mxu0 %v5249
    %v5251 = vand.u32 %v172, 4294901760
    %v5252 = vsub.f32 %v172, %v5251
    %v5253 = vand.u32 %v5252, 4294901760
    %v5254 = vsub.f32 %v5252, %v5253
    %v5255 = vand.u32 %v5254, 4294901760
    %5256 = vmatpush.msra.mxu0 %v5255
    %v5257 = vand.u32 %v171, 4294901760
    %v5258 = vsub.f32 %v171, %v5257
    %v5259 = vand.u32 %v5258, 4294901760
    %v5260 = vsub.f32 %v5258, %v5259
    %v5261 = vand.u32 %v5260, 4294901760
    %5262 = vmatpush.msra.mxu0 %v5261
    %v5263 = vand.u32 %v170, 4294901760
    %v5264 = vsub.f32 %v170, %v5263
    %v5265 = vand.u32 %v5264, 4294901760
    %v5266 = vsub.f32 %v5264, %v5265
    %v5267 = vand.u32 %v5266, 4294901760
    %5268 = vmatpush.msra.mxu0 %v5267
    %v5269 = vand.u32 %v4970, 4294901760
    %5270 = vmatmul.f32.gmra.mxu0 %v5269
    %v5271 = vpop.f32.mrf.mxu0
    %v5272 = vadd.f32 %v5231, %v5271
    %5273 = vdwg.mxu0
    %5274 = vmatpush.msra.mxu0 0.0
    %5275 = vmatpush.msra.mxu0 0.0
    %5276 = vmatpush.msra.mxu0 0.0
    %5277 = vmatpush.msra.mxu0 0.0
    %5278 = vmatpush.msra.mxu0 0.0
    %5279 = vmatpush.msra.mxu0 0.0
    %5280 = vmatpush.msra.mxu0 0.0
    %5281 = vmatpush.msra.mxu0 0.0
    %5282 = vmatpush.msra.mxu0 0.0
    %5283 = vmatpush.msra.mxu0 0.0
    %5284 = vmatpush.msra.mxu0 0.0
    %5285 = vmatpush.msra.mxu0 0.0
    %v5286 = vand.u32 %v173, 4294901760
    %v5287 = vsub.f32 %v173, %v5286
    %5288 = vmatpush.msra.mxu0 %v5287
    %v5289 = vand.u32 %v172, 4294901760
    %v5290 = vsub.f32 %v172, %v5289
    %5291 = vmatpush.msra.mxu0 %v5290
    %v5292 = vand.u32 %v171, 4294901760
    %v5293 = vsub.f32 %v171, %v5292
    %5294 = vmatpush.msra.mxu0 %v5293
    %v5295 = vand.u32 %v170, 4294901760
    %v5296 = vsub.f32 %v170, %v5295
    %5297 = vmatpush.msra.mxu0 %v5296
    %v5298 = vand.u32 %v4970, 4294901760
    %v5299 = vsub.f32 %v4970, %v5298
    %5300 = vmatmul.f32.gmra.mxu0 %v5299
    %v5301 = vpop.f32.mrf.mxu0
    %v5302 = vadd.f32 %v5272, %v5301
    %5303 = vdwg.mxu0
    %5304 = vmatpush.msra.mxu0 0.0
    %5305 = vmatpush.msra.mxu0 0.0
    %5306 = vmatpush.msra.mxu0 0.0
    %5307 = vmatpush.msra.mxu0 0.0
    %5308 = vmatpush.msra.mxu0 0.0
    %5309 = vmatpush.msra.mxu0 0.0
    %5310 = vmatpush.msra.mxu0 0.0
    %5311 = vmatpush.msra.mxu0 0.0
    %5312 = vmatpush.msra.mxu0 0.0
    %5313 = vmatpush.msra.mxu0 0.0
    %5314 = vmatpush.msra.mxu0 0.0
    %5315 = vmatpush.msra.mxu0 0.0
    %v5316 = vand.u32 %v173, 4294901760
    %5317 = vmatpush.msra.mxu0 %v5316
    %v5318 = vand.u32 %v172, 4294901760
    %5319 = vmatpush.msra.mxu0 %v5318
    %v5320 = vand.u32 %v171, 4294901760
    %5321 = vmatpush.msra.mxu0 %v5320
    %v5322 = vand.u32 %v170, 4294901760
    %5323 = vmatpush.msra.mxu0 %v5322
    %v5324 = vand.u32 %v4970, 4294901760
    %v5325 = vsub.f32 %v4970, %v5324
    %v5326 = vand.u32 %v5325, 4294901760
    %5327 = vmatmul.f32.gmra.mxu0 %v5326
    %v5328 = vpop.f32.mrf.mxu0
    %v5329 = vadd.f32 %v5302, %v5328
    %5330 = vdwg.mxu0
    %5331 = vmatpush.msra.mxu0 0.0
    %5332 = vmatpush.msra.mxu0 0.0
    %5333 = vmatpush.msra.mxu0 0.0
    %5334 = vmatpush.msra.mxu0 0.0
    %5335 = vmatpush.msra.mxu0 0.0
    %5336 = vmatpush.msra.mxu0 0.0
    %5337 = vmatpush.msra.mxu0 0.0
    %5338 = vmatpush.msra.mxu0 0.0
    %5339 = vmatpush.msra.mxu0 0.0
    %5340 = vmatpush.msra.mxu0 0.0
    %5341 = vmatpush.msra.mxu0 0.0
    %5342 = vmatpush.msra.mxu0 0.0
    %v5343 = vand.u32 %v173, 4294901760
    %v5344 = vsub.f32 %v173, %v5343
    %v5345 = vand.u32 %v5344, 4294901760
    %5346 = vmatpush.msra.mxu0 %v5345
    %v5347 = vand.u32 %v172, 4294901760
    %v5348 = vsub.f32 %v172, %v5347
    %v5349 = vand.u32 %v5348, 4294901760
    %5350 = vmatpush.msra.mxu0 %v5349
    %v5351 = vand.u32 %v171, 4294901760
    %v5352 = vsub.f32 %v171, %v5351
    %v5353 = vand.u32 %v5352, 4294901760
    %5354 = vmatpush.msra.mxu0 %v5353
    %v5355 = vand.u32 %v170, 4294901760
    %v5356 = vsub.f32 %v170, %v5355
    %v5357 = vand.u32 %v5356, 4294901760
    %5358 = vmatpush.msra.mxu0 %v5357
    %v5359 = vand.u32 %v4970, 4294901760
    %5360 = vmatmul.f32.gmra.mxu0 %v5359
    %v5361 = vpop.f32.mrf.mxu0
    %v5362 = vadd.f32 %v5329, %v5361
    %5363 = vdwg.mxu0
    %5364 = vmatpush.msra.mxu0 0.0
    %5365 = vmatpush.msra.mxu0 0.0
    %5366 = vmatpush.msra.mxu0 0.0
    %5367 = vmatpush.msra.mxu0 0.0
    %5368 = vmatpush.msra.mxu0 0.0
    %5369 = vmatpush.msra.mxu0 0.0
    %5370 = vmatpush.msra.mxu0 0.0
    %5371 = vmatpush.msra.mxu0 0.0
    %5372 = vmatpush.msra.mxu0 0.0
    %5373 = vmatpush.msra.mxu0 0.0
    %5374 = vmatpush.msra.mxu0 0.0
    %5375 = vmatpush.msra.mxu0 0.0
    %v5376 = vand.u32 %v173, 4294901760
    %5377 = vmatpush.msra.mxu0 %v5376
    %v5378 = vand.u32 %v172, 4294901760
    %5379 = vmatpush.msra.mxu0 %v5378
    %v5380 = vand.u32 %v171, 4294901760
    %5381 = vmatpush.msra.mxu0 %v5380
    %v5382 = vand.u32 %v170, 4294901760
    %5383 = vmatpush.msra.mxu0 %v5382
    %v5384 = vand.u32 %v4970, 4294901760
    %5385 = vmatmul.f32.gmra.mxu0 %v5384
    %v5386 = vpop.f32.mrf.mxu0
    %v5387 = vadd.f32 %v5362, %v5386
    %5388 = vdwg.mxu0
    %v5389 = vadd.f32 %v5203, %v5387
    %v5390 = vtanh.pop %v5389
    %v5391 = vxor.u32 %v5389, 2147483648
    %v5392 = vmul.f32 %v5391, 1.442695
    %v5393 = vpow.pop %v5392
    %v5394 = vadd.f32 %v5393, 1.0
    %v5395 = vrcp.pop %v5394
    %v5396 = vmul.f32 %v5394, %v5395
    %v5397 = vsub.f32 1.0, %v5396
    %v5398 = vmul.f32 %v5395, %v5397
    %v5399 = vadd.f32 %v5395, %v5398
    %vm5400 = vweird.f32 %v5394
    %vm5401 = vweird.f32 %v5395
    %vm5402 = vmor %vm5400, %vm5401
    %v5403 = vsel %vm5402, %v5395, %v5399
    %v5404 = vand.u32 2147483647, %v5394
    %vm5405 = vcmp.eq.f32.partialorder %v5404, 8.507059e+37
    %v5406 = vand.u32 %v5394, 2147483648
    %v5407 = vor.u32 1.1754944e-38, %v5406
    %v5408 = vsel %vm5405, %v5407, %v5403
    %v5409 = vmul.f32 1.0, %v5408
    %v5410 = vsel %vm649, %v5390, %v5409
    %v5411 = vmul.f32 %v5410, %v4773
    %5413 = vrot.lane.b32.xlu0 %v5410, 64
    %v5414 = vpop.permute.xlu0 %5413
    %v5416 = vmul.f32 %v5410, %v5414
    %5418 = vrot.lane.b32.xlu0 %v5416, 32
    %v5419 = vpop.permute.xlu0 %5418
    %v5421 = vadd.f32 %v5411, %v5419
    %v5422 = vtanh.pop %v5421
    %5424 = vrot.lane.b32.xlu0 %v5422, 64
    %v5425 = vpop.permute.xlu0 %5424
    %v5427 = vmul.f32 %v5410, %v5425
    %v5428 = vsel %vm210, %v5198, 0
    %5430 = vmatpush.msra.mxu0 0.0
    %5431 = vmatpush.msra.mxu0 0.0
    %5432 = vmatpush.msra.mxu0 0.0
    %5433 = vmatpush.msra.mxu0 0.0
    %5434 = vmatpush.msra.mxu0 0.0
    %5435 = vmatpush.msra.mxu0 0.0
    %5436 = vmatpush.msra.mxu0 0.0
    %5437 = vmatpush.msra.mxu0 0.0
    %5438 = vmatpush.msra.mxu0 0.0
    %5439 = vmatpush.msra.mxu0 0.0
    %5440 = vmatpush.msra.mxu0 0.0
    %5441 = vmatpush.msra.mxu0 0.0
    %v5442 = vand.u32 %v181, 4294901760
    %5443 = vmatpush.msra.mxu0 %v5442
    %v5444 = vand.u32 %v180, 4294901760
    %5445 = vmatpush.msra.mxu0 %v5444
    %v5446 = vand.u32 %v179, 4294901760
    %5447 = vmatpush.msra.mxu0 %v5446
    %v5448 = vand.u32 %v178, 4294901760
    %5449 = vmatpush.msra.mxu0 %v5448
    %v5450 = vand.u32 %v5428, 4294901760
    %v5451 = vsub.f32 %v5428, %v5450
    %v5452 = vand.u32 %v5451, 4294901760
    %v5453 = vsub.f32 %v5451, %v5452
    %v5454 = vand.u32 %v5453, 4294901760
    %5455 = vmatmul.f32.gmra.mxu0 %v5454
    %v5456 = vpop.f32.mrf.mxu0
    %v5457 = vadd.f32 0.0, %v5456
    %5458 = vdwg.mxu0
    %5459 = vmatpush.msra.mxu0 0.0
    %5460 = vmatpush.msra.mxu0 0.0
    %5461 = vmatpush.msra.mxu0 0.0
    %5462 = vmatpush.msra.mxu0 0.0
    %5463 = vmatpush.msra.mxu0 0.0
    %5464 = vmatpush.msra.mxu0 0.0
    %5465 = vmatpush.msra.mxu0 0.0
    %5466 = vmatpush.msra.mxu0 0.0
    %5467 = vmatpush.msra.mxu0 0.0
    %5468 = vmatpush.msra.mxu0 0.0
    %5469 = vmatpush.msra.mxu0 0.0
    %5470 = vmatpush.msra.mxu0 0.0
    %v5471 = vand.u32 %v181, 4294901760
    %v5472 = vsub.f32 %v181, %v5471
    %v5473 = vand.u32 %v5472, 4294901760
    %v5474 = vsub.f32 %v5472, %v5473
    %v5475 = vand.u32 %v5474, 4294901760
    %5476 = vmatpush.msra.mxu0 %v5475
    %v5477 = vand.u32 %v180, 4294901760
    %v5478 = vsub.f32 %v180, %v5477
    %v5479 = vand.u32 %v5478, 4294901760
    %v5480 = vsub.f32 %v5478, %v5479
    %v5481 = vand.u32 %v5480, 4294901760
    %5482 = vmatpush.msra.mxu0 %v5481
    %v5483 = vand.u32 %v179, 4294901760
    %v5484 = vsub.f32 %v179, %v5483
    %v5485 = vand.u32 %v5484, 4294901760
    %v5486 = vsub.f32 %v5484, %v5485
    %v5487 = vand.u32 %v5486, 4294901760
    %5488 = vmatpush.msra.mxu0 %v5487
    %v5489 = vand.u32 %v178, 4294901760
    %v5490 = vsub.f32 %v178, %v5489
    %v5491 = vand.u32 %v5490, 4294901760
    %v5492 = vsub.f32 %v5490, %v5491
    %v5493 = vand.u32 %v5492, 4294901760
    %5494 = vmatpush.msra.mxu0 %v5493
    %v5495 = vand.u32 %v5428, 4294901760
    %5496 = vmatmul.f32.gmra.mxu0 %v5495
    %v5497 = vpop.f32.mrf.mxu0
    %v5498 = vadd.f32 %v5457, %v5497
    %5499 = vdwg.mxu0
    %5500 = vmatpush.msra.mxu0 0.0
    %5501 = vmatpush.msra.mxu0 0.0
    %5502 = vmatpush.msra.mxu0 0.0
    %5503 = vmatpush.msra.mxu0 0.0
    %5504 = vmatpush.msra.mxu0 0.0
    %5505 = vmatpush.msra.mxu0 0.0
    %5506 = vmatpush.msra.mxu0 0.0
    %5507 = vmatpush.msra.mxu0 0.0
    %5508 = vmatpush.msra.mxu0 0.0
    %5509 = vmatpush.msra.mxu0 0.0
    %5510 = vmatpush.msra.mxu0 0.0
    %5511 = vmatpush.msra.mxu0 0.0
    %v5512 = vand.u32 %v181, 4294901760
    %v5513 = vsub.f32 %v181, %v5512
    %5514 = vmatpush.msra.mxu0 %v5513
    %v5515 = vand.u32 %v180, 4294901760
    %v5516 = vsub.f32 %v180, %v5515
    %5517 = vmatpush.msra.mxu0 %v5516
    %v5518 = vand.u32 %v179, 4294901760
    %v5519 = vsub.f32 %v179, %v5518
    %5520 = vmatpush.msra.mxu0 %v5519
    %v5521 = vand.u32 %v178, 4294901760
    %v5522 = vsub.f32 %v178, %v5521
    %5523 = vmatpush.msra.mxu0 %v5522
    %v5524 = vand.u32 %v5428, 4294901760
    %v5525 = vsub.f32 %v5428, %v5524
    %5526 = vmatmul.f32.gmra.mxu0 %v5525
    %v5527 = vpop.f32.mrf.mxu0
    %v5528 = vadd.f32 %v5498, %v5527
    %5529 = vdwg.mxu0
    %5530 = vmatpush.msra.mxu0 0.0
    %5531 = vmatpush.msra.mxu0 0.0
    %5532 = vmatpush.msra.mxu0 0.0
    %5533 = vmatpush.msra.mxu0 0.0
    %5534 = vmatpush.msra.mxu0 0.0
    %5535 = vmatpush.msra.mxu0 0.0
    %5536 = vmatpush.msra.mxu0 0.0
    %5537 = vmatpush.msra.mxu0 0.0
    %5538 = vmatpush.msra.mxu0 0.0
    %5539 = vmatpush.msra.mxu0 0.0
    %5540 = vmatpush.msra.mxu0 0.0
    %5541 = vmatpush.msra.mxu0 0.0
    %v5542 = vand.u32 %v181, 4294901760
    %5543 = vmatpush.msra.mxu0 %v5542
    %v5544 = vand.u32 %v180, 4294901760
    %5545 = vmatpush.msra.mxu0 %v5544
    %v5546 = vand.u32 %v179, 4294901760
    %5547 = vmatpush.msra.mxu0 %v5546
    %v5548 = vand.u32 %v178, 4294901760
    %5549 = vmatpush.msra.mxu0 %v5548
    %v5550 = vand.u32 %v5428, 4294901760
    %v5551 = vsub.f32 %v5428, %v5550
    %v5552 = vand.u32 %v5551, 4294901760
    %5553 = vmatmul.f32.gmra.mxu0 %v5552
    %v5554 = vpop.f32.mrf.mxu0
    %v5555 = vadd.f32 %v5528, %v5554
    %5556 = vdwg.mxu0
    %5557 = vmatpush.msra.mxu0 0.0
    %5558 = vmatpush.msra.mxu0 0.0
    %5559 = vmatpush.msra.mxu0 0.0
    %5560 = vmatpush.msra.mxu0 0.0
    %5561 = vmatpush.msra.mxu0 0.0
    %5562 = vmatpush.msra.mxu0 0.0
    %5563 = vmatpush.msra.mxu0 0.0
    %5564 = vmatpush.msra.mxu0 0.0
    %5565 = vmatpush.msra.mxu0 0.0
    %5566 = vmatpush.msra.mxu0 0.0
    %5567 = vmatpush.msra.mxu0 0.0
    %5568 = vmatpush.msra.mxu0 0.0
    %v5569 = vand.u32 %v181, 4294901760
    %v5570 = vsub.f32 %v181, %v5569
    %v5571 = vand.u32 %v5570, 4294901760
    %5572 = vmatpush.msra.mxu0 %v5571
    %v5573 = vand.u32 %v180, 4294901760
    %v5574 = vsub.f32 %v180, %v5573
    %v5575 = vand.u32 %v5574, 4294901760
    %5576 = vmatpush.msra.mxu0 %v5575
    %v5577 = vand.u32 %v179, 4294901760
    %v5578 = vsub.f32 %v179, %v5577
    %v5579 = vand.u32 %v5578, 4294901760
    %5580 = vmatpush.msra.mxu0 %v5579
    %v5581 = vand.u32 %v178, 4294901760
    %v5582 = vsub.f32 %v178, %v5581
    %v5583 = vand.u32 %v5582, 4294901760
    %5584 = vmatpush.msra.mxu0 %v5583
    %v5585 = vand.u32 %v5428, 4294901760
    %5586 = vmatmul.f32.gmra.mxu0 %v5585
    %v5587 = vpop.f32.mrf.mxu0
    %v5588 = vadd.f32 %v5555, %v5587
    %5589 = vdwg.mxu0
    %5590 = vmatpush.msra.mxu0 0.0
    %5591 = vmatpush.msra.mxu0 0.0
    %5592 = vmatpush.msra.mxu0 0.0
    %5593 = vmatpush.msra.mxu0 0.0
    %5594 = vmatpush.msra.mxu0 0.0
    %5595 = vmatpush.msra.mxu0 0.0
    %5596 = vmatpush.msra.mxu0 0.0
    %5597 = vmatpush.msra.mxu0 0.0
    %5598 = vmatpush.msra.mxu0 0.0
    %5599 = vmatpush.msra.mxu0 0.0
    %5600 = vmatpush.msra.mxu0 0.0
    %5601 = vmatpush.msra.mxu0 0.0
    %v5602 = vand.u32 %v181, 4294901760
    %5603 = vmatpush.msra.mxu0 %v5602
    %v5604 = vand.u32 %v180, 4294901760
    %5605 = vmatpush.msra.mxu0 %v5604
    %v5606 = vand.u32 %v179, 4294901760
    %5607 = vmatpush.msra.mxu0 %v5606
    %v5608 = vand.u32 %v178, 4294901760
    %5609 = vmatpush.msra.mxu0 %v5608
    %v5610 = vand.u32 %v5428, 4294901760
    %5611 = vmatmul.f32.gmra.mxu0 %v5610
    %v5612 = vpop.f32.mrf.mxu0
    %v5613 = vadd.f32 %v5588, %v5612
    %5614 = vdwg.mxu0
    %5616 = vrot.lane.b32.xlu0 %v5427, 32
    %v5617 = vpop.permute.xlu0 %5616
    %v5618 = vsel %vm210, %v5617, 0
    %5620 = vmatpush.msra.mxu0 0.0
    %5621 = vmatpush.msra.mxu0 0.0
    %5622 = vmatpush.msra.mxu0 0.0
    %5623 = vmatpush.msra.mxu0 0.0
    %5624 = vmatpush.msra.mxu0 0.0
    %5625 = vmatpush.msra.mxu0 0.0
    %5626 = vmatpush.msra.mxu0 0.0
    %5627 = vmatpush.msra.mxu0 0.0
    %5628 = vmatpush.msra.mxu0 0.0
    %5629 = vmatpush.msra.mxu0 0.0
    %5630 = vmatpush.msra.mxu0 0.0
    %5631 = vmatpush.msra.mxu0 0.0
    %v5632 = vand.u32 %v177, 4294901760
    %5633 = vmatpush.msra.mxu0 %v5632
    %v5634 = vand.u32 %v176, 4294901760
    %5635 = vmatpush.msra.mxu0 %v5634
    %v5636 = vand.u32 %v175, 4294901760
    %5637 = vmatpush.msra.mxu0 %v5636
    %v5638 = vand.u32 %v174, 4294901760
    %5639 = vmatpush.msra.mxu0 %v5638
    %v5640 = vand.u32 %v5618, 4294901760
    %v5641 = vsub.f32 %v5618, %v5640
    %v5642 = vand.u32 %v5641, 4294901760
    %v5643 = vsub.f32 %v5641, %v5642
    %v5644 = vand.u32 %v5643, 4294901760
    %5645 = vmatmul.f32.gmra.mxu0 %v5644
    %v5646 = vpop.f32.mrf.mxu0
    %v5647 = vadd.f32 %v5613, %v5646
    %5648 = vdwg.mxu0
    %5649 = vmatpush.msra.mxu0 0.0
    %5650 = vmatpush.msra.mxu0 0.0
    %5651 = vmatpush.msra.mxu0 0.0
    %5652 = vmatpush.msra.mxu0 0.0
    %5653 = vmatpush.msra.mxu0 0.0
    %5654 = vmatpush.msra.mxu0 0.0
    %5655 = vmatpush.msra.mxu0 0.0
    %5656 = vmatpush.msra.mxu0 0.0
    %5657 = vmatpush.msra.mxu0 0.0
    %5658 = vmatpush.msra.mxu0 0.0
    %5659 = vmatpush.msra.mxu0 0.0
    %5660 = vmatpush.msra.mxu0 0.0
    %v5661 = vand.u32 %v177, 4294901760
    %v5662 = vsub.f32 %v177, %v5661
    %v5663 = vand.u32 %v5662, 4294901760
    %v5664 = vsub.f32 %v5662, %v5663
    %v5665 = vand.u32 %v5664, 4294901760
    %5666 = vmatpush.msra.mxu0 %v5665
    %v5667 = vand.u32 %v176, 4294901760
    %v5668 = vsub.f32 %v176, %v5667
    %v5669 = vand.u32 %v5668, 4294901760
    %v5670 = vsub.f32 %v5668, %v5669
    %v5671 = vand.u32 %v5670, 4294901760
    %5672 = vmatpush.msra.mxu0 %v5671
    %v5673 = vand.u32 %v175, 4294901760
    %v5674 = vsub.f32 %v175, %v5673
    %v5675 = vand.u32 %v5674, 4294901760
    %v5676 = vsub.f32 %v5674, %v5675
    %v5677 = vand.u32 %v5676, 4294901760
    %5678 = vmatpush.msra.mxu0 %v5677
    %v5679 = vand.u32 %v174, 4294901760
    %v5680 = vsub.f32 %v174, %v5679
    %v5681 = vand.u32 %v5680, 4294901760
    %v5682 = vsub.f32 %v5680, %v5681
    %v5683 = vand.u32 %v5682, 4294901760
    %5684 = vmatpush.msra.mxu0 %v5683
    %v5685 = vand.u32 %v5618, 4294901760
    %5686 = vmatmul.f32.gmra.mxu0 %v5685
    %v5687 = vpop.f32.mrf.mxu0
    %v5688 = vadd.f32 %v5647, %v5687
    %5689 = vdwg.mxu0
    %5690 = vmatpush.msra.mxu0 0.0
    %5691 = vmatpush.msra.mxu0 0.0
    %5692 = vmatpush.msra.mxu0 0.0
    %5693 = vmatpush.msra.mxu0 0.0
    %5694 = vmatpush.msra.mxu0 0.0
    %5695 = vmatpush.msra.mxu0 0.0
    %5696 = vmatpush.msra.mxu0 0.0
    %5697 = vmatpush.msra.mxu0 0.0
    %5698 = vmatpush.msra.mxu0 0.0
    %5699 = vmatpush.msra.mxu0 0.0
    %5700 = vmatpush.msra.mxu0 0.0
    %5701 = vmatpush.msra.mxu0 0.0
    %v5702 = vand.u32 %v177, 4294901760
    %v5703 = vsub.f32 %v177, %v5702
    %5704 = vmatpush.msra.mxu0 %v5703
    %v5705 = vand.u32 %v176, 4294901760
    %v5706 = vsub.f32 %v176, %v5705
    %5707 = vmatpush.msra.mxu0 %v5706
    %v5708 = vand.u32 %v175, 4294901760
    %v5709 = vsub.f32 %v175, %v5708
    %5710 = vmatpush.msra.mxu0 %v5709
    %v5711 = vand.u32 %v174, 4294901760
    %v5712 = vsub.f32 %v174, %v5711
    %5713 = vmatpush.msra.mxu0 %v5712
    %v5714 = vand.u32 %v5618, 4294901760
    %v5715 = vsub.f32 %v5618, %v5714
    %5716 = vmatmul.f32.gmra.mxu0 %v5715
    %v5717 = vpop.f32.mrf.mxu0
    %v5718 = vadd.f32 %v5688, %v5717
    %5719 = vdwg.mxu0
    %5720 = vmatpush.msra.mxu0 0.0
    %5721 = vmatpush.msra.mxu0 0.0
    %5722 = vmatpush.msra.mxu0 0.0
    %5723 = vmatpush.msra.mxu0 0.0
    %5724 = vmatpush.msra.mxu0 0.0
    %5725 = vmatpush.msra.mxu0 0.0
    %5726 = vmatpush.msra.mxu0 0.0
    %5727 = vmatpush.msra.mxu0 0.0
    %5728 = vmatpush.msra.mxu0 0.0
    %5729 = vmatpush.msra.mxu0 0.0
    %5730 = vmatpush.msra.mxu0 0.0
    %5731 = vmatpush.msra.mxu0 0.0
    %v5732 = vand.u32 %v177, 4294901760
    %5733 = vmatpush.msra.mxu0 %v5732
    %v5734 = vand.u32 %v176, 4294901760
    %5735 = vmatpush.msra.mxu0 %v5734
    %v5736 = vand.u32 %v175, 4294901760
    %5737 = vmatpush.msra.mxu0 %v5736
    %v5738 = vand.u32 %v174, 4294901760
    %5739 = vmatpush.msra.mxu0 %v5738
    %v5740 = vand.u32 %v5618, 4294901760
    %v5741 = vsub.f32 %v5618, %v5740
    %v5742 = vand.u32 %v5741, 4294901760
    %5743 = vmatmul.f32.gmra.mxu0 %v5742
    %v5744 = vpop.f32.mrf.mxu0
    %v5745 = vadd.f32 %v5718, %v5744
    %5746 = vdwg.mxu0
    %5747 = vmatpush.msra.mxu0 0.0
    %5748 = vmatpush.msra.mxu0 0.0
    %5749 = vmatpush.msra.mxu0 0.0
    %5750 = vmatpush.msra.mxu0 0.0
    %5751 = vmatpush.msra.mxu0 0.0
    %5752 = vmatpush.msra.mxu0 0.0
    %5753 = vmatpush.msra.mxu0 0.0
    %5754 = vmatpush.msra.mxu0 0.0
    %5755 = vmatpush.msra.mxu0 0.0
    %5756 = vmatpush.msra.mxu0 0.0
    %5757 = vmatpush.msra.mxu0 0.0
    %5758 = vmatpush.msra.mxu0 0.0
    %v5759 = vand.u32 %v177, 4294901760
    %v5760 = vsub.f32 %v177, %v5759
    %v5761 = vand.u32 %v5760, 4294901760
    %5762 = vmatpush.msra.mxu0 %v5761
    %v5763 = vand.u32 %v176, 4294901760
    %v5764 = vsub.f32 %v176, %v5763
    %v5765 = vand.u32 %v5764, 4294901760
    %5766 = vmatpush.msra.mxu0 %v5765
    %v5767 = vand.u32 %v175, 4294901760
    %v5768 = vsub.f32 %v175, %v5767
    %v5769 = vand.u32 %v5768, 4294901760
    %5770 = vmatpush.msra.mxu0 %v5769
    %v5771 = vand.u32 %v174, 4294901760
    %v5772 = vsub.f32 %v174, %v5771
    %v5773 = vand.u32 %v5772, 4294901760
    %5774 = vmatpush.msra.mxu0 %v5773
    %v5775 = vand.u32 %v5618, 4294901760
    %5776 = vmatmul.f32.gmra.mxu0 %v5775
    %v5777 = vpop.f32.mrf.mxu0
    %v5778 = vadd.f32 %v5745, %v5777
    %5779 = vdwg.mxu0
    %5780 = vmatpush.msra.mxu0 0.0
    %5781 = vmatpush.msra.mxu0 0.0
    %5782 = vmatpush.msra.mxu0 0.0
    %5783 = vmatpush.msra.mxu0 0.0
    %5784 = vmatpush.msra.mxu0 0.0
    %5785 = vmatpush.msra.mxu0 0.0
    %5786 = vmatpush.msra.mxu0 0.0
    %5787 = vmatpush.msra.mxu0 0.0
    %5788 = vmatpush.msra.mxu0 0.0
    %5789 = vmatpush.msra.mxu0 0.0
    %5790 = vmatpush.msra.mxu0 0.0
    %5791 = vmatpush.msra.mxu0 0.0
    %v5792 = vand.u32 %v177, 4294901760
    %5793 = vmatpush.msra.mxu0 %v5792
    %v5794 = vand.u32 %v176, 4294901760
    %5795 = vmatpush.msra.mxu0 %v5794
    %v5796 = vand.u32 %v175, 4294901760
    %5797 = vmatpush.msra.mxu0 %v5796
    %v5798 = vand.u32 %v174, 4294901760
    %5799 = vmatpush.msra.mxu0 %v5798
    %v5800 = vand.u32 %v5618, 4294901760
    %5801 = vmatmul.f32.gmra.mxu0 %v5800
    %v5802 = vpop.f32.mrf.mxu0
    %v5803 = vadd.f32 %v5778, %v5802
    %5804 = vdwg.mxu0
    %v5805 = vadd.f32 %v5803, %v184
    %v5806 = vtanh.pop %v5805
    %v5807 = vxor.u32 %v5805, 2147483648
    %v5808 = vmul.f32 %v5807, 1.442695
    %v5809 = vpow.pop %v5808
    %v5810 = vadd.f32 %v5809, 1.0
    %v5811 = vrcp.pop %v5810
    %v5812 = vmul.f32 %v5810, %v5811
    %v5813 = vsub.f32 1.0, %v5812
    %v5814 = vmul.f32 %v5811, %v5813
    %v5815 = vadd.f32 %v5811, %v5814
    %vm5816 = vweird.f32 %v5810
    %vm5817 = vweird.f32 %v5811
    %vm5818 = vmor %vm5816, %vm5817
    %v5819 = vsel %vm5818, %v5811, %v5815
    %v5820 = vand.u32 2147483647, %v5810
    %vm5821 = vcmp.eq.f32.partialorder %v5820, 8.507059e+37
    %v5822 = vand.u32 %v5810, 2147483648
    %v5823 = vor.u32 1.1754944e-38, %v5822
    %v5824 = vsel %vm5821, %v5823, %v5819
    %v5825 = vmul.f32 1.0, %v5824
    %v5826 = vsel %vm649, %v5806, %v5825
    %v5827 = vmul.f32 %v5826, %v5189
    %5829 = vrot.lane.b32.xlu0 %v5826, 64
    %v5830 = vpop.permute.xlu0 %5829
    %v5832 = vmul.f32 %v5826, %v5830
    %5834 = vrot.lane.b32.xlu0 %v5832, 32
    %v5835 = vpop.permute.xlu0 %5834
    %v5837 = vadd.f32 %v5827, %v5835
    %v5838 = vtanh.pop %v5837
    %5840 = vrot.lane.b32.xlu0 %v5838, 64
    %v5841 = vpop.permute.xlu0 %5840
    %v5843 = vmul.f32 %v5826, %v5841
    %5845 = vrot.lane.b32.xlu0 %v5843, 32
    %v5846 = vpop.permute.xlu0 %5845
    %s5848 = scalar_lea.vmem [#allocation17], 56
    %5849 = vst.msk [vmem:[%s5848] sm:$0xff] %vm210, %v5846
    %5851 = vst.msk [vmem:[#allocation20] sm:$0xff] %vm210, %v5617
    %s5852 = scalar_lea.vmem [#allocation20], 8
    %5853 = vst.msk [vmem:[%s5852] sm:$0xff] %vm210, %v5846
    %5855 = vrot.lane.b32.xlu0 %v5421, 96
    %v5856 = vpop.permute.xlu0 %5855
    %5858 = vst.msk [vmem:[#allocation21] sm:$0xff] %vm210, %v5856
    %5860 = vrot.lane.b32.xlu0 %v5837, 96
    %v5861 = vpop.permute.xlu0 %5860
    %s5863 = scalar_lea.vmem [#allocation21], 8
    %5864 = vst.msk [vmem:[%s5863] sm:$0xff] %vm210, %v5861
    %v5865 = vld [vmem:[#allocation17] sm:$0xff]
    %v5866 = vld [vmem:[#allocation17 + $0x8] sm:$0xff]
    %v5867 = vld [vmem:[#allocation17 + $0x10] sm:$0xff]
    %v5868 = vld [vmem:[#allocation17 + $0x18] sm:$0xff]
    %v5869 = vld [vmem:[#allocation17 + $0x20] sm:$0xff]
    %v5870 = vld [vmem:[#allocation17 + $0x28] sm:$0xff]
    %v5871 = vld [vmem:[#allocation17 + $0x30] sm:$0xff]
    %v5872 = vld [vmem:[#allocation17 + $0x38] sm:$0xff]
    %v5873 = vld [vmem:[#allocation15] sm:$0xff]
    %v5874 = vld [vmem:[#allocation15 + $0x8] sm:$0xff]
    %v5875 = vld [vmem:[#allocation15 + $0x10] sm:$0xff]
    %v5876 = vld [vmem:[#allocation15 + $0x18] sm:$0xff]
    %v5877 = vld [vmem:[%s10] sm:$0x1]
    %v5879 = vperm.slane %v5877, 0
    %v5882 = vsel %vm210, %v5865, 0
    %v5885 = vsel %vm210, %v5866, 0
    %v5888 = vsel %vm210, %v5867, 0
    %v5891 = vsel %vm210, %v5868, 0
    %v5894 = vsel %vm210, %v5869, 0
    %v5897 = vsel %vm210, %v5870, 0
    %v5900 = vsel %vm210, %v5871, 0
    %v5903 = vsel %vm210, %v5872, 0
    %5905 = vmatpush.msra.mxu0 0.0
    %5906 = vmatpush.msra.mxu0 0.0
    %5907 = vmatpush.msra.mxu0 0.0
    %5908 = vmatpush.msra.mxu0 0.0
    %5909 = vmatpush.msra.mxu0 0.0
    %5910 = vmatpush.msra.mxu0 0.0
    %5911 = vmatpush.msra.mxu0 0.0
    %5912 = vmatpush.msra.mxu0 0.0
    %5913 = vmatpush.msra.mxu0 0.0
    %5914 = vmatpush.msra.mxu0 0.0
    %5915 = vmatpush.msra.mxu0 0.0
    %5916 = vmatpush.msra.mxu0 0.0
    %v5917 = vand.u32 %v5876, 4294901760
    %5918 = vmatpush.msra.mxu0 %v5917
    %v5919 = vand.u32 %v5875, 4294901760
    %5920 = vmatpush.msra.mxu0 %v5919
    %v5921 = vand.u32 %v5874, 4294901760
    %5922 = vmatpush.msra.mxu0 %v5921
    %v5923 = vand.u32 %v5873, 4294901760
    %5924 = vmatpush.msra.mxu0 %v5923
    %v5925 = vand.u32 %v5882, 4294901760
    %v5926 = vsub.f32 %v5882, %v5925
    %v5927 = vand.u32 %v5926, 4294901760
    %v5928 = vsub.f32 %v5926, %v5927
    %v5929 = vand.u32 %v5928, 4294901760
    %5930 = vmatmul.f32.gmra.mxu0 %v5929
    %v5931 = vpop.f32.mrf.mxu0
    %v5932 = vadd.f32 %v5879, %v5931
    %v5933 = vand.u32 %v5885, 4294901760
    %v5934 = vsub.f32 %v5885, %v5933
    %v5935 = vand.u32 %v5934, 4294901760
    %v5936 = vsub.f32 %v5934, %v5935
    %v5937 = vand.u32 %v5936, 4294901760
    %5938 = vmatmul.f32.gmra.mxu0 %v5937
    %v5939 = vpop.f32.mrf.mxu0
    %v5940 = vadd.f32 %v5879, %v5939
    %v5941 = vand.u32 %v5888, 4294901760
    %v5942 = vsub.f32 %v5888, %v5941
    %v5943 = vand.u32 %v5942, 4294901760
    %v5944 = vsub.f32 %v5942, %v5943
    %v5945 = vand.u32 %v5944, 4294901760
    %5946 = vmatmul.f32.gmra.mxu0 %v5945
    %v5947 = vpop.f32.mrf.mxu0
    %v5948 = vadd.f32 %v5879, %v5947
    %v5949 = vand.u32 %v5891, 4294901760
    %v5950 = vsub.f32 %v5891, %v5949
    %v5951 = vand.u32 %v5950, 4294901760
    %v5952 = vsub.f32 %v5950, %v5951
    %v5953 = vand.u32 %v5952, 4294901760
    %5954 = vmatmul.f32.gmra.mxu0 %v5953
    %v5955 = vpop.f32.mrf.mxu0
    %v5956 = vadd.f32 %v5879, %v5955
    %v5957 = vand.u32 %v5894, 4294901760
    %v5958 = vsub.f32 %v5894, %v5957
    %v5959 = vand.u32 %v5958, 4294901760
    %v5960 = vsub.f32 %v5958, %v5959
    %v5961 = vand.u32 %v5960, 4294901760
    %5962 = vmatmul.f32.gmra.mxu0 %v5961
    %v5963 = vpop.f32.mrf.mxu0
    %v5964 = vadd.f32 %v5879, %v5963
    %v5965 = vand.u32 %v5897, 4294901760
    %v5966 = vsub.f32 %v5897, %v5965
    %v5967 = vand.u32 %v5966, 4294901760
    %v5968 = vsub.f32 %v5966, %v5967
    %v5969 = vand.u32 %v5968, 4294901760
    %5970 = vmatmul.f32.gmra.mxu0 %v5969
    %v5971 = vpop.f32.mrf.mxu0
    %v5972 = vadd.f32 %v5879, %v5971
    %v5973 = vand.u32 %v5900, 4294901760
    %v5974 = vsub.f32 %v5900, %v5973
    %v5975 = vand.u32 %v5974, 4294901760
    %v5976 = vsub.f32 %v5974, %v5975
    %v5977 = vand.u32 %v5976, 4294901760
    %5978 = vmatmul.f32.gmra.mxu0 %v5977
    %v5979 = vpop.f32.mrf.mxu0
    %v5980 = vadd.f32 %v5879, %v5979
    %v5981 = vand.u32 %v5903, 4294901760
    %v5982 = vsub.f32 %v5903, %v5981
    %v5983 = vand.u32 %v5982, 4294901760
    %v5984 = vsub.f32 %v5982, %v5983
    %v5985 = vand.u32 %v5984, 4294901760
    %5986 = vmatmul.f32.gmra.mxu0 %v5985
    %v5987 = vpop.f32.mrf.mxu0
    %v5988 = vadd.f32 %v5879, %v5987
    %5989 = vdwg.mxu0
    %5990 = vmatpush.msra.mxu0 0.0
    %5991 = vmatpush.msra.mxu0 0.0
    %5992 = vmatpush.msra.mxu0 0.0
    %5993 = vmatpush.msra.mxu0 0.0
    %5994 = vmatpush.msra.mxu0 0.0
    %5995 = vmatpush.msra.mxu0 0.0
    %5996 = vmatpush.msra.mxu0 0.0
    %5997 = vmatpush.msra.mxu0 0.0
    %5998 = vmatpush.msra.mxu0 0.0
    %5999 = vmatpush.msra.mxu0 0.0
    %6000 = vmatpush.msra.mxu0 0.0
    %6001 = vmatpush.msra.mxu0 0.0
    %v6002 = vand.u32 %v5876, 4294901760
    %v6003 = vsub.f32 %v5876, %v6002
    %v6004 = vand.u32 %v6003, 4294901760
    %v6005 = vsub.f32 %v6003, %v6004
    %v6006 = vand.u32 %v6005, 4294901760
    %6007 = vmatpush.msra.mxu0 %v6006
    %v6008 = vand.u32 %v5875, 4294901760
    %v6009 = vsub.f32 %v5875, %v6008
    %v6010 = vand.u32 %v6009, 4294901760
    %v6011 = vsub.f32 %v6009, %v6010
    %v6012 = vand.u32 %v6011, 4294901760
    %6013 = vmatpush.msra.mxu0 %v6012
    %v6014 = vand.u32 %v5874, 4294901760
    %v6015 = vsub.f32 %v5874, %v6014
    %v6016 = vand.u32 %v6015, 4294901760
    %v6017 = vsub.f32 %v6015, %v6016
    %v6018 = vand.u32 %v6017, 4294901760
    %6019 = vmatpush.msra.mxu0 %v6018
    %v6020 = vand.u32 %v5873, 4294901760
    %v6021 = vsub.f32 %v5873, %v6020
    %v6022 = vand.u32 %v6021, 4294901760
    %v6023 = vsub.f32 %v6021, %v6022
    %v6024 = vand.u32 %v6023, 4294901760
    %6025 = vmatpush.msra.mxu0 %v6024
    %v6026 = vand.u32 %v5882, 4294901760
    %6027 = vmatmul.f32.gmra.mxu0 %v6026
    %v6028 = vpop.f32.mrf.mxu0
    %v6029 = vadd.f32 %v5932, %v6028
    %v6030 = vand.u32 %v5885, 4294901760
    %6031 = vmatmul.f32.gmra.mxu0 %v6030
    %v6032 = vpop.f32.mrf.mxu0
    %v6033 = vadd.f32 %v5940, %v6032
    %v6034 = vand.u32 %v5888, 4294901760
    %6035 = vmatmul.f32.gmra.mxu0 %v6034
    %v6036 = vpop.f32.mrf.mxu0
    %v6037 = vadd.f32 %v5948, %v6036
    %v6038 = vand.u32 %v5891, 4294901760
    %6039 = vmatmul.f32.gmra.mxu0 %v6038
    %v6040 = vpop.f32.mrf.mxu0
    %v6041 = vadd.f32 %v5956, %v6040
    %v6042 = vand.u32 %v5894, 4294901760
    %6043 = vmatmul.f32.gmra.mxu0 %v6042
    %v6044 = vpop.f32.mrf.mxu0
    %v6045 = vadd.f32 %v5964, %v6044
    %v6046 = vand.u32 %v5897, 4294901760
    %6047 = vmatmul.f32.gmra.mxu0 %v6046
    %v6048 = vpop.f32.mrf.mxu0
    %v6049 = vadd.f32 %v5972, %v6048
    %v6050 = vand.u32 %v5900, 4294901760
    %6051 = vmatmul.f32.gmra.mxu0 %v6050
    %v6052 = vpop.f32.mrf.mxu0
    %v6053 = vadd.f32 %v5980, %v6052
    %v6054 = vand.u32 %v5903, 4294901760
    %6055 = vmatmul.f32.gmra.mxu0 %v6054
    %v6056 = vpop.f32.mrf.mxu0
    %v6057 = vadd.f32 %v5988, %v6056
    %6058 = vdwg.mxu0
    %6059 = vmatpush.msra.mxu0 0.0
    %6060 = vmatpush.msra.mxu0 0.0
    %6061 = vmatpush.msra.mxu0 0.0
    %6062 = vmatpush.msra.mxu0 0.0
    %6063 = vmatpush.msra.mxu0 0.0
    %6064 = vmatpush.msra.mxu0 0.0
    %6065 = vmatpush.msra.mxu0 0.0
    %6066 = vmatpush.msra.mxu0 0.0
    %6067 = vmatpush.msra.mxu0 0.0
    %6068 = vmatpush.msra.mxu0 0.0
    %6069 = vmatpush.msra.mxu0 0.0
    %6070 = vmatpush.msra.mxu0 0.0
    %v6071 = vand.u32 %v5876, 4294901760
    %v6072 = vsub.f32 %v5876, %v6071
    %6073 = vmatpush.msra.mxu0 %v6072
    %v6074 = vand.u32 %v5875, 4294901760
    %v6075 = vsub.f32 %v5875, %v6074
    %6076 = vmatpush.msra.mxu0 %v6075
    %v6077 = vand.u32 %v5874, 4294901760
    %v6078 = vsub.f32 %v5874, %v6077
    %6079 = vmatpush.msra.mxu0 %v6078
    %v6080 = vand.u32 %v5873, 4294901760
    %v6081 = vsub.f32 %v5873, %v6080
    %6082 = vmatpush.msra.mxu0 %v6081
    %v6083 = vand.u32 %v5882, 4294901760
    %v6084 = vsub.f32 %v5882, %v6083
    %6085 = vmatmul.f32.gmra.mxu0 %v6084
    %v6086 = vpop.f32.mrf.mxu0
    %v6087 = vadd.f32 %v6029, %v6086
    %v6088 = vand.u32 %v5885, 4294901760
    %v6089 = vsub.f32 %v5885, %v6088
    %6090 = vmatmul.f32.gmra.mxu0 %v6089
    %v6091 = vpop.f32.mrf.mxu0
    %v6092 = vadd.f32 %v6033, %v6091
    %v6093 = vand.u32 %v5888, 4294901760
    %v6094 = vsub.f32 %v5888, %v6093
    %6095 = vmatmul.f32.gmra.mxu0 %v6094
    %v6096 = vpop.f32.mrf.mxu0
    %v6097 = vadd.f32 %v6037, %v6096
    %v6098 = vand.u32 %v5891, 4294901760
    %v6099 = vsub.f32 %v5891, %v6098
    %6100 = vmatmul.f32.gmra.mxu0 %v6099
    %v6101 = vpop.f32.mrf.mxu0
    %v6102 = vadd.f32 %v6041, %v6101
    %v6103 = vand.u32 %v5894, 4294901760
    %v6104 = vsub.f32 %v5894, %v6103
    %6105 = vmatmul.f32.gmra.mxu0 %v6104
    %v6106 = vpop.f32.mrf.mxu0
    %v6107 = vadd.f32 %v6045, %v6106
    %v6108 = vand.u32 %v5897, 4294901760
    %v6109 = vsub.f32 %v5897, %v6108
    %6110 = vmatmul.f32.gmra.mxu0 %v6109
    %v6111 = vpop.f32.mrf.mxu0
    %v6112 = vadd.f32 %v6049, %v6111
    %v6113 = vand.u32 %v5900, 4294901760
    %v6114 = vsub.f32 %v5900, %v6113
    %6115 = vmatmul.f32.gmra.mxu0 %v6114
    %v6116 = vpop.f32.mrf.mxu0
    %v6117 = vadd.f32 %v6053, %v6116
    %v6118 = vand.u32 %v5903, 4294901760
    %v6119 = vsub.f32 %v5903, %v6118
    %6120 = vmatmul.f32.gmra.mxu0 %v6119
    %v6121 = vpop.f32.mrf.mxu0
    %v6122 = vadd.f32 %v6057, %v6121
    %6123 = vdwg.mxu0
    %6124 = vmatpush.msra.mxu0 0.0
    %6125 = vmatpush.msra.mxu0 0.0
    %6126 = vmatpush.msra.mxu0 0.0
    %6127 = vmatpush.msra.mxu0 0.0
    %6128 = vmatpush.msra.mxu0 0.0
    %6129 = vmatpush.msra.mxu0 0.0
    %6130 = vmatpush.msra.mxu0 0.0
    %6131 = vmatpush.msra.mxu0 0.0
    %6132 = vmatpush.msra.mxu0 0.0
    %6133 = vmatpush.msra.mxu0 0.0
    %6134 = vmatpush.msra.mxu0 0.0
    %6135 = vmatpush.msra.mxu0 0.0
    %v6136 = vand.u32 %v5876, 4294901760
    %6137 = vmatpush.msra.mxu0 %v6136
    %v6138 = vand.u32 %v5875, 4294901760
    %6139 = vmatpush.msra.mxu0 %v6138
    %v6140 = vand.u32 %v5874, 4294901760
    %6141 = vmatpush.msra.mxu0 %v6140
    %v6142 = vand.u32 %v5873, 4294901760
    %6143 = vmatpush.msra.mxu0 %v6142
    %v6144 = vand.u32 %v5882, 4294901760
    %v6145 = vsub.f32 %v5882, %v6144
    %v6146 = vand.u32 %v6145, 4294901760
    %6147 = vmatmul.f32.gmra.mxu0 %v6146
    %v6148 = vpop.f32.mrf.mxu0
    %v6149 = vadd.f32 %v6087, %v6148
    %v6150 = vand.u32 %v5885, 4294901760
    %v6151 = vsub.f32 %v5885, %v6150
    %v6152 = vand.u32 %v6151, 4294901760
    %6153 = vmatmul.f32.gmra.mxu0 %v6152
    %v6154 = vpop.f32.mrf.mxu0
    %v6155 = vadd.f32 %v6092, %v6154
    %v6156 = vand.u32 %v5888, 4294901760
    %v6157 = vsub.f32 %v5888, %v6156
    %v6158 = vand.u32 %v6157, 4294901760
    %6159 = vmatmul.f32.gmra.mxu0 %v6158
    %v6160 = vpop.f32.mrf.mxu0
    %v6161 = vadd.f32 %v6097, %v6160
    %v6162 = vand.u32 %v5891, 4294901760
    %v6163 = vsub.f32 %v5891, %v6162
    %v6164 = vand.u32 %v6163, 4294901760
    %6165 = vmatmul.f32.gmra.mxu0 %v6164
    %v6166 = vpop.f32.mrf.mxu0
    %v6167 = vadd.f32 %v6102, %v6166
    %v6168 = vand.u32 %v5894, 4294901760
    %v6169 = vsub.f32 %v5894, %v6168
    %v6170 = vand.u32 %v6169, 4294901760
    %6171 = vmatmul.f32.gmra.mxu0 %v6170
    %v6172 = vpop.f32.mrf.mxu0
    %v6173 = vadd.f32 %v6107, %v6172
    %v6174 = vand.u32 %v5897, 4294901760
    %v6175 = vsub.f32 %v5897, %v6174
    %v6176 = vand.u32 %v6175, 4294901760
    %6177 = vmatmul.f32.gmra.mxu0 %v6176
    %v6178 = vpop.f32.mrf.mxu0
    %v6179 = vadd.f32 %v6112, %v6178
    %v6180 = vand.u32 %v5900, 4294901760
    %v6181 = vsub.f32 %v5900, %v6180
    %v6182 = vand.u32 %v6181, 4294901760
    %6183 = vmatmul.f32.gmra.mxu0 %v6182
    %v6184 = vpop.f32.mrf.mxu0
    %v6185 = vadd.f32 %v6117, %v6184
    %v6186 = vand.u32 %v5903, 4294901760
    %v6187 = vsub.f32 %v5903, %v6186
    %v6188 = vand.u32 %v6187, 4294901760
    %6189 = vmatmul.f32.gmra.mxu0 %v6188
    %v6190 = vpop.f32.mrf.mxu0
    %v6191 = vadd.f32 %v6122, %v6190
    %6192 = vdwg.mxu0
    %6193 = vmatpush.msra.mxu0 0.0
    %6194 = vmatpush.msra.mxu0 0.0
    %6195 = vmatpush.msra.mxu0 0.0
    %6196 = vmatpush.msra.mxu0 0.0
    %6197 = vmatpush.msra.mxu0 0.0
    %6198 = vmatpush.msra.mxu0 0.0
    %6199 = vmatpush.msra.mxu0 0.0
    %6200 = vmatpush.msra.mxu0 0.0
    %6201 = vmatpush.msra.mxu0 0.0
    %6202 = vmatpush.msra.mxu0 0.0
    %6203 = vmatpush.msra.mxu0 0.0
    %6204 = vmatpush.msra.mxu0 0.0
    %v6205 = vand.u32 %v5876, 4294901760
    %v6206 = vsub.f32 %v5876, %v6205
    %v6207 = vand.u32 %v6206, 4294901760
    %6208 = vmatpush.msra.mxu0 %v6207
    %v6209 = vand.u32 %v5875, 4294901760
    %v6210 = vsub.f32 %v5875, %v6209
    %v6211 = vand.u32 %v6210, 4294901760
    %6212 = vmatpush.msra.mxu0 %v6211
    %v6213 = vand.u32 %v5874, 4294901760
    %v6214 = vsub.f32 %v5874, %v6213
    %v6215 = vand.u32 %v6214, 4294901760
    %6216 = vmatpush.msra.mxu0 %v6215
    %v6217 = vand.u32 %v5873, 4294901760
    %v6218 = vsub.f32 %v5873, %v6217
    %v6219 = vand.u32 %v6218, 4294901760
    %6220 = vmatpush.msra.mxu0 %v6219
    %v6221 = vand.u32 %v5882, 4294901760
    %6222 = vmatmul.f32.gmra.mxu0 %v6221
    %v6223 = vpop.f32.mrf.mxu0
    %v6224 = vadd.f32 %v6149, %v6223
    %v6225 = vand.u32 %v5885, 4294901760
    %6226 = vmatmul.f32.gmra.mxu0 %v6225
    %v6227 = vpop.f32.mrf.mxu0
    %v6228 = vadd.f32 %v6155, %v6227
    %v6229 = vand.u32 %v5888, 4294901760
    %6230 = vmatmul.f32.gmra.mxu0 %v6229
    %v6231 = vpop.f32.mrf.mxu0
    %v6232 = vadd.f32 %v6161, %v6231
    %v6233 = vand.u32 %v5891, 4294901760
    %6234 = vmatmul.f32.gmra.mxu0 %v6233
    %v6235 = vpop.f32.mrf.mxu0
    %v6236 = vadd.f32 %v6167, %v6235
    %v6237 = vand.u32 %v5894, 4294901760
    %6238 = vmatmul.f32.gmra.mxu0 %v6237
    %v6239 = vpop.f32.mrf.mxu0
    %v6240 = vadd.f32 %v6173, %v6239
    %v6241 = vand.u32 %v5897, 4294901760
    %6242 = vmatmul.f32.gmra.mxu0 %v6241
    %v6243 = vpop.f32.mrf.mxu0
    %v6244 = vadd.f32 %v6179, %v6243
    %v6245 = vand.u32 %v5900, 4294901760
    %6246 = vmatmul.f32.gmra.mxu0 %v6245
    %v6247 = vpop.f32.mrf.mxu0
    %v6248 = vadd.f32 %v6185, %v6247
    %v6249 = vand.u32 %v5903, 4294901760
    %6250 = vmatmul.f32.gmra.mxu0 %v6249
    %v6251 = vpop.f32.mrf.mxu0
    %v6252 = vadd.f32 %v6191, %v6251
    %6253 = vdwg.mxu0
    %6254 = vmatpush.msra.mxu0 0.0
    %6255 = vmatpush.msra.mxu0 0.0
    %6256 = vmatpush.msra.mxu0 0.0
    %6257 = vmatpush.msra.mxu0 0.0
    %6258 = vmatpush.msra.mxu0 0.0
    %6259 = vmatpush.msra.mxu0 0.0
    %6260 = vmatpush.msra.mxu0 0.0
    %6261 = vmatpush.msra.mxu0 0.0
    %6262 = vmatpush.msra.mxu0 0.0
    %6263 = vmatpush.msra.mxu0 0.0
    %6264 = vmatpush.msra.mxu0 0.0
    %6265 = vmatpush.msra.mxu0 0.0
    %v6266 = vand.u32 %v5876, 4294901760
    %6267 = vmatpush.msra.mxu0 %v6266
    %v6268 = vand.u32 %v5875, 4294901760
    %6269 = vmatpush.msra.mxu0 %v6268
    %v6270 = vand.u32 %v5874, 4294901760
    %6271 = vmatpush.msra.mxu0 %v6270
    %v6272 = vand.u32 %v5873, 4294901760
    %6273 = vmatpush.msra.mxu0 %v6272
    %v6274 = vand.u32 %v5882, 4294901760
    %6275 = vmatmul.f32.gmra.mxu0 %v6274
    %v6276 = vpop.f32.mrf.mxu0
    %v6277 = vadd.f32 %v6224, %v6276
    %v6278 = vand.u32 %v5885, 4294901760
    %6279 = vmatmul.f32.gmra.mxu0 %v6278
    %v6280 = vpop.f32.mrf.mxu0
    %v6281 = vadd.f32 %v6228, %v6280
    %v6282 = vand.u32 %v5888, 4294901760
    %6283 = vmatmul.f32.gmra.mxu0 %v6282
    %v6284 = vpop.f32.mrf.mxu0
    %v6285 = vadd.f32 %v6232, %v6284
    %v6286 = vand.u32 %v5891, 4294901760
    %6287 = vmatmul.f32.gmra.mxu0 %v6286
    %v6288 = vpop.f32.mrf.mxu0
    %v6289 = vadd.f32 %v6236, %v6288
    %v6290 = vand.u32 %v5894, 4294901760
    %6291 = vmatmul.f32.gmra.mxu0 %v6290
    %v6292 = vpop.f32.mrf.mxu0
    %v6293 = vadd.f32 %v6240, %v6292
    %v6294 = vand.u32 %v5897, 4294901760
    %6295 = vmatmul.f32.gmra.mxu0 %v6294
    %v6296 = vpop.f32.mrf.mxu0
    %v6297 = vadd.f32 %v6244, %v6296
    %v6298 = vand.u32 %v5900, 4294901760
    %6299 = vmatmul.f32.gmra.mxu0 %v6298
    %v6300 = vpop.f32.mrf.mxu0
    %v6301 = vadd.f32 %v6248, %v6300
    %v6302 = vand.u32 %v5903, 4294901760
    %6303 = vmatmul.f32.gmra.mxu0 %v6302
    %v6304 = vpop.f32.mrf.mxu0
    %v6305 = vadd.f32 %v6252, %v6304
    %6306 = vdwg.mxu0
    %v6307 = vmax.f32 %v6277, %v6293
    %v6308 = vmax.f32 %v6281, %v6297
    %v6309 = vmax.f32 %v6285, %v6301
    %v6310 = vmax.f32 %v6289, %v6305
    %v6311 = vmax.f32 %v6307, %v6308
    %v6312 = vmax.f32 %v6309, %v6310
    %v6313 = vmax.f32 %v6311, %v6312
    %v6314 = vsub.f32 %v6277, %v6313
    %v6315 = vsub.f32 %v6281, %v6313
    %v6316 = vsub.f32 %v6285, %v6313
    %v6317 = vsub.f32 %v6289, %v6313
    %v6318 = vsub.f32 %v6293, %v6313
    %v6319 = vsub.f32 %v6297, %v6313
    %v6320 = vsub.f32 %v6301, %v6313
    %v6321 = vsub.f32 %v6305, %v6313
    %v6322 = vmul.f32 %v6314, 1.442695
    %v6323 = vpow.pop %v6322
    %v6324 = vmul.f32 %v6315, 1.442695
    %v6325 = vpow.pop %v6324
    %v6326 = vmul.f32 %v6316, 1.442695
    %v6327 = vpow.pop %v6326
    %v6328 = vmul.f32 %v6317, 1.442695
    %v6329 = vpow.pop %v6328
    %v6330 = vmul.f32 %v6318, 1.442695
    %v6331 = vpow.pop %v6330
    %v6332 = vmul.f32 %v6319, 1.442695
    %v6333 = vpow.pop %v6332
    %v6334 = vmul.f32 %v6320, 1.442695
    %v6335 = vpow.pop %v6334
    %v6336 = vmul.f32 %v6321, 1.442695
    %v6337 = vpow.pop %v6336
    %v6338 = vadd.f32 %v6323, %v6325
    %v6339 = vadd.f32 %v6338, %v6327
    %v6340 = vadd.f32 %v6339, %v6329
    %v6341 = vadd.f32 %v6340, %v6331
    %v6342 = vadd.f32 %v6341, %v6333
    %v6343 = vadd.f32 %v6342, %v6335
    %v6344 = vadd.f32 %v6343, %v6337
    %v6345 = vlog2.pop %v6344
    %v6346 = vmul.f32 %v6345, 0.6931472
    %v6347 = vadd.f32 %v6346, %v6313
    %v6348 = vsub.f32 %v6277, %v6347
    %v6349 = vsub.f32 %v6281, %v6347
    %v6350 = vsub.f32 %v6285, %v6347
    %v6351 = vsub.f32 %v6289, %v6347
    %v6352 = vsub.f32 %v6293, %v6347
    %v6353 = vsub.f32 %v6297, %v6347
    %v6354 = vsub.f32 %v6301, %v6347
    %v6355 = vsub.f32 %v6305, %v6347
    %6356 = vst [vmem:[#allocation18] sm:$0xff] %v6348
    %6357 = vst [vmem:[#allocation18 + $0x8] sm:$0xff] %v6349
    %6358 = vst [vmem:[#allocation18 + $0x10] sm:$0xff] %v6350
    %6359 = vst [vmem:[#allocation18 + $0x18] sm:$0xff] %v6351
    %6360 = vst [vmem:[#allocation18 + $0x20] sm:$0xff] %v6352
    %6361 = vst [vmem:[#allocation18 + $0x28] sm:$0xff] %v6353
    %6362 = vst [vmem:[#allocation18 + $0x30] sm:$0xff] %v6354
    %6363 = vst [vmem:[#allocation18 + $0x38] sm:$0xff] %v6355
    // Predicated region
    $region78: #{tpu_custom_call.1} parent=1 // pred_check
      _
    $region79: #{tpu_custom_call.1} parent=1 // pred_check_branch
      %6365 = sbr.rel (0) target = $region81
    $region80: #{tpu_custom_call.1} parent=1 // pred_region
      %6367 = vsyncadd [#allocation5], 0
      %s6368 = sshll.u32 [#allocation17], 4
      %s6369 = int_to_ptr.vmem [resolvable:$true] %s6368
      %s6370 = sshll.u32 %s11, 4
      %s6371 = int_to_ptr.hbm [resolvable:$true] %s6370
      %6376 = dma.vmem_to_hbm [thread:$0]  %s6369, 1024, %s6371, [#allocation5], 128, 128, 8
    $region81: #{tpu_custom_call.1} parent=1 // pred_fallthru
      _
    // Predicated region
    $region82: #{tpu_custom_call.1} parent=1 // pred_check
      _
    $region83: #{tpu_custom_call.1} parent=1 // pred_check_branch
      %6378 = sbr.rel (0) target = $region85
    $region84: #{tpu_custom_call.1} parent=1 // pred_region
      %6380 = vsyncadd [#allocation19], 0
      %s6381 = sshll.u32 [#allocation18], 4
      %s6382 = int_to_ptr.vmem [resolvable:$true] %s6381
      %s6383 = sshll.u32 %s12, 4
      %s6384 = int_to_ptr.hbm [resolvable:$true] %s6383
      %6389 = dma.vmem_to_hbm [thread:$0]  %s6382, 1024, %s6384, [#allocation19], 128, 128, 8
    $region85: #{tpu_custom_call.1} parent=1 // pred_fallthru
      _
    // Predicated region
    $region86: #{tpu_custom_call.1} parent=1 // pred_check
      _
    $region87: #{tpu_custom_call.1} parent=1 // pred_check_branch
      %6391 = sbr.rel (0) target = $region89
    $region88: #{tpu_custom_call.1} parent=1 // pred_region
      %6393 = vsyncadd [#allocation19], 0
      %s6394 = sshll.u32 [#allocation20], 4
      %s6395 = int_to_ptr.vmem [resolvable:$true] %s6394
      %s6396 = sshll.u32 %s13, 4
      %s6397 = int_to_ptr.hbm [resolvable:$true] %s6396
      %6402 = dma.vmem_to_hbm [thread:$0]  %s6395, 256, %s6397, [#allocation19], 128, 128, 8
    $region89: #{tpu_custom_call.1} parent=1 // pred_fallthru
      _
    // Predicated region
    $region90: #{tpu_custom_call.1} parent=1 // pred_check
      _
    $region91: #{tpu_custom_call.1} parent=1 // pred_check_branch
      %6404 = sbr.rel (0) target = $region93
    $region92: #{tpu_custom_call.1} parent=1 // pred_region
      %6406 = vsyncadd [#allocation22], 0
      %s6407 = sshll.u32 [#allocation21], 4
      %s6408 = int_to_ptr.vmem [resolvable:$true] %s6407
      %s6409 = sshll.u32 %s14, 4
      %s6410 = int_to_ptr.hbm [resolvable:$true] %s6409
      %6415 = dma.vmem_to_hbm [thread:$0]  %s6408, 256, %s6410, [#allocation22], 128, 128, 8
    $region93: #{tpu_custom_call.1} parent=1 // pred_fallthru
      _
    // Predicated region
    $region94: #{tpu_custom_call.1} parent=1 // pred_check
      _
    $region95: #{tpu_custom_call.1} parent=1 // pred_check_branch
      %6417 = sbr.rel (0) target = $region97
    $region96: #{tpu_custom_call.1} parent=1 // pred_region
      %6419 = dma.done [#allocation5], 1024
    $region97: #{tpu_custom_call.1} parent=1 // pred_fallthru
      _
    // Predicated region
    $region98: #{tpu_custom_call.1} parent=1 // pred_check
      _
    $region99: #{tpu_custom_call.1} parent=1 // pred_check_branch
      %6421 = sbr.rel (0) target = $region101
    $region100: #{tpu_custom_call.1} parent=1 // pred_region
      %6423 = dma.done [#allocation19], 1024
    $region101: #{tpu_custom_call.1} parent=1 // pred_fallthru
      _
    // Predicated region
    $region102: #{tpu_custom_call.1} parent=1 // pred_check
      _
    $region103: #{tpu_custom_call.1} parent=1 // pred_check_branch
      %6425 = sbr.rel (0) target = $region105
    $region104: #{tpu_custom_call.1} parent=1 // pred_region
      %6427 = dma.done [#allocation19], 256
    $region105: #{tpu_custom_call.1} parent=1 // pred_fallthru
      _
    // Predicated region
    $region106: #{tpu_custom_call.1} parent=1 // pred_check
      _
    $region107: #{tpu_custom_call.1} parent=1 // pred_check_branch
      %6429 = sbr.rel (0) target = $region109
    $region108: #{tpu_custom_call.1} parent=1 // pred_region
      %6431 = dma.done [#allocation22], 256
    $region109: #{tpu_custom_call.1} parent=1 // pred_fallthru
      _
    %6432 = vsyncpa [#allocation4], 1
    %6433 = vsyncpa [#allocation7], 1
    %6434 = vsyncpa [#allocation10], 1
    %6435 = vsyncpa [#allocation13], 1
    %6436 = vsyncpa [#allocation16], 1
    %6437 = vsyncpa [#allocation5], 1
    %6438 = vsyncpa [#allocation19], 1
    %6439 = vsyncpa [#allocation22], 1

</llo_original>
